<compile_context>
chip_gen: v7x
topology: tpu7x:2x2x1
jax: 0.10.0
libtpu: 0.0.40
codegen_flags: <defaults>
</compile_context>

<pallas_src>
import jax
import jax.numpy as jnp
from jax.experimental import pallas as pl
from jax.experimental.pallas import tpu as pltpu

EPS = 1e-5


# ---------------------------------------------------------------------------
# Fused ResBlock kernel
# ---------------------------------------------------------------------------
def _resblock_kernel(x_ref, w1_ref, w2_ref, g1_ref, b1_ref, g2_ref, b2_ref,
                     out_ref, pad_scr):
    """Fused ResBlock forward.

    x_ref   : (N, H, W, C)       input, NHWC, f32
    w1_ref  : (9*C, C)           conv1 weights, row = (dy*3+dx)*C + cin
    w2_ref  : (9*C, C)           conv2 weights, same layout
    g*/b*   : (1, C)             BN gamma / beta
    out_ref : (N, H, W, C)       output, NHWC
    pad_scr : (N, H+2, W+2, C)   reused zero-halo VMEM scratch
    """
    N, H, W, C = x_ref.shape
    M = N * H * W

    def im2col(xp):
        # xp: (N, H+2, W+2, C) value -> (M, 9*C) patch matrix, tap-major columns.
        cols = [xp[:, dy:dy + H, dx:dx + W, :].reshape(M, C)
                for dy in range(3) for dx in range(3)]
        return jnp.concatenate(cols, axis=-1)

    def bn(z, g, b):
        # PyTorch training-mode BN (biased variance), folded to a single FMA.
        mean = jnp.mean(z, axis=0, keepdims=True)
        var = jnp.mean((z - mean) ** 2, axis=0, keepdims=True)
        scale = g * jax.lax.rsqrt(var + EPS)
        bias = b - mean * scale
        return z * scale + bias

    # Zero the halo scratch once; only the interior is overwritten below, so the
    # 1-pixel border stays zero for both convolutions.
    pad_scr[...] = jnp.zeros_like(pad_scr)

    # ---- stage 1: y = relu(bn1(conv1(x))) ---------------------------------
    pad_scr[:, 1:H + 1, 1:W + 1, :] = x_ref[...]
    z1 = jnp.dot(im2col(pad_scr[...]), w1_ref[...],
                 preferred_element_type=jnp.float32)
    y = jnp.maximum(bn(z1, g1_ref[...], b1_ref[...]), 0.0)          # (M, C)

    # ---- stage 2: out = relu(bn2(conv2(y)) + residual) --------------------
    pad_scr[:, 1:H + 1, 1:W + 1, :] = y.reshape(N, H, W, C)         # y stays in VMEM
    z2 = jnp.dot(im2col(pad_scr[...]), w2_ref[...],
                 preferred_element_type=jnp.float32)
    z2 = bn(z2, g2_ref[...], b2_ref[...]) + x_ref[...].reshape(M, C)
    out_ref[...] = jnp.maximum(z2, 0.0).reshape(N, H, W, C)


# ---------------------------------------------------------------------------
# Wrapper (layout glue only: NCHW<->NHWC for the module interface, weight re-layout)
# ---------------------------------------------------------------------------
def _vmem_spec():
    return pl.BlockSpec(memory_space=pltpu.MemorySpace.VMEM)


def _oihw_to_mat(w_oihw):
    """(Cout, Cin, 3, 3) -> (9*Cin, Cout), row index = (dy*3+dx)*Cin + cin."""
    cout, cin = w_oihw.shape[0], w_oihw.shape[1]
    return jnp.transpose(w_oihw, (2, 3, 1, 0)).reshape(9 * cin, cout)


@jax.jit
def resblock_pallas(x_nchw, w1_oihw, g1, b1, w2_oihw, g2, b2):
    N, C, H, W = x_nchw.shape
    x = jnp.transpose(x_nchw, (0, 2, 3, 1)).astype(jnp.float32)      # NHWC
    w1 = _oihw_to_mat(w1_oihw.astype(jnp.float32))
    w2 = _oihw_to_mat(w2_oihw.astype(jnp.float32))
    g1r = g1.reshape(1, -1).astype(jnp.float32)
    b1r = b1.reshape(1, -1).astype(jnp.float32)
    g2r = g2.reshape(1, -1).astype(jnp.float32)
    b2r = b2.reshape(1, -1).astype(jnp.float32)

    out = pl.pallas_call(
        _resblock_kernel,
        out_shape=jax.ShapeDtypeStruct((N, H, W, C), jnp.float32),
        in_specs=[_vmem_spec()] * 7,
        out_specs=_vmem_spec(),
        scratch_shapes=[pltpu.VMEM((N, H + 2, W + 2, C), jnp.float32)],
    )(x, w1, w2, g1r, b1r, g2r, b2r)

    # Module interface is NCHW; transpose back (cheap at these shapes).
    return jnp.transpose(out, (0, 3, 1, 2))


# ---------------------------------------------------------------------------
# Pure-JAX reference (mirrors the PyTorch forward in training mode)
# ---------------------------------------------------------------------------
def resblock_reference(x, w1, g1, b1, w2, g2, b2):
    def conv(x_, w_):
        return jax.lax.conv_general_dilated(
            x_, w_, window_strides=(1, 1), padding=((1, 1), (1, 1)),
            dimension_numbers=("NCHW", "OIHW", "NCHW"),
            precision=jax.lax.Precision.HIGHEST)

    def bn(x_, g_, b_):
        mean = x_.mean(axis=(0, 2, 3), keepdims=True)
        var = ((x_ - mean) ** 2).mean(axis=(0, 2, 3), keepdims=True)
        return (x_ - mean) / jnp.sqrt(var + EPS) * g_.reshape(1, -1, 1, 1) \
            + b_.reshape(1, -1, 1, 1)

    y = jax.nn.relu(bn(conv(x, w1), g1, b1))
    z = bn(conv(y, w2), g2, b2)
    return jax.nn.relu(z + x)


# ---------------------------------------------------------------------------
if __name__ == "__main__":
    N, C, H, W = 2, 4, 16, 16  # in_channels == out_channels, stride=1, no downsample

    key = jax.random.PRNGKey(0)
    kx, kw1, kw2 = jax.random.split(key, 3)

    x = jax.random.normal(kx, (N, C, H, W), dtype=jnp.float32)
    # Conv weights (OIHW), bias=False.
    w1 = jax.random.normal(kw1, (C, C, 3, 3), dtype=jnp.float32) * 0.1
    w2 = jax.random.normal(kw2, (C, C, 3, 3), dtype=jnp.float32) * 0.1
    # BatchNorm affine params: PyTorch default init (gamma=1, beta=0).
    g1 = jnp.ones((C,), jnp.float32)
    b1 = jnp.zeros((C,), jnp.float32)
    g2 = jnp.ones((C,), jnp.float32)
    b2 = jnp.zeros((C,), jnp.float32)

    out = jax.block_until_ready(resblock_pallas(x, w1, g1, b1, w2, g2, b2))

    ref = resblock_reference(x, w1, g1, b1, w2, g2, b2)
    assert out.shape == (N, C, H, W), out.shape
    assert jnp.allclose(out, ref, rtol=2e-3, atol=2e-3), \
        f"max abs err {jnp.max(jnp.abs(out - ref))}"

    print("KERNEL_OK")
</pallas_src>

<mosaic_0001>
module attributes {stable_mosaic.version = 11 : i64} {
  func.func @_resblock_kernel(%arg0: memref<2x16x16x4xf32, #tpu.memory_space<vmem>>, %arg1: memref<36x4xf32, #tpu.memory_space<vmem>>, %arg2: memref<36x4xf32, #tpu.memory_space<vmem>>, %arg3: memref<1x4xf32, #tpu.memory_space<vmem>>, %arg4: memref<1x4xf32, #tpu.memory_space<vmem>>, %arg5: memref<1x4xf32, #tpu.memory_space<vmem>>, %arg6: memref<1x4xf32, #tpu.memory_space<vmem>>, %arg7: memref<2x16x16x4xf32, #tpu.memory_space<vmem>>, %arg8: memref<2x18x18x4xf32, #tpu.memory_space<vmem>>) attributes {dimension_semantics = [], scalar_prefetch = 0 : i64, scratch_operands = 1 : i64, tpu.core_type = #tpu.core_type<tc>} {
    %cst = arith.constant 0.000000e+00 : f32
    %0 = vector.broadcast %cst : f32 to vector<2x18x18x4xf32>
    %c0 = arith.constant 0 : index
    %c0_0 = arith.constant 0 : index
    %c0_1 = arith.constant 0 : index
    %c0_2 = arith.constant 0 : index
    %1 = vector.load %arg8[%c0, %c0_0, %c0_1, %c0_2] : memref<2x18x18x4xf32, #tpu.memory_space<vmem>>, vector<2x18x18x4xf32>
    tpu.vector_store %arg8[%c0, %c0_0, %c0_1, %c0_2], %0 {strides = array<i32>} : memref<2x18x18x4xf32, #tpu.memory_space<vmem>>, vector<2x18x18x4xf32>,
    %c0_3 = arith.constant 0 : index
    %c0_4 = arith.constant 0 : index
    %c0_5 = arith.constant 0 : index
    %c0_6 = arith.constant 0 : index
    %2 = vector.load %arg0[%c0_3, %c0_4, %c0_5, %c0_6] : memref<2x16x16x4xf32, #tpu.memory_space<vmem>>, vector<2x16x16x4xf32>
    %c0_7 = arith.constant 0 : index
    %c1 = arith.constant 1 : index
    %c1_8 = arith.constant 1 : index
    %c0_9 = arith.constant 0 : index
    %3 = vector.load %arg8[%c0_7, %c1, %c1_8, %c0_9] : memref<2x18x18x4xf32, #tpu.memory_space<vmem>>, vector<2x16x16x4xf32>
    tpu.vector_store %arg8[%c0_7, %c1, %c1_8, %c0_9], %2 {strides = array<i32>} : memref<2x18x18x4xf32, #tpu.memory_space<vmem>>, vector<2x16x16x4xf32>,
    %c0_10 = arith.constant 0 : index
    %c0_11 = arith.constant 0 : index
    %c0_12 = arith.constant 0 : index
    %c0_13 = arith.constant 0 : index
    %4 = vector.load %arg8[%c0_10, %c0_11, %c0_12, %c0_13] : memref<2x18x18x4xf32, #tpu.memory_space<vmem>>, vector<2x18x18x4xf32>
    %5 = vector.extract_strided_slice %4 {offsets = [0, 0, 0, 0], sizes = [2, 16, 16, 4], strides = [1, 1, 1, 1]} : vector<2x18x18x4xf32> to vector<2x16x16x4xf32>
    %6 = vector.shape_cast %5 : vector<2x16x16x4xf32> to vector<512x4xf32>
    %7 = vector.extract_strided_slice %4 {offsets = [0, 0, 1, 0], sizes = [2, 16, 16, 4], strides = [1, 1, 1, 1]} : vector<2x18x18x4xf32> to vector<2x16x16x4xf32>
    %8 = vector.shape_cast %7 : vector<2x16x16x4xf32> to vector<512x4xf32>
    %9 = vector.extract_strided_slice %4 {offsets = [0, 0, 2, 0], sizes = [2, 16, 16, 4], strides = [1, 1, 1, 1]} : vector<2x18x18x4xf32> to vector<2x16x16x4xf32>
    %10 = vector.shape_cast %9 : vector<2x16x16x4xf32> to vector<512x4xf32>
    %11 = vector.extract_strided_slice %4 {offsets = [0, 1, 0, 0], sizes = [2, 16, 16, 4], strides = [1, 1, 1, 1]} : vector<2x18x18x4xf32> to vector<2x16x16x4xf32>
    %12 = vector.shape_cast %11 : vector<2x16x16x4xf32> to vector<512x4xf32>
    %13 = vector.extract_strided_slice %4 {offsets = [0, 1, 1, 0], sizes = [2, 16, 16, 4], strides = [1, 1, 1, 1]} : vector<2x18x18x4xf32> to vector<2x16x16x4xf32>
    %14 = vector.shape_cast %13 : vector<2x16x16x4xf32> to vector<512x4xf32>
    %15 = vector.extract_strided_slice %4 {offsets = [0, 1, 2, 0], sizes = [2, 16, 16, 4], strides = [1, 1, 1, 1]} : vector<2x18x18x4xf32> to vector<2x16x16x4xf32>
    %16 = vector.shape_cast %15 : vector<2x16x16x4xf32> to vector<512x4xf32>
    %17 = vector.extract_strided_slice %4 {offsets = [0, 2, 0, 0], sizes = [2, 16, 16, 4], strides = [1, 1, 1, 1]} : vector<2x18x18x4xf32> to vector<2x16x16x4xf32>
    %18 = vector.shape_cast %17 : vector<2x16x16x4xf32> to vector<512x4xf32>
    %19 = vector.extract_strided_slice %4 {offsets = [0, 2, 1, 0], sizes = [2, 16, 16, 4], strides = [1, 1, 1, 1]} : vector<2x18x18x4xf32> to vector<2x16x16x4xf32>
    %20 = vector.shape_cast %19 : vector<2x16x16x4xf32> to vector<512x4xf32>
    %21 = vector.extract_strided_slice %4 {offsets = [0, 2, 2, 0], sizes = [2, 16, 16, 4], strides = [1, 1, 1, 1]} : vector<2x18x18x4xf32> to vector<2x16x16x4xf32>
    %22 = vector.shape_cast %21 : vector<2x16x16x4xf32> to vector<512x4xf32>
    %23 = tpu.concatenate %6, %8, %10, %12, %14, %16, %18, %20, %22 in 1 : vector<512x4xf32>, vector<512x4xf32>, vector<512x4xf32>, vector<512x4xf32>, vector<512x4xf32>, vector<512x4xf32>, vector<512x4xf32>, vector<512x4xf32>, vector<512x4xf32> -> vector<512x36xf32>
    %c0_14 = arith.constant 0 : index
    %c0_15 = arith.constant 0 : index
    %24 = vector.load %arg1[%c0_14, %c0_15] : memref<36x4xf32, #tpu.memory_space<vmem>>, vector<36x4xf32>
    %cst_16 = arith.constant dense<0.000000e+00> : vector<512x4xf32>
    %25 = tpu.matmul %23, %24, %cst_16 {dimension_numbers = #tpu.dot_dimension_numbers<[1], [0], [0], [1], [0, 0, 1, 1], [], []>} : vector<512x36xf32>, vector<36x4xf32>, vector<512x4xf32> -> vector<512x4xf32>
    %c0_17 = arith.constant 0 : index
    %c0_18 = arith.constant 0 : index
    %26 = vector.load %arg3[%c0_17, %c0_18] : memref<1x4xf32, #tpu.memory_space<vmem>>, vector<1x4xf32>
    %c0_19 = arith.constant 0 : index
    %c0_20 = arith.constant 0 : index
    %27 = vector.load %arg4[%c0_19, %c0_20] : memref<1x4xf32, #tpu.memory_space<vmem>>, vector<1x4xf32>
    %cst_21 = arith.constant dense<0.000000e+00> : vector<4xf32>
    %28 = vector.multi_reduction <add>, %25, %cst_21 [0] : vector<512x4xf32> to vector<4xf32>
    %29 = vector.shape_cast %28 : vector<4xf32> to vector<1x4xf32>
    %cst_22 = arith.constant 5.120000e+02 : f32
    %30 = vector.broadcast %cst_22 : f32 to vector<1x4xf32>
    %31 = arith.divf %29, %30 : vector<1x4xf32>
    %32 = vector.broadcast %31 : vector<1x4xf32> to vector<512x4xf32>
    %33 = arith.subf %25, %32 : vector<512x4xf32>
    %34 = arith.mulf %33, %33 : vector<512x4xf32>
    %cst_23 = arith.constant dense<0.000000e+00> : vector<4xf32>
    %35 = vector.multi_reduction <add>, %34, %cst_23 [0] : vector<512x4xf32> to vector<4xf32>
    %36 = vector.shape_cast %35 : vector<4xf32> to vector<1x4xf32>
    %cst_24 = arith.constant 5.120000e+02 : f32
    %37 = vector.broadcast %cst_24 : f32 to vector<1x4xf32>
    %38 = arith.divf %36, %37 : vector<1x4xf32>
    %cst_25 = arith.constant 9.99999974E-6 : f32
    %39 = vector.broadcast %cst_25 : f32 to vector<1x4xf32>
    %40 = arith.addf %38, %39 : vector<1x4xf32>
    %41 = math.rsqrt %40 : vector<1x4xf32>
    %42 = arith.mulf %26, %41 : vector<1x4xf32>
    %43 = arith.mulf %31, %42 : vector<1x4xf32>
    %44 = arith.subf %27, %43 : vector<1x4xf32>
    %45 = vector.broadcast %42 : vector<1x4xf32> to vector<512x4xf32>
    %46 = arith.mulf %25, %45 : vector<512x4xf32>
    %47 = vector.broadcast %44 : vector<1x4xf32> to vector<512x4xf32>
    %48 = arith.addf %46, %47 : vector<512x4xf32>
    %cst_26 = arith.constant 0.000000e+00 : f32
    %49 = vector.broadcast %cst_26 : f32 to vector<512x4xf32>
    %50 = arith.maximumf %48, %49 : vector<512x4xf32>
    %51 = vector.shape_cast %50 : vector<512x4xf32> to vector<2x16x16x4xf32>
    %c0_27 = arith.constant 0 : index
    %c1_28 = arith.constant 1 : index
    %c1_29 = arith.constant 1 : index
    %c0_30 = arith.constant 0 : index
    %52 = vector.load %arg8[%c0_27, %c1_28, %c1_29, %c0_30] : memref<2x18x18x4xf32, #tpu.memory_space<vmem>>, vector<2x16x16x4xf32>
    tpu.vector_store %arg8[%c0_27, %c1_28, %c1_29, %c0_30], %51 {strides = array<i32>} : memref<2x18x18x4xf32, #tpu.memory_space<vmem>>, vector<2x16x16x4xf32>,
    %c0_31 = arith.constant 0 : index
    %c0_32 = arith.constant 0 : index
    %c0_33 = arith.constant 0 : index
    %c0_34 = arith.constant 0 : index
    %53 = vector.load %arg8[%c0_31, %c0_32, %c0_33, %c0_34] : memref<2x18x18x4xf32, #tpu.memory_space<vmem>>, vector<2x18x18x4xf32>
    %54 = vector.extract_strided_slice %53 {offsets = [0, 0, 0, 0], sizes = [2, 16, 16, 4], strides = [1, 1, 1, 1]} : vector<2x18x18x4xf32> to vector<2x16x16x4xf32>
    %55 = vector.shape_cast %54 : vector<2x16x16x4xf32> to vector<512x4xf32>
    %56 = vector.extract_strided_slice %53 {offsets = [0, 0, 1, 0], sizes = [2, 16, 16, 4], strides = [1, 1, 1, 1]} : vector<2x18x18x4xf32> to vector<2x16x16x4xf32>
    %57 = vector.shape_cast %56 : vector<2x16x16x4xf32> to vector<512x4xf32>
    %58 = vector.extract_strided_slice %53 {offsets = [0, 0, 2, 0], sizes = [2, 16, 16, 4], strides = [1, 1, 1, 1]} : vector<2x18x18x4xf32> to vector<2x16x16x4xf32>
    %59 = vector.shape_cast %58 : vector<2x16x16x4xf32> to vector<512x4xf32>
    %60 = vector.extract_strided_slice %53 {offsets = [0, 1, 0, 0], sizes = [2, 16, 16, 4], strides = [1, 1, 1, 1]} : vector<2x18x18x4xf32> to vector<2x16x16x4xf32>
    %61 = vector.shape_cast %60 : vector<2x16x16x4xf32> to vector<512x4xf32>
    %62 = vector.extract_strided_slice %53 {offsets = [0, 1, 1, 0], sizes = [2, 16, 16, 4], strides = [1, 1, 1, 1]} : vector<2x18x18x4xf32> to vector<2x16x16x4xf32>
    %63 = vector.shape_cast %62 : vector<2x16x16x4xf32> to vector<512x4xf32>
    %64 = vector.extract_strided_slice %53 {offsets = [0, 1, 2, 0], sizes = [2, 16, 16, 4], strides = [1, 1, 1, 1]} : vector<2x18x18x4xf32> to vector<2x16x16x4xf32>
    %65 = vector.shape_cast %64 : vector<2x16x16x4xf32> to vector<512x4xf32>
    %66 = vector.extract_strided_slice %53 {offsets = [0, 2, 0, 0], sizes = [2, 16, 16, 4], strides = [1, 1, 1, 1]} : vector<2x18x18x4xf32> to vector<2x16x16x4xf32>
    %67 = vector.shape_cast %66 : vector<2x16x16x4xf32> to vector<512x4xf32>
    %68 = vector.extract_strided_slice %53 {offsets = [0, 2, 1, 0], sizes = [2, 16, 16, 4], strides = [1, 1, 1, 1]} : vector<2x18x18x4xf32> to vector<2x16x16x4xf32>
    %69 = vector.shape_cast %68 : vector<2x16x16x4xf32> to vector<512x4xf32>
    %70 = vector.extract_strided_slice %53 {offsets = [0, 2, 2, 0], sizes = [2, 16, 16, 4], strides = [1, 1, 1, 1]} : vector<2x18x18x4xf32> to vector<2x16x16x4xf32>
    %71 = vector.shape_cast %70 : vector<2x16x16x4xf32> to vector<512x4xf32>
    %72 = tpu.concatenate %55, %57, %59, %61, %63, %65, %67, %69, %71 in 1 : vector<512x4xf32>, vector<512x4xf32>, vector<512x4xf32>, vector<512x4xf32>, vector<512x4xf32>, vector<512x4xf32>, vector<512x4xf32>, vector<512x4xf32>, vector<512x4xf32> -> vector<512x36xf32>
    %c0_35 = arith.constant 0 : index
    %c0_36 = arith.constant 0 : index
    %73 = vector.load %arg2[%c0_35, %c0_36] : memref<36x4xf32, #tpu.memory_space<vmem>>, vector<36x4xf32>
    %cst_37 = arith.constant dense<0.000000e+00> : vector<512x4xf32>
    %74 = tpu.matmul %72, %73, %cst_37 {dimension_numbers = #tpu.dot_dimension_numbers<[1], [0], [0], [1], [0, 0, 1, 1], [], []>} : vector<512x36xf32>, vector<36x4xf32>, vector<512x4xf32> -> vector<512x4xf32>
    %c0_38 = arith.constant 0 : index
    %c0_39 = arith.constant 0 : index
    %75 = vector.load %arg5[%c0_38, %c0_39] : memref<1x4xf32, #tpu.memory_space<vmem>>, vector<1x4xf32>
    %c0_40 = arith.constant 0 : index
    %c0_41 = arith.constant 0 : index
    %76 = vector.load %arg6[%c0_40, %c0_41] : memref<1x4xf32, #tpu.memory_space<vmem>>, vector<1x4xf32>
    %cst_42 = arith.constant dense<0.000000e+00> : vector<4xf32>
    %77 = vector.multi_reduction <add>, %74, %cst_42 [0] : vector<512x4xf32> to vector<4xf32>
    %78 = vector.shape_cast %77 : vector<4xf32> to vector<1x4xf32>
    %cst_43 = arith.constant 5.120000e+02 : f32
    %79 = vector.broadcast %cst_43 : f32 to vector<1x4xf32>
    %80 = arith.divf %78, %79 : vector<1x4xf32>
    %81 = vector.broadcast %80 : vector<1x4xf32> to vector<512x4xf32>
    %82 = arith.subf %74, %81 : vector<512x4xf32>
    %83 = arith.mulf %82, %82 : vector<512x4xf32>
    %cst_44 = arith.constant dense<0.000000e+00> : vector<4xf32>
    %84 = vector.multi_reduction <add>, %83, %cst_44 [0] : vector<512x4xf32> to vector<4xf32>
    %85 = vector.shape_cast %84 : vector<4xf32> to vector<1x4xf32>
    %cst_45 = arith.constant 5.120000e+02 : f32
    %86 = vector.broadcast %cst_45 : f32 to vector<1x4xf32>
    %87 = arith.divf %85, %86 : vector<1x4xf32>
    %cst_46 = arith.constant 9.99999974E-6 : f32
    %88 = vector.broadcast %cst_46 : f32 to vector<1x4xf32>
    %89 = arith.addf %87, %88 : vector<1x4xf32>
    %90 = math.rsqrt %89 : vector<1x4xf32>
    %91 = arith.mulf %75, %90 : vector<1x4xf32>
    %92 = arith.mulf %80, %91 : vector<1x4xf32>
    %93 = arith.subf %76, %92 : vector<1x4xf32>
    %94 = vector.broadcast %91 : vector<1x4xf32> to vector<512x4xf32>
    %95 = arith.mulf %74, %94 : vector<512x4xf32>
    %96 = vector.broadcast %93 : vector<1x4xf32> to vector<512x4xf32>
    %97 = arith.addf %95, %96 : vector<512x4xf32>
    %c0_47 = arith.constant 0 : index
    %c0_48 = arith.constant 0 : index
    %c0_49 = arith.constant 0 : index
    %c0_50 = arith.constant 0 : index
    %98 = vector.load %arg0[%c0_47, %c0_48, %c0_49, %c0_50] : memref<2x16x16x4xf32, #tpu.memory_space<vmem>>, vector<2x16x16x4xf32>
    %99 = vector.shape_cast %98 : vector<2x16x16x4xf32> to vector<512x4xf32>
    %100 = arith.addf %97, %99 : vector<512x4xf32>
    %cst_51 = arith.constant 0.000000e+00 : f32
    %101 = vector.broadcast %cst_51 : f32 to vector<512x4xf32>
    %102 = arith.maximumf %100, %101 : vector<512x4xf32>
    %103 = vector.shape_cast %102 : vector<512x4xf32> to vector<2x16x16x4xf32>
    %c0_52 = arith.constant 0 : index
    %c0_53 = arith.constant 0 : index
    %c0_54 = arith.constant 0 : index
    %c0_55 = arith.constant 0 : index
    %104 = vector.load %arg7[%c0_52, %c0_53, %c0_54, %c0_55] : memref<2x16x16x4xf32, #tpu.memory_space<vmem>>, vector<2x16x16x4xf32>
    tpu.vector_store %arg7[%c0_52, %c0_53, %c0_54, %c0_55], %103 {strides = array<i32>} : memref<2x16x16x4xf32, #tpu.memory_space<vmem>>, vector<2x16x16x4xf32>,
    return
  }
}

</mosaic_0001>

<llo_original>
// kernel: resblock_pallas.1
$region0: #{resblock_pallas.1}
  #allocation0 [shape = 'u32[]', space=smem, size = 0x4, offset = 0x4, fixed_abs, tag = 'smem constant byte address 0x4 - core index']
  #allocation1 [shape = 'u32[144,128]{1,0:T(1,128)}', space=vmem, size = 0x12000, scoped, tag = 'internal scratch']
  #allocation2 [shape = 'f32[2,18,18,4]{3,2,1,0:T(8,128)}', space=vmem, size = 0x6c000, scoped, tag = 'scratch operand']
  %s0 = inlined_call_operand.vmem [shape: f32[2,16,16,4], index: 0, kind: input, shape index: {}]
  %s1 = inlined_call_operand.vmem [shape: f32[36,4], index: 1, kind: input, shape index: {}]
  %s2 = inlined_call_operand.vmem [shape: f32[36,4], index: 2, kind: input, shape index: {}]
  %s3 = inlined_call_operand.vmem [shape: f32[1,4], index: 3, kind: input, shape index: {}]
  %s4 = inlined_call_operand.vmem [shape: f32[1,4], index: 4, kind: input, shape index: {}]
  %s5 = inlined_call_operand.vmem [shape: f32[1,4], index: 5, kind: input, shape index: {}]
  %s6 = inlined_call_operand.vmem [shape: f32[1,4], index: 6, kind: input, shape index: {}]
  %s7 = inlined_call_operand.vmem [shape: f32[2,16,16,4], index: 7, kind: output, shape index: {}]
  %s8 = sld [smem:[#allocation0]]
  $region38: #{resblock_pallas.1} parent=0
    _
  %s10 = ssub.s32 1, %s8
  %s11 = scalar_select 0, %s10, %s8
  // Predicated region
  $region2: #{resblock_pallas.1} parent=0 // pred_check
    _
  $region3: #{resblock_pallas.1} parent=0 // pred_check_branch
    %13 = sbr.rel (0) target = $region5
  $region4: #{resblock_pallas.1} parent=0 // pred_region
    _
  $region5: #{resblock_pallas.1} parent=0 // pred_fallthru
    _
  // Predicated region
  $region6: #{resblock_pallas.1} parent=0 // pred_check
    _
  $region7: #{resblock_pallas.1} parent=0 // pred_check_branch
    %15 = sbr.rel (0) target = $region9
  $region8: #{resblock_pallas.1} parent=0 // pred_region
    _
  $region9: #{resblock_pallas.1} parent=0 // pred_fallthru
    _
  // Predicated region
  $region10: #{resblock_pallas.1} parent=0 // pred_check
    _
  $region11: #{resblock_pallas.1} parent=0 // pred_check_branch
    %17 = sbr.rel (0) target = $region13
  $region12: #{resblock_pallas.1} parent=0 // pred_region
    _
  $region13: #{resblock_pallas.1} parent=0 // pred_fallthru
    _
  // Predicated region
  $region14: #{resblock_pallas.1} parent=0 // pred_check
    _
  $region15: #{resblock_pallas.1} parent=0 // pred_check_branch
    %19 = sbr.rel (0) target = $region17
  $region16: #{resblock_pallas.1} parent=0 // pred_region
    _
  $region17: #{resblock_pallas.1} parent=0 // pred_fallthru
    _
  // Predicated region
  $region18: #{resblock_pallas.1} parent=0 // pred_check
    _
  $region19: #{resblock_pallas.1} parent=0 // pred_check_branch
    %21 = sbr.rel (0) target = $region21
  $region20: #{resblock_pallas.1} parent=0 // pred_region
    _
  $region21: #{resblock_pallas.1} parent=0 // pred_fallthru
    _
  // Predicated region
  $region22: #{resblock_pallas.1} parent=0 // pred_check
    _
  $region23: #{resblock_pallas.1} parent=0 // pred_check_branch
    %23 = sbr.rel (0) target = $region25
  $region24: #{resblock_pallas.1} parent=0 // pred_region
    _
  $region25: #{resblock_pallas.1} parent=0 // pred_fallthru
    _
  // Predicated region
  $region26: #{resblock_pallas.1} parent=0 // pred_check
    _
  $region27: #{resblock_pallas.1} parent=0 // pred_check_branch
    %25 = sbr.rel (0) target = $region29
  $region28: #{resblock_pallas.1} parent=0 // pred_region
    _
  $region29: #{resblock_pallas.1} parent=0 // pred_fallthru
    _
  %vm26 = vcmask 31744
  %27 = vst.msk [vmem:[#allocation2] sm:$0xff] %vm26, 0.0
  %28 = vst.msk [vmem:[#allocation2 + $0x8] sm:$0xff] %vm26, 0.0
  %vm29 = vcmask 25600
  %30 = vst.msk [vmem:[#allocation2 + $0x10] sm:$0x3] %vm29, 0.0
  %31 = vst.msk [vmem:[#allocation2 + $0x18] sm:$0xff] %vm26, 0.0
  %32 = vst.msk [vmem:[#allocation2 + $0x20] sm:$0xff] %vm26, 0.0
  %33 = vst.msk [vmem:[#allocation2 + $0x28] sm:$0x3] %vm29, 0.0
  %34 = vst.msk [vmem:[#allocation2 + $0x30] sm:$0xff] %vm26, 0.0
  %35 = vst.msk [vmem:[#allocation2 + $0x38] sm:$0xff] %vm26, 0.0
  %36 = vst.msk [vmem:[#allocation2 + $0x40] sm:$0x3] %vm29, 0.0
  %37 = vst.msk [vmem:[#allocation2 + $0x48] sm:$0xff] %vm26, 0.0
  %38 = vst.msk [vmem:[#allocation2 + $0x50] sm:$0xff] %vm26, 0.0
  %39 = vst.msk [vmem:[#allocation2 + $0x58] sm:$0x3] %vm29, 0.0
  %40 = vst.msk [vmem:[#allocation2 + $0x60] sm:$0xff] %vm26, 0.0
  %41 = vst.msk [vmem:[#allocation2 + $0x68] sm:$0xff] %vm26, 0.0
  %42 = vst.msk [vmem:[#allocation2 + $0x70] sm:$0x3] %vm29, 0.0
  %43 = vst.msk [vmem:[#allocation2 + $0x78] sm:$0xff] %vm26, 0.0
  %44 = vst.msk [vmem:[#allocation2 + $0x80] sm:$0xff] %vm26, 0.0
  %45 = vst.msk [vmem:[#allocation2 + $0x88] sm:$0x3] %vm29, 0.0
  %46 = vst.msk [vmem:[#allocation2 + $0x90] sm:$0xff] %vm26, 0.0
  %47 = vst.msk [vmem:[#allocation2 + $0x98] sm:$0xff] %vm26, 0.0
  %48 = vst.msk [vmem:[#allocation2 + $0xa0] sm:$0x3] %vm29, 0.0
  %49 = vst.msk [vmem:[#allocation2 + $0xa8] sm:$0xff] %vm26, 0.0
  %50 = vst.msk [vmem:[#allocation2 + $0xb0] sm:$0xff] %vm26, 0.0
  %51 = vst.msk [vmem:[#allocation2 + $0xb8] sm:$0x3] %vm29, 0.0
  %52 = vst.msk [vmem:[#allocation2 + $0xc0] sm:$0xff] %vm26, 0.0
  %53 = vst.msk [vmem:[#allocation2 + $0xc8] sm:$0xff] %vm26, 0.0
  %54 = vst.msk [vmem:[#allocation2 + $0xd0] sm:$0x3] %vm29, 0.0
  %55 = vst.msk [vmem:[#allocation2 + $0xd8] sm:$0xff] %vm26, 0.0
  %56 = vst.msk [vmem:[#allocation2 + $0xe0] sm:$0xff] %vm26, 0.0
  %57 = vst.msk [vmem:[#allocation2 + $0xe8] sm:$0x3] %vm29, 0.0
  %58 = vst.msk [vmem:[#allocation2 + $0xf0] sm:$0xff] %vm26, 0.0
  %59 = vst.msk [vmem:[#allocation2 + $0xf8] sm:$0xff] %vm26, 0.0
  %60 = vst.msk [vmem:[#allocation2 + $0x100] sm:$0x3] %vm29, 0.0
  %61 = vst.msk [vmem:[#allocation2 + $0x108] sm:$0xff] %vm26, 0.0
  %62 = vst.msk [vmem:[#allocation2 + $0x110] sm:$0xff] %vm26, 0.0
  %63 = vst.msk [vmem:[#allocation2 + $0x118] sm:$0x3] %vm29, 0.0
  %64 = vst.msk [vmem:[#allocation2 + $0x120] sm:$0xff] %vm26, 0.0
  %65 = vst.msk [vmem:[#allocation2 + $0x128] sm:$0xff] %vm26, 0.0
  %66 = vst.msk [vmem:[#allocation2 + $0x130] sm:$0x3] %vm29, 0.0
  %67 = vst.msk [vmem:[#allocation2 + $0x138] sm:$0xff] %vm26, 0.0
  %68 = vst.msk [vmem:[#allocation2 + $0x140] sm:$0xff] %vm26, 0.0
  %69 = vst.msk [vmem:[#allocation2 + $0x148] sm:$0x3] %vm29, 0.0
  %70 = vst.msk [vmem:[#allocation2 + $0x150] sm:$0xff] %vm26, 0.0
  %71 = vst.msk [vmem:[#allocation2 + $0x158] sm:$0xff] %vm26, 0.0
  %72 = vst.msk [vmem:[#allocation2 + $0x160] sm:$0x3] %vm29, 0.0
  %73 = vst.msk [vmem:[#allocation2 + $0x168] sm:$0xff] %vm26, 0.0
  %74 = vst.msk [vmem:[#allocation2 + $0x170] sm:$0xff] %vm26, 0.0
  %75 = vst.msk [vmem:[#allocation2 + $0x178] sm:$0x3] %vm29, 0.0
  %76 = vst.msk [vmem:[#allocation2 + $0x180] sm:$0xff] %vm26, 0.0
  %77 = vst.msk [vmem:[#allocation2 + $0x188] sm:$0xff] %vm26, 0.0
  %78 = vst.msk [vmem:[#allocation2 + $0x190] sm:$0x3] %vm29, 0.0
  %79 = vst.msk [vmem:[#allocation2 + $0x198] sm:$0xff] %vm26, 0.0
  %80 = vst.msk [vmem:[#allocation2 + $0x1a0] sm:$0xff] %vm26, 0.0
  %81 = vst.msk [vmem:[#allocation2 + $0x1a8] sm:$0x3] %vm29, 0.0
  %82 = vst.msk [vmem:[#allocation2 + $0x1b0] sm:$0xff] %vm26, 0.0
  %83 = vst.msk [vmem:[#allocation2 + $0x1b8] sm:$0xff] %vm26, 0.0
  %84 = vst.msk [vmem:[#allocation2 + $0x1c0] sm:$0x3] %vm29, 0.0
  %85 = vst.msk [vmem:[#allocation2 + $0x1c8] sm:$0xff] %vm26, 0.0
  %86 = vst.msk [vmem:[#allocation2 + $0x1d0] sm:$0xff] %vm26, 0.0
  %87 = vst.msk [vmem:[#allocation2 + $0x1d8] sm:$0x3] %vm29, 0.0
  %88 = vst.msk [vmem:[#allocation2 + $0x1e0] sm:$0xff] %vm26, 0.0
  %89 = vst.msk [vmem:[#allocation2 + $0x1e8] sm:$0xff] %vm26, 0.0
  %90 = vst.msk [vmem:[#allocation2 + $0x1f0] sm:$0x3] %vm29, 0.0
  %91 = vst.msk [vmem:[#allocation2 + $0x1f8] sm:$0xff] %vm26, 0.0
  %92 = vst.msk [vmem:[#allocation2 + $0x200] sm:$0xff] %vm26, 0.0
  %93 = vst.msk [vmem:[#allocation2 + $0x208] sm:$0x3] %vm29, 0.0
  %94 = vst.msk [vmem:[#allocation2 + $0x210] sm:$0xff] %vm26, 0.0
  %95 = vst.msk [vmem:[#allocation2 + $0x218] sm:$0xff] %vm26, 0.0
  %96 = vst.msk [vmem:[#allocation2 + $0x220] sm:$0x3] %vm29, 0.0
  %97 = vst.msk [vmem:[#allocation2 + $0x228] sm:$0xff] %vm26, 0.0
  %98 = vst.msk [vmem:[#allocation2 + $0x230] sm:$0xff] %vm26, 0.0
  %99 = vst.msk [vmem:[#allocation2 + $0x238] sm:$0x3] %vm29, 0.0
  %100 = vst.msk [vmem:[#allocation2 + $0x240] sm:$0xff] %vm26, 0.0
  %101 = vst.msk [vmem:[#allocation2 + $0x248] sm:$0xff] %vm26, 0.0
  %102 = vst.msk [vmem:[#allocation2 + $0x250] sm:$0x3] %vm29, 0.0
  %103 = vst.msk [vmem:[#allocation2 + $0x258] sm:$0xff] %vm26, 0.0
  %104 = vst.msk [vmem:[#allocation2 + $0x260] sm:$0xff] %vm26, 0.0
  %105 = vst.msk [vmem:[#allocation2 + $0x268] sm:$0x3] %vm29, 0.0
  %106 = vst.msk [vmem:[#allocation2 + $0x270] sm:$0xff] %vm26, 0.0
  %107 = vst.msk [vmem:[#allocation2 + $0x278] sm:$0xff] %vm26, 0.0
  %108 = vst.msk [vmem:[#allocation2 + $0x280] sm:$0x3] %vm29, 0.0
  %109 = vst.msk [vmem:[#allocation2 + $0x288] sm:$0xff] %vm26, 0.0
  %110 = vst.msk [vmem:[#allocation2 + $0x290] sm:$0xff] %vm26, 0.0
  %111 = vst.msk [vmem:[#allocation2 + $0x298] sm:$0x3] %vm29, 0.0
  %112 = vst.msk [vmem:[#allocation2 + $0x2a0] sm:$0xff] %vm26, 0.0
  %113 = vst.msk [vmem:[#allocation2 + $0x2a8] sm:$0xff] %vm26, 0.0
  %114 = vst.msk [vmem:[#allocation2 + $0x2b0] sm:$0x3] %vm29, 0.0
  %115 = vst.msk [vmem:[#allocation2 + $0x2b8] sm:$0xff] %vm26, 0.0
  %116 = vst.msk [vmem:[#allocation2 + $0x2c0] sm:$0xff] %vm26, 0.0
  %117 = vst.msk [vmem:[#allocation2 + $0x2c8] sm:$0x3] %vm29, 0.0
  %118 = vst.msk [vmem:[#allocation2 + $0x2d0] sm:$0xff] %vm26, 0.0
  %119 = vst.msk [vmem:[#allocation2 + $0x2d8] sm:$0xff] %vm26, 0.0
  %120 = vst.msk [vmem:[#allocation2 + $0x2e0] sm:$0x3] %vm29, 0.0
  %121 = vst.msk [vmem:[#allocation2 + $0x2e8] sm:$0xff] %vm26, 0.0
  %122 = vst.msk [vmem:[#allocation2 + $0x2f0] sm:$0xff] %vm26, 0.0
  %123 = vst.msk [vmem:[#allocation2 + $0x2f8] sm:$0x3] %vm29, 0.0
  %124 = vst.msk [vmem:[#allocation2 + $0x300] sm:$0xff] %vm26, 0.0
  %125 = vst.msk [vmem:[#allocation2 + $0x308] sm:$0xff] %vm26, 0.0
  %126 = vst.msk [vmem:[#allocation2 + $0x310] sm:$0x3] %vm29, 0.0
  %127 = vst.msk [vmem:[#allocation2 + $0x318] sm:$0xff] %vm26, 0.0
  %128 = vst.msk [vmem:[#allocation2 + $0x320] sm:$0xff] %vm26, 0.0
  %129 = vst.msk [vmem:[#allocation2 + $0x328] sm:$0x3] %vm29, 0.0
  %130 = vst.msk [vmem:[#allocation2 + $0x330] sm:$0xff] %vm26, 0.0
  %131 = vst.msk [vmem:[#allocation2 + $0x338] sm:$0xff] %vm26, 0.0
  %132 = vst.msk [vmem:[#allocation2 + $0x340] sm:$0x3] %vm29, 0.0
  %133 = vst.msk [vmem:[#allocation2 + $0x348] sm:$0xff] %vm26, 0.0
  %134 = vst.msk [vmem:[#allocation2 + $0x350] sm:$0xff] %vm26, 0.0
  %135 = vst.msk [vmem:[#allocation2 + $0x358] sm:$0x3] %vm29, 0.0
  %v136 = vld [vmem:[%s0] sm:$0xff]
  %v137 = vld [vmem:[%s0 + $0x8] sm:$0xff]
  %v138 = vld [vmem:[%s0 + $0x10] sm:$0xff]
  %v139 = vld [vmem:[%s0 + $0x18] sm:$0xff]
  %v140 = vld [vmem:[%s0 + $0x20] sm:$0xff]
  %v141 = vld [vmem:[%s0 + $0x28] sm:$0xff]
  %v142 = vld [vmem:[%s0 + $0x30] sm:$0xff]
  %v143 = vld [vmem:[%s0 + $0x38] sm:$0xff]
  %v144 = vld [vmem:[%s0 + $0x40] sm:$0xff]
  %v145 = vld [vmem:[%s0 + $0x48] sm:$0xff]
  %v146 = vld [vmem:[%s0 + $0x50] sm:$0xff]
  %v147 = vld [vmem:[%s0 + $0x58] sm:$0xff]
  %v148 = vld [vmem:[%s0 + $0x60] sm:$0xff]
  %v149 = vld [vmem:[%s0 + $0x68] sm:$0xff]
  %v150 = vld [vmem:[%s0 + $0x70] sm:$0xff]
  %v151 = vld [vmem:[%s0 + $0x78] sm:$0xff]
  %v152 = vld [vmem:[%s0 + $0x80] sm:$0xff]
  %v153 = vld [vmem:[%s0 + $0x88] sm:$0xff]
  %v154 = vld [vmem:[%s0 + $0x90] sm:$0xff]
  %v155 = vld [vmem:[%s0 + $0x98] sm:$0xff]
  %v156 = vld [vmem:[%s0 + $0xa0] sm:$0xff]
  %v157 = vld [vmem:[%s0 + $0xa8] sm:$0xff]
  %v158 = vld [vmem:[%s0 + $0xb0] sm:$0xff]
  %v159 = vld [vmem:[%s0 + $0xb8] sm:$0xff]
  %v160 = vld [vmem:[%s0 + $0xc0] sm:$0xff]
  %v161 = vld [vmem:[%s0 + $0xc8] sm:$0xff]
  %v162 = vld [vmem:[%s0 + $0xd0] sm:$0xff]
  %v163 = vld [vmem:[%s0 + $0xd8] sm:$0xff]
  %v164 = vld [vmem:[%s0 + $0xe0] sm:$0xff]
  %v165 = vld [vmem:[%s0 + $0xe8] sm:$0xff]
  %v166 = vld [vmem:[%s0 + $0xf0] sm:$0xff]
  %v167 = vld [vmem:[%s0 + $0xf8] sm:$0xff]
  %v168 = vld [vmem:[%s0 + $0x100] sm:$0xff]
  %v169 = vld [vmem:[%s0 + $0x108] sm:$0xff]
  %v170 = vld [vmem:[%s0 + $0x110] sm:$0xff]
  %v171 = vld [vmem:[%s0 + $0x118] sm:$0xff]
  %v172 = vld [vmem:[%s0 + $0x120] sm:$0xff]
  %v173 = vld [vmem:[%s0 + $0x128] sm:$0xff]
  %v174 = vld [vmem:[%s0 + $0x130] sm:$0xff]
  %v175 = vld [vmem:[%s0 + $0x138] sm:$0xff]
  %v176 = vld [vmem:[%s0 + $0x140] sm:$0xff]
  %v177 = vld [vmem:[%s0 + $0x148] sm:$0xff]
  %v178 = vld [vmem:[%s0 + $0x150] sm:$0xff]
  %v179 = vld [vmem:[%s0 + $0x158] sm:$0xff]
  %v180 = vld [vmem:[%s0 + $0x160] sm:$0xff]
  %v181 = vld [vmem:[%s0 + $0x168] sm:$0xff]
  %v182 = vld [vmem:[%s0 + $0x170] sm:$0xff]
  %v183 = vld [vmem:[%s0 + $0x178] sm:$0xff]
  %v184 = vld [vmem:[%s0 + $0x180] sm:$0xff]
  %v185 = vld [vmem:[%s0 + $0x188] sm:$0xff]
  %v186 = vld [vmem:[%s0 + $0x190] sm:$0xff]
  %v187 = vld [vmem:[%s0 + $0x198] sm:$0xff]
  %v188 = vld [vmem:[%s0 + $0x1a0] sm:$0xff]
  %v189 = vld [vmem:[%s0 + $0x1a8] sm:$0xff]
  %v190 = vld [vmem:[%s0 + $0x1b0] sm:$0xff]
  %v191 = vld [vmem:[%s0 + $0x1b8] sm:$0xff]
  %v192 = vld [vmem:[%s0 + $0x1c0] sm:$0xff]
  %v193 = vld [vmem:[%s0 + $0x1c8] sm:$0xff]
  %v194 = vld [vmem:[%s0 + $0x1d0] sm:$0xff]
  %v195 = vld [vmem:[%s0 + $0x1d8] sm:$0xff]
  %v196 = vld [vmem:[%s0 + $0x1e0] sm:$0xff]
  %v197 = vld [vmem:[%s0 + $0x1e8] sm:$0xff]
  %v198 = vld [vmem:[%s0 + $0x1f0] sm:$0xff]
  %v199 = vld [vmem:[%s0 + $0x1f8] sm:$0xff]
  %s200 = scalar_lea.vmem [#allocation2], 24
  %201 = vst.msk [vmem:[%s200 + $0x1] sm:$0xff] %vm26, %v136
  %202 = vst.msk [vmem:[%s200 + $0x9] sm:$0xff] %vm26, %v137
  %203 = vst.msk [vmem:[%s200 + $0x19] sm:$0xff] %vm26, %v138
  %204 = vst.msk [vmem:[%s200 + $0x21] sm:$0xff] %vm26, %v139
  %205 = vst.msk [vmem:[%s200 + $0x31] sm:$0xff] %vm26, %v140
  %206 = vst.msk [vmem:[%s200 + $0x39] sm:$0xff] %vm26, %v141
  %207 = vst.msk [vmem:[%s200 + $0x49] sm:$0xff] %vm26, %v142
  %208 = vst.msk [vmem:[%s200 + $0x51] sm:$0xff] %vm26, %v143
  %209 = vst.msk [vmem:[%s200 + $0x61] sm:$0xff] %vm26, %v144
  %210 = vst.msk [vmem:[%s200 + $0x69] sm:$0xff] %vm26, %v145
  %211 = vst.msk [vmem:[%s200 + $0x79] sm:$0xff] %vm26, %v146
  %212 = vst.msk [vmem:[%s200 + $0x81] sm:$0xff] %vm26, %v147
  %213 = vst.msk [vmem:[%s200 + $0x91] sm:$0xff] %vm26, %v148
  %214 = vst.msk [vmem:[%s200 + $0x99] sm:$0xff] %vm26, %v149
  %215 = vst.msk [vmem:[%s200 + $0xa9] sm:$0xff] %vm26, %v150
  %216 = vst.msk [vmem:[%s200 + $0xb1] sm:$0xff] %vm26, %v151
  %217 = vst.msk [vmem:[%s200 + $0xc1] sm:$0xff] %vm26, %v152
  %218 = vst.msk [vmem:[%s200 + $0xc9] sm:$0xff] %vm26, %v153
  %219 = vst.msk [vmem:[%s200 + $0xd9] sm:$0xff] %vm26, %v154
  %220 = vst.msk [vmem:[%s200 + $0xe1] sm:$0xff] %vm26, %v155
  %221 = vst.msk [vmem:[%s200 + $0xf1] sm:$0xff] %vm26, %v156
  %222 = vst.msk [vmem:[%s200 + $0xf9] sm:$0xff] %vm26, %v157
  %223 = vst.msk [vmem:[%s200 + $0x109] sm:$0xff] %vm26, %v158
  %224 = vst.msk [vmem:[%s200 + $0x111] sm:$0xff] %vm26, %v159
  %225 = vst.msk [vmem:[%s200 + $0x121] sm:$0xff] %vm26, %v160
  %226 = vst.msk [vmem:[%s200 + $0x129] sm:$0xff] %vm26, %v161
  %227 = vst.msk [vmem:[%s200 + $0x139] sm:$0xff] %vm26, %v162
  %228 = vst.msk [vmem:[%s200 + $0x141] sm:$0xff] %vm26, %v163
  %229 = vst.msk [vmem:[%s200 + $0x151] sm:$0xff] %vm26, %v164
  %230 = vst.msk [vmem:[%s200 + $0x159] sm:$0xff] %vm26, %v165
  %231 = vst.msk [vmem:[%s200 + $0x169] sm:$0xff] %vm26, %v166
  %232 = vst.msk [vmem:[%s200 + $0x171] sm:$0xff] %vm26, %v167
  %233 = vst.msk [vmem:[%s200 + $0x1b1] sm:$0xff] %vm26, %v168
  %234 = vst.msk [vmem:[%s200 + $0x1b9] sm:$0xff] %vm26, %v169
  %235 = vst.msk [vmem:[%s200 + $0x1c9] sm:$0xff] %vm26, %v170
  %236 = vst.msk [vmem:[%s200 + $0x1d1] sm:$0xff] %vm26, %v171
  %237 = vst.msk [vmem:[%s200 + $0x1e1] sm:$0xff] %vm26, %v172
  %238 = vst.msk [vmem:[%s200 + $0x1e9] sm:$0xff] %vm26, %v173
  %239 = vst.msk [vmem:[%s200 + $0x1f9] sm:$0xff] %vm26, %v174
  %240 = vst.msk [vmem:[%s200 + $0x201] sm:$0xff] %vm26, %v175
  %241 = vst.msk [vmem:[%s200 + $0x211] sm:$0xff] %vm26, %v176
  %242 = vst.msk [vmem:[%s200 + $0x219] sm:$0xff] %vm26, %v177
  %243 = vst.msk [vmem:[%s200 + $0x229] sm:$0xff] %vm26, %v178
  %244 = vst.msk [vmem:[%s200 + $0x231] sm:$0xff] %vm26, %v179
  %245 = vst.msk [vmem:[%s200 + $0x241] sm:$0xff] %vm26, %v180
  %246 = vst.msk [vmem:[%s200 + $0x249] sm:$0xff] %vm26, %v181
  %247 = vst.msk [vmem:[%s200 + $0x259] sm:$0xff] %vm26, %v182
  %248 = vst.msk [vmem:[%s200 + $0x261] sm:$0xff] %vm26, %v183
  %249 = vst.msk [vmem:[%s200 + $0x271] sm:$0xff] %vm26, %v184
  %250 = vst.msk [vmem:[%s200 + $0x279] sm:$0xff] %vm26, %v185
  %251 = vst.msk [vmem:[%s200 + $0x289] sm:$0xff] %vm26, %v186
  %252 = vst.msk [vmem:[%s200 + $0x291] sm:$0xff] %vm26, %v187
  %253 = vst.msk [vmem:[%s200 + $0x2a1] sm:$0xff] %vm26, %v188
  %254 = vst.msk [vmem:[%s200 + $0x2a9] sm:$0xff] %vm26, %v189
  %255 = vst.msk [vmem:[%s200 + $0x2b9] sm:$0xff] %vm26, %v190
  %256 = vst.msk [vmem:[%s200 + $0x2c1] sm:$0xff] %vm26, %v191
  %257 = vst.msk [vmem:[%s200 + $0x2d1] sm:$0xff] %vm26, %v192
  %258 = vst.msk [vmem:[%s200 + $0x2d9] sm:$0xff] %vm26, %v193
  %259 = vst.msk [vmem:[%s200 + $0x2e9] sm:$0xff] %vm26, %v194
  %260 = vst.msk [vmem:[%s200 + $0x2f1] sm:$0xff] %vm26, %v195
  %261 = vst.msk [vmem:[%s200 + $0x301] sm:$0xff] %vm26, %v196
  %262 = vst.msk [vmem:[%s200 + $0x309] sm:$0xff] %vm26, %v197
  %263 = vst.msk [vmem:[%s200 + $0x319] sm:$0xff] %vm26, %v198
  %264 = vst.msk [vmem:[%s200 + $0x321] sm:$0xff] %vm26, %v199
  %v265 = vld [vmem:[#allocation2] sm:$0xff]
  %v266 = vld [vmem:[#allocation2 + $0x8] sm:$0xff]
  %v267 = vld [vmem:[#allocation2 + $0x10] sm:$0x3]
  %v268 = vld [vmem:[#allocation2 + $0x18] sm:$0xff]
  %v269 = vld [vmem:[#allocation2 + $0x20] sm:$0xff]
  %v270 = vld [vmem:[#allocation2 + $0x28] sm:$0x3]
  %v271 = vld [vmem:[#allocation2 + $0x30] sm:$0xff]
  %v272 = vld [vmem:[#allocation2 + $0x38] sm:$0xff]
  %v273 = vld [vmem:[#allocation2 + $0x40] sm:$0x3]
  %v274 = vld [vmem:[#allocation2 + $0x48] sm:$0xff]
  %v275 = vld [vmem:[#allocation2 + $0x50] sm:$0xff]
  %v276 = vld [vmem:[#allocation2 + $0x58] sm:$0x3]
  %v277 = vld [vmem:[#allocation2 + $0x60] sm:$0xff]
  %v278 = vld [vmem:[#allocation2 + $0x68] sm:$0xff]
  %v279 = vld [vmem:[#allocation2 + $0x70] sm:$0x3]
  %v280 = vld [vmem:[#allocation2 + $0x78] sm:$0xff]
  %v281 = vld [vmem:[#allocation2 + $0x80] sm:$0xff]
  %v282 = vld [vmem:[#allocation2 + $0x88] sm:$0x3]
  %v283 = vld [vmem:[#allocation2 + $0x90] sm:$0xff]
  %v284 = vld [vmem:[#allocation2 + $0x98] sm:$0xff]
  %v285 = vld [vmem:[#allocation2 + $0xa0] sm:$0x3]
  %v286 = vld [vmem:[#allocation2 + $0xa8] sm:$0xff]
  %v287 = vld [vmem:[#allocation2 + $0xb0] sm:$0xff]
  %v288 = vld [vmem:[#allocation2 + $0xb8] sm:$0x3]
  %v289 = vld [vmem:[#allocation2 + $0xc0] sm:$0xff]
  %v290 = vld [vmem:[#allocation2 + $0xc8] sm:$0xff]
  %v291 = vld [vmem:[#allocation2 + $0xd0] sm:$0x3]
  %v292 = vld [vmem:[#allocation2 + $0xd8] sm:$0xff]
  %v293 = vld [vmem:[#allocation2 + $0xe0] sm:$0xff]
  %v294 = vld [vmem:[#allocation2 + $0xe8] sm:$0x3]
  %v295 = vld [vmem:[#allocation2 + $0xf0] sm:$0xff]
  %v296 = vld [vmem:[#allocation2 + $0xf8] sm:$0xff]
  %v297 = vld [vmem:[#allocation2 + $0x100] sm:$0x3]
  %v298 = vld [vmem:[#allocation2 + $0x108] sm:$0xff]
  %v299 = vld [vmem:[#allocation2 + $0x110] sm:$0xff]
  %v300 = vld [vmem:[#allocation2 + $0x118] sm:$0x3]
  %v301 = vld [vmem:[#allocation2 + $0x120] sm:$0xff]
  %v302 = vld [vmem:[#allocation2 + $0x128] sm:$0xff]
  %v303 = vld [vmem:[#allocation2 + $0x130] sm:$0x3]
  %v304 = vld [vmem:[#allocation2 + $0x138] sm:$0xff]
  %v305 = vld [vmem:[#allocation2 + $0x140] sm:$0xff]
  %v306 = vld [vmem:[#allocation2 + $0x148] sm:$0x3]
  %v307 = vld [vmem:[#allocation2 + $0x150] sm:$0xff]
  %v308 = vld [vmem:[#allocation2 + $0x158] sm:$0xff]
  %v309 = vld [vmem:[#allocation2 + $0x160] sm:$0x3]
  %v310 = vld [vmem:[#allocation2 + $0x168] sm:$0xff]
  %v311 = vld [vmem:[#allocation2 + $0x170] sm:$0xff]
  %v312 = vld [vmem:[#allocation2 + $0x178] sm:$0x3]
  %v313 = vld [vmem:[#allocation2 + $0x180] sm:$0xff]
  %v314 = vld [vmem:[#allocation2 + $0x188] sm:$0xff]
  %v315 = vld [vmem:[#allocation2 + $0x190] sm:$0x3]
  %v316 = vld [vmem:[#allocation2 + $0x198] sm:$0xff]
  %v317 = vld [vmem:[#allocation2 + $0x1a0] sm:$0xff]
  %v318 = vld [vmem:[#allocation2 + $0x1a8] sm:$0x3]
  %v319 = vld [vmem:[#allocation2 + $0x1b0] sm:$0xff]
  %v320 = vld [vmem:[#allocation2 + $0x1b8] sm:$0xff]
  %v321 = vld [vmem:[#allocation2 + $0x1c0] sm:$0x3]
  %v322 = vld [vmem:[#allocation2 + $0x1c8] sm:$0xff]
  %v323 = vld [vmem:[#allocation2 + $0x1d0] sm:$0xff]
  %v324 = vld [vmem:[#allocation2 + $0x1d8] sm:$0x3]
  %v325 = vld [vmem:[#allocation2 + $0x1e0] sm:$0xff]
  %v326 = vld [vmem:[#allocation2 + $0x1e8] sm:$0xff]
  %v327 = vld [vmem:[#allocation2 + $0x1f0] sm:$0x3]
  %v328 = vld [vmem:[#allocation2 + $0x1f8] sm:$0xff]
  %v329 = vld [vmem:[#allocation2 + $0x200] sm:$0xff]
  %v330 = vld [vmem:[#allocation2 + $0x208] sm:$0x3]
  %v331 = vld [vmem:[#allocation2 + $0x210] sm:$0xff]
  %v332 = vld [vmem:[#allocation2 + $0x218] sm:$0xff]
  %v333 = vld [vmem:[#allocation2 + $0x220] sm:$0x3]
  %v334 = vld [vmem:[#allocation2 + $0x228] sm:$0xff]
  %v335 = vld [vmem:[#allocation2 + $0x230] sm:$0xff]
  %v336 = vld [vmem:[#allocation2 + $0x238] sm:$0x3]
  %v337 = vld [vmem:[#allocation2 + $0x240] sm:$0xff]
  %v338 = vld [vmem:[#allocation2 + $0x248] sm:$0xff]
  %v339 = vld [vmem:[#allocation2 + $0x250] sm:$0x3]
  %v340 = vld [vmem:[#allocation2 + $0x258] sm:$0xff]
  %v341 = vld [vmem:[#allocation2 + $0x260] sm:$0xff]
  %v342 = vld [vmem:[#allocation2 + $0x268] sm:$0x3]
  %v343 = vld [vmem:[#allocation2 + $0x270] sm:$0xff]
  %v344 = vld [vmem:[#allocation2 + $0x278] sm:$0xff]
  %v345 = vld [vmem:[#allocation2 + $0x280] sm:$0x3]
  %v346 = vld [vmem:[#allocation2 + $0x288] sm:$0xff]
  %v347 = vld [vmem:[#allocation2 + $0x290] sm:$0xff]
  %v348 = vld [vmem:[#allocation2 + $0x298] sm:$0x3]
  %v349 = vld [vmem:[#allocation2 + $0x2a0] sm:$0xff]
  %v350 = vld [vmem:[#allocation2 + $0x2a8] sm:$0xff]
  %v351 = vld [vmem:[#allocation2 + $0x2b0] sm:$0x3]
  %v352 = vld [vmem:[#allocation2 + $0x2b8] sm:$0xff]
  %v353 = vld [vmem:[#allocation2 + $0x2c0] sm:$0xff]
  %v354 = vld [vmem:[#allocation2 + $0x2c8] sm:$0x3]
  %v355 = vld [vmem:[#allocation2 + $0x2d0] sm:$0xff]
  %v356 = vld [vmem:[#allocation2 + $0x2d8] sm:$0xff]
  %v357 = vld [vmem:[#allocation2 + $0x2e0] sm:$0x3]
  %v358 = vld [vmem:[#allocation2 + $0x2e8] sm:$0xff]
  %v359 = vld [vmem:[#allocation2 + $0x2f0] sm:$0xff]
  %v360 = vld [vmem:[#allocation2 + $0x2f8] sm:$0x3]
  %v361 = vld [vmem:[#allocation2 + $0x300] sm:$0xff]
  %v362 = vld [vmem:[#allocation2 + $0x308] sm:$0xff]
  %v363 = vld [vmem:[#allocation2 + $0x310] sm:$0x3]
  %v364 = vld [vmem:[#allocation2 + $0x318] sm:$0xff]
  %v365 = vld [vmem:[#allocation2 + $0x320] sm:$0xff]
  %v366 = vld [vmem:[#allocation2 + $0x328] sm:$0x3]
  %v367 = vld [vmem:[#allocation2 + $0x330] sm:$0xff]
  %v368 = vld [vmem:[#allocation2 + $0x338] sm:$0xff]
  %v369 = vld [vmem:[#allocation2 + $0x340] sm:$0x3]
  %v370 = vld [vmem:[#allocation2 + $0x348] sm:$0xff]
  %v371 = vld [vmem:[#allocation2 + $0x350] sm:$0xff]
  %v372 = vld [vmem:[#allocation2 + $0x358] sm:$0x3]
  %vm469 = vcmask 1046528
  %v470 = vrot.slane %v265, 1
  %v471 = vrot.slane %v266, 1
  %v472 = vsel %vm469, %v470, %v471
  %v473 = vrot.slane %v267, 1
  %v474 = vsel %vm469, %v471, %v473
  %v475 = vrot.slane %v268, 1
  %v476 = vrot.slane %v269, 1
  %v477 = vsel %vm469, %v475, %v476
  %v478 = vrot.slane %v270, 1
  %v479 = vsel %vm469, %v476, %v478
  %v480 = vrot.slane %v271, 1
  %v481 = vrot.slane %v272, 1
  %v482 = vsel %vm469, %v480, %v481
  %v483 = vrot.slane %v273, 1
  %v484 = vsel %vm469, %v481, %v483
  %v485 = vrot.slane %v274, 1
  %v486 = vrot.slane %v275, 1
  %v487 = vsel %vm469, %v485, %v486
  %v488 = vrot.slane %v276, 1
  %v489 = vsel %vm469, %v486, %v488
  %v490 = vrot.slane %v277, 1
  %v491 = vrot.slane %v278, 1
  %v492 = vsel %vm469, %v490, %v491
  %v493 = vrot.slane %v279, 1
  %v494 = vsel %vm469, %v491, %v493
  %v495 = vrot.slane %v280, 1
  %v496 = vrot.slane %v281, 1
  %v497 = vsel %vm469, %v495, %v496
  %v498 = vrot.slane %v282, 1
  %v499 = vsel %vm469, %v496, %v498
  %v500 = vrot.slane %v283, 1
  %v501 = vrot.slane %v284, 1
  %v502 = vsel %vm469, %v500, %v501
  %v503 = vrot.slane %v285, 1
  %v504 = vsel %vm469, %v501, %v503
  %v505 = vrot.slane %v286, 1
  %v506 = vrot.slane %v287, 1
  %v507 = vsel %vm469, %v505, %v506
  %v508 = vrot.slane %v288, 1
  %v509 = vsel %vm469, %v506, %v508
  %v510 = vrot.slane %v289, 1
  %v511 = vrot.slane %v290, 1
  %v512 = vsel %vm469, %v510, %v511
  %v513 = vrot.slane %v291, 1
  %v514 = vsel %vm469, %v511, %v513
  %v515 = vrot.slane %v292, 1
  %v516 = vrot.slane %v293, 1
  %v517 = vsel %vm469, %v515, %v516
  %v518 = vrot.slane %v294, 1
  %v519 = vsel %vm469, %v516, %v518
  %v520 = vrot.slane %v295, 1
  %v521 = vrot.slane %v296, 1
  %v522 = vsel %vm469, %v520, %v521
  %v523 = vrot.slane %v297, 1
  %v524 = vsel %vm469, %v521, %v523
  %v525 = vrot.slane %v298, 1
  %v526 = vrot.slane %v299, 1
  %v527 = vsel %vm469, %v525, %v526
  %v528 = vrot.slane %v300, 1
  %v529 = vsel %vm469, %v526, %v528
  %v530 = vrot.slane %v301, 1
  %v531 = vrot.slane %v302, 1
  %v532 = vsel %vm469, %v530, %v531
  %v533 = vrot.slane %v303, 1
  %v534 = vsel %vm469, %v531, %v533
  %v535 = vrot.slane %v304, 1
  %v536 = vrot.slane %v305, 1
  %v537 = vsel %vm469, %v535, %v536
  %v538 = vrot.slane %v306, 1
  %v539 = vsel %vm469, %v536, %v538
  %v540 = vrot.slane %v307, 1
  %v541 = vrot.slane %v308, 1
  %v542 = vsel %vm469, %v540, %v541
  %v543 = vrot.slane %v309, 1
  %v544 = vsel %vm469, %v541, %v543
  %v545 = vrot.slane %v310, 1
  %v546 = vrot.slane %v311, 1
  %v547 = vsel %vm469, %v545, %v546
  %v548 = vrot.slane %v312, 1
  %v549 = vsel %vm469, %v546, %v548
  %v550 = vrot.slane %v319, 1
  %v551 = vrot.slane %v320, 1
  %v552 = vsel %vm469, %v550, %v551
  %v553 = vrot.slane %v321, 1
  %v554 = vsel %vm469, %v551, %v553
  %v555 = vrot.slane %v322, 1
  %v556 = vrot.slane %v323, 1
  %v557 = vsel %vm469, %v555, %v556
  %v558 = vrot.slane %v324, 1
  %v559 = vsel %vm469, %v556, %v558
  %v560 = vrot.slane %v325, 1
  %v561 = vrot.slane %v326, 1
  %v562 = vsel %vm469, %v560, %v561
  %v563 = vrot.slane %v327, 1
  %v564 = vsel %vm469, %v561, %v563
  %v565 = vrot.slane %v328, 1
  %v566 = vrot.slane %v329, 1
  %v567 = vsel %vm469, %v565, %v566
  %v568 = vrot.slane %v330, 1
  %v569 = vsel %vm469, %v566, %v568
  %v570 = vrot.slane %v331, 1
  %v571 = vrot.slane %v332, 1
  %v572 = vsel %vm469, %v570, %v571
  %v573 = vrot.slane %v333, 1
  %v574 = vsel %vm469, %v571, %v573
  %v575 = vrot.slane %v334, 1
  %v576 = vrot.slane %v335, 1
  %v577 = vsel %vm469, %v575, %v576
  %v578 = vrot.slane %v336, 1
  %v579 = vsel %vm469, %v576, %v578
  %v580 = vrot.slane %v337, 1
  %v581 = vrot.slane %v338, 1
  %v582 = vsel %vm469, %v580, %v581
  %v583 = vrot.slane %v339, 1
  %v584 = vsel %vm469, %v581, %v583
  %v585 = vrot.slane %v340, 1
  %v586 = vrot.slane %v341, 1
  %v587 = vsel %vm469, %v585, %v586
  %v588 = vrot.slane %v342, 1
  %v589 = vsel %vm469, %v586, %v588
  %v590 = vrot.slane %v343, 1
  %v591 = vrot.slane %v344, 1
  %v592 = vsel %vm469, %v590, %v591
  %v593 = vrot.slane %v345, 1
  %v594 = vsel %vm469, %v591, %v593
  %v595 = vrot.slane %v346, 1
  %v596 = vrot.slane %v347, 1
  %v597 = vsel %vm469, %v595, %v596
  %v598 = vrot.slane %v348, 1
  %v599 = vsel %vm469, %v596, %v598
  %v600 = vrot.slane %v349, 1
  %v601 = vrot.slane %v350, 1
  %v602 = vsel %vm469, %v600, %v601
  %v603 = vrot.slane %v351, 1
  %v604 = vsel %vm469, %v601, %v603
  %v605 = vrot.slane %v352, 1
  %v606 = vrot.slane %v353, 1
  %v607 = vsel %vm469, %v605, %v606
  %v608 = vrot.slane %v354, 1
  %v609 = vsel %vm469, %v606, %v608
  %v610 = vrot.slane %v355, 1
  %v611 = vrot.slane %v356, 1
  %v612 = vsel %vm469, %v610, %v611
  %v613 = vrot.slane %v357, 1
  %v614 = vsel %vm469, %v611, %v613
  %v615 = vrot.slane %v358, 1
  %v616 = vrot.slane %v359, 1
  %v617 = vsel %vm469, %v615, %v616
  %v618 = vrot.slane %v360, 1
  %v619 = vsel %vm469, %v616, %v618
  %v620 = vrot.slane %v361, 1
  %v621 = vrot.slane %v362, 1
  %v622 = vsel %vm469, %v620, %v621
  %v623 = vrot.slane %v363, 1
  %v624 = vsel %vm469, %v621, %v623
  %v625 = vrot.slane %v364, 1
  %v626 = vrot.slane %v365, 1
  %v627 = vsel %vm469, %v625, %v626
  %v628 = vrot.slane %v366, 1
  %v629 = vsel %vm469, %v626, %v628
  %vm630 = vcmask 1045504
  %v631 = vrot.slane %v265, 2
  %v632 = vrot.slane %v266, 2
  %v633 = vsel %vm630, %v631, %v632
  %v634 = vrot.slane %v267, 2
  %v635 = vsel %vm630, %v632, %v634
  %v636 = vrot.slane %v268, 2
  %v637 = vrot.slane %v269, 2
  %v638 = vsel %vm630, %v636, %v637
  %v639 = vrot.slane %v270, 2
  %v640 = vsel %vm630, %v637, %v639
  %v641 = vrot.slane %v271, 2
  %v642 = vrot.slane %v272, 2
  %v643 = vsel %vm630, %v641, %v642
  %v644 = vrot.slane %v273, 2
  %v645 = vsel %vm630, %v642, %v644
  %v646 = vrot.slane %v274, 2
  %v647 = vrot.slane %v275, 2
  %v648 = vsel %vm630, %v646, %v647
  %v649 = vrot.slane %v276, 2
  %v650 = vsel %vm630, %v647, %v649
  %v651 = vrot.slane %v277, 2
  %v652 = vrot.slane %v278, 2
  %v653 = vsel %vm630, %v651, %v652
  %v654 = vrot.slane %v279, 2
  %v655 = vsel %vm630, %v652, %v654
  %v656 = vrot.slane %v280, 2
  %v657 = vrot.slane %v281, 2
  %v658 = vsel %vm630, %v656, %v657
  %v659 = vrot.slane %v282, 2
  %v660 = vsel %vm630, %v657, %v659
  %v661 = vrot.slane %v283, 2
  %v662 = vrot.slane %v284, 2
  %v663 = vsel %vm630, %v661, %v662
  %v664 = vrot.slane %v285, 2
  %v665 = vsel %vm630, %v662, %v664
  %v666 = vrot.slane %v286, 2
  %v667 = vrot.slane %v287, 2
  %v668 = vsel %vm630, %v666, %v667
  %v669 = vrot.slane %v288, 2
  %v670 = vsel %vm630, %v667, %v669
  %v671 = vrot.slane %v289, 2
  %v672 = vrot.slane %v290, 2
  %v673 = vsel %vm630, %v671, %v672
  %v674 = vrot.slane %v291, 2
  %v675 = vsel %vm630, %v672, %v674
  %v676 = vrot.slane %v292, 2
  %v677 = vrot.slane %v293, 2
  %v678 = vsel %vm630, %v676, %v677
  %v679 = vrot.slane %v294, 2
  %v680 = vsel %vm630, %v677, %v679
  %v681 = vrot.slane %v295, 2
  %v682 = vrot.slane %v296, 2
  %v683 = vsel %vm630, %v681, %v682
  %v684 = vrot.slane %v297, 2
  %v685 = vsel %vm630, %v682, %v684
  %v686 = vrot.slane %v298, 2
  %v687 = vrot.slane %v299, 2
  %v688 = vsel %vm630, %v686, %v687
  %v689 = vrot.slane %v300, 2
  %v690 = vsel %vm630, %v687, %v689
  %v691 = vrot.slane %v301, 2
  %v692 = vrot.slane %v302, 2
  %v693 = vsel %vm630, %v691, %v692
  %v694 = vrot.slane %v303, 2
  %v695 = vsel %vm630, %v692, %v694
  %v696 = vrot.slane %v304, 2
  %v697 = vrot.slane %v305, 2
  %v698 = vsel %vm630, %v696, %v697
  %v699 = vrot.slane %v306, 2
  %v700 = vsel %vm630, %v697, %v699
  %v701 = vrot.slane %v307, 2
  %v702 = vrot.slane %v308, 2
  %v703 = vsel %vm630, %v701, %v702
  %v704 = vrot.slane %v309, 2
  %v705 = vsel %vm630, %v702, %v704
  %v706 = vrot.slane %v310, 2
  %v707 = vrot.slane %v311, 2
  %v708 = vsel %vm630, %v706, %v707
  %v709 = vrot.slane %v312, 2
  %v710 = vsel %vm630, %v707, %v709
  %v711 = vrot.slane %v319, 2
  %v712 = vrot.slane %v320, 2
  %v713 = vsel %vm630, %v711, %v712
  %v714 = vrot.slane %v321, 2
  %v715 = vsel %vm630, %v712, %v714
  %v716 = vrot.slane %v322, 2
  %v717 = vrot.slane %v323, 2
  %v718 = vsel %vm630, %v716, %v717
  %v719 = vrot.slane %v324, 2
  %v720 = vsel %vm630, %v717, %v719
  %v721 = vrot.slane %v325, 2
  %v722 = vrot.slane %v326, 2
  %v723 = vsel %vm630, %v721, %v722
  %v724 = vrot.slane %v327, 2
  %v725 = vsel %vm630, %v722, %v724
  %v726 = vrot.slane %v328, 2
  %v727 = vrot.slane %v329, 2
  %v728 = vsel %vm630, %v726, %v727
  %v729 = vrot.slane %v330, 2
  %v730 = vsel %vm630, %v727, %v729
  %v731 = vrot.slane %v331, 2
  %v732 = vrot.slane %v332, 2
  %v733 = vsel %vm630, %v731, %v732
  %v734 = vrot.slane %v333, 2
  %v735 = vsel %vm630, %v732, %v734
  %v736 = vrot.slane %v334, 2
  %v737 = vrot.slane %v335, 2
  %v738 = vsel %vm630, %v736, %v737
  %v739 = vrot.slane %v336, 2
  %v740 = vsel %vm630, %v737, %v739
  %v741 = vrot.slane %v337, 2
  %v742 = vrot.slane %v338, 2
  %v743 = vsel %vm630, %v741, %v742
  %v744 = vrot.slane %v339, 2
  %v745 = vsel %vm630, %v742, %v744
  %v746 = vrot.slane %v340, 2
  %v747 = vrot.slane %v341, 2
  %v748 = vsel %vm630, %v746, %v747
  %v749 = vrot.slane %v342, 2
  %v750 = vsel %vm630, %v747, %v749
  %v751 = vrot.slane %v343, 2
  %v752 = vrot.slane %v344, 2
  %v753 = vsel %vm630, %v751, %v752
  %v754 = vrot.slane %v345, 2
  %v755 = vsel %vm630, %v752, %v754
  %v756 = vrot.slane %v346, 2
  %v757 = vrot.slane %v347, 2
  %v758 = vsel %vm630, %v756, %v757
  %v759 = vrot.slane %v348, 2
  %v760 = vsel %vm630, %v757, %v759
  %v761 = vrot.slane %v349, 2
  %v762 = vrot.slane %v350, 2
  %v763 = vsel %vm630, %v761, %v762
  %v764 = vrot.slane %v351, 2
  %v765 = vsel %vm630, %v762, %v764
  %v766 = vrot.slane %v352, 2
  %v767 = vrot.slane %v353, 2
  %v768 = vsel %vm630, %v766, %v767
  %v769 = vrot.slane %v354, 2
  %v770 = vsel %vm630, %v767, %v769
  %v771 = vrot.slane %v355, 2
  %v772 = vrot.slane %v356, 2
  %v773 = vsel %vm630, %v771, %v772
  %v774 = vrot.slane %v357, 2
  %v775 = vsel %vm630, %v772, %v774
  %v776 = vrot.slane %v358, 2
  %v777 = vrot.slane %v359, 2
  %v778 = vsel %vm630, %v776, %v777
  %v779 = vrot.slane %v360, 2
  %v780 = vsel %vm630, %v777, %v779
  %v781 = vrot.slane %v361, 2
  %v782 = vrot.slane %v362, 2
  %v783 = vsel %vm630, %v781, %v782
  %v784 = vrot.slane %v363, 2
  %v785 = vsel %vm630, %v782, %v784
  %v786 = vrot.slane %v364, 2
  %v787 = vrot.slane %v365, 2
  %v788 = vsel %vm630, %v786, %v787
  %v789 = vrot.slane %v366, 2
  %v790 = vsel %vm630, %v787, %v789
  %v797 = vrot.slane %v313, 1
  %v798 = vrot.slane %v314, 1
  %v799 = vsel %vm469, %v797, %v798
  %v800 = vrot.slane %v315, 1
  %v801 = vsel %vm469, %v798, %v800
  %v802 = vrot.slane %v367, 1
  %v803 = vrot.slane %v368, 1
  %v804 = vsel %vm469, %v802, %v803
  %v805 = vrot.slane %v369, 1
  %v806 = vsel %vm469, %v803, %v805
  %v807 = vrot.slane %v313, 2
  %v808 = vrot.slane %v314, 2
  %v809 = vsel %vm630, %v807, %v808
  %v810 = vrot.slane %v315, 2
  %v811 = vsel %vm630, %v808, %v810
  %v812 = vrot.slane %v367, 2
  %v813 = vrot.slane %v368, 2
  %v814 = vsel %vm630, %v812, %v813
  %v815 = vrot.slane %v369, 2
  %v816 = vsel %vm630, %v813, %v815
  %v823 = vrot.slane %v316, 1
  %v824 = vrot.slane %v317, 1
  %v825 = vsel %vm469, %v823, %v824
  %v826 = vrot.slane %v318, 1
  %v827 = vsel %vm469, %v824, %v826
  %v828 = vrot.slane %v370, 1
  %v829 = vrot.slane %v371, 1
  %v830 = vsel %vm469, %v828, %v829
  %v831 = vrot.slane %v372, 1
  %v832 = vsel %vm469, %v829, %v831
  %v833 = vrot.slane %v316, 2
  %v834 = vrot.slane %v317, 2
  %v835 = vsel %vm630, %v833, %v834
  %v836 = vrot.slane %v318, 2
  %v837 = vsel %vm630, %v834, %v836
  %v838 = vrot.slane %v370, 2
  %v839 = vrot.slane %v371, 2
  %v840 = vsel %vm630, %v838, %v839
  %v841 = vrot.slane %v372, 2
  %v842 = vsel %vm630, %v839, %v841
  %843 = vrot.lane.b32.xlu0 %v472, 4
  %v844 = vpop.permute.xlu0 %843
  %845 = vrot.lane.b32.xlu0 %v474, 4
  %v846 = vpop.permute.xlu0 %845
  %847 = vrot.lane.b32.xlu0 %v477, 4
  %v848 = vpop.permute.xlu0 %847
  %849 = vrot.lane.b32.xlu0 %v479, 4
  %v850 = vpop.permute.xlu0 %849
  %851 = vrot.lane.b32.xlu0 %v482, 4
  %v852 = vpop.permute.xlu0 %851
  %853 = vrot.lane.b32.xlu0 %v484, 4
  %v854 = vpop.permute.xlu0 %853
  %855 = vrot.lane.b32.xlu0 %v487, 4
  %v856 = vpop.permute.xlu0 %855
  %857 = vrot.lane.b32.xlu0 %v489, 4
  %v858 = vpop.permute.xlu0 %857
  %859 = vrot.lane.b32.xlu0 %v492, 4
  %v860 = vpop.permute.xlu0 %859
  %861 = vrot.lane.b32.xlu0 %v494, 4
  %v862 = vpop.permute.xlu0 %861
  %863 = vrot.lane.b32.xlu0 %v497, 4
  %v864 = vpop.permute.xlu0 %863
  %865 = vrot.lane.b32.xlu0 %v499, 4
  %v866 = vpop.permute.xlu0 %865
  %867 = vrot.lane.b32.xlu0 %v502, 4
  %v868 = vpop.permute.xlu0 %867
  %869 = vrot.lane.b32.xlu0 %v504, 4
  %v870 = vpop.permute.xlu0 %869
  %871 = vrot.lane.b32.xlu0 %v507, 4
  %v872 = vpop.permute.xlu0 %871
  %873 = vrot.lane.b32.xlu0 %v509, 4
  %v874 = vpop.permute.xlu0 %873
  %875 = vrot.lane.b32.xlu0 %v512, 4
  %v876 = vpop.permute.xlu0 %875
  %877 = vrot.lane.b32.xlu0 %v514, 4
  %v878 = vpop.permute.xlu0 %877
  %879 = vrot.lane.b32.xlu0 %v517, 4
  %v880 = vpop.permute.xlu0 %879
  %881 = vrot.lane.b32.xlu0 %v519, 4
  %v882 = vpop.permute.xlu0 %881
  %883 = vrot.lane.b32.xlu0 %v522, 4
  %v884 = vpop.permute.xlu0 %883
  %885 = vrot.lane.b32.xlu0 %v524, 4
  %v886 = vpop.permute.xlu0 %885
  %887 = vrot.lane.b32.xlu0 %v527, 4
  %v888 = vpop.permute.xlu0 %887
  %889 = vrot.lane.b32.xlu0 %v529, 4
  %v890 = vpop.permute.xlu0 %889
  %891 = vrot.lane.b32.xlu0 %v532, 4
  %v892 = vpop.permute.xlu0 %891
  %893 = vrot.lane.b32.xlu0 %v534, 4
  %v894 = vpop.permute.xlu0 %893
  %895 = vrot.lane.b32.xlu0 %v537, 4
  %v896 = vpop.permute.xlu0 %895
  %897 = vrot.lane.b32.xlu0 %v539, 4
  %v898 = vpop.permute.xlu0 %897
  %899 = vrot.lane.b32.xlu0 %v542, 4
  %v900 = vpop.permute.xlu0 %899
  %901 = vrot.lane.b32.xlu0 %v544, 4
  %v902 = vpop.permute.xlu0 %901
  %903 = vrot.lane.b32.xlu0 %v547, 4
  %v904 = vpop.permute.xlu0 %903
  %905 = vrot.lane.b32.xlu0 %v549, 4
  %v906 = vpop.permute.xlu0 %905
  %907 = vrot.lane.b32.xlu0 %v552, 4
  %v908 = vpop.permute.xlu0 %907
  %909 = vrot.lane.b32.xlu0 %v554, 4
  %v910 = vpop.permute.xlu0 %909
  %911 = vrot.lane.b32.xlu0 %v557, 4
  %v912 = vpop.permute.xlu0 %911
  %913 = vrot.lane.b32.xlu0 %v559, 4
  %v914 = vpop.permute.xlu0 %913
  %915 = vrot.lane.b32.xlu0 %v562, 4
  %v916 = vpop.permute.xlu0 %915
  %917 = vrot.lane.b32.xlu0 %v564, 4
  %v918 = vpop.permute.xlu0 %917
  %919 = vrot.lane.b32.xlu0 %v567, 4
  %v920 = vpop.permute.xlu0 %919
  %921 = vrot.lane.b32.xlu0 %v569, 4
  %v922 = vpop.permute.xlu0 %921
  %923 = vrot.lane.b32.xlu0 %v572, 4
  %v924 = vpop.permute.xlu0 %923
  %925 = vrot.lane.b32.xlu0 %v574, 4
  %v926 = vpop.permute.xlu0 %925
  %927 = vrot.lane.b32.xlu0 %v577, 4
  %v928 = vpop.permute.xlu0 %927
  %929 = vrot.lane.b32.xlu0 %v579, 4
  %v930 = vpop.permute.xlu0 %929
  %931 = vrot.lane.b32.xlu0 %v582, 4
  %v932 = vpop.permute.xlu0 %931
  %933 = vrot.lane.b32.xlu0 %v584, 4
  %v934 = vpop.permute.xlu0 %933
  %935 = vrot.lane.b32.xlu0 %v587, 4
  %v936 = vpop.permute.xlu0 %935
  %937 = vrot.lane.b32.xlu0 %v589, 4
  %v938 = vpop.permute.xlu0 %937
  %939 = vrot.lane.b32.xlu0 %v592, 4
  %v940 = vpop.permute.xlu0 %939
  %941 = vrot.lane.b32.xlu0 %v594, 4
  %v942 = vpop.permute.xlu0 %941
  %943 = vrot.lane.b32.xlu0 %v597, 4
  %v944 = vpop.permute.xlu0 %943
  %945 = vrot.lane.b32.xlu0 %v599, 4
  %v946 = vpop.permute.xlu0 %945
  %947 = vrot.lane.b32.xlu0 %v602, 4
  %v948 = vpop.permute.xlu0 %947
  %949 = vrot.lane.b32.xlu0 %v604, 4
  %v950 = vpop.permute.xlu0 %949
  %951 = vrot.lane.b32.xlu0 %v607, 4
  %v952 = vpop.permute.xlu0 %951
  %953 = vrot.lane.b32.xlu0 %v609, 4
  %v954 = vpop.permute.xlu0 %953
  %955 = vrot.lane.b32.xlu0 %v612, 4
  %v956 = vpop.permute.xlu0 %955
  %957 = vrot.lane.b32.xlu0 %v614, 4
  %v958 = vpop.permute.xlu0 %957
  %959 = vrot.lane.b32.xlu0 %v617, 4
  %v960 = vpop.permute.xlu0 %959
  %961 = vrot.lane.b32.xlu0 %v619, 4
  %v962 = vpop.permute.xlu0 %961
  %963 = vrot.lane.b32.xlu0 %v622, 4
  %v964 = vpop.permute.xlu0 %963
  %965 = vrot.lane.b32.xlu0 %v624, 4
  %v966 = vpop.permute.xlu0 %965
  %967 = vrot.lane.b32.xlu0 %v627, 4
  %v968 = vpop.permute.xlu0 %967
  %969 = vrot.lane.b32.xlu0 %v629, 4
  %v970 = vpop.permute.xlu0 %969
  %1035 = vrot.lane.b32.xlu0 %v633, 8
  %v1036 = vpop.permute.xlu0 %1035
  %1037 = vrot.lane.b32.xlu0 %v635, 8
  %v1038 = vpop.permute.xlu0 %1037
  %1039 = vrot.lane.b32.xlu0 %v638, 8
  %v1040 = vpop.permute.xlu0 %1039
  %1041 = vrot.lane.b32.xlu0 %v640, 8
  %v1042 = vpop.permute.xlu0 %1041
  %1043 = vrot.lane.b32.xlu0 %v643, 8
  %v1044 = vpop.permute.xlu0 %1043
  %1045 = vrot.lane.b32.xlu0 %v645, 8
  %v1046 = vpop.permute.xlu0 %1045
  %1047 = vrot.lane.b32.xlu0 %v648, 8
  %v1048 = vpop.permute.xlu0 %1047
  %1049 = vrot.lane.b32.xlu0 %v650, 8
  %v1050 = vpop.permute.xlu0 %1049
  %1051 = vrot.lane.b32.xlu0 %v653, 8
  %v1052 = vpop.permute.xlu0 %1051
  %1053 = vrot.lane.b32.xlu0 %v655, 8
  %v1054 = vpop.permute.xlu0 %1053
  %1055 = vrot.lane.b32.xlu0 %v658, 8
  %v1056 = vpop.permute.xlu0 %1055
  %1057 = vrot.lane.b32.xlu0 %v660, 8
  %v1058 = vpop.permute.xlu0 %1057
  %1059 = vrot.lane.b32.xlu0 %v663, 8
  %v1060 = vpop.permute.xlu0 %1059
  %1061 = vrot.lane.b32.xlu0 %v665, 8
  %v1062 = vpop.permute.xlu0 %1061
  %1063 = vrot.lane.b32.xlu0 %v668, 8
  %v1064 = vpop.permute.xlu0 %1063
  %1065 = vrot.lane.b32.xlu0 %v670, 8
  %v1066 = vpop.permute.xlu0 %1065
  %1067 = vrot.lane.b32.xlu0 %v673, 8
  %v1068 = vpop.permute.xlu0 %1067
  %1069 = vrot.lane.b32.xlu0 %v675, 8
  %v1070 = vpop.permute.xlu0 %1069
  %1071 = vrot.lane.b32.xlu0 %v678, 8
  %v1072 = vpop.permute.xlu0 %1071
  %1073 = vrot.lane.b32.xlu0 %v680, 8
  %v1074 = vpop.permute.xlu0 %1073
  %1075 = vrot.lane.b32.xlu0 %v683, 8
  %v1076 = vpop.permute.xlu0 %1075
  %1077 = vrot.lane.b32.xlu0 %v685, 8
  %v1078 = vpop.permute.xlu0 %1077
  %1079 = vrot.lane.b32.xlu0 %v688, 8
  %v1080 = vpop.permute.xlu0 %1079
  %1081 = vrot.lane.b32.xlu0 %v690, 8
  %v1082 = vpop.permute.xlu0 %1081
  %1083 = vrot.lane.b32.xlu0 %v693, 8
  %v1084 = vpop.permute.xlu0 %1083
  %1085 = vrot.lane.b32.xlu0 %v695, 8
  %v1086 = vpop.permute.xlu0 %1085
  %1087 = vrot.lane.b32.xlu0 %v698, 8
  %v1088 = vpop.permute.xlu0 %1087
  %1089 = vrot.lane.b32.xlu0 %v700, 8
  %v1090 = vpop.permute.xlu0 %1089
  %1091 = vrot.lane.b32.xlu0 %v703, 8
  %v1092 = vpop.permute.xlu0 %1091
  %1093 = vrot.lane.b32.xlu0 %v705, 8
  %v1094 = vpop.permute.xlu0 %1093
  %1095 = vrot.lane.b32.xlu0 %v708, 8
  %v1096 = vpop.permute.xlu0 %1095
  %1097 = vrot.lane.b32.xlu0 %v710, 8
  %v1098 = vpop.permute.xlu0 %1097
  %1099 = vrot.lane.b32.xlu0 %v713, 8
  %v1100 = vpop.permute.xlu0 %1099
  %1101 = vrot.lane.b32.xlu0 %v715, 8
  %v1102 = vpop.permute.xlu0 %1101
  %1103 = vrot.lane.b32.xlu0 %v718, 8
  %v1104 = vpop.permute.xlu0 %1103
  %1105 = vrot.lane.b32.xlu0 %v720, 8
  %v1106 = vpop.permute.xlu0 %1105
  %1107 = vrot.lane.b32.xlu0 %v723, 8
  %v1108 = vpop.permute.xlu0 %1107
  %1109 = vrot.lane.b32.xlu0 %v725, 8
  %v1110 = vpop.permute.xlu0 %1109
  %1111 = vrot.lane.b32.xlu0 %v728, 8
  %v1112 = vpop.permute.xlu0 %1111
  %1113 = vrot.lane.b32.xlu0 %v730, 8
  %v1114 = vpop.permute.xlu0 %1113
  %1115 = vrot.lane.b32.xlu0 %v733, 8
  %v1116 = vpop.permute.xlu0 %1115
  %1117 = vrot.lane.b32.xlu0 %v735, 8
  %v1118 = vpop.permute.xlu0 %1117
  %1119 = vrot.lane.b32.xlu0 %v738, 8
  %v1120 = vpop.permute.xlu0 %1119
  %1121 = vrot.lane.b32.xlu0 %v740, 8
  %v1122 = vpop.permute.xlu0 %1121
  %1123 = vrot.lane.b32.xlu0 %v743, 8
  %v1124 = vpop.permute.xlu0 %1123
  %1125 = vrot.lane.b32.xlu0 %v745, 8
  %v1126 = vpop.permute.xlu0 %1125
  %1127 = vrot.lane.b32.xlu0 %v748, 8
  %v1128 = vpop.permute.xlu0 %1127
  %1129 = vrot.lane.b32.xlu0 %v750, 8
  %v1130 = vpop.permute.xlu0 %1129
  %1131 = vrot.lane.b32.xlu0 %v753, 8
  %v1132 = vpop.permute.xlu0 %1131
  %1133 = vrot.lane.b32.xlu0 %v755, 8
  %v1134 = vpop.permute.xlu0 %1133
  %1135 = vrot.lane.b32.xlu0 %v758, 8
  %v1136 = vpop.permute.xlu0 %1135
  %1137 = vrot.lane.b32.xlu0 %v760, 8
  %v1138 = vpop.permute.xlu0 %1137
  %1139 = vrot.lane.b32.xlu0 %v763, 8
  %v1140 = vpop.permute.xlu0 %1139
  %1141 = vrot.lane.b32.xlu0 %v765, 8
  %v1142 = vpop.permute.xlu0 %1141
  %1143 = vrot.lane.b32.xlu0 %v768, 8
  %v1144 = vpop.permute.xlu0 %1143
  %1145 = vrot.lane.b32.xlu0 %v770, 8
  %v1146 = vpop.permute.xlu0 %1145
  %1147 = vrot.lane.b32.xlu0 %v773, 8
  %v1148 = vpop.permute.xlu0 %1147
  %1149 = vrot.lane.b32.xlu0 %v775, 8
  %v1150 = vpop.permute.xlu0 %1149
  %1151 = vrot.lane.b32.xlu0 %v778, 8
  %v1152 = vpop.permute.xlu0 %1151
  %1153 = vrot.lane.b32.xlu0 %v780, 8
  %v1154 = vpop.permute.xlu0 %1153
  %1155 = vrot.lane.b32.xlu0 %v783, 8
  %v1156 = vpop.permute.xlu0 %1155
  %1157 = vrot.lane.b32.xlu0 %v785, 8
  %v1158 = vpop.permute.xlu0 %1157
  %1159 = vrot.lane.b32.xlu0 %v788, 8
  %v1160 = vpop.permute.xlu0 %1159
  %1161 = vrot.lane.b32.xlu0 %v790, 8
  %v1162 = vpop.permute.xlu0 %1161
  %1227 = vrot.lane.b32.xlu0 %v268, 12
  %v1228 = vpop.permute.xlu0 %1227
  %1229 = vrot.lane.b32.xlu0 %v269, 12
  %v1230 = vpop.permute.xlu0 %1229
  %1231 = vrot.lane.b32.xlu0 %v271, 12
  %v1232 = vpop.permute.xlu0 %1231
  %1233 = vrot.lane.b32.xlu0 %v272, 12
  %v1234 = vpop.permute.xlu0 %1233
  %1235 = vrot.lane.b32.xlu0 %v274, 12
  %v1236 = vpop.permute.xlu0 %1235
  %1237 = vrot.lane.b32.xlu0 %v275, 12
  %v1238 = vpop.permute.xlu0 %1237
  %1239 = vrot.lane.b32.xlu0 %v277, 12
  %v1240 = vpop.permute.xlu0 %1239
  %1241 = vrot.lane.b32.xlu0 %v278, 12
  %v1242 = vpop.permute.xlu0 %1241
  %1243 = vrot.lane.b32.xlu0 %v280, 12
  %v1244 = vpop.permute.xlu0 %1243
  %1245 = vrot.lane.b32.xlu0 %v281, 12
  %v1246 = vpop.permute.xlu0 %1245
  %1247 = vrot.lane.b32.xlu0 %v283, 12
  %v1248 = vpop.permute.xlu0 %1247
  %1249 = vrot.lane.b32.xlu0 %v284, 12
  %v1250 = vpop.permute.xlu0 %1249
  %1251 = vrot.lane.b32.xlu0 %v286, 12
  %v1252 = vpop.permute.xlu0 %1251
  %1253 = vrot.lane.b32.xlu0 %v287, 12
  %v1254 = vpop.permute.xlu0 %1253
  %1255 = vrot.lane.b32.xlu0 %v289, 12
  %v1256 = vpop.permute.xlu0 %1255
  %1257 = vrot.lane.b32.xlu0 %v290, 12
  %v1258 = vpop.permute.xlu0 %1257
  %1259 = vrot.lane.b32.xlu0 %v292, 12
  %v1260 = vpop.permute.xlu0 %1259
  %1261 = vrot.lane.b32.xlu0 %v293, 12
  %v1262 = vpop.permute.xlu0 %1261
  %1263 = vrot.lane.b32.xlu0 %v295, 12
  %v1264 = vpop.permute.xlu0 %1263
  %1265 = vrot.lane.b32.xlu0 %v296, 12
  %v1266 = vpop.permute.xlu0 %1265
  %1267 = vrot.lane.b32.xlu0 %v298, 12
  %v1268 = vpop.permute.xlu0 %1267
  %1269 = vrot.lane.b32.xlu0 %v299, 12
  %v1270 = vpop.permute.xlu0 %1269
  %1271 = vrot.lane.b32.xlu0 %v301, 12
  %v1272 = vpop.permute.xlu0 %1271
  %1273 = vrot.lane.b32.xlu0 %v302, 12
  %v1274 = vpop.permute.xlu0 %1273
  %1275 = vrot.lane.b32.xlu0 %v304, 12
  %v1276 = vpop.permute.xlu0 %1275
  %1277 = vrot.lane.b32.xlu0 %v305, 12
  %v1278 = vpop.permute.xlu0 %1277
  %1279 = vrot.lane.b32.xlu0 %v307, 12
  %v1280 = vpop.permute.xlu0 %1279
  %1281 = vrot.lane.b32.xlu0 %v308, 12
  %v1282 = vpop.permute.xlu0 %1281
  %1283 = vrot.lane.b32.xlu0 %v310, 12
  %v1284 = vpop.permute.xlu0 %1283
  %1285 = vrot.lane.b32.xlu0 %v311, 12
  %v1286 = vpop.permute.xlu0 %1285
  %1287 = vrot.lane.b32.xlu0 %v313, 12
  %v1288 = vpop.permute.xlu0 %1287
  %1289 = vrot.lane.b32.xlu0 %v314, 12
  %v1290 = vpop.permute.xlu0 %1289
  %1291 = vrot.lane.b32.xlu0 %v322, 12
  %v1292 = vpop.permute.xlu0 %1291
  %1293 = vrot.lane.b32.xlu0 %v323, 12
  %v1294 = vpop.permute.xlu0 %1293
  %1295 = vrot.lane.b32.xlu0 %v325, 12
  %v1296 = vpop.permute.xlu0 %1295
  %1297 = vrot.lane.b32.xlu0 %v326, 12
  %v1298 = vpop.permute.xlu0 %1297
  %1299 = vrot.lane.b32.xlu0 %v328, 12
  %v1300 = vpop.permute.xlu0 %1299
  %1301 = vrot.lane.b32.xlu0 %v329, 12
  %v1302 = vpop.permute.xlu0 %1301
  %1303 = vrot.lane.b32.xlu0 %v331, 12
  %v1304 = vpop.permute.xlu0 %1303
  %1305 = vrot.lane.b32.xlu0 %v332, 12
  %v1306 = vpop.permute.xlu0 %1305
  %1307 = vrot.lane.b32.xlu0 %v334, 12
  %v1308 = vpop.permute.xlu0 %1307
  %1309 = vrot.lane.b32.xlu0 %v335, 12
  %v1310 = vpop.permute.xlu0 %1309
  %1311 = vrot.lane.b32.xlu0 %v337, 12
  %v1312 = vpop.permute.xlu0 %1311
  %1313 = vrot.lane.b32.xlu0 %v338, 12
  %v1314 = vpop.permute.xlu0 %1313
  %1315 = vrot.lane.b32.xlu0 %v340, 12
  %v1316 = vpop.permute.xlu0 %1315
  %1317 = vrot.lane.b32.xlu0 %v341, 12
  %v1318 = vpop.permute.xlu0 %1317
  %1319 = vrot.lane.b32.xlu0 %v343, 12
  %v1320 = vpop.permute.xlu0 %1319
  %1321 = vrot.lane.b32.xlu0 %v344, 12
  %v1322 = vpop.permute.xlu0 %1321
  %1323 = vrot.lane.b32.xlu0 %v346, 12
  %v1324 = vpop.permute.xlu0 %1323
  %1325 = vrot.lane.b32.xlu0 %v347, 12
  %v1326 = vpop.permute.xlu0 %1325
  %1327 = vrot.lane.b32.xlu0 %v349, 12
  %v1328 = vpop.permute.xlu0 %1327
  %1329 = vrot.lane.b32.xlu0 %v350, 12
  %v1330 = vpop.permute.xlu0 %1329
  %1331 = vrot.lane.b32.xlu0 %v352, 12
  %v1332 = vpop.permute.xlu0 %1331
  %1333 = vrot.lane.b32.xlu0 %v353, 12
  %v1334 = vpop.permute.xlu0 %1333
  %1335 = vrot.lane.b32.xlu0 %v355, 12
  %v1336 = vpop.permute.xlu0 %1335
  %1337 = vrot.lane.b32.xlu0 %v356, 12
  %v1338 = vpop.permute.xlu0 %1337
  %1339 = vrot.lane.b32.xlu0 %v358, 12
  %v1340 = vpop.permute.xlu0 %1339
  %1341 = vrot.lane.b32.xlu0 %v359, 12
  %v1342 = vpop.permute.xlu0 %1341
  %1343 = vrot.lane.b32.xlu0 %v361, 12
  %v1344 = vpop.permute.xlu0 %1343
  %1345 = vrot.lane.b32.xlu0 %v362, 12
  %v1346 = vpop.permute.xlu0 %1345
  %1347 = vrot.lane.b32.xlu0 %v364, 12
  %v1348 = vpop.permute.xlu0 %1347
  %1349 = vrot.lane.b32.xlu0 %v365, 12
  %v1350 = vpop.permute.xlu0 %1349
  %1351 = vrot.lane.b32.xlu0 %v367, 12
  %v1352 = vpop.permute.xlu0 %1351
  %1353 = vrot.lane.b32.xlu0 %v368, 12
  %v1354 = vpop.permute.xlu0 %1353
  %1419 = vrot.lane.b32.xlu0 %v477, 16
  %v1420 = vpop.permute.xlu0 %1419
  %1421 = vrot.lane.b32.xlu0 %v479, 16
  %v1422 = vpop.permute.xlu0 %1421
  %1423 = vrot.lane.b32.xlu0 %v482, 16
  %v1424 = vpop.permute.xlu0 %1423
  %1425 = vrot.lane.b32.xlu0 %v484, 16
  %v1426 = vpop.permute.xlu0 %1425
  %1427 = vrot.lane.b32.xlu0 %v487, 16
  %v1428 = vpop.permute.xlu0 %1427
  %1429 = vrot.lane.b32.xlu0 %v489, 16
  %v1430 = vpop.permute.xlu0 %1429
  %1431 = vrot.lane.b32.xlu0 %v492, 16
  %v1432 = vpop.permute.xlu0 %1431
  %1433 = vrot.lane.b32.xlu0 %v494, 16
  %v1434 = vpop.permute.xlu0 %1433
  %1435 = vrot.lane.b32.xlu0 %v497, 16
  %v1436 = vpop.permute.xlu0 %1435
  %1437 = vrot.lane.b32.xlu0 %v499, 16
  %v1438 = vpop.permute.xlu0 %1437
  %1439 = vrot.lane.b32.xlu0 %v502, 16
  %v1440 = vpop.permute.xlu0 %1439
  %1441 = vrot.lane.b32.xlu0 %v504, 16
  %v1442 = vpop.permute.xlu0 %1441
  %1443 = vrot.lane.b32.xlu0 %v507, 16
  %v1444 = vpop.permute.xlu0 %1443
  %1445 = vrot.lane.b32.xlu0 %v509, 16
  %v1446 = vpop.permute.xlu0 %1445
  %1447 = vrot.lane.b32.xlu0 %v512, 16
  %v1448 = vpop.permute.xlu0 %1447
  %1449 = vrot.lane.b32.xlu0 %v514, 16
  %v1450 = vpop.permute.xlu0 %1449
  %1451 = vrot.lane.b32.xlu0 %v517, 16
  %v1452 = vpop.permute.xlu0 %1451
  %1453 = vrot.lane.b32.xlu0 %v519, 16
  %v1454 = vpop.permute.xlu0 %1453
  %1455 = vrot.lane.b32.xlu0 %v522, 16
  %v1456 = vpop.permute.xlu0 %1455
  %1457 = vrot.lane.b32.xlu0 %v524, 16
  %v1458 = vpop.permute.xlu0 %1457
  %1459 = vrot.lane.b32.xlu0 %v527, 16
  %v1460 = vpop.permute.xlu0 %1459
  %1461 = vrot.lane.b32.xlu0 %v529, 16
  %v1462 = vpop.permute.xlu0 %1461
  %1463 = vrot.lane.b32.xlu0 %v532, 16
  %v1464 = vpop.permute.xlu0 %1463
  %1465 = vrot.lane.b32.xlu0 %v534, 16
  %v1466 = vpop.permute.xlu0 %1465
  %1467 = vrot.lane.b32.xlu0 %v537, 16
  %v1468 = vpop.permute.xlu0 %1467
  %1469 = vrot.lane.b32.xlu0 %v539, 16
  %v1470 = vpop.permute.xlu0 %1469
  %1471 = vrot.lane.b32.xlu0 %v542, 16
  %v1472 = vpop.permute.xlu0 %1471
  %1473 = vrot.lane.b32.xlu0 %v544, 16
  %v1474 = vpop.permute.xlu0 %1473
  %1475 = vrot.lane.b32.xlu0 %v547, 16
  %v1476 = vpop.permute.xlu0 %1475
  %1477 = vrot.lane.b32.xlu0 %v549, 16
  %v1478 = vpop.permute.xlu0 %1477
  %1479 = vrot.lane.b32.xlu0 %v799, 16
  %v1480 = vpop.permute.xlu0 %1479
  %1481 = vrot.lane.b32.xlu0 %v801, 16
  %v1482 = vpop.permute.xlu0 %1481
  %1483 = vrot.lane.b32.xlu0 %v557, 16
  %v1484 = vpop.permute.xlu0 %1483
  %1485 = vrot.lane.b32.xlu0 %v559, 16
  %v1486 = vpop.permute.xlu0 %1485
  %1487 = vrot.lane.b32.xlu0 %v562, 16
  %v1488 = vpop.permute.xlu0 %1487
  %1489 = vrot.lane.b32.xlu0 %v564, 16
  %v1490 = vpop.permute.xlu0 %1489
  %1491 = vrot.lane.b32.xlu0 %v567, 16
  %v1492 = vpop.permute.xlu0 %1491
  %1493 = vrot.lane.b32.xlu0 %v569, 16
  %v1494 = vpop.permute.xlu0 %1493
  %1495 = vrot.lane.b32.xlu0 %v572, 16
  %v1496 = vpop.permute.xlu0 %1495
  %1497 = vrot.lane.b32.xlu0 %v574, 16
  %v1498 = vpop.permute.xlu0 %1497
  %1499 = vrot.lane.b32.xlu0 %v577, 16
  %v1500 = vpop.permute.xlu0 %1499
  %1501 = vrot.lane.b32.xlu0 %v579, 16
  %v1502 = vpop.permute.xlu0 %1501
  %1503 = vrot.lane.b32.xlu0 %v582, 16
  %v1504 = vpop.permute.xlu0 %1503
  %1505 = vrot.lane.b32.xlu0 %v584, 16
  %v1506 = vpop.permute.xlu0 %1505
  %1507 = vrot.lane.b32.xlu0 %v587, 16
  %v1508 = vpop.permute.xlu0 %1507
  %1509 = vrot.lane.b32.xlu0 %v589, 16
  %v1510 = vpop.permute.xlu0 %1509
  %1511 = vrot.lane.b32.xlu0 %v592, 16
  %v1512 = vpop.permute.xlu0 %1511
  %1513 = vrot.lane.b32.xlu0 %v594, 16
  %v1514 = vpop.permute.xlu0 %1513
  %1515 = vrot.lane.b32.xlu0 %v597, 16
  %v1516 = vpop.permute.xlu0 %1515
  %1517 = vrot.lane.b32.xlu0 %v599, 16
  %v1518 = vpop.permute.xlu0 %1517
  %1519 = vrot.lane.b32.xlu0 %v602, 16
  %v1520 = vpop.permute.xlu0 %1519
  %1521 = vrot.lane.b32.xlu0 %v604, 16
  %v1522 = vpop.permute.xlu0 %1521
  %1523 = vrot.lane.b32.xlu0 %v607, 16
  %v1524 = vpop.permute.xlu0 %1523
  %1525 = vrot.lane.b32.xlu0 %v609, 16
  %v1526 = vpop.permute.xlu0 %1525
  %1527 = vrot.lane.b32.xlu0 %v612, 16
  %v1528 = vpop.permute.xlu0 %1527
  %1529 = vrot.lane.b32.xlu0 %v614, 16
  %v1530 = vpop.permute.xlu0 %1529
  %1531 = vrot.lane.b32.xlu0 %v617, 16
  %v1532 = vpop.permute.xlu0 %1531
  %1533 = vrot.lane.b32.xlu0 %v619, 16
  %v1534 = vpop.permute.xlu0 %1533
  %1535 = vrot.lane.b32.xlu0 %v622, 16
  %v1536 = vpop.permute.xlu0 %1535
  %1537 = vrot.lane.b32.xlu0 %v624, 16
  %v1538 = vpop.permute.xlu0 %1537
  %1539 = vrot.lane.b32.xlu0 %v627, 16
  %v1540 = vpop.permute.xlu0 %1539
  %1541 = vrot.lane.b32.xlu0 %v629, 16
  %v1542 = vpop.permute.xlu0 %1541
  %1543 = vrot.lane.b32.xlu0 %v804, 16
  %v1544 = vpop.permute.xlu0 %1543
  %1545 = vrot.lane.b32.xlu0 %v806, 16
  %v1546 = vpop.permute.xlu0 %1545
  %1611 = vrot.lane.b32.xlu0 %v638, 20
  %v1612 = vpop.permute.xlu0 %1611
  %1613 = vrot.lane.b32.xlu0 %v640, 20
  %v1614 = vpop.permute.xlu0 %1613
  %1615 = vrot.lane.b32.xlu0 %v643, 20
  %v1616 = vpop.permute.xlu0 %1615
  %1617 = vrot.lane.b32.xlu0 %v645, 20
  %v1618 = vpop.permute.xlu0 %1617
  %1619 = vrot.lane.b32.xlu0 %v648, 20
  %v1620 = vpop.permute.xlu0 %1619
  %1621 = vrot.lane.b32.xlu0 %v650, 20
  %v1622 = vpop.permute.xlu0 %1621
  %1623 = vrot.lane.b32.xlu0 %v653, 20
  %v1624 = vpop.permute.xlu0 %1623
  %1625 = vrot.lane.b32.xlu0 %v655, 20
  %v1626 = vpop.permute.xlu0 %1625
  %1627 = vrot.lane.b32.xlu0 %v658, 20
  %v1628 = vpop.permute.xlu0 %1627
  %1629 = vrot.lane.b32.xlu0 %v660, 20
  %v1630 = vpop.permute.xlu0 %1629
  %1631 = vrot.lane.b32.xlu0 %v663, 20
  %v1632 = vpop.permute.xlu0 %1631
  %1633 = vrot.lane.b32.xlu0 %v665, 20
  %v1634 = vpop.permute.xlu0 %1633
  %1635 = vrot.lane.b32.xlu0 %v668, 20
  %v1636 = vpop.permute.xlu0 %1635
  %1637 = vrot.lane.b32.xlu0 %v670, 20
  %v1638 = vpop.permute.xlu0 %1637
  %1639 = vrot.lane.b32.xlu0 %v673, 20
  %v1640 = vpop.permute.xlu0 %1639
  %1641 = vrot.lane.b32.xlu0 %v675, 20
  %v1642 = vpop.permute.xlu0 %1641
  %1643 = vrot.lane.b32.xlu0 %v678, 20
  %v1644 = vpop.permute.xlu0 %1643
  %1645 = vrot.lane.b32.xlu0 %v680, 20
  %v1646 = vpop.permute.xlu0 %1645
  %1647 = vrot.lane.b32.xlu0 %v683, 20
  %v1648 = vpop.permute.xlu0 %1647
  %1649 = vrot.lane.b32.xlu0 %v685, 20
  %v1650 = vpop.permute.xlu0 %1649
  %1651 = vrot.lane.b32.xlu0 %v688, 20
  %v1652 = vpop.permute.xlu0 %1651
  %1653 = vrot.lane.b32.xlu0 %v690, 20
  %v1654 = vpop.permute.xlu0 %1653
  %1655 = vrot.lane.b32.xlu0 %v693, 20
  %v1656 = vpop.permute.xlu0 %1655
  %1657 = vrot.lane.b32.xlu0 %v695, 20
  %v1658 = vpop.permute.xlu0 %1657
  %1659 = vrot.lane.b32.xlu0 %v698, 20
  %v1660 = vpop.permute.xlu0 %1659
  %1661 = vrot.lane.b32.xlu0 %v700, 20
  %v1662 = vpop.permute.xlu0 %1661
  %1663 = vrot.lane.b32.xlu0 %v703, 20
  %v1664 = vpop.permute.xlu0 %1663
  %1665 = vrot.lane.b32.xlu0 %v705, 20
  %v1666 = vpop.permute.xlu0 %1665
  %1667 = vrot.lane.b32.xlu0 %v708, 20
  %v1668 = vpop.permute.xlu0 %1667
  %1669 = vrot.lane.b32.xlu0 %v710, 20
  %v1670 = vpop.permute.xlu0 %1669
  %1671 = vrot.lane.b32.xlu0 %v809, 20
  %v1672 = vpop.permute.xlu0 %1671
  %1673 = vrot.lane.b32.xlu0 %v811, 20
  %v1674 = vpop.permute.xlu0 %1673
  %1675 = vrot.lane.b32.xlu0 %v718, 20
  %v1676 = vpop.permute.xlu0 %1675
  %1677 = vrot.lane.b32.xlu0 %v720, 20
  %v1678 = vpop.permute.xlu0 %1677
  %1679 = vrot.lane.b32.xlu0 %v723, 20
  %v1680 = vpop.permute.xlu0 %1679
  %1681 = vrot.lane.b32.xlu0 %v725, 20
  %v1682 = vpop.permute.xlu0 %1681
  %1683 = vrot.lane.b32.xlu0 %v728, 20
  %v1684 = vpop.permute.xlu0 %1683
  %1685 = vrot.lane.b32.xlu0 %v730, 20
  %v1686 = vpop.permute.xlu0 %1685
  %1687 = vrot.lane.b32.xlu0 %v733, 20
  %v1688 = vpop.permute.xlu0 %1687
  %1689 = vrot.lane.b32.xlu0 %v735, 20
  %v1690 = vpop.permute.xlu0 %1689
  %1691 = vrot.lane.b32.xlu0 %v738, 20
  %v1692 = vpop.permute.xlu0 %1691
  %1693 = vrot.lane.b32.xlu0 %v740, 20
  %v1694 = vpop.permute.xlu0 %1693
  %1695 = vrot.lane.b32.xlu0 %v743, 20
  %v1696 = vpop.permute.xlu0 %1695
  %1697 = vrot.lane.b32.xlu0 %v745, 20
  %v1698 = vpop.permute.xlu0 %1697
  %1699 = vrot.lane.b32.xlu0 %v748, 20
  %v1700 = vpop.permute.xlu0 %1699
  %1701 = vrot.lane.b32.xlu0 %v750, 20
  %v1702 = vpop.permute.xlu0 %1701
  %1703 = vrot.lane.b32.xlu0 %v753, 20
  %v1704 = vpop.permute.xlu0 %1703
  %1705 = vrot.lane.b32.xlu0 %v755, 20
  %v1706 = vpop.permute.xlu0 %1705
  %1707 = vrot.lane.b32.xlu0 %v758, 20
  %v1708 = vpop.permute.xlu0 %1707
  %1709 = vrot.lane.b32.xlu0 %v760, 20
  %v1710 = vpop.permute.xlu0 %1709
  %1711 = vrot.lane.b32.xlu0 %v763, 20
  %v1712 = vpop.permute.xlu0 %1711
  %1713 = vrot.lane.b32.xlu0 %v765, 20
  %v1714 = vpop.permute.xlu0 %1713
  %1715 = vrot.lane.b32.xlu0 %v768, 20
  %v1716 = vpop.permute.xlu0 %1715
  %1717 = vrot.lane.b32.xlu0 %v770, 20
  %v1718 = vpop.permute.xlu0 %1717
  %1719 = vrot.lane.b32.xlu0 %v773, 20
  %v1720 = vpop.permute.xlu0 %1719
  %1721 = vrot.lane.b32.xlu0 %v775, 20
  %v1722 = vpop.permute.xlu0 %1721
  %1723 = vrot.lane.b32.xlu0 %v778, 20
  %v1724 = vpop.permute.xlu0 %1723
  %1725 = vrot.lane.b32.xlu0 %v780, 20
  %v1726 = vpop.permute.xlu0 %1725
  %1727 = vrot.lane.b32.xlu0 %v783, 20
  %v1728 = vpop.permute.xlu0 %1727
  %1729 = vrot.lane.b32.xlu0 %v785, 20
  %v1730 = vpop.permute.xlu0 %1729
  %1731 = vrot.lane.b32.xlu0 %v788, 20
  %v1732 = vpop.permute.xlu0 %1731
  %1733 = vrot.lane.b32.xlu0 %v790, 20
  %v1734 = vpop.permute.xlu0 %1733
  %1735 = vrot.lane.b32.xlu0 %v814, 20
  %v1736 = vpop.permute.xlu0 %1735
  %1737 = vrot.lane.b32.xlu0 %v816, 20
  %v1738 = vpop.permute.xlu0 %1737
  %1803 = vrot.lane.b32.xlu0 %v271, 24
  %v1804 = vpop.permute.xlu0 %1803
  %1805 = vrot.lane.b32.xlu0 %v272, 24
  %v1806 = vpop.permute.xlu0 %1805
  %1807 = vrot.lane.b32.xlu0 %v274, 24
  %v1808 = vpop.permute.xlu0 %1807
  %1809 = vrot.lane.b32.xlu0 %v275, 24
  %v1810 = vpop.permute.xlu0 %1809
  %1811 = vrot.lane.b32.xlu0 %v277, 24
  %v1812 = vpop.permute.xlu0 %1811
  %1813 = vrot.lane.b32.xlu0 %v278, 24
  %v1814 = vpop.permute.xlu0 %1813
  %1815 = vrot.lane.b32.xlu0 %v280, 24
  %v1816 = vpop.permute.xlu0 %1815
  %1817 = vrot.lane.b32.xlu0 %v281, 24
  %v1818 = vpop.permute.xlu0 %1817
  %1819 = vrot.lane.b32.xlu0 %v283, 24
  %v1820 = vpop.permute.xlu0 %1819
  %1821 = vrot.lane.b32.xlu0 %v284, 24
  %v1822 = vpop.permute.xlu0 %1821
  %1823 = vrot.lane.b32.xlu0 %v286, 24
  %v1824 = vpop.permute.xlu0 %1823
  %1825 = vrot.lane.b32.xlu0 %v287, 24
  %v1826 = vpop.permute.xlu0 %1825
  %1827 = vrot.lane.b32.xlu0 %v289, 24
  %v1828 = vpop.permute.xlu0 %1827
  %1829 = vrot.lane.b32.xlu0 %v290, 24
  %v1830 = vpop.permute.xlu0 %1829
  %1831 = vrot.lane.b32.xlu0 %v292, 24
  %v1832 = vpop.permute.xlu0 %1831
  %1833 = vrot.lane.b32.xlu0 %v293, 24
  %v1834 = vpop.permute.xlu0 %1833
  %1835 = vrot.lane.b32.xlu0 %v295, 24
  %v1836 = vpop.permute.xlu0 %1835
  %1837 = vrot.lane.b32.xlu0 %v296, 24
  %v1838 = vpop.permute.xlu0 %1837
  %1839 = vrot.lane.b32.xlu0 %v298, 24
  %v1840 = vpop.permute.xlu0 %1839
  %1841 = vrot.lane.b32.xlu0 %v299, 24
  %v1842 = vpop.permute.xlu0 %1841
  %1843 = vrot.lane.b32.xlu0 %v301, 24
  %v1844 = vpop.permute.xlu0 %1843
  %1845 = vrot.lane.b32.xlu0 %v302, 24
  %v1846 = vpop.permute.xlu0 %1845
  %1847 = vrot.lane.b32.xlu0 %v304, 24
  %v1848 = vpop.permute.xlu0 %1847
  %1849 = vrot.lane.b32.xlu0 %v305, 24
  %v1850 = vpop.permute.xlu0 %1849
  %1851 = vrot.lane.b32.xlu0 %v307, 24
  %v1852 = vpop.permute.xlu0 %1851
  %1853 = vrot.lane.b32.xlu0 %v308, 24
  %v1854 = vpop.permute.xlu0 %1853
  %1855 = vrot.lane.b32.xlu0 %v310, 24
  %v1856 = vpop.permute.xlu0 %1855
  %1857 = vrot.lane.b32.xlu0 %v311, 24
  %v1858 = vpop.permute.xlu0 %1857
  %1859 = vrot.lane.b32.xlu0 %v313, 24
  %v1860 = vpop.permute.xlu0 %1859
  %1861 = vrot.lane.b32.xlu0 %v314, 24
  %v1862 = vpop.permute.xlu0 %1861
  %1863 = vrot.lane.b32.xlu0 %v316, 24
  %v1864 = vpop.permute.xlu0 %1863
  %1865 = vrot.lane.b32.xlu0 %v317, 24
  %v1866 = vpop.permute.xlu0 %1865
  %1867 = vrot.lane.b32.xlu0 %v325, 24
  %v1868 = vpop.permute.xlu0 %1867
  %1869 = vrot.lane.b32.xlu0 %v326, 24
  %v1870 = vpop.permute.xlu0 %1869
  %1871 = vrot.lane.b32.xlu0 %v328, 24
  %v1872 = vpop.permute.xlu0 %1871
  %1873 = vrot.lane.b32.xlu0 %v329, 24
  %v1874 = vpop.permute.xlu0 %1873
  %1875 = vrot.lane.b32.xlu0 %v331, 24
  %v1876 = vpop.permute.xlu0 %1875
  %1877 = vrot.lane.b32.xlu0 %v332, 24
  %v1878 = vpop.permute.xlu0 %1877
  %1879 = vrot.lane.b32.xlu0 %v334, 24
  %v1880 = vpop.permute.xlu0 %1879
  %1881 = vrot.lane.b32.xlu0 %v335, 24
  %v1882 = vpop.permute.xlu0 %1881
  %1883 = vrot.lane.b32.xlu0 %v337, 24
  %v1884 = vpop.permute.xlu0 %1883
  %1885 = vrot.lane.b32.xlu0 %v338, 24
  %v1886 = vpop.permute.xlu0 %1885
  %1887 = vrot.lane.b32.xlu0 %v340, 24
  %v1888 = vpop.permute.xlu0 %1887
  %1889 = vrot.lane.b32.xlu0 %v341, 24
  %v1890 = vpop.permute.xlu0 %1889
  %1891 = vrot.lane.b32.xlu0 %v343, 24
  %v1892 = vpop.permute.xlu0 %1891
  %1893 = vrot.lane.b32.xlu0 %v344, 24
  %v1894 = vpop.permute.xlu0 %1893
  %1895 = vrot.lane.b32.xlu0 %v346, 24
  %v1896 = vpop.permute.xlu0 %1895
  %1897 = vrot.lane.b32.xlu0 %v347, 24
  %v1898 = vpop.permute.xlu0 %1897
  %1899 = vrot.lane.b32.xlu0 %v349, 24
  %v1900 = vpop.permute.xlu0 %1899
  %1901 = vrot.lane.b32.xlu0 %v350, 24
  %v1902 = vpop.permute.xlu0 %1901
  %1903 = vrot.lane.b32.xlu0 %v352, 24
  %v1904 = vpop.permute.xlu0 %1903
  %1905 = vrot.lane.b32.xlu0 %v353, 24
  %v1906 = vpop.permute.xlu0 %1905
  %1907 = vrot.lane.b32.xlu0 %v355, 24
  %v1908 = vpop.permute.xlu0 %1907
  %1909 = vrot.lane.b32.xlu0 %v356, 24
  %v1910 = vpop.permute.xlu0 %1909
  %1911 = vrot.lane.b32.xlu0 %v358, 24
  %v1912 = vpop.permute.xlu0 %1911
  %1913 = vrot.lane.b32.xlu0 %v359, 24
  %v1914 = vpop.permute.xlu0 %1913
  %1915 = vrot.lane.b32.xlu0 %v361, 24
  %v1916 = vpop.permute.xlu0 %1915
  %1917 = vrot.lane.b32.xlu0 %v362, 24
  %v1918 = vpop.permute.xlu0 %1917
  %1919 = vrot.lane.b32.xlu0 %v364, 24
  %v1920 = vpop.permute.xlu0 %1919
  %1921 = vrot.lane.b32.xlu0 %v365, 24
  %v1922 = vpop.permute.xlu0 %1921
  %1923 = vrot.lane.b32.xlu0 %v367, 24
  %v1924 = vpop.permute.xlu0 %1923
  %1925 = vrot.lane.b32.xlu0 %v368, 24
  %v1926 = vpop.permute.xlu0 %1925
  %1927 = vrot.lane.b32.xlu0 %v370, 24
  %v1928 = vpop.permute.xlu0 %1927
  %1929 = vrot.lane.b32.xlu0 %v371, 24
  %v1930 = vpop.permute.xlu0 %1929
  %1995 = vrot.lane.b32.xlu0 %v482, 28
  %v1996 = vpop.permute.xlu0 %1995
  %1997 = vrot.lane.b32.xlu0 %v484, 28
  %v1998 = vpop.permute.xlu0 %1997
  %1999 = vrot.lane.b32.xlu0 %v487, 28
  %v2000 = vpop.permute.xlu0 %1999
  %2001 = vrot.lane.b32.xlu0 %v489, 28
  %v2002 = vpop.permute.xlu0 %2001
  %2003 = vrot.lane.b32.xlu0 %v492, 28
  %v2004 = vpop.permute.xlu0 %2003
  %2005 = vrot.lane.b32.xlu0 %v494, 28
  %v2006 = vpop.permute.xlu0 %2005
  %2007 = vrot.lane.b32.xlu0 %v497, 28
  %v2008 = vpop.permute.xlu0 %2007
  %2009 = vrot.lane.b32.xlu0 %v499, 28
  %v2010 = vpop.permute.xlu0 %2009
  %2011 = vrot.lane.b32.xlu0 %v502, 28
  %v2012 = vpop.permute.xlu0 %2011
  %2013 = vrot.lane.b32.xlu0 %v504, 28
  %v2014 = vpop.permute.xlu0 %2013
  %2015 = vrot.lane.b32.xlu0 %v507, 28
  %v2016 = vpop.permute.xlu0 %2015
  %2017 = vrot.lane.b32.xlu0 %v509, 28
  %v2018 = vpop.permute.xlu0 %2017
  %2019 = vrot.lane.b32.xlu0 %v512, 28
  %v2020 = vpop.permute.xlu0 %2019
  %2021 = vrot.lane.b32.xlu0 %v514, 28
  %v2022 = vpop.permute.xlu0 %2021
  %2023 = vrot.lane.b32.xlu0 %v517, 28
  %v2024 = vpop.permute.xlu0 %2023
  %2025 = vrot.lane.b32.xlu0 %v519, 28
  %v2026 = vpop.permute.xlu0 %2025
  %2027 = vrot.lane.b32.xlu0 %v522, 28
  %v2028 = vpop.permute.xlu0 %2027
  %2029 = vrot.lane.b32.xlu0 %v524, 28
  %v2030 = vpop.permute.xlu0 %2029
  %2031 = vrot.lane.b32.xlu0 %v527, 28
  %v2032 = vpop.permute.xlu0 %2031
  %2033 = vrot.lane.b32.xlu0 %v529, 28
  %v2034 = vpop.permute.xlu0 %2033
  %2035 = vrot.lane.b32.xlu0 %v532, 28
  %v2036 = vpop.permute.xlu0 %2035
  %2037 = vrot.lane.b32.xlu0 %v534, 28
  %v2038 = vpop.permute.xlu0 %2037
  %2039 = vrot.lane.b32.xlu0 %v537, 28
  %v2040 = vpop.permute.xlu0 %2039
  %2041 = vrot.lane.b32.xlu0 %v539, 28
  %v2042 = vpop.permute.xlu0 %2041
  %2043 = vrot.lane.b32.xlu0 %v542, 28
  %v2044 = vpop.permute.xlu0 %2043
  %2045 = vrot.lane.b32.xlu0 %v544, 28
  %v2046 = vpop.permute.xlu0 %2045
  %2047 = vrot.lane.b32.xlu0 %v547, 28
  %v2048 = vpop.permute.xlu0 %2047
  %2049 = vrot.lane.b32.xlu0 %v549, 28
  %v2050 = vpop.permute.xlu0 %2049
  %2051 = vrot.lane.b32.xlu0 %v799, 28
  %v2052 = vpop.permute.xlu0 %2051
  %2053 = vrot.lane.b32.xlu0 %v801, 28
  %v2054 = vpop.permute.xlu0 %2053
  %2055 = vrot.lane.b32.xlu0 %v825, 28
  %v2056 = vpop.permute.xlu0 %2055
  %2057 = vrot.lane.b32.xlu0 %v827, 28
  %v2058 = vpop.permute.xlu0 %2057
  %2059 = vrot.lane.b32.xlu0 %v562, 28
  %v2060 = vpop.permute.xlu0 %2059
  %2061 = vrot.lane.b32.xlu0 %v564, 28
  %v2062 = vpop.permute.xlu0 %2061
  %2063 = vrot.lane.b32.xlu0 %v567, 28
  %v2064 = vpop.permute.xlu0 %2063
  %2065 = vrot.lane.b32.xlu0 %v569, 28
  %v2066 = vpop.permute.xlu0 %2065
  %2067 = vrot.lane.b32.xlu0 %v572, 28
  %v2068 = vpop.permute.xlu0 %2067
  %2069 = vrot.lane.b32.xlu0 %v574, 28
  %v2070 = vpop.permute.xlu0 %2069
  %2071 = vrot.lane.b32.xlu0 %v577, 28
  %v2072 = vpop.permute.xlu0 %2071
  %2073 = vrot.lane.b32.xlu0 %v579, 28
  %v2074 = vpop.permute.xlu0 %2073
  %2075 = vrot.lane.b32.xlu0 %v582, 28
  %v2076 = vpop.permute.xlu0 %2075
  %2077 = vrot.lane.b32.xlu0 %v584, 28
  %v2078 = vpop.permute.xlu0 %2077
  %2079 = vrot.lane.b32.xlu0 %v587, 28
  %v2080 = vpop.permute.xlu0 %2079
  %2081 = vrot.lane.b32.xlu0 %v589, 28
  %v2082 = vpop.permute.xlu0 %2081
  %2083 = vrot.lane.b32.xlu0 %v592, 28
  %v2084 = vpop.permute.xlu0 %2083
  %2085 = vrot.lane.b32.xlu0 %v594, 28
  %v2086 = vpop.permute.xlu0 %2085
  %2087 = vrot.lane.b32.xlu0 %v597, 28
  %v2088 = vpop.permute.xlu0 %2087
  %2089 = vrot.lane.b32.xlu0 %v599, 28
  %v2090 = vpop.permute.xlu0 %2089
  %2091 = vrot.lane.b32.xlu0 %v602, 28
  %v2092 = vpop.permute.xlu0 %2091
  %2093 = vrot.lane.b32.xlu0 %v604, 28
  %v2094 = vpop.permute.xlu0 %2093
  %2095 = vrot.lane.b32.xlu0 %v607, 28
  %v2096 = vpop.permute.xlu0 %2095
  %2097 = vrot.lane.b32.xlu0 %v609, 28
  %v2098 = vpop.permute.xlu0 %2097
  %2099 = vrot.lane.b32.xlu0 %v612, 28
  %v2100 = vpop.permute.xlu0 %2099
  %2101 = vrot.lane.b32.xlu0 %v614, 28
  %v2102 = vpop.permute.xlu0 %2101
  %2103 = vrot.lane.b32.xlu0 %v617, 28
  %v2104 = vpop.permute.xlu0 %2103
  %2105 = vrot.lane.b32.xlu0 %v619, 28
  %v2106 = vpop.permute.xlu0 %2105
  %2107 = vrot.lane.b32.xlu0 %v622, 28
  %v2108 = vpop.permute.xlu0 %2107
  %2109 = vrot.lane.b32.xlu0 %v624, 28
  %v2110 = vpop.permute.xlu0 %2109
  %2111 = vrot.lane.b32.xlu0 %v627, 28
  %v2112 = vpop.permute.xlu0 %2111
  %2113 = vrot.lane.b32.xlu0 %v629, 28
  %v2114 = vpop.permute.xlu0 %2113
  %2115 = vrot.lane.b32.xlu0 %v804, 28
  %v2116 = vpop.permute.xlu0 %2115
  %2117 = vrot.lane.b32.xlu0 %v806, 28
  %v2118 = vpop.permute.xlu0 %2117
  %2119 = vrot.lane.b32.xlu0 %v830, 28
  %v2120 = vpop.permute.xlu0 %2119
  %2121 = vrot.lane.b32.xlu0 %v832, 28
  %v2122 = vpop.permute.xlu0 %2121
  %2187 = vrot.lane.b32.xlu0 %v643, 32
  %v2188 = vpop.permute.xlu0 %2187
  %2189 = vrot.lane.b32.xlu0 %v645, 32
  %v2190 = vpop.permute.xlu0 %2189
  %2191 = vrot.lane.b32.xlu0 %v648, 32
  %v2192 = vpop.permute.xlu0 %2191
  %2193 = vrot.lane.b32.xlu0 %v650, 32
  %v2194 = vpop.permute.xlu0 %2193
  %2195 = vrot.lane.b32.xlu0 %v653, 32
  %v2196 = vpop.permute.xlu0 %2195
  %2197 = vrot.lane.b32.xlu0 %v655, 32
  %v2198 = vpop.permute.xlu0 %2197
  %2199 = vrot.lane.b32.xlu0 %v658, 32
  %v2200 = vpop.permute.xlu0 %2199
  %2201 = vrot.lane.b32.xlu0 %v660, 32
  %v2202 = vpop.permute.xlu0 %2201
  %2203 = vrot.lane.b32.xlu0 %v663, 32
  %v2204 = vpop.permute.xlu0 %2203
  %2205 = vrot.lane.b32.xlu0 %v665, 32
  %v2206 = vpop.permute.xlu0 %2205
  %2207 = vrot.lane.b32.xlu0 %v668, 32
  %v2208 = vpop.permute.xlu0 %2207
  %2209 = vrot.lane.b32.xlu0 %v670, 32
  %v2210 = vpop.permute.xlu0 %2209
  %2211 = vrot.lane.b32.xlu0 %v673, 32
  %v2212 = vpop.permute.xlu0 %2211
  %2213 = vrot.lane.b32.xlu0 %v675, 32
  %v2214 = vpop.permute.xlu0 %2213
  %2215 = vrot.lane.b32.xlu0 %v678, 32
  %v2216 = vpop.permute.xlu0 %2215
  %2217 = vrot.lane.b32.xlu0 %v680, 32
  %v2218 = vpop.permute.xlu0 %2217
  %2219 = vrot.lane.b32.xlu0 %v683, 32
  %v2220 = vpop.permute.xlu0 %2219
  %2221 = vrot.lane.b32.xlu0 %v685, 32
  %v2222 = vpop.permute.xlu0 %2221
  %2223 = vrot.lane.b32.xlu0 %v688, 32
  %v2224 = vpop.permute.xlu0 %2223
  %2225 = vrot.lane.b32.xlu0 %v690, 32
  %v2226 = vpop.permute.xlu0 %2225
  %2227 = vrot.lane.b32.xlu0 %v693, 32
  %v2228 = vpop.permute.xlu0 %2227
  %2229 = vrot.lane.b32.xlu0 %v695, 32
  %v2230 = vpop.permute.xlu0 %2229
  %2231 = vrot.lane.b32.xlu0 %v698, 32
  %v2232 = vpop.permute.xlu0 %2231
  %2233 = vrot.lane.b32.xlu0 %v700, 32
  %v2234 = vpop.permute.xlu0 %2233
  %2235 = vrot.lane.b32.xlu0 %v703, 32
  %v2236 = vpop.permute.xlu0 %2235
  %2237 = vrot.lane.b32.xlu0 %v705, 32
  %v2238 = vpop.permute.xlu0 %2237
  %2239 = vrot.lane.b32.xlu0 %v708, 32
  %v2240 = vpop.permute.xlu0 %2239
  %2241 = vrot.lane.b32.xlu0 %v710, 32
  %v2242 = vpop.permute.xlu0 %2241
  %2243 = vrot.lane.b32.xlu0 %v809, 32
  %v2244 = vpop.permute.xlu0 %2243
  %2245 = vrot.lane.b32.xlu0 %v811, 32
  %v2246 = vpop.permute.xlu0 %2245
  %2247 = vrot.lane.b32.xlu0 %v835, 32
  %v2248 = vpop.permute.xlu0 %2247
  %2249 = vrot.lane.b32.xlu0 %v837, 32
  %v2250 = vpop.permute.xlu0 %2249
  %2251 = vrot.lane.b32.xlu0 %v723, 32
  %v2252 = vpop.permute.xlu0 %2251
  %2253 = vrot.lane.b32.xlu0 %v725, 32
  %v2254 = vpop.permute.xlu0 %2253
  %2255 = vrot.lane.b32.xlu0 %v728, 32
  %v2256 = vpop.permute.xlu0 %2255
  %2257 = vrot.lane.b32.xlu0 %v730, 32
  %v2258 = vpop.permute.xlu0 %2257
  %2259 = vrot.lane.b32.xlu0 %v733, 32
  %v2260 = vpop.permute.xlu0 %2259
  %2261 = vrot.lane.b32.xlu0 %v735, 32
  %v2262 = vpop.permute.xlu0 %2261
  %2263 = vrot.lane.b32.xlu0 %v738, 32
  %v2264 = vpop.permute.xlu0 %2263
  %2265 = vrot.lane.b32.xlu0 %v740, 32
  %v2266 = vpop.permute.xlu0 %2265
  %2267 = vrot.lane.b32.xlu0 %v743, 32
  %v2268 = vpop.permute.xlu0 %2267
  %2269 = vrot.lane.b32.xlu0 %v745, 32
  %v2270 = vpop.permute.xlu0 %2269
  %2271 = vrot.lane.b32.xlu0 %v748, 32
  %v2272 = vpop.permute.xlu0 %2271
  %2273 = vrot.lane.b32.xlu0 %v750, 32
  %v2274 = vpop.permute.xlu0 %2273
  %2275 = vrot.lane.b32.xlu0 %v753, 32
  %v2276 = vpop.permute.xlu0 %2275
  %2277 = vrot.lane.b32.xlu0 %v755, 32
  %v2278 = vpop.permute.xlu0 %2277
  %2279 = vrot.lane.b32.xlu0 %v758, 32
  %v2280 = vpop.permute.xlu0 %2279
  %2281 = vrot.lane.b32.xlu0 %v760, 32
  %v2282 = vpop.permute.xlu0 %2281
  %2283 = vrot.lane.b32.xlu0 %v763, 32
  %v2284 = vpop.permute.xlu0 %2283
  %2285 = vrot.lane.b32.xlu0 %v765, 32
  %v2286 = vpop.permute.xlu0 %2285
  %2287 = vrot.lane.b32.xlu0 %v768, 32
  %v2288 = vpop.permute.xlu0 %2287
  %2289 = vrot.lane.b32.xlu0 %v770, 32
  %v2290 = vpop.permute.xlu0 %2289
  %2291 = vrot.lane.b32.xlu0 %v773, 32
  %v2292 = vpop.permute.xlu0 %2291
  %2293 = vrot.lane.b32.xlu0 %v775, 32
  %v2294 = vpop.permute.xlu0 %2293
  %2295 = vrot.lane.b32.xlu0 %v778, 32
  %v2296 = vpop.permute.xlu0 %2295
  %2297 = vrot.lane.b32.xlu0 %v780, 32
  %v2298 = vpop.permute.xlu0 %2297
  %2299 = vrot.lane.b32.xlu0 %v783, 32
  %v2300 = vpop.permute.xlu0 %2299
  %2301 = vrot.lane.b32.xlu0 %v785, 32
  %v2302 = vpop.permute.xlu0 %2301
  %2303 = vrot.lane.b32.xlu0 %v788, 32
  %v2304 = vpop.permute.xlu0 %2303
  %2305 = vrot.lane.b32.xlu0 %v790, 32
  %v2306 = vpop.permute.xlu0 %2305
  %2307 = vrot.lane.b32.xlu0 %v814, 32
  %v2308 = vpop.permute.xlu0 %2307
  %2309 = vrot.lane.b32.xlu0 %v816, 32
  %v2310 = vpop.permute.xlu0 %2309
  %2311 = vrot.lane.b32.xlu0 %v840, 32
  %v2312 = vpop.permute.xlu0 %2311
  %2313 = vrot.lane.b32.xlu0 %v842, 32
  %v2314 = vpop.permute.xlu0 %2313
  %v2379 = vsel %vm26, %v265, %v844
  %v2380 = vsel %vm26, %v266, %v846
  %v2381 = vsel %vm26, %v268, %v848
  %v2382 = vsel %vm26, %v269, %v850
  %v2383 = vsel %vm26, %v271, %v852
  %v2384 = vsel %vm26, %v272, %v854
  %v2385 = vsel %vm26, %v274, %v856
  %v2386 = vsel %vm26, %v275, %v858
  %v2387 = vsel %vm26, %v277, %v860
  %v2388 = vsel %vm26, %v278, %v862
  %v2389 = vsel %vm26, %v280, %v864
  %v2390 = vsel %vm26, %v281, %v866
  %v2391 = vsel %vm26, %v283, %v868
  %v2392 = vsel %vm26, %v284, %v870
  %v2393 = vsel %vm26, %v286, %v872
  %v2394 = vsel %vm26, %v287, %v874
  %v2395 = vsel %vm26, %v289, %v876
  %v2396 = vsel %vm26, %v290, %v878
  %v2397 = vsel %vm26, %v292, %v880
  %v2398 = vsel %vm26, %v293, %v882
  %v2399 = vsel %vm26, %v295, %v884
  %v2400 = vsel %vm26, %v296, %v886
  %v2401 = vsel %vm26, %v298, %v888
  %v2402 = vsel %vm26, %v299, %v890
  %v2403 = vsel %vm26, %v301, %v892
  %v2404 = vsel %vm26, %v302, %v894
  %v2405 = vsel %vm26, %v304, %v896
  %v2406 = vsel %vm26, %v305, %v898
  %v2407 = vsel %vm26, %v307, %v900
  %v2408 = vsel %vm26, %v308, %v902
  %v2409 = vsel %vm26, %v310, %v904
  %v2410 = vsel %vm26, %v311, %v906
  %v2411 = vsel %vm26, %v319, %v908
  %v2412 = vsel %vm26, %v320, %v910
  %v2413 = vsel %vm26, %v322, %v912
  %v2414 = vsel %vm26, %v323, %v914
  %v2415 = vsel %vm26, %v325, %v916
  %v2416 = vsel %vm26, %v326, %v918
  %v2417 = vsel %vm26, %v328, %v920
  %v2418 = vsel %vm26, %v329, %v922
  %v2419 = vsel %vm26, %v331, %v924
  %v2420 = vsel %vm26, %v332, %v926
  %v2421 = vsel %vm26, %v334, %v928
  %v2422 = vsel %vm26, %v335, %v930
  %v2423 = vsel %vm26, %v337, %v932
  %v2424 = vsel %vm26, %v338, %v934
  %v2425 = vsel %vm26, %v340, %v936
  %v2426 = vsel %vm26, %v341, %v938
  %v2427 = vsel %vm26, %v343, %v940
  %v2428 = vsel %vm26, %v344, %v942
  %v2429 = vsel %vm26, %v346, %v944
  %v2430 = vsel %vm26, %v347, %v946
  %v2431 = vsel %vm26, %v349, %v948
  %v2432 = vsel %vm26, %v350, %v950
  %v2433 = vsel %vm26, %v352, %v952
  %v2434 = vsel %vm26, %v353, %v954
  %v2435 = vsel %vm26, %v355, %v956
  %v2436 = vsel %vm26, %v356, %v958
  %v2437 = vsel %vm26, %v358, %v960
  %v2438 = vsel %vm26, %v359, %v962
  %v2439 = vsel %vm26, %v361, %v964
  %v2440 = vsel %vm26, %v362, %v966
  %v2441 = vsel %vm26, %v364, %v968
  %v2442 = vsel %vm26, %v365, %v970
  %vm2443 = vcmask 64512
  %v2444 = vsel %vm2443, %v2379, %v1036
  %v2445 = vsel %vm2443, %v2380, %v1038
  %v2446 = vsel %vm2443, %v2381, %v1040
  %v2447 = vsel %vm2443, %v2382, %v1042
  %v2448 = vsel %vm2443, %v2383, %v1044
  %v2449 = vsel %vm2443, %v2384, %v1046
  %v2450 = vsel %vm2443, %v2385, %v1048
  %v2451 = vsel %vm2443, %v2386, %v1050
  %v2452 = vsel %vm2443, %v2387, %v1052
  %v2453 = vsel %vm2443, %v2388, %v1054
  %v2454 = vsel %vm2443, %v2389, %v1056
  %v2455 = vsel %vm2443, %v2390, %v1058
  %v2456 = vsel %vm2443, %v2391, %v1060
  %v2457 = vsel %vm2443, %v2392, %v1062
  %v2458 = vsel %vm2443, %v2393, %v1064
  %v2459 = vsel %vm2443, %v2394, %v1066
  %v2460 = vsel %vm2443, %v2395, %v1068
  %v2461 = vsel %vm2443, %v2396, %v1070
  %v2462 = vsel %vm2443, %v2397, %v1072
  %v2463 = vsel %vm2443, %v2398, %v1074
  %v2464 = vsel %vm2443, %v2399, %v1076
  %v2465 = vsel %vm2443, %v2400, %v1078
  %v2466 = vsel %vm2443, %v2401, %v1080
  %v2467 = vsel %vm2443, %v2402, %v1082
  %v2468 = vsel %vm2443, %v2403, %v1084
  %v2469 = vsel %vm2443, %v2404, %v1086
  %v2470 = vsel %vm2443, %v2405, %v1088
  %v2471 = vsel %vm2443, %v2406, %v1090
  %v2472 = vsel %vm2443, %v2407, %v1092
  %v2473 = vsel %vm2443, %v2408, %v1094
  %v2474 = vsel %vm2443, %v2409, %v1096
  %v2475 = vsel %vm2443, %v2410, %v1098
  %v2476 = vsel %vm2443, %v2411, %v1100
  %v2477 = vsel %vm2443, %v2412, %v1102
  %v2478 = vsel %vm2443, %v2413, %v1104
  %v2479 = vsel %vm2443, %v2414, %v1106
  %v2480 = vsel %vm2443, %v2415, %v1108
  %v2481 = vsel %vm2443, %v2416, %v1110
  %v2482 = vsel %vm2443, %v2417, %v1112
  %v2483 = vsel %vm2443, %v2418, %v1114
  %v2484 = vsel %vm2443, %v2419, %v1116
  %v2485 = vsel %vm2443, %v2420, %v1118
  %v2486 = vsel %vm2443, %v2421, %v1120
  %v2487 = vsel %vm2443, %v2422, %v1122
  %v2488 = vsel %vm2443, %v2423, %v1124
  %v2489 = vsel %vm2443, %v2424, %v1126
  %v2490 = vsel %vm2443, %v2425, %v1128
  %v2491 = vsel %vm2443, %v2426, %v1130
  %v2492 = vsel %vm2443, %v2427, %v1132
  %v2493 = vsel %vm2443, %v2428, %v1134
  %v2494 = vsel %vm2443, %v2429, %v1136
  %v2495 = vsel %vm2443, %v2430, %v1138
  %v2496 = vsel %vm2443, %v2431, %v1140
  %v2497 = vsel %vm2443, %v2432, %v1142
  %v2498 = vsel %vm2443, %v2433, %v1144
  %v2499 = vsel %vm2443, %v2434, %v1146
  %v2500 = vsel %vm2443, %v2435, %v1148
  %v2501 = vsel %vm2443, %v2436, %v1150
  %v2502 = vsel %vm2443, %v2437, %v1152
  %v2503 = vsel %vm2443, %v2438, %v1154
  %v2504 = vsel %vm2443, %v2439, %v1156
  %v2505 = vsel %vm2443, %v2440, %v1158
  %v2506 = vsel %vm2443, %v2441, %v1160
  %v2507 = vsel %vm2443, %v2442, %v1162
  %vm2508 = vcmask 97280
  %v2509 = vsel %vm2508, %v2444, %v1228
  %v2510 = vsel %vm2508, %v2445, %v1230
  %v2511 = vsel %vm2508, %v2446, %v1232
  %v2512 = vsel %vm2508, %v2447, %v1234
  %v2513 = vsel %vm2508, %v2448, %v1236
  %v2514 = vsel %vm2508, %v2449, %v1238
  %v2515 = vsel %vm2508, %v2450, %v1240
  %v2516 = vsel %vm2508, %v2451, %v1242
  %v2517 = vsel %vm2508, %v2452, %v1244
  %v2518 = vsel %vm2508, %v2453, %v1246
  %v2519 = vsel %vm2508, %v2454, %v1248
  %v2520 = vsel %vm2508, %v2455, %v1250
  %v2521 = vsel %vm2508, %v2456, %v1252
  %v2522 = vsel %vm2508, %v2457, %v1254
  %v2523 = vsel %vm2508, %v2458, %v1256
  %v2524 = vsel %vm2508, %v2459, %v1258
  %v2525 = vsel %vm2508, %v2460, %v1260
  %v2526 = vsel %vm2508, %v2461, %v1262
  %v2527 = vsel %vm2508, %v2462, %v1264
  %v2528 = vsel %vm2508, %v2463, %v1266
  %v2529 = vsel %vm2508, %v2464, %v1268
  %v2530 = vsel %vm2508, %v2465, %v1270
  %v2531 = vsel %vm2508, %v2466, %v1272
  %v2532 = vsel %vm2508, %v2467, %v1274
  %v2533 = vsel %vm2508, %v2468, %v1276
  %v2534 = vsel %vm2508, %v2469, %v1278
  %v2535 = vsel %vm2508, %v2470, %v1280
  %v2536 = vsel %vm2508, %v2471, %v1282
  %v2537 = vsel %vm2508, %v2472, %v1284
  %v2538 = vsel %vm2508, %v2473, %v1286
  %v2539 = vsel %vm2508, %v2474, %v1288
  %v2540 = vsel %vm2508, %v2475, %v1290
  %v2541 = vsel %vm2508, %v2476, %v1292
  %v2542 = vsel %vm2508, %v2477, %v1294
  %v2543 = vsel %vm2508, %v2478, %v1296
  %v2544 = vsel %vm2508, %v2479, %v1298
  %v2545 = vsel %vm2508, %v2480, %v1300
  %v2546 = vsel %vm2508, %v2481, %v1302
  %v2547 = vsel %vm2508, %v2482, %v1304
  %v2548 = vsel %vm2508, %v2483, %v1306
  %v2549 = vsel %vm2508, %v2484, %v1308
  %v2550 = vsel %vm2508, %v2485, %v1310
  %v2551 = vsel %vm2508, %v2486, %v1312
  %v2552 = vsel %vm2508, %v2487, %v1314
  %v2553 = vsel %vm2508, %v2488, %v1316
  %v2554 = vsel %vm2508, %v2489, %v1318
  %v2555 = vsel %vm2508, %v2490, %v1320
  %v2556 = vsel %vm2508, %v2491, %v1322
  %v2557 = vsel %vm2508, %v2492, %v1324
  %v2558 = vsel %vm2508, %v2493, %v1326
  %v2559 = vsel %vm2508, %v2494, %v1328
  %v2560 = vsel %vm2508, %v2495, %v1330
  %v2561 = vsel %vm2508, %v2496, %v1332
  %v2562 = vsel %vm2508, %v2497, %v1334
  %v2563 = vsel %vm2508, %v2498, %v1336
  %v2564 = vsel %vm2508, %v2499, %v1338
  %v2565 = vsel %vm2508, %v2500, %v1340
  %v2566 = vsel %vm2508, %v2501, %v1342
  %v2567 = vsel %vm2508, %v2502, %v1344
  %v2568 = vsel %vm2508, %v2503, %v1346
  %v2569 = vsel %vm2508, %v2504, %v1348
  %v2570 = vsel %vm2508, %v2505, %v1350
  %v2571 = vsel %vm2508, %v2506, %v1352
  %v2572 = vsel %vm2508, %v2507, %v1354
  %vm2573 = vcmask 130048
  %v2574 = vsel %vm2573, %v2509, %v1420
  %v2575 = vsel %vm2573, %v2510, %v1422
  %v2576 = vsel %vm2573, %v2511, %v1424
  %v2577 = vsel %vm2573, %v2512, %v1426
  %v2578 = vsel %vm2573, %v2513, %v1428
  %v2579 = vsel %vm2573, %v2514, %v1430
  %v2580 = vsel %vm2573, %v2515, %v1432
  %v2581 = vsel %vm2573, %v2516, %v1434
  %v2582 = vsel %vm2573, %v2517, %v1436
  %v2583 = vsel %vm2573, %v2518, %v1438
  %v2584 = vsel %vm2573, %v2519, %v1440
  %v2585 = vsel %vm2573, %v2520, %v1442
  %v2586 = vsel %vm2573, %v2521, %v1444
  %v2587 = vsel %vm2573, %v2522, %v1446
  %v2588 = vsel %vm2573, %v2523, %v1448
  %v2589 = vsel %vm2573, %v2524, %v1450
  %v2590 = vsel %vm2573, %v2525, %v1452
  %v2591 = vsel %vm2573, %v2526, %v1454
  %v2592 = vsel %vm2573, %v2527, %v1456
  %v2593 = vsel %vm2573, %v2528, %v1458
  %v2594 = vsel %vm2573, %v2529, %v1460
  %v2595 = vsel %vm2573, %v2530, %v1462
  %v2596 = vsel %vm2573, %v2531, %v1464
  %v2597 = vsel %vm2573, %v2532, %v1466
  %v2598 = vsel %vm2573, %v2533, %v1468
  %v2599 = vsel %vm2573, %v2534, %v1470
  %v2600 = vsel %vm2573, %v2535, %v1472
  %v2601 = vsel %vm2573, %v2536, %v1474
  %v2602 = vsel %vm2573, %v2537, %v1476
  %v2603 = vsel %vm2573, %v2538, %v1478
  %v2604 = vsel %vm2573, %v2539, %v1480
  %v2605 = vsel %vm2573, %v2540, %v1482
  %v2606 = vsel %vm2573, %v2541, %v1484
  %v2607 = vsel %vm2573, %v2542, %v1486
  %v2608 = vsel %vm2573, %v2543, %v1488
  %v2609 = vsel %vm2573, %v2544, %v1490
  %v2610 = vsel %vm2573, %v2545, %v1492
  %v2611 = vsel %vm2573, %v2546, %v1494
  %v2612 = vsel %vm2573, %v2547, %v1496
  %v2613 = vsel %vm2573, %v2548, %v1498
  %v2614 = vsel %vm2573, %v2549, %v1500
  %v2615 = vsel %vm2573, %v2550, %v1502
  %v2616 = vsel %vm2573, %v2551, %v1504
  %v2617 = vsel %vm2573, %v2552, %v1506
  %v2618 = vsel %vm2573, %v2553, %v1508
  %v2619 = vsel %vm2573, %v2554, %v1510
  %v2620 = vsel %vm2573, %v2555, %v1512
  %v2621 = vsel %vm2573, %v2556, %v1514
  %v2622 = vsel %vm2573, %v2557, %v1516
  %v2623 = vsel %vm2573, %v2558, %v1518
  %v2624 = vsel %vm2573, %v2559, %v1520
  %v2625 = vsel %vm2573, %v2560, %v1522
  %v2626 = vsel %vm2573, %v2561, %v1524
  %v2627 = vsel %vm2573, %v2562, %v1526
  %v2628 = vsel %vm2573, %v2563, %v1528
  %v2629 = vsel %vm2573, %v2564, %v1530
  %v2630 = vsel %vm2573, %v2565, %v1532
  %v2631 = vsel %vm2573, %v2566, %v1534
  %v2632 = vsel %vm2573, %v2567, %v1536
  %v2633 = vsel %vm2573, %v2568, %v1538
  %v2634 = vsel %vm2573, %v2569, %v1540
  %v2635 = vsel %vm2573, %v2570, %v1542
  %v2636 = vsel %vm2573, %v2571, %v1544
  %v2637 = vsel %vm2573, %v2572, %v1546
  %vm2638 = vcmask 162816
  %v2639 = vsel %vm2638, %v2574, %v1612
  %v2640 = vsel %vm2638, %v2575, %v1614
  %v2641 = vsel %vm2638, %v2576, %v1616
  %v2642 = vsel %vm2638, %v2577, %v1618
  %v2643 = vsel %vm2638, %v2578, %v1620
  %v2644 = vsel %vm2638, %v2579, %v1622
  %v2645 = vsel %vm2638, %v2580, %v1624
  %v2646 = vsel %vm2638, %v2581, %v1626
  %v2647 = vsel %vm2638, %v2582, %v1628
  %v2648 = vsel %vm2638, %v2583, %v1630
  %v2649 = vsel %vm2638, %v2584, %v1632
  %v2650 = vsel %vm2638, %v2585, %v1634
  %v2651 = vsel %vm2638, %v2586, %v1636
  %v2652 = vsel %vm2638, %v2587, %v1638
  %v2653 = vsel %vm2638, %v2588, %v1640
  %v2654 = vsel %vm2638, %v2589, %v1642
  %v2655 = vsel %vm2638, %v2590, %v1644
  %v2656 = vsel %vm2638, %v2591, %v1646
  %v2657 = vsel %vm2638, %v2592, %v1648
  %v2658 = vsel %vm2638, %v2593, %v1650
  %v2659 = vsel %vm2638, %v2594, %v1652
  %v2660 = vsel %vm2638, %v2595, %v1654
  %v2661 = vsel %vm2638, %v2596, %v1656
  %v2662 = vsel %vm2638, %v2597, %v1658
  %v2663 = vsel %vm2638, %v2598, %v1660
  %v2664 = vsel %vm2638, %v2599, %v1662
  %v2665 = vsel %vm2638, %v2600, %v1664
  %v2666 = vsel %vm2638, %v2601, %v1666
  %v2667 = vsel %vm2638, %v2602, %v1668
  %v2668 = vsel %vm2638, %v2603, %v1670
  %v2669 = vsel %vm2638, %v2604, %v1672
  %v2670 = vsel %vm2638, %v2605, %v1674
  %v2671 = vsel %vm2638, %v2606, %v1676
  %v2672 = vsel %vm2638, %v2607, %v1678
  %v2673 = vsel %vm2638, %v2608, %v1680
  %v2674 = vsel %vm2638, %v2609, %v1682
  %v2675 = vsel %vm2638, %v2610, %v1684
  %v2676 = vsel %vm2638, %v2611, %v1686
  %v2677 = vsel %vm2638, %v2612, %v1688
  %v2678 = vsel %vm2638, %v2613, %v1690
  %v2679 = vsel %vm2638, %v2614, %v1692
  %v2680 = vsel %vm2638, %v2615, %v1694
  %v2681 = vsel %vm2638, %v2616, %v1696
  %v2682 = vsel %vm2638, %v2617, %v1698
  %v2683 = vsel %vm2638, %v2618, %v1700
  %v2684 = vsel %vm2638, %v2619, %v1702
  %v2685 = vsel %vm2638, %v2620, %v1704
  %v2686 = vsel %vm2638, %v2621, %v1706
  %v2687 = vsel %vm2638, %v2622, %v1708
  %v2688 = vsel %vm2638, %v2623, %v1710
  %v2689 = vsel %vm2638, %v2624, %v1712
  %v2690 = vsel %vm2638, %v2625, %v1714
  %v2691 = vsel %vm2638, %v2626, %v1716
  %v2692 = vsel %vm2638, %v2627, %v1718
  %v2693 = vsel %vm2638, %v2628, %v1720
  %v2694 = vsel %vm2638, %v2629, %v1722
  %v2695 = vsel %vm2638, %v2630, %v1724
  %v2696 = vsel %vm2638, %v2631, %v1726
  %v2697 = vsel %vm2638, %v2632, %v1728
  %v2698 = vsel %vm2638, %v2633, %v1730
  %v2699 = vsel %vm2638, %v2634, %v1732
  %v2700 = vsel %vm2638, %v2635, %v1734
  %v2701 = vsel %vm2638, %v2636, %v1736
  %v2702 = vsel %vm2638, %v2637, %v1738
  %vm2703 = vcmask 195584
  %v2704 = vsel %vm2703, %v2639, %v1804
  %v2705 = vsel %vm2703, %v2640, %v1806
  %v2706 = vsel %vm2703, %v2641, %v1808
  %v2707 = vsel %vm2703, %v2642, %v1810
  %v2708 = vsel %vm2703, %v2643, %v1812
  %v2709 = vsel %vm2703, %v2644, %v1814
  %v2710 = vsel %vm2703, %v2645, %v1816
  %v2711 = vsel %vm2703, %v2646, %v1818
  %v2712 = vsel %vm2703, %v2647, %v1820
  %v2713 = vsel %vm2703, %v2648, %v1822
  %v2714 = vsel %vm2703, %v2649, %v1824
  %v2715 = vsel %vm2703, %v2650, %v1826
  %v2716 = vsel %vm2703, %v2651, %v1828
  %v2717 = vsel %vm2703, %v2652, %v1830
  %v2718 = vsel %vm2703, %v2653, %v1832
  %v2719 = vsel %vm2703, %v2654, %v1834
  %v2720 = vsel %vm2703, %v2655, %v1836
  %v2721 = vsel %vm2703, %v2656, %v1838
  %v2722 = vsel %vm2703, %v2657, %v1840
  %v2723 = vsel %vm2703, %v2658, %v1842
  %v2724 = vsel %vm2703, %v2659, %v1844
  %v2725 = vsel %vm2703, %v2660, %v1846
  %v2726 = vsel %vm2703, %v2661, %v1848
  %v2727 = vsel %vm2703, %v2662, %v1850
  %v2728 = vsel %vm2703, %v2663, %v1852
  %v2729 = vsel %vm2703, %v2664, %v1854
  %v2730 = vsel %vm2703, %v2665, %v1856
  %v2731 = vsel %vm2703, %v2666, %v1858
  %v2732 = vsel %vm2703, %v2667, %v1860
  %v2733 = vsel %vm2703, %v2668, %v1862
  %v2734 = vsel %vm2703, %v2669, %v1864
  %v2735 = vsel %vm2703, %v2670, %v1866
  %v2736 = vsel %vm2703, %v2671, %v1868
  %v2737 = vsel %vm2703, %v2672, %v1870
  %v2738 = vsel %vm2703, %v2673, %v1872
  %v2739 = vsel %vm2703, %v2674, %v1874
  %v2740 = vsel %vm2703, %v2675, %v1876
  %v2741 = vsel %vm2703, %v2676, %v1878
  %v2742 = vsel %vm2703, %v2677, %v1880
  %v2743 = vsel %vm2703, %v2678, %v1882
  %v2744 = vsel %vm2703, %v2679, %v1884
  %v2745 = vsel %vm2703, %v2680, %v1886
  %v2746 = vsel %vm2703, %v2681, %v1888
  %v2747 = vsel %vm2703, %v2682, %v1890
  %v2748 = vsel %vm2703, %v2683, %v1892
  %v2749 = vsel %vm2703, %v2684, %v1894
  %v2750 = vsel %vm2703, %v2685, %v1896
  %v2751 = vsel %vm2703, %v2686, %v1898
  %v2752 = vsel %vm2703, %v2687, %v1900
  %v2753 = vsel %vm2703, %v2688, %v1902
  %v2754 = vsel %vm2703, %v2689, %v1904
  %v2755 = vsel %vm2703, %v2690, %v1906
  %v2756 = vsel %vm2703, %v2691, %v1908
  %v2757 = vsel %vm2703, %v2692, %v1910
  %v2758 = vsel %vm2703, %v2693, %v1912
  %v2759 = vsel %vm2703, %v2694, %v1914
  %v2760 = vsel %vm2703, %v2695, %v1916
  %v2761 = vsel %vm2703, %v2696, %v1918
  %v2762 = vsel %vm2703, %v2697, %v1920
  %v2763 = vsel %vm2703, %v2698, %v1922
  %v2764 = vsel %vm2703, %v2699, %v1924
  %v2765 = vsel %vm2703, %v2700, %v1926
  %v2766 = vsel %vm2703, %v2701, %v1928
  %v2767 = vsel %vm2703, %v2702, %v1930
  %vm2768 = vcmask 228352
  %v2769 = vsel %vm2768, %v2704, %v1996
  %v2770 = vsel %vm2768, %v2705, %v1998
  %v2771 = vsel %vm2768, %v2706, %v2000
  %v2772 = vsel %vm2768, %v2707, %v2002
  %v2773 = vsel %vm2768, %v2708, %v2004
  %v2774 = vsel %vm2768, %v2709, %v2006
  %v2775 = vsel %vm2768, %v2710, %v2008
  %v2776 = vsel %vm2768, %v2711, %v2010
  %v2777 = vsel %vm2768, %v2712, %v2012
  %v2778 = vsel %vm2768, %v2713, %v2014
  %v2779 = vsel %vm2768, %v2714, %v2016
  %v2780 = vsel %vm2768, %v2715, %v2018
  %v2781 = vsel %vm2768, %v2716, %v2020
  %v2782 = vsel %vm2768, %v2717, %v2022
  %v2783 = vsel %vm2768, %v2718, %v2024
  %v2784 = vsel %vm2768, %v2719, %v2026
  %v2785 = vsel %vm2768, %v2720, %v2028
  %v2786 = vsel %vm2768, %v2721, %v2030
  %v2787 = vsel %vm2768, %v2722, %v2032
  %v2788 = vsel %vm2768, %v2723, %v2034
  %v2789 = vsel %vm2768, %v2724, %v2036
  %v2790 = vsel %vm2768, %v2725, %v2038
  %v2791 = vsel %vm2768, %v2726, %v2040
  %v2792 = vsel %vm2768, %v2727, %v2042
  %v2793 = vsel %vm2768, %v2728, %v2044
  %v2794 = vsel %vm2768, %v2729, %v2046
  %v2795 = vsel %vm2768, %v2730, %v2048
  %v2796 = vsel %vm2768, %v2731, %v2050
  %v2797 = vsel %vm2768, %v2732, %v2052
  %v2798 = vsel %vm2768, %v2733, %v2054
  %v2799 = vsel %vm2768, %v2734, %v2056
  %v2800 = vsel %vm2768, %v2735, %v2058
  %v2801 = vsel %vm2768, %v2736, %v2060
  %v2802 = vsel %vm2768, %v2737, %v2062
  %v2803 = vsel %vm2768, %v2738, %v2064
  %v2804 = vsel %vm2768, %v2739, %v2066
  %v2805 = vsel %vm2768, %v2740, %v2068
  %v2806 = vsel %vm2768, %v2741, %v2070
  %v2807 = vsel %vm2768, %v2742, %v2072
  %v2808 = vsel %vm2768, %v2743, %v2074
  %v2809 = vsel %vm2768, %v2744, %v2076
  %v2810 = vsel %vm2768, %v2745, %v2078
  %v2811 = vsel %vm2768, %v2746, %v2080
  %v2812 = vsel %vm2768, %v2747, %v2082
  %v2813 = vsel %vm2768, %v2748, %v2084
  %v2814 = vsel %vm2768, %v2749, %v2086
  %v2815 = vsel %vm2768, %v2750, %v2088
  %v2816 = vsel %vm2768, %v2751, %v2090
  %v2817 = vsel %vm2768, %v2752, %v2092
  %v2818 = vsel %vm2768, %v2753, %v2094
  %v2819 = vsel %vm2768, %v2754, %v2096
  %v2820 = vsel %vm2768, %v2755, %v2098
  %v2821 = vsel %vm2768, %v2756, %v2100
  %v2822 = vsel %vm2768, %v2757, %v2102
  %v2823 = vsel %vm2768, %v2758, %v2104
  %v2824 = vsel %vm2768, %v2759, %v2106
  %v2825 = vsel %vm2768, %v2760, %v2108
  %v2826 = vsel %vm2768, %v2761, %v2110
  %v2827 = vsel %vm2768, %v2762, %v2112
  %v2828 = vsel %vm2768, %v2763, %v2114
  %v2829 = vsel %vm2768, %v2764, %v2116
  %v2830 = vsel %vm2768, %v2765, %v2118
  %v2831 = vsel %vm2768, %v2766, %v2120
  %v2832 = vsel %vm2768, %v2767, %v2122
  %vm2833 = vcmask 261120
  %v2834 = vsel %vm2833, %v2769, %v2188
  %v2835 = vsel %vm2833, %v2770, %v2190
  %v2836 = vsel %vm2833, %v2771, %v2192
  %v2837 = vsel %vm2833, %v2772, %v2194
  %v2838 = vsel %vm2833, %v2773, %v2196
  %v2839 = vsel %vm2833, %v2774, %v2198
  %v2840 = vsel %vm2833, %v2775, %v2200
  %v2841 = vsel %vm2833, %v2776, %v2202
  %v2842 = vsel %vm2833, %v2777, %v2204
  %v2843 = vsel %vm2833, %v2778, %v2206
  %v2844 = vsel %vm2833, %v2779, %v2208
  %v2845 = vsel %vm2833, %v2780, %v2210
  %v2846 = vsel %vm2833, %v2781, %v2212
  %v2847 = vsel %vm2833, %v2782, %v2214
  %v2848 = vsel %vm2833, %v2783, %v2216
  %v2849 = vsel %vm2833, %v2784, %v2218
  %v2850 = vsel %vm2833, %v2785, %v2220
  %v2851 = vsel %vm2833, %v2786, %v2222
  %v2852 = vsel %vm2833, %v2787, %v2224
  %v2853 = vsel %vm2833, %v2788, %v2226
  %v2854 = vsel %vm2833, %v2789, %v2228
  %v2855 = vsel %vm2833, %v2790, %v2230
  %v2856 = vsel %vm2833, %v2791, %v2232
  %v2857 = vsel %vm2833, %v2792, %v2234
  %v2858 = vsel %vm2833, %v2793, %v2236
  %v2859 = vsel %vm2833, %v2794, %v2238
  %v2860 = vsel %vm2833, %v2795, %v2240
  %v2861 = vsel %vm2833, %v2796, %v2242
  %v2862 = vsel %vm2833, %v2797, %v2244
  %v2863 = vsel %vm2833, %v2798, %v2246
  %v2864 = vsel %vm2833, %v2799, %v2248
  %v2865 = vsel %vm2833, %v2800, %v2250
  %v2866 = vsel %vm2833, %v2801, %v2252
  %v2867 = vsel %vm2833, %v2802, %v2254
  %v2868 = vsel %vm2833, %v2803, %v2256
  %v2869 = vsel %vm2833, %v2804, %v2258
  %v2870 = vsel %vm2833, %v2805, %v2260
  %v2871 = vsel %vm2833, %v2806, %v2262
  %v2872 = vsel %vm2833, %v2807, %v2264
  %v2873 = vsel %vm2833, %v2808, %v2266
  %v2874 = vsel %vm2833, %v2809, %v2268
  %v2875 = vsel %vm2833, %v2810, %v2270
  %v2876 = vsel %vm2833, %v2811, %v2272
  %v2877 = vsel %vm2833, %v2812, %v2274
  %v2878 = vsel %vm2833, %v2813, %v2276
  %v2879 = vsel %vm2833, %v2814, %v2278
  %v2880 = vsel %vm2833, %v2815, %v2280
  %v2881 = vsel %vm2833, %v2816, %v2282
  %v2882 = vsel %vm2833, %v2817, %v2284
  %v2883 = vsel %vm2833, %v2818, %v2286
  %v2884 = vsel %vm2833, %v2819, %v2288
  %v2885 = vsel %vm2833, %v2820, %v2290
  %v2886 = vsel %vm2833, %v2821, %v2292
  %v2887 = vsel %vm2833, %v2822, %v2294
  %v2888 = vsel %vm2833, %v2823, %v2296
  %v2889 = vsel %vm2833, %v2824, %v2298
  %v2890 = vsel %vm2833, %v2825, %v2300
  %v2891 = vsel %vm2833, %v2826, %v2302
  %v2892 = vsel %vm2833, %v2827, %v2304
  %v2893 = vsel %vm2833, %v2828, %v2306
  %v2894 = vsel %vm2833, %v2829, %v2308
  %v2895 = vsel %vm2833, %v2830, %v2310
  %v2896 = vsel %vm2833, %v2831, %v2312
  %v2897 = vsel %vm2833, %v2832, %v2314
  %v2898 = vld [vmem:[%s1] sm:$0xff]
  %v2899 = vld [vmem:[%s1 + $0x8] sm:$0xff]
  %v2900 = vld [vmem:[%s1 + $0x10] sm:$0xff]
  %v2901 = vld [vmem:[%s1 + $0x18] sm:$0xff]
  %v2902 = vld [vmem:[%s1 + $0x20] sm:$0xf]
  %vm2903 = vcmask 293888
  %v2905 = vsel %vm2903, %v2834, 0
  %v2908 = vsel %vm2903, %v2835, 0
  %v2911 = vsel %vm2903, %v2836, 0
  %v2914 = vsel %vm2903, %v2837, 0
  %v2917 = vsel %vm2903, %v2838, 0
  %v2920 = vsel %vm2903, %v2839, 0
  %v2923 = vsel %vm2903, %v2840, 0
  %v2926 = vsel %vm2903, %v2841, 0
  %v2929 = vsel %vm2903, %v2842, 0
  %v2932 = vsel %vm2903, %v2843, 0
  %v2935 = vsel %vm2903, %v2844, 0
  %v2938 = vsel %vm2903, %v2845, 0
  %v2941 = vsel %vm2903, %v2846, 0
  %v2944 = vsel %vm2903, %v2847, 0
  %v2947 = vsel %vm2903, %v2848, 0
  %v2950 = vsel %vm2903, %v2849, 0
  %v2953 = vsel %vm2903, %v2850, 0
  %v2956 = vsel %vm2903, %v2851, 0
  %v2959 = vsel %vm2903, %v2852, 0
  %v2962 = vsel %vm2903, %v2853, 0
  %v2965 = vsel %vm2903, %v2854, 0
  %v2968 = vsel %vm2903, %v2855, 0
  %v2971 = vsel %vm2903, %v2856, 0
  %v2974 = vsel %vm2903, %v2857, 0
  %v2977 = vsel %vm2903, %v2858, 0
  %v2980 = vsel %vm2903, %v2859, 0
  %v2983 = vsel %vm2903, %v2860, 0
  %v2986 = vsel %vm2903, %v2861, 0
  %v2989 = vsel %vm2903, %v2862, 0
  %v2992 = vsel %vm2903, %v2863, 0
  %v2995 = vsel %vm2903, %v2864, 0
  %v2998 = vsel %vm2903, %v2865, 0
  %v3001 = vsel %vm2903, %v2866, 0
  %v3004 = vsel %vm2903, %v2867, 0
  %v3007 = vsel %vm2903, %v2868, 0
  %v3010 = vsel %vm2903, %v2869, 0
  %v3013 = vsel %vm2903, %v2870, 0
  %v3016 = vsel %vm2903, %v2871, 0
  %v3019 = vsel %vm2903, %v2872, 0
  %v3022 = vsel %vm2903, %v2873, 0
  %v3025 = vsel %vm2903, %v2874, 0
  %v3028 = vsel %vm2903, %v2875, 0
  %v3031 = vsel %vm2903, %v2876, 0
  %v3034 = vsel %vm2903, %v2877, 0
  %v3037 = vsel %vm2903, %v2878, 0
  %v3040 = vsel %vm2903, %v2879, 0
  %v3043 = vsel %vm2903, %v2880, 0
  %v3046 = vsel %vm2903, %v2881, 0
  %v3049 = vsel %vm2903, %v2882, 0
  %v3052 = vsel %vm2903, %v2883, 0
  %v3055 = vsel %vm2903, %v2884, 0
  %v3058 = vsel %vm2903, %v2885, 0
  %v3061 = vsel %vm2903, %v2886, 0
  %v3064 = vsel %vm2903, %v2887, 0
  %v3067 = vsel %vm2903, %v2888, 0
  %v3070 = vsel %vm2903, %v2889, 0
  %v3073 = vsel %vm2903, %v2890, 0
  %v3076 = vsel %vm2903, %v2891, 0
  %v3079 = vsel %vm2903, %v2892, 0
  %v3082 = vsel %vm2903, %v2893, 0
  %v3085 = vsel %vm2903, %v2894, 0
  %v3088 = vsel %vm2903, %v2895, 0
  %v3091 = vsel %vm2903, %v2896, 0
  %v3094 = vsel %vm2903, %v2897, 0
  %vm3096 = vcmask 1043456
  %v3098 = vsel %vm3096, %v2902, 0
  %3100 = vmatprep.subr.mxu0 0.0
  %3101 = vmatpush1.msra.mxu0 %v2898
  %3102 = vmatprep.subr.mxu0 0.0
  %3103 = vmatpush1.msra.mxu0 %v2899
  %3104 = vmatprep.subr.mxu0 0.0
  %3105 = vmatpush1.msra.mxu0 %v2900
  %3106 = vmatprep.subr.mxu0 0.0
  %3107 = vmatpush1.msra.mxu0 %v2901
  %3108 = vmatprep.subr.mxu0 0.0
  %3109 = vmatpush1.msra.mxu0 %v3098
  %3110 = vmatprep.subr.mxu0 0.0
  %3111 = vmatpush1.msra.mxu0 0.0
  %3112 = vmatprep.subr.mxu0 0.0
  %3113 = vmatpush1.msra.mxu0 0.0
  %3114 = vmatprep.subr.mxu0 0.0
  %3115 = vmatpush1.msra.mxu0 0.0
  %3116 = vmatprep.subr.mxu0 0.0
  %3117 = vmatpush1.msra.mxu0 0.0
  %3118 = vmatprep.subr.mxu0 0.0
  %3119 = vmatpush1.msra.mxu0 0.0
  %3120 = vmatprep.subr.mxu0 0.0
  %3121 = vmatpush1.msra.mxu0 0.0
  %3122 = vmatprep.subr.mxu0 0.0
  %3123 = vmatpush1.msra.mxu0 0.0
  %3124 = vmatprep.subr.mxu0 0.0
  %3125 = vmatpush1.msra.mxu0 0.0
  %3126 = vmatprep.subr.mxu0 0.0
  %3127 = vmatpush1.msra.mxu0 0.0
  %3128 = vmatprep.subr.mxu0 0.0
  %3129 = vmatpush1.msra.mxu0 0.0
  %3130 = vmatprep.subr.mxu0 0.0
  %3131 = vmatpush1.msra.mxu0 0.0
  %3132 = vmatprep.subr.mxu0 0.0
  %3133 = vmatpush1.msra.mxu0 0.0
  %3134 = vmatprep.subr.mxu0 0.0
  %3135 = vmatpush1.msra.mxu0 0.0
  %3136 = vmatprep.subr.mxu0 0.0
  %3137 = vmatpush1.msra.mxu0 0.0
  %3138 = vmatprep.subr.mxu0 0.0
  %3139 = vmatpush1.msra.mxu0 0.0
  %3140 = vmatprep.subr.mxu0 0.0
  %3141 = vmatpush1.msra.mxu0 0.0
  %3142 = vmatprep.subr.mxu0 0.0
  %3143 = vmatpush1.msra.mxu0 0.0
  %3144 = vmatprep.subr.mxu0 0.0
  %3145 = vmatpush1.msra.mxu0 0.0
  %3146 = vmatprep.subr.mxu0 0.0
  %3147 = vmatpush1.msra.mxu0 0.0
  %3148 = vmatprep.subr.mxu0 0.0
  %3149 = vmatpush1.msra.mxu0 0.0
  %3150 = vmatprep.subr.mxu0 0.0
  %3151 = vmatpush1.msra.mxu0 0.0
  %3152 = vmatprep.subr.mxu0 0.0
  %3153 = vmatpush1.msra.mxu0 0.0
  %3154 = vmatprep.subr.mxu0 0.0
  %3155 = vmatpush1.msra.mxu0 0.0
  %3156 = vmatprep.subr.mxu0 0.0
  %3157 = vmatpush1.msra.mxu0 0.0
  %3158 = vmatprep.subr.mxu0 0.0
  %3159 = vmatpush1.msra.mxu0 0.0
  %3160 = vmatprep.subr.mxu0 0.0
  %3161 = vmatpush1.msra.mxu0 0.0
  %3162 = vmatprep.subr.mxu0 0.0
  %3163 = vmatpush1.msra.mxu0 0.0
  %3164 = vmatprep.mubr.f32.mxu0 0.0
  %3165 = vmatmul.mubr.f32.gmra.mrb[0].mxu0 %v2905
  %v3166 = vpop.f32.mrb[0].mxu0
  %v3167 = vadd.f32 0.0, %v3166
  %v3168 = vpop.f32.mrb[0].mxu0
  %3169 = vmatprep.mubr.f32.mxu0 0.0
  %3170 = vmatmul.mubr.f32.gmra.mrb[0].mxu0 %v2908
  %v3171 = vpop.f32.mrb[0].mxu0
  %v3172 = vadd.f32 0.0, %v3171
  %v3173 = vpop.f32.mrb[0].mxu0
  %3174 = vmatprep.mubr.f32.mxu0 0.0
  %3175 = vmatmul.mubr.f32.gmra.mrb[0].mxu0 %v2911
  %v3176 = vpop.f32.mrb[0].mxu0
  %v3177 = vadd.f32 0.0, %v3176
  %v3178 = vpop.f32.mrb[0].mxu0
  %3179 = vmatprep.mubr.f32.mxu0 0.0
  %3180 = vmatmul.mubr.f32.gmra.mrb[0].mxu0 %v2914
  %v3181 = vpop.f32.mrb[0].mxu0
  %v3182 = vadd.f32 0.0, %v3181
  %v3183 = vpop.f32.mrb[0].mxu0
  %3184 = vmatprep.mubr.f32.mxu0 0.0
  %3185 = vmatmul.mubr.f32.gmra.mrb[0].mxu0 %v2917
  %v3186 = vpop.f32.mrb[0].mxu0
  %v3187 = vadd.f32 0.0, %v3186
  %v3188 = vpop.f32.mrb[0].mxu0
  %3189 = vmatprep.mubr.f32.mxu0 0.0
  %3190 = vmatmul.mubr.f32.gmra.mrb[0].mxu0 %v2920
  %v3191 = vpop.f32.mrb[0].mxu0
  %v3192 = vadd.f32 0.0, %v3191
  %v3193 = vpop.f32.mrb[0].mxu0
  %3194 = vmatprep.mubr.f32.mxu0 0.0
  %3195 = vmatmul.mubr.f32.gmra.mrb[0].mxu0 %v2923
  %v3196 = vpop.f32.mrb[0].mxu0
  %v3197 = vadd.f32 0.0, %v3196
  %v3198 = vpop.f32.mrb[0].mxu0
  %3199 = vmatprep.mubr.f32.mxu0 0.0
  %3200 = vmatmul.mubr.f32.gmra.mrb[0].mxu0 %v2926
  %v3201 = vpop.f32.mrb[0].mxu0
  %v3202 = vadd.f32 0.0, %v3201
  %v3203 = vpop.f32.mrb[0].mxu0
  %3204 = vmatprep.mubr.f32.mxu0 0.0
  %3205 = vmatmul.mubr.f32.gmra.mrb[0].mxu0 %v2929
  %v3206 = vpop.f32.mrb[0].mxu0
  %v3207 = vadd.f32 0.0, %v3206
  %v3208 = vpop.f32.mrb[0].mxu0
  %3209 = vmatprep.mubr.f32.mxu0 0.0
  %3210 = vmatmul.mubr.f32.gmra.mrb[0].mxu0 %v2932
  %v3211 = vpop.f32.mrb[0].mxu0
  %v3212 = vadd.f32 0.0, %v3211
  %v3213 = vpop.f32.mrb[0].mxu0
  %3214 = vmatprep.mubr.f32.mxu0 0.0
  %3215 = vmatmul.mubr.f32.gmra.mrb[0].mxu0 %v2935
  %v3216 = vpop.f32.mrb[0].mxu0
  %v3217 = vadd.f32 0.0, %v3216
  %v3218 = vpop.f32.mrb[0].mxu0
  %3219 = vmatprep.mubr.f32.mxu0 0.0
  %3220 = vmatmul.mubr.f32.gmra.mrb[0].mxu0 %v2938
  %v3221 = vpop.f32.mrb[0].mxu0
  %v3222 = vadd.f32 0.0, %v3221
  %v3223 = vpop.f32.mrb[0].mxu0
  %3224 = vmatprep.mubr.f32.mxu0 0.0
  %3225 = vmatmul.mubr.f32.gmra.mrb[0].mxu0 %v2941
  %v3226 = vpop.f32.mrb[0].mxu0
  %v3227 = vadd.f32 0.0, %v3226
  %v3228 = vpop.f32.mrb[0].mxu0
  %3229 = vmatprep.mubr.f32.mxu0 0.0
  %3230 = vmatmul.mubr.f32.gmra.mrb[0].mxu0 %v2944
  %v3231 = vpop.f32.mrb[0].mxu0
  %v3232 = vadd.f32 0.0, %v3231
  %v3233 = vpop.f32.mrb[0].mxu0
  %3234 = vmatprep.mubr.f32.mxu0 0.0
  %3235 = vmatmul.mubr.f32.gmra.mrb[0].mxu0 %v2947
  %v3236 = vpop.f32.mrb[0].mxu0
  %v3237 = vadd.f32 0.0, %v3236
  %v3238 = vpop.f32.mrb[0].mxu0
  %3239 = vmatprep.mubr.f32.mxu0 0.0
  %3240 = vmatmul.mubr.f32.gmra.mrb[0].mxu0 %v2950
  %v3241 = vpop.f32.mrb[0].mxu0
  %v3242 = vadd.f32 0.0, %v3241
  %v3243 = vpop.f32.mrb[0].mxu0
  %3244 = vmatprep.mubr.f32.mxu0 0.0
  %3245 = vmatmul.mubr.f32.gmra.mrb[0].mxu0 %v2953
  %v3246 = vpop.f32.mrb[0].mxu0
  %v3247 = vadd.f32 0.0, %v3246
  %v3248 = vpop.f32.mrb[0].mxu0
  %3249 = vmatprep.mubr.f32.mxu0 0.0
  %3250 = vmatmul.mubr.f32.gmra.mrb[0].mxu0 %v2956
  %v3251 = vpop.f32.mrb[0].mxu0
  %v3252 = vadd.f32 0.0, %v3251
  %v3253 = vpop.f32.mrb[0].mxu0
  %3254 = vmatprep.mubr.f32.mxu0 0.0
  %3255 = vmatmul.mubr.f32.gmra.mrb[0].mxu0 %v2959
  %v3256 = vpop.f32.mrb[0].mxu0
  %v3257 = vadd.f32 0.0, %v3256
  %v3258 = vpop.f32.mrb[0].mxu0
  %3259 = vmatprep.mubr.f32.mxu0 0.0
  %3260 = vmatmul.mubr.f32.gmra.mrb[0].mxu0 %v2962
  %v3261 = vpop.f32.mrb[0].mxu0
  %v3262 = vadd.f32 0.0, %v3261
  %v3263 = vpop.f32.mrb[0].mxu0
  %3264 = vmatprep.mubr.f32.mxu0 0.0
  %3265 = vmatmul.mubr.f32.gmra.mrb[0].mxu0 %v2965
  %v3266 = vpop.f32.mrb[0].mxu0
  %v3267 = vadd.f32 0.0, %v3266
  %v3268 = vpop.f32.mrb[0].mxu0
  %3269 = vmatprep.mubr.f32.mxu0 0.0
  %3270 = vmatmul.mubr.f32.gmra.mrb[0].mxu0 %v2968
  %v3271 = vpop.f32.mrb[0].mxu0
  %v3272 = vadd.f32 0.0, %v3271
  %v3273 = vpop.f32.mrb[0].mxu0
  %3274 = vmatprep.mubr.f32.mxu0 0.0
  %3275 = vmatmul.mubr.f32.gmra.mrb[0].mxu0 %v2971
  %v3276 = vpop.f32.mrb[0].mxu0
  %v3277 = vadd.f32 0.0, %v3276
  %v3278 = vpop.f32.mrb[0].mxu0
  %3279 = vmatprep.mubr.f32.mxu0 0.0
  %3280 = vmatmul.mubr.f32.gmra.mrb[0].mxu0 %v2974
  %v3281 = vpop.f32.mrb[0].mxu0
  %v3282 = vadd.f32 0.0, %v3281
  %v3283 = vpop.f32.mrb[0].mxu0
  %3284 = vmatprep.mubr.f32.mxu0 0.0
  %3285 = vmatmul.mubr.f32.gmra.mrb[0].mxu0 %v2977
  %v3286 = vpop.f32.mrb[0].mxu0
  %v3287 = vadd.f32 0.0, %v3286
  %v3288 = vpop.f32.mrb[0].mxu0
  %3289 = vmatprep.mubr.f32.mxu0 0.0
  %3290 = vmatmul.mubr.f32.gmra.mrb[0].mxu0 %v2980
  %v3291 = vpop.f32.mrb[0].mxu0
  %v3292 = vadd.f32 0.0, %v3291
  %v3293 = vpop.f32.mrb[0].mxu0
  %3294 = vmatprep.mubr.f32.mxu0 0.0
  %3295 = vmatmul.mubr.f32.gmra.mrb[0].mxu0 %v2983
  %v3296 = vpop.f32.mrb[0].mxu0
  %v3297 = vadd.f32 0.0, %v3296
  %v3298 = vpop.f32.mrb[0].mxu0
  %3299 = vmatprep.mubr.f32.mxu0 0.0
  %3300 = vmatmul.mubr.f32.gmra.mrb[0].mxu0 %v2986
  %v3301 = vpop.f32.mrb[0].mxu0
  %v3302 = vadd.f32 0.0, %v3301
  %v3303 = vpop.f32.mrb[0].mxu0
  %3304 = vmatprep.mubr.f32.mxu0 0.0
  %3305 = vmatmul.mubr.f32.gmra.mrb[0].mxu0 %v2989
  %v3306 = vpop.f32.mrb[0].mxu0
  %v3307 = vadd.f32 0.0, %v3306
  %v3308 = vpop.f32.mrb[0].mxu0
  %3309 = vmatprep.mubr.f32.mxu0 0.0
  %3310 = vmatmul.mubr.f32.gmra.mrb[0].mxu0 %v2992
  %v3311 = vpop.f32.mrb[0].mxu0
  %v3312 = vadd.f32 0.0, %v3311
  %v3313 = vpop.f32.mrb[0].mxu0
  %3314 = vmatprep.mubr.f32.mxu0 0.0
  %3315 = vmatmul.mubr.f32.gmra.mrb[0].mxu0 %v2995
  %v3316 = vpop.f32.mrb[0].mxu0
  %v3317 = vadd.f32 0.0, %v3316
  %v3318 = vpop.f32.mrb[0].mxu0
  %3319 = vmatprep.mubr.f32.mxu0 0.0
  %3320 = vmatmul.mubr.f32.gmra.mrb[0].mxu0 %v2998
  %v3321 = vpop.f32.mrb[0].mxu0
  %v3322 = vadd.f32 0.0, %v3321
  %v3323 = vpop.f32.mrb[0].mxu0
  %3324 = vmatprep.mubr.f32.mxu0 0.0
  %3325 = vmatmul.mubr.f32.gmra.mrb[0].mxu0 %v3001
  %v3326 = vpop.f32.mrb[0].mxu0
  %v3327 = vadd.f32 0.0, %v3326
  %v3328 = vpop.f32.mrb[0].mxu0
  %3329 = vmatprep.mubr.f32.mxu0 0.0
  %3330 = vmatmul.mubr.f32.gmra.mrb[0].mxu0 %v3004
  %v3331 = vpop.f32.mrb[0].mxu0
  %v3332 = vadd.f32 0.0, %v3331
  %v3333 = vpop.f32.mrb[0].mxu0
  %3334 = vmatprep.mubr.f32.mxu0 0.0
  %3335 = vmatmul.mubr.f32.gmra.mrb[0].mxu0 %v3007
  %v3336 = vpop.f32.mrb[0].mxu0
  %v3337 = vadd.f32 0.0, %v3336
  %v3338 = vpop.f32.mrb[0].mxu0
  %3339 = vmatprep.mubr.f32.mxu0 0.0
  %3340 = vmatmul.mubr.f32.gmra.mrb[0].mxu0 %v3010
  %v3341 = vpop.f32.mrb[0].mxu0
  %v3342 = vadd.f32 0.0, %v3341
  %v3343 = vpop.f32.mrb[0].mxu0
  %3344 = vmatprep.mubr.f32.mxu0 0.0
  %3345 = vmatmul.mubr.f32.gmra.mrb[0].mxu0 %v3013
  %v3346 = vpop.f32.mrb[0].mxu0
  %v3347 = vadd.f32 0.0, %v3346
  %v3348 = vpop.f32.mrb[0].mxu0
  %3349 = vmatprep.mubr.f32.mxu0 0.0
  %3350 = vmatmul.mubr.f32.gmra.mrb[0].mxu0 %v3016
  %v3351 = vpop.f32.mrb[0].mxu0
  %v3352 = vadd.f32 0.0, %v3351
  %v3353 = vpop.f32.mrb[0].mxu0
  %3354 = vmatprep.mubr.f32.mxu0 0.0
  %3355 = vmatmul.mubr.f32.gmra.mrb[0].mxu0 %v3019
  %v3356 = vpop.f32.mrb[0].mxu0
  %v3357 = vadd.f32 0.0, %v3356
  %v3358 = vpop.f32.mrb[0].mxu0
  %3359 = vmatprep.mubr.f32.mxu0 0.0
  %3360 = vmatmul.mubr.f32.gmra.mrb[0].mxu0 %v3022
  %v3361 = vpop.f32.mrb[0].mxu0
  %v3362 = vadd.f32 0.0, %v3361
  %v3363 = vpop.f32.mrb[0].mxu0
  %3364 = vmatprep.mubr.f32.mxu0 0.0
  %3365 = vmatmul.mubr.f32.gmra.mrb[0].mxu0 %v3025
  %v3366 = vpop.f32.mrb[0].mxu0
  %v3367 = vadd.f32 0.0, %v3366
  %v3368 = vpop.f32.mrb[0].mxu0
  %3369 = vmatprep.mubr.f32.mxu0 0.0
  %3370 = vmatmul.mubr.f32.gmra.mrb[0].mxu0 %v3028
  %v3371 = vpop.f32.mrb[0].mxu0
  %v3372 = vadd.f32 0.0, %v3371
  %v3373 = vpop.f32.mrb[0].mxu0
  %3374 = vmatprep.mubr.f32.mxu0 0.0
  %3375 = vmatmul.mubr.f32.gmra.mrb[0].mxu0 %v3031
  %v3376 = vpop.f32.mrb[0].mxu0
  %v3377 = vadd.f32 0.0, %v3376
  %v3378 = vpop.f32.mrb[0].mxu0
  %3379 = vmatprep.mubr.f32.mxu0 0.0
  %3380 = vmatmul.mubr.f32.gmra.mrb[0].mxu0 %v3034
  %v3381 = vpop.f32.mrb[0].mxu0
  %v3382 = vadd.f32 0.0, %v3381
  %v3383 = vpop.f32.mrb[0].mxu0
  %3384 = vmatprep.mubr.f32.mxu0 0.0
  %3385 = vmatmul.mubr.f32.gmra.mrb[0].mxu0 %v3037
  %v3386 = vpop.f32.mrb[0].mxu0
  %v3387 = vadd.f32 0.0, %v3386
  %v3388 = vpop.f32.mrb[0].mxu0
  %3389 = vmatprep.mubr.f32.mxu0 0.0
  %3390 = vmatmul.mubr.f32.gmra.mrb[0].mxu0 %v3040
  %v3391 = vpop.f32.mrb[0].mxu0
  %v3392 = vadd.f32 0.0, %v3391
  %v3393 = vpop.f32.mrb[0].mxu0
  %3394 = vmatprep.mubr.f32.mxu0 0.0
  %3395 = vmatmul.mubr.f32.gmra.mrb[0].mxu0 %v3043
  %v3396 = vpop.f32.mrb[0].mxu0
  %v3397 = vadd.f32 0.0, %v3396
  %v3398 = vpop.f32.mrb[0].mxu0
  %3399 = vmatprep.mubr.f32.mxu0 0.0
  %3400 = vmatmul.mubr.f32.gmra.mrb[0].mxu0 %v3046
  %v3401 = vpop.f32.mrb[0].mxu0
  %v3402 = vadd.f32 0.0, %v3401
  %v3403 = vpop.f32.mrb[0].mxu0
  %3404 = vmatprep.mubr.f32.mxu0 0.0
  %3405 = vmatmul.mubr.f32.gmra.mrb[0].mxu0 %v3049
  %v3406 = vpop.f32.mrb[0].mxu0
  %v3407 = vadd.f32 0.0, %v3406
  %v3408 = vpop.f32.mrb[0].mxu0
  %3409 = vmatprep.mubr.f32.mxu0 0.0
  %3410 = vmatmul.mubr.f32.gmra.mrb[0].mxu0 %v3052
  %v3411 = vpop.f32.mrb[0].mxu0
  %v3412 = vadd.f32 0.0, %v3411
  %v3413 = vpop.f32.mrb[0].mxu0
  %3414 = vmatprep.mubr.f32.mxu0 0.0
  %3415 = vmatmul.mubr.f32.gmra.mrb[0].mxu0 %v3055
  %v3416 = vpop.f32.mrb[0].mxu0
  %v3417 = vadd.f32 0.0, %v3416
  %v3418 = vpop.f32.mrb[0].mxu0
  %3419 = vmatprep.mubr.f32.mxu0 0.0
  %3420 = vmatmul.mubr.f32.gmra.mrb[0].mxu0 %v3058
  %v3421 = vpop.f32.mrb[0].mxu0
  %v3422 = vadd.f32 0.0, %v3421
  %v3423 = vpop.f32.mrb[0].mxu0
  %3424 = vmatprep.mubr.f32.mxu0 0.0
  %3425 = vmatmul.mubr.f32.gmra.mrb[0].mxu0 %v3061
  %v3426 = vpop.f32.mrb[0].mxu0
  %v3427 = vadd.f32 0.0, %v3426
  %v3428 = vpop.f32.mrb[0].mxu0
  %3429 = vmatprep.mubr.f32.mxu0 0.0
  %3430 = vmatmul.mubr.f32.gmra.mrb[0].mxu0 %v3064
  %v3431 = vpop.f32.mrb[0].mxu0
  %v3432 = vadd.f32 0.0, %v3431
  %v3433 = vpop.f32.mrb[0].mxu0
  %3434 = vmatprep.mubr.f32.mxu0 0.0
  %3435 = vmatmul.mubr.f32.gmra.mrb[0].mxu0 %v3067
  %v3436 = vpop.f32.mrb[0].mxu0
  %v3437 = vadd.f32 0.0, %v3436
  %v3438 = vpop.f32.mrb[0].mxu0
  %3439 = vmatprep.mubr.f32.mxu0 0.0
  %3440 = vmatmul.mubr.f32.gmra.mrb[0].mxu0 %v3070
  %v3441 = vpop.f32.mrb[0].mxu0
  %v3442 = vadd.f32 0.0, %v3441
  %v3443 = vpop.f32.mrb[0].mxu0
  %3444 = vmatprep.mubr.f32.mxu0 0.0
  %3445 = vmatmul.mubr.f32.gmra.mrb[0].mxu0 %v3073
  %v3446 = vpop.f32.mrb[0].mxu0
  %v3447 = vadd.f32 0.0, %v3446
  %v3448 = vpop.f32.mrb[0].mxu0
  %3449 = vmatprep.mubr.f32.mxu0 0.0
  %3450 = vmatmul.mubr.f32.gmra.mrb[0].mxu0 %v3076
  %v3451 = vpop.f32.mrb[0].mxu0
  %v3452 = vadd.f32 0.0, %v3451
  %v3453 = vpop.f32.mrb[0].mxu0
  %3454 = vmatprep.mubr.f32.mxu0 0.0
  %3455 = vmatmul.mubr.f32.gmra.mrb[0].mxu0 %v3079
  %v3456 = vpop.f32.mrb[0].mxu0
  %v3457 = vadd.f32 0.0, %v3456
  %v3458 = vpop.f32.mrb[0].mxu0
  %3459 = vmatprep.mubr.f32.mxu0 0.0
  %3460 = vmatmul.mubr.f32.gmra.mrb[0].mxu0 %v3082
  %v3461 = vpop.f32.mrb[0].mxu0
  %v3462 = vadd.f32 0.0, %v3461
  %v3463 = vpop.f32.mrb[0].mxu0
  %3464 = vmatprep.mubr.f32.mxu0 0.0
  %3465 = vmatmul.mubr.f32.gmra.mrb[0].mxu0 %v3085
  %v3466 = vpop.f32.mrb[0].mxu0
  %v3467 = vadd.f32 0.0, %v3466
  %v3468 = vpop.f32.mrb[0].mxu0
  %3469 = vmatprep.mubr.f32.mxu0 0.0
  %3470 = vmatmul.mubr.f32.gmra.mrb[0].mxu0 %v3088
  %v3471 = vpop.f32.mrb[0].mxu0
  %v3472 = vadd.f32 0.0, %v3471
  %v3473 = vpop.f32.mrb[0].mxu0
  %3474 = vmatprep.mubr.f32.mxu0 0.0
  %3475 = vmatmul.mubr.f32.gmra.mrb[0].mxu0 %v3091
  %v3476 = vpop.f32.mrb[0].mxu0
  %v3477 = vadd.f32 0.0, %v3476
  %v3478 = vpop.f32.mrb[0].mxu0
  %3479 = vmatprep.mubr.f32.mxu0 0.0
  %3480 = vmatmul.mubr.f32.gmra.mrb[0].mxu0 %v3094
  %v3481 = vpop.f32.mrb[0].mxu0
  %v3482 = vadd.f32 0.0, %v3481
  %v3483 = vpop.f32.mrb[0].mxu0
  %3484 = vdwg.mxu0
  %v3485 = vld [vmem:[%s3] sm:$0x1]
  %v3486 = vld [vmem:[%s4] sm:$0x1]
  %v3487 = vsel %vm26, %v3167, 0.0
  %v3488 = vsel %vm26, %v3172, 0.0
  %v3489 = vadd.f32 %v3487, %v3488
  %v3490 = vsel %vm26, %v3177, 0.0
  %v3491 = vadd.f32 %v3489, %v3490
  %v3492 = vsel %vm26, %v3182, 0.0
  %v3493 = vadd.f32 %v3491, %v3492
  %v3494 = vsel %vm26, %v3187, 0.0
  %v3495 = vadd.f32 %v3493, %v3494
  %v3496 = vsel %vm26, %v3192, 0.0
  %v3497 = vadd.f32 %v3495, %v3496
  %v3498 = vsel %vm26, %v3197, 0.0
  %v3499 = vadd.f32 %v3497, %v3498
  %v3500 = vsel %vm26, %v3202, 0.0
  %v3501 = vadd.f32 %v3499, %v3500
  %v3502 = vsel %vm26, %v3207, 0.0
  %v3503 = vadd.f32 %v3501, %v3502
  %v3504 = vsel %vm26, %v3212, 0.0
  %v3505 = vadd.f32 %v3503, %v3504
  %v3506 = vsel %vm26, %v3217, 0.0
  %v3507 = vadd.f32 %v3505, %v3506
  %v3508 = vsel %vm26, %v3222, 0.0
  %v3509 = vadd.f32 %v3507, %v3508
  %v3510 = vsel %vm26, %v3227, 0.0
  %v3511 = vadd.f32 %v3509, %v3510
  %v3512 = vsel %vm26, %v3232, 0.0
  %v3513 = vadd.f32 %v3511, %v3512
  %v3514 = vsel %vm26, %v3237, 0.0
  %v3515 = vadd.f32 %v3513, %v3514
  %v3516 = vsel %vm26, %v3242, 0.0
  %v3517 = vadd.f32 %v3515, %v3516
  %v3518 = vsel %vm26, %v3247, 0.0
  %v3519 = vadd.f32 %v3517, %v3518
  %v3520 = vsel %vm26, %v3252, 0.0
  %v3521 = vadd.f32 %v3519, %v3520
  %v3522 = vsel %vm26, %v3257, 0.0
  %v3523 = vadd.f32 %v3521, %v3522
  %v3524 = vsel %vm26, %v3262, 0.0
  %v3525 = vadd.f32 %v3523, %v3524
  %v3526 = vsel %vm26, %v3267, 0.0
  %v3527 = vadd.f32 %v3525, %v3526
  %v3528 = vsel %vm26, %v3272, 0.0
  %v3529 = vadd.f32 %v3527, %v3528
  %v3530 = vsel %vm26, %v3277, 0.0
  %v3531 = vadd.f32 %v3529, %v3530
  %v3532 = vsel %vm26, %v3282, 0.0
  %v3533 = vadd.f32 %v3531, %v3532
  %v3534 = vsel %vm26, %v3287, 0.0
  %v3535 = vadd.f32 %v3533, %v3534
  %v3536 = vsel %vm26, %v3292, 0.0
  %v3537 = vadd.f32 %v3535, %v3536
  %v3538 = vsel %vm26, %v3297, 0.0
  %v3539 = vadd.f32 %v3537, %v3538
  %v3540 = vsel %vm26, %v3302, 0.0
  %v3541 = vadd.f32 %v3539, %v3540
  %v3542 = vsel %vm26, %v3307, 0.0
  %v3543 = vadd.f32 %v3541, %v3542
  %v3544 = vsel %vm26, %v3312, 0.0
  %v3545 = vadd.f32 %v3543, %v3544
  %v3546 = vsel %vm26, %v3317, 0.0
  %v3547 = vadd.f32 %v3545, %v3546
  %v3548 = vsel %vm26, %v3322, 0.0
  %v3549 = vadd.f32 %v3547, %v3548
  %v3550 = vsel %vm26, %v3327, 0.0
  %v3551 = vadd.f32 %v3549, %v3550
  %v3552 = vsel %vm26, %v3332, 0.0
  %v3553 = vadd.f32 %v3551, %v3552
  %v3554 = vsel %vm26, %v3337, 0.0
  %v3555 = vadd.f32 %v3553, %v3554
  %v3556 = vsel %vm26, %v3342, 0.0
  %v3557 = vadd.f32 %v3555, %v3556
  %v3558 = vsel %vm26, %v3347, 0.0
  %v3559 = vadd.f32 %v3557, %v3558
  %v3560 = vsel %vm26, %v3352, 0.0
  %v3561 = vadd.f32 %v3559, %v3560
  %v3562 = vsel %vm26, %v3357, 0.0
  %v3563 = vadd.f32 %v3561, %v3562
  %v3564 = vsel %vm26, %v3362, 0.0
  %v3565 = vadd.f32 %v3563, %v3564
  %v3566 = vsel %vm26, %v3367, 0.0
  %v3567 = vadd.f32 %v3565, %v3566
  %v3568 = vsel %vm26, %v3372, 0.0
  %v3569 = vadd.f32 %v3567, %v3568
  %v3570 = vsel %vm26, %v3377, 0.0
  %v3571 = vadd.f32 %v3569, %v3570
  %v3572 = vsel %vm26, %v3382, 0.0
  %v3573 = vadd.f32 %v3571, %v3572
  %v3574 = vsel %vm26, %v3387, 0.0
  %v3575 = vadd.f32 %v3573, %v3574
  %v3576 = vsel %vm26, %v3392, 0.0
  %v3577 = vadd.f32 %v3575, %v3576
  %v3578 = vsel %vm26, %v3397, 0.0
  %v3579 = vadd.f32 %v3577, %v3578
  %v3580 = vsel %vm26, %v3402, 0.0
  %v3581 = vadd.f32 %v3579, %v3580
  %v3582 = vsel %vm26, %v3407, 0.0
  %v3583 = vadd.f32 %v3581, %v3582
  %v3584 = vsel %vm26, %v3412, 0.0
  %v3585 = vadd.f32 %v3583, %v3584
  %v3586 = vsel %vm26, %v3417, 0.0
  %v3587 = vadd.f32 %v3585, %v3586
  %v3588 = vsel %vm26, %v3422, 0.0
  %v3589 = vadd.f32 %v3587, %v3588
  %v3590 = vsel %vm26, %v3427, 0.0
  %v3591 = vadd.f32 %v3589, %v3590
  %v3592 = vsel %vm26, %v3432, 0.0
  %v3593 = vadd.f32 %v3591, %v3592
  %v3594 = vsel %vm26, %v3437, 0.0
  %v3595 = vadd.f32 %v3593, %v3594
  %v3596 = vsel %vm26, %v3442, 0.0
  %v3597 = vadd.f32 %v3595, %v3596
  %v3598 = vsel %vm26, %v3447, 0.0
  %v3599 = vadd.f32 %v3597, %v3598
  %v3600 = vsel %vm26, %v3452, 0.0
  %v3601 = vadd.f32 %v3599, %v3600
  %v3602 = vsel %vm26, %v3457, 0.0
  %v3603 = vadd.f32 %v3601, %v3602
  %v3604 = vsel %vm26, %v3462, 0.0
  %v3605 = vadd.f32 %v3603, %v3604
  %v3606 = vsel %vm26, %v3467, 0.0
  %v3607 = vadd.f32 %v3605, %v3606
  %v3608 = vsel %vm26, %v3472, 0.0
  %v3609 = vadd.f32 %v3607, %v3608
  %v3610 = vsel %vm26, %v3477, 0.0
  %v3611 = vadd.f32 %v3609, %v3610
  %v3612 = vsel %vm26, %v3482, 0.0
  %v3613 = vadd.f32 %v3611, %v3612
  %v3614 = vrot.slane %v3613, 4
  %v3615 = vadd.f32 %v3613, %v3614
  %v3616 = vrot.slane %v3615, 2
  %v3617 = vadd.f32 %v3615, %v3616
  %v3618 = vrot.slane %v3617, 1
  %v3619 = vadd.f32 %v3617, %v3618
  %v3620 = vrcp.pop 512.0
  %v3621 = vmul.f32 %v3619, %v3620
  %v3622 = vsub.f32 %v3167, %v3621
  %v3623 = vsub.f32 %v3172, %v3621
  %v3624 = vsub.f32 %v3177, %v3621
  %v3625 = vsub.f32 %v3182, %v3621
  %v3626 = vsub.f32 %v3187, %v3621
  %v3627 = vsub.f32 %v3192, %v3621
  %v3628 = vsub.f32 %v3197, %v3621
  %v3629 = vsub.f32 %v3202, %v3621
  %v3630 = vsub.f32 %v3207, %v3621
  %v3631 = vsub.f32 %v3212, %v3621
  %v3632 = vsub.f32 %v3217, %v3621
  %v3633 = vsub.f32 %v3222, %v3621
  %v3634 = vsub.f32 %v3227, %v3621
  %v3635 = vsub.f32 %v3232, %v3621
  %v3636 = vsub.f32 %v3237, %v3621
  %v3637 = vsub.f32 %v3242, %v3621
  %v3638 = vsub.f32 %v3247, %v3621
  %v3639 = vsub.f32 %v3252, %v3621
  %v3640 = vsub.f32 %v3257, %v3621
  %v3641 = vsub.f32 %v3262, %v3621
  %v3642 = vsub.f32 %v3267, %v3621
  %v3643 = vsub.f32 %v3272, %v3621
  %v3644 = vsub.f32 %v3277, %v3621
  %v3645 = vsub.f32 %v3282, %v3621
  %v3646 = vsub.f32 %v3287, %v3621
  %v3647 = vsub.f32 %v3292, %v3621
  %v3648 = vsub.f32 %v3297, %v3621
  %v3649 = vsub.f32 %v3302, %v3621
  %v3650 = vsub.f32 %v3307, %v3621
  %v3651 = vsub.f32 %v3312, %v3621
  %v3652 = vsub.f32 %v3317, %v3621
  %v3653 = vsub.f32 %v3322, %v3621
  %v3654 = vsub.f32 %v3327, %v3621
  %v3655 = vsub.f32 %v3332, %v3621
  %v3656 = vsub.f32 %v3337, %v3621
  %v3657 = vsub.f32 %v3342, %v3621
  %v3658 = vsub.f32 %v3347, %v3621
  %v3659 = vsub.f32 %v3352, %v3621
  %v3660 = vsub.f32 %v3357, %v3621
  %v3661 = vsub.f32 %v3362, %v3621
  %v3662 = vsub.f32 %v3367, %v3621
  %v3663 = vsub.f32 %v3372, %v3621
  %v3664 = vsub.f32 %v3377, %v3621
  %v3665 = vsub.f32 %v3382, %v3621
  %v3666 = vsub.f32 %v3387, %v3621
  %v3667 = vsub.f32 %v3392, %v3621
  %v3668 = vsub.f32 %v3397, %v3621
  %v3669 = vsub.f32 %v3402, %v3621
  %v3670 = vsub.f32 %v3407, %v3621
  %v3671 = vsub.f32 %v3412, %v3621
  %v3672 = vsub.f32 %v3417, %v3621
  %v3673 = vsub.f32 %v3422, %v3621
  %v3674 = vsub.f32 %v3427, %v3621
  %v3675 = vsub.f32 %v3432, %v3621
  %v3676 = vsub.f32 %v3437, %v3621
  %v3677 = vsub.f32 %v3442, %v3621
  %v3678 = vsub.f32 %v3447, %v3621
  %v3679 = vsub.f32 %v3452, %v3621
  %v3680 = vsub.f32 %v3457, %v3621
  %v3681 = vsub.f32 %v3462, %v3621
  %v3682 = vsub.f32 %v3467, %v3621
  %v3683 = vsub.f32 %v3472, %v3621
  %v3684 = vsub.f32 %v3477, %v3621
  %v3685 = vsub.f32 %v3482, %v3621
  %v3686 = vmul.f32 %v3622, %v3622
  %v3687 = vmul.f32 %v3623, %v3623
  %v3688 = vmul.f32 %v3624, %v3624
  %v3689 = vmul.f32 %v3625, %v3625
  %v3690 = vmul.f32 %v3626, %v3626
  %v3691 = vmul.f32 %v3627, %v3627
  %v3692 = vmul.f32 %v3628, %v3628
  %v3693 = vmul.f32 %v3629, %v3629
  %v3694 = vmul.f32 %v3630, %v3630
  %v3695 = vmul.f32 %v3631, %v3631
  %v3696 = vmul.f32 %v3632, %v3632
  %v3697 = vmul.f32 %v3633, %v3633
  %v3698 = vmul.f32 %v3634, %v3634
  %v3699 = vmul.f32 %v3635, %v3635
  %v3700 = vmul.f32 %v3636, %v3636
  %v3701 = vmul.f32 %v3637, %v3637
  %v3702 = vmul.f32 %v3638, %v3638
  %v3703 = vmul.f32 %v3639, %v3639
  %v3704 = vmul.f32 %v3640, %v3640
  %v3705 = vmul.f32 %v3641, %v3641
  %v3706 = vmul.f32 %v3642, %v3642
  %v3707 = vmul.f32 %v3643, %v3643
  %v3708 = vmul.f32 %v3644, %v3644
  %v3709 = vmul.f32 %v3645, %v3645
  %v3710 = vmul.f32 %v3646, %v3646
  %v3711 = vmul.f32 %v3647, %v3647
  %v3712 = vmul.f32 %v3648, %v3648
  %v3713 = vmul.f32 %v3649, %v3649
  %v3714 = vmul.f32 %v3650, %v3650
  %v3715 = vmul.f32 %v3651, %v3651
  %v3716 = vmul.f32 %v3652, %v3652
  %v3717 = vmul.f32 %v3653, %v3653
  %v3718 = vmul.f32 %v3654, %v3654
  %v3719 = vmul.f32 %v3655, %v3655
  %v3720 = vmul.f32 %v3656, %v3656
  %v3721 = vmul.f32 %v3657, %v3657
  %v3722 = vmul.f32 %v3658, %v3658
  %v3723 = vmul.f32 %v3659, %v3659
  %v3724 = vmul.f32 %v3660, %v3660
  %v3725 = vmul.f32 %v3661, %v3661
  %v3726 = vmul.f32 %v3662, %v3662
  %v3727 = vmul.f32 %v3663, %v3663
  %v3728 = vmul.f32 %v3664, %v3664
  %v3729 = vmul.f32 %v3665, %v3665
  %v3730 = vmul.f32 %v3666, %v3666
  %v3731 = vmul.f32 %v3667, %v3667
  %v3732 = vmul.f32 %v3668, %v3668
  %v3733 = vmul.f32 %v3669, %v3669
  %v3734 = vmul.f32 %v3670, %v3670
  %v3735 = vmul.f32 %v3671, %v3671
  %v3736 = vmul.f32 %v3672, %v3672
  %v3737 = vmul.f32 %v3673, %v3673
  %v3738 = vmul.f32 %v3674, %v3674
  %v3739 = vmul.f32 %v3675, %v3675
  %v3740 = vmul.f32 %v3676, %v3676
  %v3741 = vmul.f32 %v3677, %v3677
  %v3742 = vmul.f32 %v3678, %v3678
  %v3743 = vmul.f32 %v3679, %v3679
  %v3744 = vmul.f32 %v3680, %v3680
  %v3745 = vmul.f32 %v3681, %v3681
  %v3746 = vmul.f32 %v3682, %v3682
  %v3747 = vmul.f32 %v3683, %v3683
  %v3748 = vmul.f32 %v3684, %v3684
  %v3749 = vmul.f32 %v3685, %v3685
  %v3750 = vsel %vm26, %v3686, 0.0
  %v3751 = vsel %vm26, %v3687, 0.0
  %v3752 = vadd.f32 %v3750, %v3751
  %v3753 = vsel %vm26, %v3688, 0.0
  %v3754 = vadd.f32 %v3752, %v3753
  %v3755 = vsel %vm26, %v3689, 0.0
  %v3756 = vadd.f32 %v3754, %v3755
  %v3757 = vsel %vm26, %v3690, 0.0
  %v3758 = vadd.f32 %v3756, %v3757
  %v3759 = vsel %vm26, %v3691, 0.0
  %v3760 = vadd.f32 %v3758, %v3759
  %v3761 = vsel %vm26, %v3692, 0.0
  %v3762 = vadd.f32 %v3760, %v3761
  %v3763 = vsel %vm26, %v3693, 0.0
  %v3764 = vadd.f32 %v3762, %v3763
  %v3765 = vsel %vm26, %v3694, 0.0
  %v3766 = vadd.f32 %v3764, %v3765
  %v3767 = vsel %vm26, %v3695, 0.0
  %v3768 = vadd.f32 %v3766, %v3767
  %v3769 = vsel %vm26, %v3696, 0.0
  %v3770 = vadd.f32 %v3768, %v3769
  %v3771 = vsel %vm26, %v3697, 0.0
  %v3772 = vadd.f32 %v3770, %v3771
  %v3773 = vsel %vm26, %v3698, 0.0
  %v3774 = vadd.f32 %v3772, %v3773
  %v3775 = vsel %vm26, %v3699, 0.0
  %v3776 = vadd.f32 %v3774, %v3775
  %v3777 = vsel %vm26, %v3700, 0.0
  %v3778 = vadd.f32 %v3776, %v3777
  %v3779 = vsel %vm26, %v3701, 0.0
  %v3780 = vadd.f32 %v3778, %v3779
  %v3781 = vsel %vm26, %v3702, 0.0
  %v3782 = vadd.f32 %v3780, %v3781
  %v3783 = vsel %vm26, %v3703, 0.0
  %v3784 = vadd.f32 %v3782, %v3783
  %v3785 = vsel %vm26, %v3704, 0.0
  %v3786 = vadd.f32 %v3784, %v3785
  %v3787 = vsel %vm26, %v3705, 0.0
  %v3788 = vadd.f32 %v3786, %v3787
  %v3789 = vsel %vm26, %v3706, 0.0
  %v3790 = vadd.f32 %v3788, %v3789
  %v3791 = vsel %vm26, %v3707, 0.0
  %v3792 = vadd.f32 %v3790, %v3791
  %v3793 = vsel %vm26, %v3708, 0.0
  %v3794 = vadd.f32 %v3792, %v3793
  %v3795 = vsel %vm26, %v3709, 0.0
  %v3796 = vadd.f32 %v3794, %v3795
  %v3797 = vsel %vm26, %v3710, 0.0
  %v3798 = vadd.f32 %v3796, %v3797
  %v3799 = vsel %vm26, %v3711, 0.0
  %v3800 = vadd.f32 %v3798, %v3799
  %v3801 = vsel %vm26, %v3712, 0.0
  %v3802 = vadd.f32 %v3800, %v3801
  %v3803 = vsel %vm26, %v3713, 0.0
  %v3804 = vadd.f32 %v3802, %v3803
  %v3805 = vsel %vm26, %v3714, 0.0
  %v3806 = vadd.f32 %v3804, %v3805
  %v3807 = vsel %vm26, %v3715, 0.0
  %v3808 = vadd.f32 %v3806, %v3807
  %v3809 = vsel %vm26, %v3716, 0.0
  %v3810 = vadd.f32 %v3808, %v3809
  %v3811 = vsel %vm26, %v3717, 0.0
  %v3812 = vadd.f32 %v3810, %v3811
  %v3813 = vsel %vm26, %v3718, 0.0
  %v3814 = vadd.f32 %v3812, %v3813
  %v3815 = vsel %vm26, %v3719, 0.0
  %v3816 = vadd.f32 %v3814, %v3815
  %v3817 = vsel %vm26, %v3720, 0.0
  %v3818 = vadd.f32 %v3816, %v3817
  %v3819 = vsel %vm26, %v3721, 0.0
  %v3820 = vadd.f32 %v3818, %v3819
  %v3821 = vsel %vm26, %v3722, 0.0
  %v3822 = vadd.f32 %v3820, %v3821
  %v3823 = vsel %vm26, %v3723, 0.0
  %v3824 = vadd.f32 %v3822, %v3823
  %v3825 = vsel %vm26, %v3724, 0.0
  %v3826 = vadd.f32 %v3824, %v3825
  %v3827 = vsel %vm26, %v3725, 0.0
  %v3828 = vadd.f32 %v3826, %v3827
  %v3829 = vsel %vm26, %v3726, 0.0
  %v3830 = vadd.f32 %v3828, %v3829
  %v3831 = vsel %vm26, %v3727, 0.0
  %v3832 = vadd.f32 %v3830, %v3831
  %v3833 = vsel %vm26, %v3728, 0.0
  %v3834 = vadd.f32 %v3832, %v3833
  %v3835 = vsel %vm26, %v3729, 0.0
  %v3836 = vadd.f32 %v3834, %v3835
  %v3837 = vsel %vm26, %v3730, 0.0
  %v3838 = vadd.f32 %v3836, %v3837
  %v3839 = vsel %vm26, %v3731, 0.0
  %v3840 = vadd.f32 %v3838, %v3839
  %v3841 = vsel %vm26, %v3732, 0.0
  %v3842 = vadd.f32 %v3840, %v3841
  %v3843 = vsel %vm26, %v3733, 0.0
  %v3844 = vadd.f32 %v3842, %v3843
  %v3845 = vsel %vm26, %v3734, 0.0
  %v3846 = vadd.f32 %v3844, %v3845
  %v3847 = vsel %vm26, %v3735, 0.0
  %v3848 = vadd.f32 %v3846, %v3847
  %v3849 = vsel %vm26, %v3736, 0.0
  %v3850 = vadd.f32 %v3848, %v3849
  %v3851 = vsel %vm26, %v3737, 0.0
  %v3852 = vadd.f32 %v3850, %v3851
  %v3853 = vsel %vm26, %v3738, 0.0
  %v3854 = vadd.f32 %v3852, %v3853
  %v3855 = vsel %vm26, %v3739, 0.0
  %v3856 = vadd.f32 %v3854, %v3855
  %v3857 = vsel %vm26, %v3740, 0.0
  %v3858 = vadd.f32 %v3856, %v3857
  %v3859 = vsel %vm26, %v3741, 0.0
  %v3860 = vadd.f32 %v3858, %v3859
  %v3861 = vsel %vm26, %v3742, 0.0
  %v3862 = vadd.f32 %v3860, %v3861
  %v3863 = vsel %vm26, %v3743, 0.0
  %v3864 = vadd.f32 %v3862, %v3863
  %v3865 = vsel %vm26, %v3744, 0.0
  %v3866 = vadd.f32 %v3864, %v3865
  %v3867 = vsel %vm26, %v3745, 0.0
  %v3868 = vadd.f32 %v3866, %v3867
  %v3869 = vsel %vm26, %v3746, 0.0
  %v3870 = vadd.f32 %v3868, %v3869
  %v3871 = vsel %vm26, %v3747, 0.0
  %v3872 = vadd.f32 %v3870, %v3871
  %v3873 = vsel %vm26, %v3748, 0.0
  %v3874 = vadd.f32 %v3872, %v3873
  %v3875 = vsel %vm26, %v3749, 0.0
  %v3876 = vadd.f32 %v3874, %v3875
  %v3877 = vrot.slane %v3876, 4
  %v3878 = vadd.f32 %v3876, %v3877
  %v3879 = vrot.slane %v3878, 2
  %v3880 = vadd.f32 %v3878, %v3879
  %v3881 = vrot.slane %v3880, 1
  %v3882 = vadd.f32 %v3880, %v3881
  %v3883 = vmul.f32 %v3882, %v3620
  %v3884 = vadd.f32 %v3883, 1e-05
  %v3885 = vrsqrt.pop %v3884
  %v3886 = vmul.f32 %v3485, %v3885
  %v3887 = vmul.f32 %v3621, %v3886
  %v3888 = vsub.f32 %v3486, %v3887
  %v3890 = vlaneseq
  %v3891 = vshrl.u32 %v3890, 7
  %v3892 = vsub.s32 0, %v3891
  %v3893 = vrot.slane %v3886, %v3892
  %v3895 = vmul.f32 %v3167, %v3893
  %v3896 = vmul.f32 %v3172, %v3893
  %v3897 = vmul.f32 %v3177, %v3893
  %v3898 = vmul.f32 %v3182, %v3893
  %v3899 = vmul.f32 %v3187, %v3893
  %v3900 = vmul.f32 %v3192, %v3893
  %v3901 = vmul.f32 %v3197, %v3893
  %v3902 = vmul.f32 %v3202, %v3893
  %v3903 = vmul.f32 %v3207, %v3893
  %v3904 = vmul.f32 %v3212, %v3893
  %v3905 = vmul.f32 %v3217, %v3893
  %v3906 = vmul.f32 %v3222, %v3893
  %v3907 = vmul.f32 %v3227, %v3893
  %v3908 = vmul.f32 %v3232, %v3893
  %v3909 = vmul.f32 %v3237, %v3893
  %v3910 = vmul.f32 %v3242, %v3893
  %v3911 = vmul.f32 %v3247, %v3893
  %v3912 = vmul.f32 %v3252, %v3893
  %v3913 = vmul.f32 %v3257, %v3893
  %v3914 = vmul.f32 %v3262, %v3893
  %v3915 = vmul.f32 %v3267, %v3893
  %v3916 = vmul.f32 %v3272, %v3893
  %v3917 = vmul.f32 %v3277, %v3893
  %v3918 = vmul.f32 %v3282, %v3893
  %v3919 = vmul.f32 %v3287, %v3893
  %v3920 = vmul.f32 %v3292, %v3893
  %v3921 = vmul.f32 %v3297, %v3893
  %v3922 = vmul.f32 %v3302, %v3893
  %v3923 = vmul.f32 %v3307, %v3893
  %v3924 = vmul.f32 %v3312, %v3893
  %v3925 = vmul.f32 %v3317, %v3893
  %v3926 = vmul.f32 %v3322, %v3893
  %v3927 = vmul.f32 %v3327, %v3893
  %v3928 = vmul.f32 %v3332, %v3893
  %v3929 = vmul.f32 %v3337, %v3893
  %v3930 = vmul.f32 %v3342, %v3893
  %v3931 = vmul.f32 %v3347, %v3893
  %v3932 = vmul.f32 %v3352, %v3893
  %v3933 = vmul.f32 %v3357, %v3893
  %v3934 = vmul.f32 %v3362, %v3893
  %v3935 = vmul.f32 %v3367, %v3893
  %v3936 = vmul.f32 %v3372, %v3893
  %v3937 = vmul.f32 %v3377, %v3893
  %v3938 = vmul.f32 %v3382, %v3893
  %v3939 = vmul.f32 %v3387, %v3893
  %v3940 = vmul.f32 %v3392, %v3893
  %v3941 = vmul.f32 %v3397, %v3893
  %v3942 = vmul.f32 %v3402, %v3893
  %v3943 = vmul.f32 %v3407, %v3893
  %v3944 = vmul.f32 %v3412, %v3893
  %v3945 = vmul.f32 %v3417, %v3893
  %v3946 = vmul.f32 %v3422, %v3893
  %v3947 = vmul.f32 %v3427, %v3893
  %v3948 = vmul.f32 %v3432, %v3893
  %v3949 = vmul.f32 %v3437, %v3893
  %v3950 = vmul.f32 %v3442, %v3893
  %v3951 = vmul.f32 %v3447, %v3893
  %v3952 = vmul.f32 %v3452, %v3893
  %v3953 = vmul.f32 %v3457, %v3893
  %v3954 = vmul.f32 %v3462, %v3893
  %v3955 = vmul.f32 %v3467, %v3893
  %v3956 = vmul.f32 %v3472, %v3893
  %v3957 = vmul.f32 %v3477, %v3893
  %v3958 = vmul.f32 %v3482, %v3893
  %v3960 = vlaneseq
  %v3961 = vshrl.u32 %v3960, 7
  %v3962 = vsub.s32 0, %v3961
  %v3963 = vrot.slane %v3888, %v3962
  %v3965 = vadd.f32 %v3895, %v3963
  %v3966 = vadd.f32 %v3896, %v3963
  %v3967 = vadd.f32 %v3897, %v3963
  %v3968 = vadd.f32 %v3898, %v3963
  %v3969 = vadd.f32 %v3899, %v3963
  %v3970 = vadd.f32 %v3900, %v3963
  %v3971 = vadd.f32 %v3901, %v3963
  %v3972 = vadd.f32 %v3902, %v3963
  %v3973 = vadd.f32 %v3903, %v3963
  %v3974 = vadd.f32 %v3904, %v3963
  %v3975 = vadd.f32 %v3905, %v3963
  %v3976 = vadd.f32 %v3906, %v3963
  %v3977 = vadd.f32 %v3907, %v3963
  %v3978 = vadd.f32 %v3908, %v3963
  %v3979 = vadd.f32 %v3909, %v3963
  %v3980 = vadd.f32 %v3910, %v3963
  %v3981 = vadd.f32 %v3911, %v3963
  %v3982 = vadd.f32 %v3912, %v3963
  %v3983 = vadd.f32 %v3913, %v3963
  %v3984 = vadd.f32 %v3914, %v3963
  %v3985 = vadd.f32 %v3915, %v3963
  %v3986 = vadd.f32 %v3916, %v3963
  %v3987 = vadd.f32 %v3917, %v3963
  %v3988 = vadd.f32 %v3918, %v3963
  %v3989 = vadd.f32 %v3919, %v3963
  %v3990 = vadd.f32 %v3920, %v3963
  %v3991 = vadd.f32 %v3921, %v3963
  %v3992 = vadd.f32 %v3922, %v3963
  %v3993 = vadd.f32 %v3923, %v3963
  %v3994 = vadd.f32 %v3924, %v3963
  %v3995 = vadd.f32 %v3925, %v3963
  %v3996 = vadd.f32 %v3926, %v3963
  %v3997 = vadd.f32 %v3927, %v3963
  %v3998 = vadd.f32 %v3928, %v3963
  %v3999 = vadd.f32 %v3929, %v3963
  %v4000 = vadd.f32 %v3930, %v3963
  %v4001 = vadd.f32 %v3931, %v3963
  %v4002 = vadd.f32 %v3932, %v3963
  %v4003 = vadd.f32 %v3933, %v3963
  %v4004 = vadd.f32 %v3934, %v3963
  %v4005 = vadd.f32 %v3935, %v3963
  %v4006 = vadd.f32 %v3936, %v3963
  %v4007 = vadd.f32 %v3937, %v3963
  %v4008 = vadd.f32 %v3938, %v3963
  %v4009 = vadd.f32 %v3939, %v3963
  %v4010 = vadd.f32 %v3940, %v3963
  %v4011 = vadd.f32 %v3941, %v3963
  %v4012 = vadd.f32 %v3942, %v3963
  %v4013 = vadd.f32 %v3943, %v3963
  %v4014 = vadd.f32 %v3944, %v3963
  %v4015 = vadd.f32 %v3945, %v3963
  %v4016 = vadd.f32 %v3946, %v3963
  %v4017 = vadd.f32 %v3947, %v3963
  %v4018 = vadd.f32 %v3948, %v3963
  %v4019 = vadd.f32 %v3949, %v3963
  %v4020 = vadd.f32 %v3950, %v3963
  %v4021 = vadd.f32 %v3951, %v3963
  %v4022 = vadd.f32 %v3952, %v3963
  %v4023 = vadd.f32 %v3953, %v3963
  %v4024 = vadd.f32 %v3954, %v3963
  %v4025 = vadd.f32 %v3955, %v3963
  %v4026 = vadd.f32 %v3956, %v3963
  %v4027 = vadd.f32 %v3957, %v3963
  %v4028 = vadd.f32 %v3958, %v3963
  %v4029 = vmax.f32 %v3965, 0.0
  %v4030 = vmax.f32 %v3966, 0.0
  %v4031 = vmax.f32 %v3967, 0.0
  %v4032 = vmax.f32 %v3968, 0.0
  %v4033 = vmax.f32 %v3969, 0.0
  %v4034 = vmax.f32 %v3970, 0.0
  %v4035 = vmax.f32 %v3971, 0.0
  %v4036 = vmax.f32 %v3972, 0.0
  %v4037 = vmax.f32 %v3973, 0.0
  %v4038 = vmax.f32 %v3974, 0.0
  %v4039 = vmax.f32 %v3975, 0.0
  %v4040 = vmax.f32 %v3976, 0.0
  %v4041 = vmax.f32 %v3977, 0.0
  %v4042 = vmax.f32 %v3978, 0.0
  %v4043 = vmax.f32 %v3979, 0.0
  %v4044 = vmax.f32 %v3980, 0.0
  %v4045 = vmax.f32 %v3981, 0.0
  %v4046 = vmax.f32 %v3982, 0.0
  %v4047 = vmax.f32 %v3983, 0.0
  %v4048 = vmax.f32 %v3984, 0.0
  %v4049 = vmax.f32 %v3985, 0.0
  %v4050 = vmax.f32 %v3986, 0.0
  %v4051 = vmax.f32 %v3987, 0.0
  %v4052 = vmax.f32 %v3988, 0.0
  %v4053 = vmax.f32 %v3989, 0.0
  %v4054 = vmax.f32 %v3990, 0.0
  %v4055 = vmax.f32 %v3991, 0.0
  %v4056 = vmax.f32 %v3992, 0.0
  %v4057 = vmax.f32 %v3993, 0.0
  %v4058 = vmax.f32 %v3994, 0.0
  %v4059 = vmax.f32 %v3995, 0.0
  %v4060 = vmax.f32 %v3996, 0.0
  %v4061 = vmax.f32 %v3997, 0.0
  %v4062 = vmax.f32 %v3998, 0.0
  %v4063 = vmax.f32 %v3999, 0.0
  %v4064 = vmax.f32 %v4000, 0.0
  %v4065 = vmax.f32 %v4001, 0.0
  %v4066 = vmax.f32 %v4002, 0.0
  %v4067 = vmax.f32 %v4003, 0.0
  %v4068 = vmax.f32 %v4004, 0.0
  %v4069 = vmax.f32 %v4005, 0.0
  %v4070 = vmax.f32 %v4006, 0.0
  %v4071 = vmax.f32 %v4007, 0.0
  %v4072 = vmax.f32 %v4008, 0.0
  %v4073 = vmax.f32 %v4009, 0.0
  %v4074 = vmax.f32 %v4010, 0.0
  %v4075 = vmax.f32 %v4011, 0.0
  %v4076 = vmax.f32 %v4012, 0.0
  %v4077 = vmax.f32 %v4013, 0.0
  %v4078 = vmax.f32 %v4014, 0.0
  %v4079 = vmax.f32 %v4015, 0.0
  %v4080 = vmax.f32 %v4016, 0.0
  %v4081 = vmax.f32 %v4017, 0.0
  %v4082 = vmax.f32 %v4018, 0.0
  %v4083 = vmax.f32 %v4019, 0.0
  %v4084 = vmax.f32 %v4020, 0.0
  %v4085 = vmax.f32 %v4021, 0.0
  %v4086 = vmax.f32 %v4022, 0.0
  %v4087 = vmax.f32 %v4023, 0.0
  %v4088 = vmax.f32 %v4024, 0.0
  %v4089 = vmax.f32 %v4025, 0.0
  %v4090 = vmax.f32 %v4026, 0.0
  %v4091 = vmax.f32 %v4027, 0.0
  %v4092 = vmax.f32 %v4028, 0.0
  %4093 = vst.msk [vmem:[%s200 + $0x1] sm:$0xff] %vm26, %v4029
  %4094 = vst.msk [vmem:[%s200 + $0x9] sm:$0xff] %vm26, %v4030
  %4095 = vst.msk [vmem:[%s200 + $0x19] sm:$0xff] %vm26, %v4031
  %4096 = vst.msk [vmem:[%s200 + $0x21] sm:$0xff] %vm26, %v4032
  %4097 = vst.msk [vmem:[%s200 + $0x31] sm:$0xff] %vm26, %v4033
  %4098 = vst.msk [vmem:[%s200 + $0x39] sm:$0xff] %vm26, %v4034
  %4099 = vst.msk [vmem:[%s200 + $0x49] sm:$0xff] %vm26, %v4035
  %4100 = vst.msk [vmem:[%s200 + $0x51] sm:$0xff] %vm26, %v4036
  %4101 = vst.msk [vmem:[%s200 + $0x61] sm:$0xff] %vm26, %v4037
  %4102 = vst.msk [vmem:[%s200 + $0x69] sm:$0xff] %vm26, %v4038
  %4103 = vst.msk [vmem:[%s200 + $0x79] sm:$0xff] %vm26, %v4039
  %4104 = vst.msk [vmem:[%s200 + $0x81] sm:$0xff] %vm26, %v4040
  %4105 = vst.msk [vmem:[%s200 + $0x91] sm:$0xff] %vm26, %v4041
  %4106 = vst.msk [vmem:[%s200 + $0x99] sm:$0xff] %vm26, %v4042
  %4107 = vst.msk [vmem:[%s200 + $0xa9] sm:$0xff] %vm26, %v4043
  %4108 = vst.msk [vmem:[%s200 + $0xb1] sm:$0xff] %vm26, %v4044
  %4109 = vst.msk [vmem:[%s200 + $0xc1] sm:$0xff] %vm26, %v4045
  %4110 = vst.msk [vmem:[%s200 + $0xc9] sm:$0xff] %vm26, %v4046
  %4111 = vst.msk [vmem:[%s200 + $0xd9] sm:$0xff] %vm26, %v4047
  %4112 = vst.msk [vmem:[%s200 + $0xe1] sm:$0xff] %vm26, %v4048
  %4113 = vst.msk [vmem:[%s200 + $0xf1] sm:$0xff] %vm26, %v4049
  %4114 = vst.msk [vmem:[%s200 + $0xf9] sm:$0xff] %vm26, %v4050
  %4115 = vst.msk [vmem:[%s200 + $0x109] sm:$0xff] %vm26, %v4051
  %4116 = vst.msk [vmem:[%s200 + $0x111] sm:$0xff] %vm26, %v4052
  %4117 = vst.msk [vmem:[%s200 + $0x121] sm:$0xff] %vm26, %v4053
  %4118 = vst.msk [vmem:[%s200 + $0x129] sm:$0xff] %vm26, %v4054
  %4119 = vst.msk [vmem:[%s200 + $0x139] sm:$0xff] %vm26, %v4055
  %4120 = vst.msk [vmem:[%s200 + $0x141] sm:$0xff] %vm26, %v4056
  %4121 = vst.msk [vmem:[%s200 + $0x151] sm:$0xff] %vm26, %v4057
  %4122 = vst.msk [vmem:[%s200 + $0x159] sm:$0xff] %vm26, %v4058
  %4123 = vst.msk [vmem:[%s200 + $0x169] sm:$0xff] %vm26, %v4059
  %4124 = vst.msk [vmem:[%s200 + $0x171] sm:$0xff] %vm26, %v4060
  %4125 = vst.msk [vmem:[%s200 + $0x1b1] sm:$0xff] %vm26, %v4061
  %4126 = vst.msk [vmem:[%s200 + $0x1b9] sm:$0xff] %vm26, %v4062
  %4127 = vst.msk [vmem:[%s200 + $0x1c9] sm:$0xff] %vm26, %v4063
  %4128 = vst.msk [vmem:[%s200 + $0x1d1] sm:$0xff] %vm26, %v4064
  %4129 = vst.msk [vmem:[%s200 + $0x1e1] sm:$0xff] %vm26, %v4065
  %4130 = vst.msk [vmem:[%s200 + $0x1e9] sm:$0xff] %vm26, %v4066
  %4131 = vst.msk [vmem:[%s200 + $0x1f9] sm:$0xff] %vm26, %v4067
  %4132 = vst.msk [vmem:[%s200 + $0x201] sm:$0xff] %vm26, %v4068
  %4133 = vst.msk [vmem:[%s200 + $0x211] sm:$0xff] %vm26, %v4069
  %4134 = vst.msk [vmem:[%s200 + $0x219] sm:$0xff] %vm26, %v4070
  %4135 = vst.msk [vmem:[%s200 + $0x229] sm:$0xff] %vm26, %v4071
  %4136 = vst.msk [vmem:[%s200 + $0x231] sm:$0xff] %vm26, %v4072
  %4137 = vst.msk [vmem:[%s200 + $0x241] sm:$0xff] %vm26, %v4073
  %4138 = vst.msk [vmem:[%s200 + $0x249] sm:$0xff] %vm26, %v4074
  %4139 = vst.msk [vmem:[%s200 + $0x259] sm:$0xff] %vm26, %v4075
  %4140 = vst.msk [vmem:[%s200 + $0x261] sm:$0xff] %vm26, %v4076
  %4141 = vst.msk [vmem:[%s200 + $0x271] sm:$0xff] %vm26, %v4077
  %4142 = vst.msk [vmem:[%s200 + $0x279] sm:$0xff] %vm26, %v4078
  %4143 = vst.msk [vmem:[%s200 + $0x289] sm:$0xff] %vm26, %v4079
  %4144 = vst.msk [vmem:[%s200 + $0x291] sm:$0xff] %vm26, %v4080
  %4145 = vst.msk [vmem:[%s200 + $0x2a1] sm:$0xff] %vm26, %v4081
  %4146 = vst.msk [vmem:[%s200 + $0x2a9] sm:$0xff] %vm26, %v4082
  %4147 = vst.msk [vmem:[%s200 + $0x2b9] sm:$0xff] %vm26, %v4083
  %4148 = vst.msk [vmem:[%s200 + $0x2c1] sm:$0xff] %vm26, %v4084
  %4149 = vst.msk [vmem:[%s200 + $0x2d1] sm:$0xff] %vm26, %v4085
  %4150 = vst.msk [vmem:[%s200 + $0x2d9] sm:$0xff] %vm26, %v4086
  %4151 = vst.msk [vmem:[%s200 + $0x2e9] sm:$0xff] %vm26, %v4087
  %4152 = vst.msk [vmem:[%s200 + $0x2f1] sm:$0xff] %vm26, %v4088
  %4153 = vst.msk [vmem:[%s200 + $0x301] sm:$0xff] %vm26, %v4089
  %4154 = vst.msk [vmem:[%s200 + $0x309] sm:$0xff] %vm26, %v4090
  %4155 = vst.msk [vmem:[%s200 + $0x319] sm:$0xff] %vm26, %v4091
  %4156 = vst.msk [vmem:[%s200 + $0x321] sm:$0xff] %vm26, %v4092
  %v4157 = vld [vmem:[#allocation2] sm:$0xff]
  %v4158 = vld [vmem:[#allocation2 + $0x8] sm:$0xff]
  %v4159 = vld [vmem:[#allocation2 + $0x10] sm:$0x3]
  %v4160 = vld [vmem:[#allocation2 + $0x18] sm:$0xff]
  %v4161 = vld [vmem:[#allocation2 + $0x20] sm:$0xff]
  %v4162 = vld [vmem:[#allocation2 + $0x28] sm:$0x3]
  %v4163 = vld [vmem:[#allocation2 + $0x30] sm:$0xff]
  %v4164 = vld [vmem:[#allocation2 + $0x38] sm:$0xff]
  %v4165 = vld [vmem:[#allocation2 + $0x40] sm:$0x3]
  %v4166 = vld [vmem:[#allocation2 + $0x48] sm:$0xff]
  %v4167 = vld [vmem:[#allocation2 + $0x50] sm:$0xff]
  %v4168 = vld [vmem:[#allocation2 + $0x58] sm:$0x3]
  %v4169 = vld [vmem:[#allocation2 + $0x60] sm:$0xff]
  %v4170 = vld [vmem:[#allocation2 + $0x68] sm:$0xff]
  %v4171 = vld [vmem:[#allocation2 + $0x70] sm:$0x3]
  %v4172 = vld [vmem:[#allocation2 + $0x78] sm:$0xff]
  %v4173 = vld [vmem:[#allocation2 + $0x80] sm:$0xff]
  %v4174 = vld [vmem:[#allocation2 + $0x88] sm:$0x3]
  %v4175 = vld [vmem:[#allocation2 + $0x90] sm:$0xff]
  %v4176 = vld [vmem:[#allocation2 + $0x98] sm:$0xff]
  %v4177 = vld [vmem:[#allocation2 + $0xa0] sm:$0x3]
  %v4178 = vld [vmem:[#allocation2 + $0xa8] sm:$0xff]
  %v4179 = vld [vmem:[#allocation2 + $0xb0] sm:$0xff]
  %v4180 = vld [vmem:[#allocation2 + $0xb8] sm:$0x3]
  %v4181 = vld [vmem:[#allocation2 + $0xc0] sm:$0xff]
  %v4182 = vld [vmem:[#allocation2 + $0xc8] sm:$0xff]
  %v4183 = vld [vmem:[#allocation2 + $0xd0] sm:$0x3]
  %v4184 = vld [vmem:[#allocation2 + $0xd8] sm:$0xff]
  %v4185 = vld [vmem:[#allocation2 + $0xe0] sm:$0xff]
  %v4186 = vld [vmem:[#allocation2 + $0xe8] sm:$0x3]
  %v4187 = vld [vmem:[#allocation2 + $0xf0] sm:$0xff]
  %v4188 = vld [vmem:[#allocation2 + $0xf8] sm:$0xff]
  %v4189 = vld [vmem:[#allocation2 + $0x100] sm:$0x3]
  %v4190 = vld [vmem:[#allocation2 + $0x108] sm:$0xff]
  %v4191 = vld [vmem:[#allocation2 + $0x110] sm:$0xff]
  %v4192 = vld [vmem:[#allocation2 + $0x118] sm:$0x3]
  %v4193 = vld [vmem:[#allocation2 + $0x120] sm:$0xff]
  %v4194 = vld [vmem:[#allocation2 + $0x128] sm:$0xff]
  %v4195 = vld [vmem:[#allocation2 + $0x130] sm:$0x3]
  %v4196 = vld [vmem:[#allocation2 + $0x138] sm:$0xff]
  %v4197 = vld [vmem:[#allocation2 + $0x140] sm:$0xff]
  %v4198 = vld [vmem:[#allocation2 + $0x148] sm:$0x3]
  %v4199 = vld [vmem:[#allocation2 + $0x150] sm:$0xff]
  %v4200 = vld [vmem:[#allocation2 + $0x158] sm:$0xff]
  %v4201 = vld [vmem:[#allocation2 + $0x160] sm:$0x3]
  %v4202 = vld [vmem:[#allocation2 + $0x168] sm:$0xff]
  %v4203 = vld [vmem:[#allocation2 + $0x170] sm:$0xff]
  %v4204 = vld [vmem:[#allocation2 + $0x178] sm:$0x3]
  %v4205 = vld [vmem:[#allocation2 + $0x180] sm:$0xff]
  %v4206 = vld [vmem:[#allocation2 + $0x188] sm:$0xff]
  %v4207 = vld [vmem:[#allocation2 + $0x190] sm:$0x3]
  %v4208 = vld [vmem:[#allocation2 + $0x198] sm:$0xff]
  %v4209 = vld [vmem:[#allocation2 + $0x1a0] sm:$0xff]
  %v4210 = vld [vmem:[#allocation2 + $0x1a8] sm:$0x3]
  %v4211 = vld [vmem:[#allocation2 + $0x1b0] sm:$0xff]
  %v4212 = vld [vmem:[#allocation2 + $0x1b8] sm:$0xff]
  %v4213 = vld [vmem:[#allocation2 + $0x1c0] sm:$0x3]
  %v4214 = vld [vmem:[#allocation2 + $0x1c8] sm:$0xff]
  %v4215 = vld [vmem:[#allocation2 + $0x1d0] sm:$0xff]
  %v4216 = vld [vmem:[#allocation2 + $0x1d8] sm:$0x3]
  %v4217 = vld [vmem:[#allocation2 + $0x1e0] sm:$0xff]
  %v4218 = vld [vmem:[#allocation2 + $0x1e8] sm:$0xff]
  %v4219 = vld [vmem:[#allocation2 + $0x1f0] sm:$0x3]
  %v4220 = vld [vmem:[#allocation2 + $0x1f8] sm:$0xff]
  %v4221 = vld [vmem:[#allocation2 + $0x200] sm:$0xff]
  %v4222 = vld [vmem:[#allocation2 + $0x208] sm:$0x3]
  %v4223 = vld [vmem:[#allocation2 + $0x210] sm:$0xff]
  %v4224 = vld [vmem:[#allocation2 + $0x218] sm:$0xff]
  %v4225 = vld [vmem:[#allocation2 + $0x220] sm:$0x3]
  %v4226 = vld [vmem:[#allocation2 + $0x228] sm:$0xff]
  %v4227 = vld [vmem:[#allocation2 + $0x230] sm:$0xff]
  %v4228 = vld [vmem:[#allocation2 + $0x238] sm:$0x3]
  %v4229 = vld [vmem:[#allocation2 + $0x240] sm:$0xff]
  %v4230 = vld [vmem:[#allocation2 + $0x248] sm:$0xff]
  %v4231 = vld [vmem:[#allocation2 + $0x250] sm:$0x3]
  %v4232 = vld [vmem:[#allocation2 + $0x258] sm:$0xff]
  %v4233 = vld [vmem:[#allocation2 + $0x260] sm:$0xff]
  %v4234 = vld [vmem:[#allocation2 + $0x268] sm:$0x3]
  %v4235 = vld [vmem:[#allocation2 + $0x270] sm:$0xff]
  %v4236 = vld [vmem:[#allocation2 + $0x278] sm:$0xff]
  %v4237 = vld [vmem:[#allocation2 + $0x280] sm:$0x3]
  %v4238 = vld [vmem:[#allocation2 + $0x288] sm:$0xff]
  %v4239 = vld [vmem:[#allocation2 + $0x290] sm:$0xff]
  %v4240 = vld [vmem:[#allocation2 + $0x298] sm:$0x3]
  %v4241 = vld [vmem:[#allocation2 + $0x2a0] sm:$0xff]
  %v4242 = vld [vmem:[#allocation2 + $0x2a8] sm:$0xff]
  %v4243 = vld [vmem:[#allocation2 + $0x2b0] sm:$0x3]
  %v4244 = vld [vmem:[#allocation2 + $0x2b8] sm:$0xff]
  %v4245 = vld [vmem:[#allocation2 + $0x2c0] sm:$0xff]
  %v4246 = vld [vmem:[#allocation2 + $0x2c8] sm:$0x3]
  %v4247 = vld [vmem:[#allocation2 + $0x2d0] sm:$0xff]
  %v4248 = vld [vmem:[#allocation2 + $0x2d8] sm:$0xff]
  %v4249 = vld [vmem:[#allocation2 + $0x2e0] sm:$0x3]
  %v4250 = vld [vmem:[#allocation2 + $0x2e8] sm:$0xff]
  %v4251 = vld [vmem:[#allocation2 + $0x2f0] sm:$0xff]
  %v4252 = vld [vmem:[#allocation2 + $0x2f8] sm:$0x3]
  %v4253 = vld [vmem:[#allocation2 + $0x300] sm:$0xff]
  %v4254 = vld [vmem:[#allocation2 + $0x308] sm:$0xff]
  %v4255 = vld [vmem:[#allocation2 + $0x310] sm:$0x3]
  %v4256 = vld [vmem:[#allocation2 + $0x318] sm:$0xff]
  %v4257 = vld [vmem:[#allocation2 + $0x320] sm:$0xff]
  %v4258 = vld [vmem:[#allocation2 + $0x328] sm:$0x3]
  %v4259 = vld [vmem:[#allocation2 + $0x330] sm:$0xff]
  %v4260 = vld [vmem:[#allocation2 + $0x338] sm:$0xff]
  %v4261 = vld [vmem:[#allocation2 + $0x340] sm:$0x3]
  %v4262 = vld [vmem:[#allocation2 + $0x348] sm:$0xff]
  %v4263 = vld [vmem:[#allocation2 + $0x350] sm:$0xff]
  %v4264 = vld [vmem:[#allocation2 + $0x358] sm:$0x3]
  %v4361 = vrot.slane %v4157, 1
  %v4362 = vrot.slane %v4158, 1
  %v4363 = vsel %vm469, %v4361, %v4362
  %v4364 = vrot.slane %v4159, 1
  %v4365 = vsel %vm469, %v4362, %v4364
  %v4366 = vrot.slane %v4160, 1
  %v4367 = vrot.slane %v4161, 1
  %v4368 = vsel %vm469, %v4366, %v4367
  %v4369 = vrot.slane %v4162, 1
  %v4370 = vsel %vm469, %v4367, %v4369
  %v4371 = vrot.slane %v4163, 1
  %v4372 = vrot.slane %v4164, 1
  %v4373 = vsel %vm469, %v4371, %v4372
  %v4374 = vrot.slane %v4165, 1
  %v4375 = vsel %vm469, %v4372, %v4374
  %v4376 = vrot.slane %v4166, 1
  %v4377 = vrot.slane %v4167, 1
  %v4378 = vsel %vm469, %v4376, %v4377
  %v4379 = vrot.slane %v4168, 1
  %v4380 = vsel %vm469, %v4377, %v4379
  %v4381 = vrot.slane %v4169, 1
  %v4382 = vrot.slane %v4170, 1
  %v4383 = vsel %vm469, %v4381, %v4382
  %v4384 = vrot.slane %v4171, 1
  %v4385 = vsel %vm469, %v4382, %v4384
  %v4386 = vrot.slane %v4172, 1
  %v4387 = vrot.slane %v4173, 1
  %v4388 = vsel %vm469, %v4386, %v4387
  %v4389 = vrot.slane %v4174, 1
  %v4390 = vsel %vm469, %v4387, %v4389
  %v4391 = vrot.slane %v4175, 1
  %v4392 = vrot.slane %v4176, 1
  %v4393 = vsel %vm469, %v4391, %v4392
  %v4394 = vrot.slane %v4177, 1
  %v4395 = vsel %vm469, %v4392, %v4394
  %v4396 = vrot.slane %v4178, 1
  %v4397 = vrot.slane %v4179, 1
  %v4398 = vsel %vm469, %v4396, %v4397
  %v4399 = vrot.slane %v4180, 1
  %v4400 = vsel %vm469, %v4397, %v4399
  %v4401 = vrot.slane %v4181, 1
  %v4402 = vrot.slane %v4182, 1
  %v4403 = vsel %vm469, %v4401, %v4402
  %v4404 = vrot.slane %v4183, 1
  %v4405 = vsel %vm469, %v4402, %v4404
  %v4406 = vrot.slane %v4184, 1
  %v4407 = vrot.slane %v4185, 1
  %v4408 = vsel %vm469, %v4406, %v4407
  %v4409 = vrot.slane %v4186, 1
  %v4410 = vsel %vm469, %v4407, %v4409
  %v4411 = vrot.slane %v4187, 1
  %v4412 = vrot.slane %v4188, 1
  %v4413 = vsel %vm469, %v4411, %v4412
  %v4414 = vrot.slane %v4189, 1
  %v4415 = vsel %vm469, %v4412, %v4414
  %v4416 = vrot.slane %v4190, 1
  %v4417 = vrot.slane %v4191, 1
  %v4418 = vsel %vm469, %v4416, %v4417
  %v4419 = vrot.slane %v4192, 1
  %v4420 = vsel %vm469, %v4417, %v4419
  %v4421 = vrot.slane %v4193, 1
  %v4422 = vrot.slane %v4194, 1
  %v4423 = vsel %vm469, %v4421, %v4422
  %v4424 = vrot.slane %v4195, 1
  %v4425 = vsel %vm469, %v4422, %v4424
  %v4426 = vrot.slane %v4196, 1
  %v4427 = vrot.slane %v4197, 1
  %v4428 = vsel %vm469, %v4426, %v4427
  %v4429 = vrot.slane %v4198, 1
  %v4430 = vsel %vm469, %v4427, %v4429
  %v4431 = vrot.slane %v4199, 1
  %v4432 = vrot.slane %v4200, 1
  %v4433 = vsel %vm469, %v4431, %v4432
  %v4434 = vrot.slane %v4201, 1
  %v4435 = vsel %vm469, %v4432, %v4434
  %v4436 = vrot.slane %v4202, 1
  %v4437 = vrot.slane %v4203, 1
  %v4438 = vsel %vm469, %v4436, %v4437
  %v4439 = vrot.slane %v4204, 1
  %v4440 = vsel %vm469, %v4437, %v4439
  %v4441 = vrot.slane %v4211, 1
  %v4442 = vrot.slane %v4212, 1
  %v4443 = vsel %vm469, %v4441, %v4442
  %v4444 = vrot.slane %v4213, 1
  %v4445 = vsel %vm469, %v4442, %v4444
  %v4446 = vrot.slane %v4214, 1
  %v4447 = vrot.slane %v4215, 1
  %v4448 = vsel %vm469, %v4446, %v4447
  %v4449 = vrot.slane %v4216, 1
  %v4450 = vsel %vm469, %v4447, %v4449
  %v4451 = vrot.slane %v4217, 1
  %v4452 = vrot.slane %v4218, 1
  %v4453 = vsel %vm469, %v4451, %v4452
  %v4454 = vrot.slane %v4219, 1
  %v4455 = vsel %vm469, %v4452, %v4454
  %v4456 = vrot.slane %v4220, 1
  %v4457 = vrot.slane %v4221, 1
  %v4458 = vsel %vm469, %v4456, %v4457
  %v4459 = vrot.slane %v4222, 1
  %v4460 = vsel %vm469, %v4457, %v4459
  %v4461 = vrot.slane %v4223, 1
  %v4462 = vrot.slane %v4224, 1
  %v4463 = vsel %vm469, %v4461, %v4462
  %v4464 = vrot.slane %v4225, 1
  %v4465 = vsel %vm469, %v4462, %v4464
  %v4466 = vrot.slane %v4226, 1
  %v4467 = vrot.slane %v4227, 1
  %v4468 = vsel %vm469, %v4466, %v4467
  %v4469 = vrot.slane %v4228, 1
  %v4470 = vsel %vm469, %v4467, %v4469
  %v4471 = vrot.slane %v4229, 1
  %v4472 = vrot.slane %v4230, 1
  %v4473 = vsel %vm469, %v4471, %v4472
  %v4474 = vrot.slane %v4231, 1
  %v4475 = vsel %vm469, %v4472, %v4474
  %v4476 = vrot.slane %v4232, 1
  %v4477 = vrot.slane %v4233, 1
  %v4478 = vsel %vm469, %v4476, %v4477
  %v4479 = vrot.slane %v4234, 1
  %v4480 = vsel %vm469, %v4477, %v4479
  %v4481 = vrot.slane %v4235, 1
  %v4482 = vrot.slane %v4236, 1
  %v4483 = vsel %vm469, %v4481, %v4482
  %v4484 = vrot.slane %v4237, 1
  %v4485 = vsel %vm469, %v4482, %v4484
  %v4486 = vrot.slane %v4238, 1
  %v4487 = vrot.slane %v4239, 1
  %v4488 = vsel %vm469, %v4486, %v4487
  %v4489 = vrot.slane %v4240, 1
  %v4490 = vsel %vm469, %v4487, %v4489
  %v4491 = vrot.slane %v4241, 1
  %v4492 = vrot.slane %v4242, 1
  %v4493 = vsel %vm469, %v4491, %v4492
  %v4494 = vrot.slane %v4243, 1
  %v4495 = vsel %vm469, %v4492, %v4494
  %v4496 = vrot.slane %v4244, 1
  %v4497 = vrot.slane %v4245, 1
  %v4498 = vsel %vm469, %v4496, %v4497
  %v4499 = vrot.slane %v4246, 1
  %v4500 = vsel %vm469, %v4497, %v4499
  %v4501 = vrot.slane %v4247, 1
  %v4502 = vrot.slane %v4248, 1
  %v4503 = vsel %vm469, %v4501, %v4502
  %v4504 = vrot.slane %v4249, 1
  %v4505 = vsel %vm469, %v4502, %v4504
  %v4506 = vrot.slane %v4250, 1
  %v4507 = vrot.slane %v4251, 1
  %v4508 = vsel %vm469, %v4506, %v4507
  %v4509 = vrot.slane %v4252, 1
  %v4510 = vsel %vm469, %v4507, %v4509
  %v4511 = vrot.slane %v4253, 1
  %v4512 = vrot.slane %v4254, 1
  %v4513 = vsel %vm469, %v4511, %v4512
  %v4514 = vrot.slane %v4255, 1
  %v4515 = vsel %vm469, %v4512, %v4514
  %v4516 = vrot.slane %v4256, 1
  %v4517 = vrot.slane %v4257, 1
  %v4518 = vsel %vm469, %v4516, %v4517
  %v4519 = vrot.slane %v4258, 1
  %v4520 = vsel %vm469, %v4517, %v4519
  %v4521 = vrot.slane %v4157, 2
  %v4522 = vrot.slane %v4158, 2
  %v4523 = vsel %vm630, %v4521, %v4522
  %v4524 = vrot.slane %v4159, 2
  %v4525 = vsel %vm630, %v4522, %v4524
  %v4526 = vrot.slane %v4160, 2
  %v4527 = vrot.slane %v4161, 2
  %v4528 = vsel %vm630, %v4526, %v4527
  %v4529 = vrot.slane %v4162, 2
  %v4530 = vsel %vm630, %v4527, %v4529
  %v4531 = vrot.slane %v4163, 2
  %v4532 = vrot.slane %v4164, 2
  %v4533 = vsel %vm630, %v4531, %v4532
  %v4534 = vrot.slane %v4165, 2
  %v4535 = vsel %vm630, %v4532, %v4534
  %v4536 = vrot.slane %v4166, 2
  %v4537 = vrot.slane %v4167, 2
  %v4538 = vsel %vm630, %v4536, %v4537
  %v4539 = vrot.slane %v4168, 2
  %v4540 = vsel %vm630, %v4537, %v4539
  %v4541 = vrot.slane %v4169, 2
  %v4542 = vrot.slane %v4170, 2
  %v4543 = vsel %vm630, %v4541, %v4542
  %v4544 = vrot.slane %v4171, 2
  %v4545 = vsel %vm630, %v4542, %v4544
  %v4546 = vrot.slane %v4172, 2
  %v4547 = vrot.slane %v4173, 2
  %v4548 = vsel %vm630, %v4546, %v4547
  %v4549 = vrot.slane %v4174, 2
  %v4550 = vsel %vm630, %v4547, %v4549
  %v4551 = vrot.slane %v4175, 2
  %v4552 = vrot.slane %v4176, 2
  %v4553 = vsel %vm630, %v4551, %v4552
  %v4554 = vrot.slane %v4177, 2
  %v4555 = vsel %vm630, %v4552, %v4554
  %v4556 = vrot.slane %v4178, 2
  %v4557 = vrot.slane %v4179, 2
  %v4558 = vsel %vm630, %v4556, %v4557
  %v4559 = vrot.slane %v4180, 2
  %v4560 = vsel %vm630, %v4557, %v4559
  %v4561 = vrot.slane %v4181, 2
  %v4562 = vrot.slane %v4182, 2
  %v4563 = vsel %vm630, %v4561, %v4562
  %v4564 = vrot.slane %v4183, 2
  %v4565 = vsel %vm630, %v4562, %v4564
  %v4566 = vrot.slane %v4184, 2
  %v4567 = vrot.slane %v4185, 2
  %v4568 = vsel %vm630, %v4566, %v4567
  %v4569 = vrot.slane %v4186, 2
  %v4570 = vsel %vm630, %v4567, %v4569
  %v4571 = vrot.slane %v4187, 2
  %v4572 = vrot.slane %v4188, 2
  %v4573 = vsel %vm630, %v4571, %v4572
  %v4574 = vrot.slane %v4189, 2
  %v4575 = vsel %vm630, %v4572, %v4574
  %v4576 = vrot.slane %v4190, 2
  %v4577 = vrot.slane %v4191, 2
  %v4578 = vsel %vm630, %v4576, %v4577
  %v4579 = vrot.slane %v4192, 2
  %v4580 = vsel %vm630, %v4577, %v4579
  %v4581 = vrot.slane %v4193, 2
  %v4582 = vrot.slane %v4194, 2
  %v4583 = vsel %vm630, %v4581, %v4582
  %v4584 = vrot.slane %v4195, 2
  %v4585 = vsel %vm630, %v4582, %v4584
  %v4586 = vrot.slane %v4196, 2
  %v4587 = vrot.slane %v4197, 2
  %v4588 = vsel %vm630, %v4586, %v4587
  %v4589 = vrot.slane %v4198, 2
  %v4590 = vsel %vm630, %v4587, %v4589
  %v4591 = vrot.slane %v4199, 2
  %v4592 = vrot.slane %v4200, 2
  %v4593 = vsel %vm630, %v4591, %v4592
  %v4594 = vrot.slane %v4201, 2
  %v4595 = vsel %vm630, %v4592, %v4594
  %v4596 = vrot.slane %v4202, 2
  %v4597 = vrot.slane %v4203, 2
  %v4598 = vsel %vm630, %v4596, %v4597
  %v4599 = vrot.slane %v4204, 2
  %v4600 = vsel %vm630, %v4597, %v4599
  %v4601 = vrot.slane %v4211, 2
  %v4602 = vrot.slane %v4212, 2
  %v4603 = vsel %vm630, %v4601, %v4602
  %v4604 = vrot.slane %v4213, 2
  %v4605 = vsel %vm630, %v4602, %v4604
  %v4606 = vrot.slane %v4214, 2
  %v4607 = vrot.slane %v4215, 2
  %v4608 = vsel %vm630, %v4606, %v4607
  %v4609 = vrot.slane %v4216, 2
  %v4610 = vsel %vm630, %v4607, %v4609
  %v4611 = vrot.slane %v4217, 2
  %v4612 = vrot.slane %v4218, 2
  %v4613 = vsel %vm630, %v4611, %v4612
  %v4614 = vrot.slane %v4219, 2
  %v4615 = vsel %vm630, %v4612, %v4614
  %v4616 = vrot.slane %v4220, 2
  %v4617 = vrot.slane %v4221, 2
  %v4618 = vsel %vm630, %v4616, %v4617
  %v4619 = vrot.slane %v4222, 2
  %v4620 = vsel %vm630, %v4617, %v4619
  %v4621 = vrot.slane %v4223, 2
  %v4622 = vrot.slane %v4224, 2
  %v4623 = vsel %vm630, %v4621, %v4622
  %v4624 = vrot.slane %v4225, 2
  %v4625 = vsel %vm630, %v4622, %v4624
  %v4626 = vrot.slane %v4226, 2
  %v4627 = vrot.slane %v4227, 2
  %v4628 = vsel %vm630, %v4626, %v4627
  %v4629 = vrot.slane %v4228, 2
  %v4630 = vsel %vm630, %v4627, %v4629
  %v4631 = vrot.slane %v4229, 2
  %v4632 = vrot.slane %v4230, 2
  %v4633 = vsel %vm630, %v4631, %v4632
  %v4634 = vrot.slane %v4231, 2
  %v4635 = vsel %vm630, %v4632, %v4634
  %v4636 = vrot.slane %v4232, 2
  %v4637 = vrot.slane %v4233, 2
  %v4638 = vsel %vm630, %v4636, %v4637
  %v4639 = vrot.slane %v4234, 2
  %v4640 = vsel %vm630, %v4637, %v4639
  %v4641 = vrot.slane %v4235, 2
  %v4642 = vrot.slane %v4236, 2
  %v4643 = vsel %vm630, %v4641, %v4642
  %v4644 = vrot.slane %v4237, 2
  %v4645 = vsel %vm630, %v4642, %v4644
  %v4646 = vrot.slane %v4238, 2
  %v4647 = vrot.slane %v4239, 2
  %v4648 = vsel %vm630, %v4646, %v4647
  %v4649 = vrot.slane %v4240, 2
  %v4650 = vsel %vm630, %v4647, %v4649
  %v4651 = vrot.slane %v4241, 2
  %v4652 = vrot.slane %v4242, 2
  %v4653 = vsel %vm630, %v4651, %v4652
  %v4654 = vrot.slane %v4243, 2
  %v4655 = vsel %vm630, %v4652, %v4654
  %v4656 = vrot.slane %v4244, 2
  %v4657 = vrot.slane %v4245, 2
  %v4658 = vsel %vm630, %v4656, %v4657
  %v4659 = vrot.slane %v4246, 2
  %v4660 = vsel %vm630, %v4657, %v4659
  %v4661 = vrot.slane %v4247, 2
  %v4662 = vrot.slane %v4248, 2
  %v4663 = vsel %vm630, %v4661, %v4662
  %v4664 = vrot.slane %v4249, 2
  %v4665 = vsel %vm630, %v4662, %v4664
  %v4666 = vrot.slane %v4250, 2
  %v4667 = vrot.slane %v4251, 2
  %v4668 = vsel %vm630, %v4666, %v4667
  %v4669 = vrot.slane %v4252, 2
  %v4670 = vsel %vm630, %v4667, %v4669
  %v4671 = vrot.slane %v4253, 2
  %v4672 = vrot.slane %v4254, 2
  %v4673 = vsel %vm630, %v4671, %v4672
  %v4674 = vrot.slane %v4255, 2
  %v4675 = vsel %vm630, %v4672, %v4674
  %v4676 = vrot.slane %v4256, 2
  %v4677 = vrot.slane %v4257, 2
  %v4678 = vsel %vm630, %v4676, %v4677
  %v4679 = vrot.slane %v4258, 2
  %v4680 = vsel %vm630, %v4677, %v4679
  %v4687 = vrot.slane %v4205, 1
  %v4688 = vrot.slane %v4206, 1
  %v4689 = vsel %vm469, %v4687, %v4688
  %v4690 = vrot.slane %v4207, 1
  %v4691 = vsel %vm469, %v4688, %v4690
  %v4692 = vrot.slane %v4259, 1
  %v4693 = vrot.slane %v4260, 1
  %v4694 = vsel %vm469, %v4692, %v4693
  %v4695 = vrot.slane %v4261, 1
  %v4696 = vsel %vm469, %v4693, %v4695
  %v4697 = vrot.slane %v4205, 2
  %v4698 = vrot.slane %v4206, 2
  %v4699 = vsel %vm630, %v4697, %v4698
  %v4700 = vrot.slane %v4207, 2
  %v4701 = vsel %vm630, %v4698, %v4700
  %v4702 = vrot.slane %v4259, 2
  %v4703 = vrot.slane %v4260, 2
  %v4704 = vsel %vm630, %v4702, %v4703
  %v4705 = vrot.slane %v4261, 2
  %v4706 = vsel %vm630, %v4703, %v4705
  %v4713 = vrot.slane %v4208, 1
  %v4714 = vrot.slane %v4209, 1
  %v4715 = vsel %vm469, %v4713, %v4714
  %v4716 = vrot.slane %v4210, 1
  %v4717 = vsel %vm469, %v4714, %v4716
  %v4718 = vrot.slane %v4262, 1
  %v4719 = vrot.slane %v4263, 1
  %v4720 = vsel %vm469, %v4718, %v4719
  %v4721 = vrot.slane %v4264, 1
  %v4722 = vsel %vm469, %v4719, %v4721
  %v4723 = vrot.slane %v4208, 2
  %v4724 = vrot.slane %v4209, 2
  %v4725 = vsel %vm630, %v4723, %v4724
  %v4726 = vrot.slane %v4210, 2
  %v4727 = vsel %vm630, %v4724, %v4726
  %v4728 = vrot.slane %v4262, 2
  %v4729 = vrot.slane %v4263, 2
  %v4730 = vsel %vm630, %v4728, %v4729
  %v4731 = vrot.slane %v4264, 2
  %v4732 = vsel %vm630, %v4729, %v4731
  %4733 = vrot.lane.b32.xlu0 %v4363, 4
  %v4734 = vpop.permute.xlu0 %4733
  %4735 = vrot.lane.b32.xlu0 %v4365, 4
  %v4736 = vpop.permute.xlu0 %4735
  %4737 = vrot.lane.b32.xlu0 %v4368, 4
  %v4738 = vpop.permute.xlu0 %4737
  %4739 = vrot.lane.b32.xlu0 %v4370, 4
  %v4740 = vpop.permute.xlu0 %4739
  %4741 = vrot.lane.b32.xlu0 %v4373, 4
  %v4742 = vpop.permute.xlu0 %4741
  %4743 = vrot.lane.b32.xlu0 %v4375, 4
  %v4744 = vpop.permute.xlu0 %4743
  %4745 = vrot.lane.b32.xlu0 %v4378, 4
  %v4746 = vpop.permute.xlu0 %4745
  %4747 = vrot.lane.b32.xlu0 %v4380, 4
  %v4748 = vpop.permute.xlu0 %4747
  %4749 = vrot.lane.b32.xlu0 %v4383, 4
  %v4750 = vpop.permute.xlu0 %4749
  %4751 = vrot.lane.b32.xlu0 %v4385, 4
  %v4752 = vpop.permute.xlu0 %4751
  %4753 = vrot.lane.b32.xlu0 %v4388, 4
  %v4754 = vpop.permute.xlu0 %4753
  %4755 = vrot.lane.b32.xlu0 %v4390, 4
  %v4756 = vpop.permute.xlu0 %4755
  %4757 = vrot.lane.b32.xlu0 %v4393, 4
  %v4758 = vpop.permute.xlu0 %4757
  %4759 = vrot.lane.b32.xlu0 %v4395, 4
  %v4760 = vpop.permute.xlu0 %4759
  %4761 = vrot.lane.b32.xlu0 %v4398, 4
  %v4762 = vpop.permute.xlu0 %4761
  %4763 = vrot.lane.b32.xlu0 %v4400, 4
  %v4764 = vpop.permute.xlu0 %4763
  %4765 = vrot.lane.b32.xlu0 %v4403, 4
  %v4766 = vpop.permute.xlu0 %4765
  %4767 = vrot.lane.b32.xlu0 %v4405, 4
  %v4768 = vpop.permute.xlu0 %4767
  %4769 = vrot.lane.b32.xlu0 %v4408, 4
  %v4770 = vpop.permute.xlu0 %4769
  %4771 = vrot.lane.b32.xlu0 %v4410, 4
  %v4772 = vpop.permute.xlu0 %4771
  %4773 = vrot.lane.b32.xlu0 %v4413, 4
  %v4774 = vpop.permute.xlu0 %4773
  %4775 = vrot.lane.b32.xlu0 %v4415, 4
  %v4776 = vpop.permute.xlu0 %4775
  %4777 = vrot.lane.b32.xlu0 %v4418, 4
  %v4778 = vpop.permute.xlu0 %4777
  %4779 = vrot.lane.b32.xlu0 %v4420, 4
  %v4780 = vpop.permute.xlu0 %4779
  %4781 = vrot.lane.b32.xlu0 %v4423, 4
  %v4782 = vpop.permute.xlu0 %4781
  %4783 = vrot.lane.b32.xlu0 %v4425, 4
  %v4784 = vpop.permute.xlu0 %4783
  %4785 = vrot.lane.b32.xlu0 %v4428, 4
  %v4786 = vpop.permute.xlu0 %4785
  %4787 = vrot.lane.b32.xlu0 %v4430, 4
  %v4788 = vpop.permute.xlu0 %4787
  %4789 = vrot.lane.b32.xlu0 %v4433, 4
  %v4790 = vpop.permute.xlu0 %4789
  %4791 = vrot.lane.b32.xlu0 %v4435, 4
  %v4792 = vpop.permute.xlu0 %4791
  %4793 = vrot.lane.b32.xlu0 %v4438, 4
  %v4794 = vpop.permute.xlu0 %4793
  %4795 = vrot.lane.b32.xlu0 %v4440, 4
  %v4796 = vpop.permute.xlu0 %4795
  %4797 = vrot.lane.b32.xlu0 %v4443, 4
  %v4798 = vpop.permute.xlu0 %4797
  %4799 = vrot.lane.b32.xlu0 %v4445, 4
  %v4800 = vpop.permute.xlu0 %4799
  %4801 = vrot.lane.b32.xlu0 %v4448, 4
  %v4802 = vpop.permute.xlu0 %4801
  %4803 = vrot.lane.b32.xlu0 %v4450, 4
  %v4804 = vpop.permute.xlu0 %4803
  %4805 = vrot.lane.b32.xlu0 %v4453, 4
  %v4806 = vpop.permute.xlu0 %4805
  %4807 = vrot.lane.b32.xlu0 %v4455, 4
  %v4808 = vpop.permute.xlu0 %4807
  %4809 = vrot.lane.b32.xlu0 %v4458, 4
  %v4810 = vpop.permute.xlu0 %4809
  %4811 = vrot.lane.b32.xlu0 %v4460, 4
  %v4812 = vpop.permute.xlu0 %4811
  %4813 = vrot.lane.b32.xlu0 %v4463, 4
  %v4814 = vpop.permute.xlu0 %4813
  %4815 = vrot.lane.b32.xlu0 %v4465, 4
  %v4816 = vpop.permute.xlu0 %4815
  %4817 = vrot.lane.b32.xlu0 %v4468, 4
  %v4818 = vpop.permute.xlu0 %4817
  %4819 = vrot.lane.b32.xlu0 %v4470, 4
  %v4820 = vpop.permute.xlu0 %4819
  %4821 = vrot.lane.b32.xlu0 %v4473, 4
  %v4822 = vpop.permute.xlu0 %4821
  %4823 = vrot.lane.b32.xlu0 %v4475, 4
  %v4824 = vpop.permute.xlu0 %4823
  %4825 = vrot.lane.b32.xlu0 %v4478, 4
  %v4826 = vpop.permute.xlu0 %4825
  %4827 = vrot.lane.b32.xlu0 %v4480, 4
  %v4828 = vpop.permute.xlu0 %4827
  %4829 = vrot.lane.b32.xlu0 %v4483, 4
  %v4830 = vpop.permute.xlu0 %4829
  %4831 = vrot.lane.b32.xlu0 %v4485, 4
  %v4832 = vpop.permute.xlu0 %4831
  %4833 = vrot.lane.b32.xlu0 %v4488, 4
  %v4834 = vpop.permute.xlu0 %4833
  %4835 = vrot.lane.b32.xlu0 %v4490, 4
  %v4836 = vpop.permute.xlu0 %4835
  %4837 = vrot.lane.b32.xlu0 %v4493, 4
  %v4838 = vpop.permute.xlu0 %4837
  %4839 = vrot.lane.b32.xlu0 %v4495, 4
  %v4840 = vpop.permute.xlu0 %4839
  %4841 = vrot.lane.b32.xlu0 %v4498, 4
  %v4842 = vpop.permute.xlu0 %4841
  %4843 = vrot.lane.b32.xlu0 %v4500, 4
  %v4844 = vpop.permute.xlu0 %4843
  %4845 = vrot.lane.b32.xlu0 %v4503, 4
  %v4846 = vpop.permute.xlu0 %4845
  %4847 = vrot.lane.b32.xlu0 %v4505, 4
  %v4848 = vpop.permute.xlu0 %4847
  %4849 = vrot.lane.b32.xlu0 %v4508, 4
  %v4850 = vpop.permute.xlu0 %4849
  %4851 = vrot.lane.b32.xlu0 %v4510, 4
  %v4852 = vpop.permute.xlu0 %4851
  %4853 = vrot.lane.b32.xlu0 %v4513, 4
  %v4854 = vpop.permute.xlu0 %4853
  %4855 = vrot.lane.b32.xlu0 %v4515, 4
  %v4856 = vpop.permute.xlu0 %4855
  %4857 = vrot.lane.b32.xlu0 %v4518, 4
  %v4858 = vpop.permute.xlu0 %4857
  %4859 = vrot.lane.b32.xlu0 %v4520, 4
  %v4860 = vpop.permute.xlu0 %4859
  %4925 = vrot.lane.b32.xlu0 %v4523, 8
  %v4926 = vpop.permute.xlu0 %4925
  %4927 = vrot.lane.b32.xlu0 %v4525, 8
  %v4928 = vpop.permute.xlu0 %4927
  %4929 = vrot.lane.b32.xlu0 %v4528, 8
  %v4930 = vpop.permute.xlu0 %4929
  %4931 = vrot.lane.b32.xlu0 %v4530, 8
  %v4932 = vpop.permute.xlu0 %4931
  %4933 = vrot.lane.b32.xlu0 %v4533, 8
  %v4934 = vpop.permute.xlu0 %4933
  %4935 = vrot.lane.b32.xlu0 %v4535, 8
  %v4936 = vpop.permute.xlu0 %4935
  %4937 = vrot.lane.b32.xlu0 %v4538, 8
  %v4938 = vpop.permute.xlu0 %4937
  %4939 = vrot.lane.b32.xlu0 %v4540, 8
  %v4940 = vpop.permute.xlu0 %4939
  %4941 = vrot.lane.b32.xlu0 %v4543, 8
  %v4942 = vpop.permute.xlu0 %4941
  %4943 = vrot.lane.b32.xlu0 %v4545, 8
  %v4944 = vpop.permute.xlu0 %4943
  %4945 = vrot.lane.b32.xlu0 %v4548, 8
  %v4946 = vpop.permute.xlu0 %4945
  %4947 = vrot.lane.b32.xlu0 %v4550, 8
  %v4948 = vpop.permute.xlu0 %4947
  %4949 = vrot.lane.b32.xlu0 %v4553, 8
  %v4950 = vpop.permute.xlu0 %4949
  %4951 = vrot.lane.b32.xlu0 %v4555, 8
  %v4952 = vpop.permute.xlu0 %4951
  %4953 = vrot.lane.b32.xlu0 %v4558, 8
  %v4954 = vpop.permute.xlu0 %4953
  %4955 = vrot.lane.b32.xlu0 %v4560, 8
  %v4956 = vpop.permute.xlu0 %4955
  %4957 = vrot.lane.b32.xlu0 %v4563, 8
  %v4958 = vpop.permute.xlu0 %4957
  %4959 = vrot.lane.b32.xlu0 %v4565, 8
  %v4960 = vpop.permute.xlu0 %4959
  %4961 = vrot.lane.b32.xlu0 %v4568, 8
  %v4962 = vpop.permute.xlu0 %4961
  %4963 = vrot.lane.b32.xlu0 %v4570, 8
  %v4964 = vpop.permute.xlu0 %4963
  %4965 = vrot.lane.b32.xlu0 %v4573, 8
  %v4966 = vpop.permute.xlu0 %4965
  %4967 = vrot.lane.b32.xlu0 %v4575, 8
  %v4968 = vpop.permute.xlu0 %4967
  %4969 = vrot.lane.b32.xlu0 %v4578, 8
  %v4970 = vpop.permute.xlu0 %4969
  %4971 = vrot.lane.b32.xlu0 %v4580, 8
  %v4972 = vpop.permute.xlu0 %4971
  %4973 = vrot.lane.b32.xlu0 %v4583, 8
  %v4974 = vpop.permute.xlu0 %4973
  %4975 = vrot.lane.b32.xlu0 %v4585, 8
  %v4976 = vpop.permute.xlu0 %4975
  %4977 = vrot.lane.b32.xlu0 %v4588, 8
  %v4978 = vpop.permute.xlu0 %4977
  %4979 = vrot.lane.b32.xlu0 %v4590, 8
  %v4980 = vpop.permute.xlu0 %4979
  %4981 = vrot.lane.b32.xlu0 %v4593, 8
  %v4982 = vpop.permute.xlu0 %4981
  %4983 = vrot.lane.b32.xlu0 %v4595, 8
  %v4984 = vpop.permute.xlu0 %4983
  %4985 = vrot.lane.b32.xlu0 %v4598, 8
  %v4986 = vpop.permute.xlu0 %4985
  %4987 = vrot.lane.b32.xlu0 %v4600, 8
  %v4988 = vpop.permute.xlu0 %4987
  %4989 = vrot.lane.b32.xlu0 %v4603, 8
  %v4990 = vpop.permute.xlu0 %4989
  %4991 = vrot.lane.b32.xlu0 %v4605, 8
  %v4992 = vpop.permute.xlu0 %4991
  %4993 = vrot.lane.b32.xlu0 %v4608, 8
  %v4994 = vpop.permute.xlu0 %4993
  %4995 = vrot.lane.b32.xlu0 %v4610, 8
  %v4996 = vpop.permute.xlu0 %4995
  %4997 = vrot.lane.b32.xlu0 %v4613, 8
  %v4998 = vpop.permute.xlu0 %4997
  %4999 = vrot.lane.b32.xlu0 %v4615, 8
  %v5000 = vpop.permute.xlu0 %4999
  %5001 = vrot.lane.b32.xlu0 %v4618, 8
  %v5002 = vpop.permute.xlu0 %5001
  %5003 = vrot.lane.b32.xlu0 %v4620, 8
  %v5004 = vpop.permute.xlu0 %5003
  %5005 = vrot.lane.b32.xlu0 %v4623, 8
  %v5006 = vpop.permute.xlu0 %5005
  %5007 = vrot.lane.b32.xlu0 %v4625, 8
  %v5008 = vpop.permute.xlu0 %5007
  %5009 = vrot.lane.b32.xlu0 %v4628, 8
  %v5010 = vpop.permute.xlu0 %5009
  %5011 = vrot.lane.b32.xlu0 %v4630, 8
  %v5012 = vpop.permute.xlu0 %5011
  %5013 = vrot.lane.b32.xlu0 %v4633, 8
  %v5014 = vpop.permute.xlu0 %5013
  %5015 = vrot.lane.b32.xlu0 %v4635, 8
  %v5016 = vpop.permute.xlu0 %5015
  %5017 = vrot.lane.b32.xlu0 %v4638, 8
  %v5018 = vpop.permute.xlu0 %5017
  %5019 = vrot.lane.b32.xlu0 %v4640, 8
  %v5020 = vpop.permute.xlu0 %5019
  %5021 = vrot.lane.b32.xlu0 %v4643, 8
  %v5022 = vpop.permute.xlu0 %5021
  %5023 = vrot.lane.b32.xlu0 %v4645, 8
  %v5024 = vpop.permute.xlu0 %5023
  %5025 = vrot.lane.b32.xlu0 %v4648, 8
  %v5026 = vpop.permute.xlu0 %5025
  %5027 = vrot.lane.b32.xlu0 %v4650, 8
  %v5028 = vpop.permute.xlu0 %5027
  %5029 = vrot.lane.b32.xlu0 %v4653, 8
  %v5030 = vpop.permute.xlu0 %5029
  %5031 = vrot.lane.b32.xlu0 %v4655, 8
  %v5032 = vpop.permute.xlu0 %5031
  %5033 = vrot.lane.b32.xlu0 %v4658, 8
  %v5034 = vpop.permute.xlu0 %5033
  %5035 = vrot.lane.b32.xlu0 %v4660, 8
  %v5036 = vpop.permute.xlu0 %5035
  %5037 = vrot.lane.b32.xlu0 %v4663, 8
  %v5038 = vpop.permute.xlu0 %5037
  %5039 = vrot.lane.b32.xlu0 %v4665, 8
  %v5040 = vpop.permute.xlu0 %5039
  %5041 = vrot.lane.b32.xlu0 %v4668, 8
  %v5042 = vpop.permute.xlu0 %5041
  %5043 = vrot.lane.b32.xlu0 %v4670, 8
  %v5044 = vpop.permute.xlu0 %5043
  %5045 = vrot.lane.b32.xlu0 %v4673, 8
  %v5046 = vpop.permute.xlu0 %5045
  %5047 = vrot.lane.b32.xlu0 %v4675, 8
  %v5048 = vpop.permute.xlu0 %5047
  %5049 = vrot.lane.b32.xlu0 %v4678, 8
  %v5050 = vpop.permute.xlu0 %5049
  %5051 = vrot.lane.b32.xlu0 %v4680, 8
  %v5052 = vpop.permute.xlu0 %5051
  %5117 = vrot.lane.b32.xlu0 %v4160, 12
  %v5118 = vpop.permute.xlu0 %5117
  %5119 = vrot.lane.b32.xlu0 %v4161, 12
  %v5120 = vpop.permute.xlu0 %5119
  %5121 = vrot.lane.b32.xlu0 %v4163, 12
  %v5122 = vpop.permute.xlu0 %5121
  %5123 = vrot.lane.b32.xlu0 %v4164, 12
  %v5124 = vpop.permute.xlu0 %5123
  %5125 = vrot.lane.b32.xlu0 %v4166, 12
  %v5126 = vpop.permute.xlu0 %5125
  %5127 = vrot.lane.b32.xlu0 %v4167, 12
  %v5128 = vpop.permute.xlu0 %5127
  %5129 = vrot.lane.b32.xlu0 %v4169, 12
  %v5130 = vpop.permute.xlu0 %5129
  %5131 = vrot.lane.b32.xlu0 %v4170, 12
  %v5132 = vpop.permute.xlu0 %5131
  %5133 = vrot.lane.b32.xlu0 %v4172, 12
  %v5134 = vpop.permute.xlu0 %5133
  %5135 = vrot.lane.b32.xlu0 %v4173, 12
  %v5136 = vpop.permute.xlu0 %5135
  %5137 = vrot.lane.b32.xlu0 %v4175, 12
  %v5138 = vpop.permute.xlu0 %5137
  %5139 = vrot.lane.b32.xlu0 %v4176, 12
  %v5140 = vpop.permute.xlu0 %5139
  %5141 = vrot.lane.b32.xlu0 %v4178, 12
  %v5142 = vpop.permute.xlu0 %5141
  %5143 = vrot.lane.b32.xlu0 %v4179, 12
  %v5144 = vpop.permute.xlu0 %5143
  %5145 = vrot.lane.b32.xlu0 %v4181, 12
  %v5146 = vpop.permute.xlu0 %5145
  %5147 = vrot.lane.b32.xlu0 %v4182, 12
  %v5148 = vpop.permute.xlu0 %5147
  %5149 = vrot.lane.b32.xlu0 %v4184, 12
  %v5150 = vpop.permute.xlu0 %5149
  %5151 = vrot.lane.b32.xlu0 %v4185, 12
  %v5152 = vpop.permute.xlu0 %5151
  %5153 = vrot.lane.b32.xlu0 %v4187, 12
  %v5154 = vpop.permute.xlu0 %5153
  %5155 = vrot.lane.b32.xlu0 %v4188, 12
  %v5156 = vpop.permute.xlu0 %5155
  %5157 = vrot.lane.b32.xlu0 %v4190, 12
  %v5158 = vpop.permute.xlu0 %5157
  %5159 = vrot.lane.b32.xlu0 %v4191, 12
  %v5160 = vpop.permute.xlu0 %5159
  %5161 = vrot.lane.b32.xlu0 %v4193, 12
  %v5162 = vpop.permute.xlu0 %5161
  %5163 = vrot.lane.b32.xlu0 %v4194, 12
  %v5164 = vpop.permute.xlu0 %5163
  %5165 = vrot.lane.b32.xlu0 %v4196, 12
  %v5166 = vpop.permute.xlu0 %5165
  %5167 = vrot.lane.b32.xlu0 %v4197, 12
  %v5168 = vpop.permute.xlu0 %5167
  %5169 = vrot.lane.b32.xlu0 %v4199, 12
  %v5170 = vpop.permute.xlu0 %5169
  %5171 = vrot.lane.b32.xlu0 %v4200, 12
  %v5172 = vpop.permute.xlu0 %5171
  %5173 = vrot.lane.b32.xlu0 %v4202, 12
  %v5174 = vpop.permute.xlu0 %5173
  %5175 = vrot.lane.b32.xlu0 %v4203, 12
  %v5176 = vpop.permute.xlu0 %5175
  %5177 = vrot.lane.b32.xlu0 %v4205, 12
  %v5178 = vpop.permute.xlu0 %5177
  %5179 = vrot.lane.b32.xlu0 %v4206, 12
  %v5180 = vpop.permute.xlu0 %5179
  %5181 = vrot.lane.b32.xlu0 %v4214, 12
  %v5182 = vpop.permute.xlu0 %5181
  %5183 = vrot.lane.b32.xlu0 %v4215, 12
  %v5184 = vpop.permute.xlu0 %5183
  %5185 = vrot.lane.b32.xlu0 %v4217, 12
  %v5186 = vpop.permute.xlu0 %5185
  %5187 = vrot.lane.b32.xlu0 %v4218, 12
  %v5188 = vpop.permute.xlu0 %5187
  %5189 = vrot.lane.b32.xlu0 %v4220, 12
  %v5190 = vpop.permute.xlu0 %5189
  %5191 = vrot.lane.b32.xlu0 %v4221, 12
  %v5192 = vpop.permute.xlu0 %5191
  %5193 = vrot.lane.b32.xlu0 %v4223, 12
  %v5194 = vpop.permute.xlu0 %5193
  %5195 = vrot.lane.b32.xlu0 %v4224, 12
  %v5196 = vpop.permute.xlu0 %5195
  %5197 = vrot.lane.b32.xlu0 %v4226, 12
  %v5198 = vpop.permute.xlu0 %5197
  %5199 = vrot.lane.b32.xlu0 %v4227, 12
  %v5200 = vpop.permute.xlu0 %5199
  %5201 = vrot.lane.b32.xlu0 %v4229, 12
  %v5202 = vpop.permute.xlu0 %5201
  %5203 = vrot.lane.b32.xlu0 %v4230, 12
  %v5204 = vpop.permute.xlu0 %5203
  %5205 = vrot.lane.b32.xlu0 %v4232, 12
  %v5206 = vpop.permute.xlu0 %5205
  %5207 = vrot.lane.b32.xlu0 %v4233, 12
  %v5208 = vpop.permute.xlu0 %5207
  %5209 = vrot.lane.b32.xlu0 %v4235, 12
  %v5210 = vpop.permute.xlu0 %5209
  %5211 = vrot.lane.b32.xlu0 %v4236, 12
  %v5212 = vpop.permute.xlu0 %5211
  %5213 = vrot.lane.b32.xlu0 %v4238, 12
  %v5214 = vpop.permute.xlu0 %5213
  %5215 = vrot.lane.b32.xlu0 %v4239, 12
  %v5216 = vpop.permute.xlu0 %5215
  %5217 = vrot.lane.b32.xlu0 %v4241, 12
  %v5218 = vpop.permute.xlu0 %5217
  %5219 = vrot.lane.b32.xlu0 %v4242, 12
  %v5220 = vpop.permute.xlu0 %5219
  %5221 = vrot.lane.b32.xlu0 %v4244, 12
  %v5222 = vpop.permute.xlu0 %5221
  %5223 = vrot.lane.b32.xlu0 %v4245, 12
  %v5224 = vpop.permute.xlu0 %5223
  %5225 = vrot.lane.b32.xlu0 %v4247, 12
  %v5226 = vpop.permute.xlu0 %5225
  %5227 = vrot.lane.b32.xlu0 %v4248, 12
  %v5228 = vpop.permute.xlu0 %5227
  %5229 = vrot.lane.b32.xlu0 %v4250, 12
  %v5230 = vpop.permute.xlu0 %5229
  %5231 = vrot.lane.b32.xlu0 %v4251, 12
  %v5232 = vpop.permute.xlu0 %5231
  %5233 = vrot.lane.b32.xlu0 %v4253, 12
  %v5234 = vpop.permute.xlu0 %5233
  %5235 = vrot.lane.b32.xlu0 %v4254, 12
  %v5236 = vpop.permute.xlu0 %5235
  %5237 = vrot.lane.b32.xlu0 %v4256, 12
  %v5238 = vpop.permute.xlu0 %5237
  %5239 = vrot.lane.b32.xlu0 %v4257, 12
  %v5240 = vpop.permute.xlu0 %5239
  %5241 = vrot.lane.b32.xlu0 %v4259, 12
  %v5242 = vpop.permute.xlu0 %5241
  %5243 = vrot.lane.b32.xlu0 %v4260, 12
  %v5244 = vpop.permute.xlu0 %5243
  %5309 = vrot.lane.b32.xlu0 %v4368, 16
  %v5310 = vpop.permute.xlu0 %5309
  %5311 = vrot.lane.b32.xlu0 %v4370, 16
  %v5312 = vpop.permute.xlu0 %5311
  %5313 = vrot.lane.b32.xlu0 %v4373, 16
  %v5314 = vpop.permute.xlu0 %5313
  %5315 = vrot.lane.b32.xlu0 %v4375, 16
  %v5316 = vpop.permute.xlu0 %5315
  %5317 = vrot.lane.b32.xlu0 %v4378, 16
  %v5318 = vpop.permute.xlu0 %5317
  %5319 = vrot.lane.b32.xlu0 %v4380, 16
  %v5320 = vpop.permute.xlu0 %5319
  %5321 = vrot.lane.b32.xlu0 %v4383, 16
  %v5322 = vpop.permute.xlu0 %5321
  %5323 = vrot.lane.b32.xlu0 %v4385, 16
  %v5324 = vpop.permute.xlu0 %5323
  %5325 = vrot.lane.b32.xlu0 %v4388, 16
  %v5326 = vpop.permute.xlu0 %5325
  %5327 = vrot.lane.b32.xlu0 %v4390, 16
  %v5328 = vpop.permute.xlu0 %5327
  %5329 = vrot.lane.b32.xlu0 %v4393, 16
  %v5330 = vpop.permute.xlu0 %5329
  %5331 = vrot.lane.b32.xlu0 %v4395, 16
  %v5332 = vpop.permute.xlu0 %5331
  %5333 = vrot.lane.b32.xlu0 %v4398, 16
  %v5334 = vpop.permute.xlu0 %5333
  %5335 = vrot.lane.b32.xlu0 %v4400, 16
  %v5336 = vpop.permute.xlu0 %5335
  %5337 = vrot.lane.b32.xlu0 %v4403, 16
  %v5338 = vpop.permute.xlu0 %5337
  %5339 = vrot.lane.b32.xlu0 %v4405, 16
  %v5340 = vpop.permute.xlu0 %5339
  %5341 = vrot.lane.b32.xlu0 %v4408, 16
  %v5342 = vpop.permute.xlu0 %5341
  %5343 = vrot.lane.b32.xlu0 %v4410, 16
  %v5344 = vpop.permute.xlu0 %5343
  %5345 = vrot.lane.b32.xlu0 %v4413, 16
  %v5346 = vpop.permute.xlu0 %5345
  %5347 = vrot.lane.b32.xlu0 %v4415, 16
  %v5348 = vpop.permute.xlu0 %5347
  %5349 = vrot.lane.b32.xlu0 %v4418, 16
  %v5350 = vpop.permute.xlu0 %5349
  %5351 = vrot.lane.b32.xlu0 %v4420, 16
  %v5352 = vpop.permute.xlu0 %5351
  %5353 = vrot.lane.b32.xlu0 %v4423, 16
  %v5354 = vpop.permute.xlu0 %5353
  %5355 = vrot.lane.b32.xlu0 %v4425, 16
  %v5356 = vpop.permute.xlu0 %5355
  %5357 = vrot.lane.b32.xlu0 %v4428, 16
  %v5358 = vpop.permute.xlu0 %5357
  %5359 = vrot.lane.b32.xlu0 %v4430, 16
  %v5360 = vpop.permute.xlu0 %5359
  %5361 = vrot.lane.b32.xlu0 %v4433, 16
  %v5362 = vpop.permute.xlu0 %5361
  %5363 = vrot.lane.b32.xlu0 %v4435, 16
  %v5364 = vpop.permute.xlu0 %5363
  %5365 = vrot.lane.b32.xlu0 %v4438, 16
  %v5366 = vpop.permute.xlu0 %5365
  %5367 = vrot.lane.b32.xlu0 %v4440, 16
  %v5368 = vpop.permute.xlu0 %5367
  %5369 = vrot.lane.b32.xlu0 %v4689, 16
  %v5370 = vpop.permute.xlu0 %5369
  %5371 = vrot.lane.b32.xlu0 %v4691, 16
  %v5372 = vpop.permute.xlu0 %5371
  %5373 = vrot.lane.b32.xlu0 %v4448, 16
  %v5374 = vpop.permute.xlu0 %5373
  %5375 = vrot.lane.b32.xlu0 %v4450, 16
  %v5376 = vpop.permute.xlu0 %5375
  %5377 = vrot.lane.b32.xlu0 %v4453, 16
  %v5378 = vpop.permute.xlu0 %5377
  %5379 = vrot.lane.b32.xlu0 %v4455, 16
  %v5380 = vpop.permute.xlu0 %5379
  %5381 = vrot.lane.b32.xlu0 %v4458, 16
  %v5382 = vpop.permute.xlu0 %5381
  %5383 = vrot.lane.b32.xlu0 %v4460, 16
  %v5384 = vpop.permute.xlu0 %5383
  %5385 = vrot.lane.b32.xlu0 %v4463, 16
  %v5386 = vpop.permute.xlu0 %5385
  %5387 = vrot.lane.b32.xlu0 %v4465, 16
  %v5388 = vpop.permute.xlu0 %5387
  %5389 = vrot.lane.b32.xlu0 %v4468, 16
  %v5390 = vpop.permute.xlu0 %5389
  %5391 = vrot.lane.b32.xlu0 %v4470, 16
  %v5392 = vpop.permute.xlu0 %5391
  %5393 = vrot.lane.b32.xlu0 %v4473, 16
  %v5394 = vpop.permute.xlu0 %5393
  %5395 = vrot.lane.b32.xlu0 %v4475, 16
  %v5396 = vpop.permute.xlu0 %5395
  %5397 = vrot.lane.b32.xlu0 %v4478, 16
  %v5398 = vpop.permute.xlu0 %5397
  %5399 = vrot.lane.b32.xlu0 %v4480, 16
  %v5400 = vpop.permute.xlu0 %5399
  %5401 = vrot.lane.b32.xlu0 %v4483, 16
  %v5402 = vpop.permute.xlu0 %5401
  %5403 = vrot.lane.b32.xlu0 %v4485, 16
  %v5404 = vpop.permute.xlu0 %5403
  %5405 = vrot.lane.b32.xlu0 %v4488, 16
  %v5406 = vpop.permute.xlu0 %5405
  %5407 = vrot.lane.b32.xlu0 %v4490, 16
  %v5408 = vpop.permute.xlu0 %5407
  %5409 = vrot.lane.b32.xlu0 %v4493, 16
  %v5410 = vpop.permute.xlu0 %5409
  %5411 = vrot.lane.b32.xlu0 %v4495, 16
  %v5412 = vpop.permute.xlu0 %5411
  %5413 = vrot.lane.b32.xlu0 %v4498, 16
  %v5414 = vpop.permute.xlu0 %5413
  %5415 = vrot.lane.b32.xlu0 %v4500, 16
  %v5416 = vpop.permute.xlu0 %5415
  %5417 = vrot.lane.b32.xlu0 %v4503, 16
  %v5418 = vpop.permute.xlu0 %5417
  %5419 = vrot.lane.b32.xlu0 %v4505, 16
  %v5420 = vpop.permute.xlu0 %5419
  %5421 = vrot.lane.b32.xlu0 %v4508, 16
  %v5422 = vpop.permute.xlu0 %5421
  %5423 = vrot.lane.b32.xlu0 %v4510, 16
  %v5424 = vpop.permute.xlu0 %5423
  %5425 = vrot.lane.b32.xlu0 %v4513, 16
  %v5426 = vpop.permute.xlu0 %5425
  %5427 = vrot.lane.b32.xlu0 %v4515, 16
  %v5428 = vpop.permute.xlu0 %5427
  %5429 = vrot.lane.b32.xlu0 %v4518, 16
  %v5430 = vpop.permute.xlu0 %5429
  %5431 = vrot.lane.b32.xlu0 %v4520, 16
  %v5432 = vpop.permute.xlu0 %5431
  %5433 = vrot.lane.b32.xlu0 %v4694, 16
  %v5434 = vpop.permute.xlu0 %5433
  %5435 = vrot.lane.b32.xlu0 %v4696, 16
  %v5436 = vpop.permute.xlu0 %5435
  %5501 = vrot.lane.b32.xlu0 %v4528, 20
  %v5502 = vpop.permute.xlu0 %5501
  %5503 = vrot.lane.b32.xlu0 %v4530, 20
  %v5504 = vpop.permute.xlu0 %5503
  %5505 = vrot.lane.b32.xlu0 %v4533, 20
  %v5506 = vpop.permute.xlu0 %5505
  %5507 = vrot.lane.b32.xlu0 %v4535, 20
  %v5508 = vpop.permute.xlu0 %5507
  %5509 = vrot.lane.b32.xlu0 %v4538, 20
  %v5510 = vpop.permute.xlu0 %5509
  %5511 = vrot.lane.b32.xlu0 %v4540, 20
  %v5512 = vpop.permute.xlu0 %5511
  %5513 = vrot.lane.b32.xlu0 %v4543, 20
  %v5514 = vpop.permute.xlu0 %5513
  %5515 = vrot.lane.b32.xlu0 %v4545, 20
  %v5516 = vpop.permute.xlu0 %5515
  %5517 = vrot.lane.b32.xlu0 %v4548, 20
  %v5518 = vpop.permute.xlu0 %5517
  %5519 = vrot.lane.b32.xlu0 %v4550, 20
  %v5520 = vpop.permute.xlu0 %5519
  %5521 = vrot.lane.b32.xlu0 %v4553, 20
  %v5522 = vpop.permute.xlu0 %5521
  %5523 = vrot.lane.b32.xlu0 %v4555, 20
  %v5524 = vpop.permute.xlu0 %5523
  %5525 = vrot.lane.b32.xlu0 %v4558, 20
  %v5526 = vpop.permute.xlu0 %5525
  %5527 = vrot.lane.b32.xlu0 %v4560, 20
  %v5528 = vpop.permute.xlu0 %5527
  %5529 = vrot.lane.b32.xlu0 %v4563, 20
  %v5530 = vpop.permute.xlu0 %5529
  %5531 = vrot.lane.b32.xlu0 %v4565, 20
  %v5532 = vpop.permute.xlu0 %5531
  %5533 = vrot.lane.b32.xlu0 %v4568, 20
  %v5534 = vpop.permute.xlu0 %5533
  %5535 = vrot.lane.b32.xlu0 %v4570, 20
  %v5536 = vpop.permute.xlu0 %5535
  %5537 = vrot.lane.b32.xlu0 %v4573, 20
  %v5538 = vpop.permute.xlu0 %5537
  %5539 = vrot.lane.b32.xlu0 %v4575, 20
  %v5540 = vpop.permute.xlu0 %5539
  %5541 = vrot.lane.b32.xlu0 %v4578, 20
  %v5542 = vpop.permute.xlu0 %5541
  %5543 = vrot.lane.b32.xlu0 %v4580, 20
  %v5544 = vpop.permute.xlu0 %5543
  %5545 = vrot.lane.b32.xlu0 %v4583, 20
  %v5546 = vpop.permute.xlu0 %5545
  %5547 = vrot.lane.b32.xlu0 %v4585, 20
  %v5548 = vpop.permute.xlu0 %5547
  %5549 = vrot.lane.b32.xlu0 %v4588, 20
  %v5550 = vpop.permute.xlu0 %5549
  %5551 = vrot.lane.b32.xlu0 %v4590, 20
  %v5552 = vpop.permute.xlu0 %5551
  %5553 = vrot.lane.b32.xlu0 %v4593, 20
  %v5554 = vpop.permute.xlu0 %5553
  %5555 = vrot.lane.b32.xlu0 %v4595, 20
  %v5556 = vpop.permute.xlu0 %5555
  %5557 = vrot.lane.b32.xlu0 %v4598, 20
  %v5558 = vpop.permute.xlu0 %5557
  %5559 = vrot.lane.b32.xlu0 %v4600, 20
  %v5560 = vpop.permute.xlu0 %5559
  %5561 = vrot.lane.b32.xlu0 %v4699, 20
  %v5562 = vpop.permute.xlu0 %5561
  %5563 = vrot.lane.b32.xlu0 %v4701, 20
  %v5564 = vpop.permute.xlu0 %5563
  %5565 = vrot.lane.b32.xlu0 %v4608, 20
  %v5566 = vpop.permute.xlu0 %5565
  %5567 = vrot.lane.b32.xlu0 %v4610, 20
  %v5568 = vpop.permute.xlu0 %5567
  %5569 = vrot.lane.b32.xlu0 %v4613, 20
  %v5570 = vpop.permute.xlu0 %5569
  %5571 = vrot.lane.b32.xlu0 %v4615, 20
  %v5572 = vpop.permute.xlu0 %5571
  %5573 = vrot.lane.b32.xlu0 %v4618, 20
  %v5574 = vpop.permute.xlu0 %5573
  %5575 = vrot.lane.b32.xlu0 %v4620, 20
  %v5576 = vpop.permute.xlu0 %5575
  %5577 = vrot.lane.b32.xlu0 %v4623, 20
  %v5578 = vpop.permute.xlu0 %5577
  %5579 = vrot.lane.b32.xlu0 %v4625, 20
  %v5580 = vpop.permute.xlu0 %5579
  %5581 = vrot.lane.b32.xlu0 %v4628, 20
  %v5582 = vpop.permute.xlu0 %5581
  %5583 = vrot.lane.b32.xlu0 %v4630, 20
  %v5584 = vpop.permute.xlu0 %5583
  %5585 = vrot.lane.b32.xlu0 %v4633, 20
  %v5586 = vpop.permute.xlu0 %5585
  %5587 = vrot.lane.b32.xlu0 %v4635, 20
  %v5588 = vpop.permute.xlu0 %5587
  %5589 = vrot.lane.b32.xlu0 %v4638, 20
  %v5590 = vpop.permute.xlu0 %5589
  %5591 = vrot.lane.b32.xlu0 %v4640, 20
  %v5592 = vpop.permute.xlu0 %5591
  %5593 = vrot.lane.b32.xlu0 %v4643, 20
  %v5594 = vpop.permute.xlu0 %5593
  %5595 = vrot.lane.b32.xlu0 %v4645, 20
  %v5596 = vpop.permute.xlu0 %5595
  %5597 = vrot.lane.b32.xlu0 %v4648, 20
  %v5598 = vpop.permute.xlu0 %5597
  %5599 = vrot.lane.b32.xlu0 %v4650, 20
  %v5600 = vpop.permute.xlu0 %5599
  %5601 = vrot.lane.b32.xlu0 %v4653, 20
  %v5602 = vpop.permute.xlu0 %5601
  %5603 = vrot.lane.b32.xlu0 %v4655, 20
  %v5604 = vpop.permute.xlu0 %5603
  %5605 = vrot.lane.b32.xlu0 %v4658, 20
  %v5606 = vpop.permute.xlu0 %5605
  %5607 = vrot.lane.b32.xlu0 %v4660, 20
  %v5608 = vpop.permute.xlu0 %5607
  %5609 = vrot.lane.b32.xlu0 %v4663, 20
  %v5610 = vpop.permute.xlu0 %5609
  %5611 = vrot.lane.b32.xlu0 %v4665, 20
  %v5612 = vpop.permute.xlu0 %5611
  %5613 = vrot.lane.b32.xlu0 %v4668, 20
  %v5614 = vpop.permute.xlu0 %5613
  %5615 = vrot.lane.b32.xlu0 %v4670, 20
  %v5616 = vpop.permute.xlu0 %5615
  %5617 = vrot.lane.b32.xlu0 %v4673, 20
  %v5618 = vpop.permute.xlu0 %5617
  %5619 = vrot.lane.b32.xlu0 %v4675, 20
  %v5620 = vpop.permute.xlu0 %5619
  %5621 = vrot.lane.b32.xlu0 %v4678, 20
  %v5622 = vpop.permute.xlu0 %5621
  %5623 = vrot.lane.b32.xlu0 %v4680, 20
  %v5624 = vpop.permute.xlu0 %5623
  %5625 = vrot.lane.b32.xlu0 %v4704, 20
  %v5626 = vpop.permute.xlu0 %5625
  %5627 = vrot.lane.b32.xlu0 %v4706, 20
  %v5628 = vpop.permute.xlu0 %5627
  %5693 = vrot.lane.b32.xlu0 %v4163, 24
  %v5694 = vpop.permute.xlu0 %5693
  %5695 = vrot.lane.b32.xlu0 %v4164, 24
  %v5696 = vpop.permute.xlu0 %5695
  %5697 = vrot.lane.b32.xlu0 %v4166, 24
  %v5698 = vpop.permute.xlu0 %5697
  %5699 = vrot.lane.b32.xlu0 %v4167, 24
  %v5700 = vpop.permute.xlu0 %5699
  %5701 = vrot.lane.b32.xlu0 %v4169, 24
  %v5702 = vpop.permute.xlu0 %5701
  %5703 = vrot.lane.b32.xlu0 %v4170, 24
  %v5704 = vpop.permute.xlu0 %5703
  %5705 = vrot.lane.b32.xlu0 %v4172, 24
  %v5706 = vpop.permute.xlu0 %5705
  %5707 = vrot.lane.b32.xlu0 %v4173, 24
  %v5708 = vpop.permute.xlu0 %5707
  %5709 = vrot.lane.b32.xlu0 %v4175, 24
  %v5710 = vpop.permute.xlu0 %5709
  %5711 = vrot.lane.b32.xlu0 %v4176, 24
  %v5712 = vpop.permute.xlu0 %5711
  %5713 = vrot.lane.b32.xlu0 %v4178, 24
  %v5714 = vpop.permute.xlu0 %5713
  %5715 = vrot.lane.b32.xlu0 %v4179, 24
  %v5716 = vpop.permute.xlu0 %5715
  %5717 = vrot.lane.b32.xlu0 %v4181, 24
  %v5718 = vpop.permute.xlu0 %5717
  %5719 = vrot.lane.b32.xlu0 %v4182, 24
  %v5720 = vpop.permute.xlu0 %5719
  %5721 = vrot.lane.b32.xlu0 %v4184, 24
  %v5722 = vpop.permute.xlu0 %5721
  %5723 = vrot.lane.b32.xlu0 %v4185, 24
  %v5724 = vpop.permute.xlu0 %5723
  %5725 = vrot.lane.b32.xlu0 %v4187, 24
  %v5726 = vpop.permute.xlu0 %5725
  %5727 = vrot.lane.b32.xlu0 %v4188, 24
  %v5728 = vpop.permute.xlu0 %5727
  %5729 = vrot.lane.b32.xlu0 %v4190, 24
  %v5730 = vpop.permute.xlu0 %5729
  %5731 = vrot.lane.b32.xlu0 %v4191, 24
  %v5732 = vpop.permute.xlu0 %5731
  %5733 = vrot.lane.b32.xlu0 %v4193, 24
  %v5734 = vpop.permute.xlu0 %5733
  %5735 = vrot.lane.b32.xlu0 %v4194, 24
  %v5736 = vpop.permute.xlu0 %5735
  %5737 = vrot.lane.b32.xlu0 %v4196, 24
  %v5738 = vpop.permute.xlu0 %5737
  %5739 = vrot.lane.b32.xlu0 %v4197, 24
  %v5740 = vpop.permute.xlu0 %5739
  %5741 = vrot.lane.b32.xlu0 %v4199, 24
  %v5742 = vpop.permute.xlu0 %5741
  %5743 = vrot.lane.b32.xlu0 %v4200, 24
  %v5744 = vpop.permute.xlu0 %5743
  %5745 = vrot.lane.b32.xlu0 %v4202, 24
  %v5746 = vpop.permute.xlu0 %5745
  %5747 = vrot.lane.b32.xlu0 %v4203, 24
  %v5748 = vpop.permute.xlu0 %5747
  %5749 = vrot.lane.b32.xlu0 %v4205, 24
  %v5750 = vpop.permute.xlu0 %5749
  %5751 = vrot.lane.b32.xlu0 %v4206, 24
  %v5752 = vpop.permute.xlu0 %5751
  %5753 = vrot.lane.b32.xlu0 %v4208, 24
  %v5754 = vpop.permute.xlu0 %5753
  %5755 = vrot.lane.b32.xlu0 %v4209, 24
  %v5756 = vpop.permute.xlu0 %5755
  %5757 = vrot.lane.b32.xlu0 %v4217, 24
  %v5758 = vpop.permute.xlu0 %5757
  %5759 = vrot.lane.b32.xlu0 %v4218, 24
  %v5760 = vpop.permute.xlu0 %5759
  %5761 = vrot.lane.b32.xlu0 %v4220, 24
  %v5762 = vpop.permute.xlu0 %5761
  %5763 = vrot.lane.b32.xlu0 %v4221, 24
  %v5764 = vpop.permute.xlu0 %5763
  %5765 = vrot.lane.b32.xlu0 %v4223, 24
  %v5766 = vpop.permute.xlu0 %5765
  %5767 = vrot.lane.b32.xlu0 %v4224, 24
  %v5768 = vpop.permute.xlu0 %5767
  %5769 = vrot.lane.b32.xlu0 %v4226, 24
  %v5770 = vpop.permute.xlu0 %5769
  %5771 = vrot.lane.b32.xlu0 %v4227, 24
  %v5772 = vpop.permute.xlu0 %5771
  %5773 = vrot.lane.b32.xlu0 %v4229, 24
  %v5774 = vpop.permute.xlu0 %5773
  %5775 = vrot.lane.b32.xlu0 %v4230, 24
  %v5776 = vpop.permute.xlu0 %5775
  %5777 = vrot.lane.b32.xlu0 %v4232, 24
  %v5778 = vpop.permute.xlu0 %5777
  %5779 = vrot.lane.b32.xlu0 %v4233, 24
  %v5780 = vpop.permute.xlu0 %5779
  %5781 = vrot.lane.b32.xlu0 %v4235, 24
  %v5782 = vpop.permute.xlu0 %5781
  %5783 = vrot.lane.b32.xlu0 %v4236, 24
  %v5784 = vpop.permute.xlu0 %5783
  %5785 = vrot.lane.b32.xlu0 %v4238, 24
  %v5786 = vpop.permute.xlu0 %5785
  %5787 = vrot.lane.b32.xlu0 %v4239, 24
  %v5788 = vpop.permute.xlu0 %5787
  %5789 = vrot.lane.b32.xlu0 %v4241, 24
  %v5790 = vpop.permute.xlu0 %5789
  %5791 = vrot.lane.b32.xlu0 %v4242, 24
  %v5792 = vpop.permute.xlu0 %5791
  %5793 = vrot.lane.b32.xlu0 %v4244, 24
  %v5794 = vpop.permute.xlu0 %5793
  %5795 = vrot.lane.b32.xlu0 %v4245, 24
  %v5796 = vpop.permute.xlu0 %5795
  %5797 = vrot.lane.b32.xlu0 %v4247, 24
  %v5798 = vpop.permute.xlu0 %5797
  %5799 = vrot.lane.b32.xlu0 %v4248, 24
  %v5800 = vpop.permute.xlu0 %5799
  %5801 = vrot.lane.b32.xlu0 %v4250, 24
  %v5802 = vpop.permute.xlu0 %5801
  %5803 = vrot.lane.b32.xlu0 %v4251, 24
  %v5804 = vpop.permute.xlu0 %5803
  %5805 = vrot.lane.b32.xlu0 %v4253, 24
  %v5806 = vpop.permute.xlu0 %5805
  %5807 = vrot.lane.b32.xlu0 %v4254, 24
  %v5808 = vpop.permute.xlu0 %5807
  %5809 = vrot.lane.b32.xlu0 %v4256, 24
  %v5810 = vpop.permute.xlu0 %5809
  %5811 = vrot.lane.b32.xlu0 %v4257, 24
  %v5812 = vpop.permute.xlu0 %5811
  %5813 = vrot.lane.b32.xlu0 %v4259, 24
  %v5814 = vpop.permute.xlu0 %5813
  %5815 = vrot.lane.b32.xlu0 %v4260, 24
  %v5816 = vpop.permute.xlu0 %5815
  %5817 = vrot.lane.b32.xlu0 %v4262, 24
  %v5818 = vpop.permute.xlu0 %5817
  %5819 = vrot.lane.b32.xlu0 %v4263, 24
  %v5820 = vpop.permute.xlu0 %5819
  %5885 = vrot.lane.b32.xlu0 %v4373, 28
  %v5886 = vpop.permute.xlu0 %5885
  %5887 = vrot.lane.b32.xlu0 %v4375, 28
  %v5888 = vpop.permute.xlu0 %5887
  %5889 = vrot.lane.b32.xlu0 %v4378, 28
  %v5890 = vpop.permute.xlu0 %5889
  %5891 = vrot.lane.b32.xlu0 %v4380, 28
  %v5892 = vpop.permute.xlu0 %5891
  %5893 = vrot.lane.b32.xlu0 %v4383, 28
  %v5894 = vpop.permute.xlu0 %5893
  %5895 = vrot.lane.b32.xlu0 %v4385, 28
  %v5896 = vpop.permute.xlu0 %5895
  %5897 = vrot.lane.b32.xlu0 %v4388, 28
  %v5898 = vpop.permute.xlu0 %5897
  %5899 = vrot.lane.b32.xlu0 %v4390, 28
  %v5900 = vpop.permute.xlu0 %5899
  %5901 = vrot.lane.b32.xlu0 %v4393, 28
  %v5902 = vpop.permute.xlu0 %5901
  %5903 = vrot.lane.b32.xlu0 %v4395, 28
  %v5904 = vpop.permute.xlu0 %5903
  %5905 = vrot.lane.b32.xlu0 %v4398, 28
  %v5906 = vpop.permute.xlu0 %5905
  %5907 = vrot.lane.b32.xlu0 %v4400, 28
  %v5908 = vpop.permute.xlu0 %5907
  %5909 = vrot.lane.b32.xlu0 %v4403, 28
  %v5910 = vpop.permute.xlu0 %5909
  %5911 = vrot.lane.b32.xlu0 %v4405, 28
  %v5912 = vpop.permute.xlu0 %5911
  %5913 = vrot.lane.b32.xlu0 %v4408, 28
  %v5914 = vpop.permute.xlu0 %5913
  %5915 = vrot.lane.b32.xlu0 %v4410, 28
  %v5916 = vpop.permute.xlu0 %5915
  %5917 = vrot.lane.b32.xlu0 %v4413, 28
  %v5918 = vpop.permute.xlu0 %5917
  %5919 = vrot.lane.b32.xlu0 %v4415, 28
  %v5920 = vpop.permute.xlu0 %5919
  %5921 = vrot.lane.b32.xlu0 %v4418, 28
  %v5922 = vpop.permute.xlu0 %5921
  %5923 = vrot.lane.b32.xlu0 %v4420, 28
  %v5924 = vpop.permute.xlu0 %5923
  %5925 = vrot.lane.b32.xlu0 %v4423, 28
  %v5926 = vpop.permute.xlu0 %5925
  %5927 = vrot.lane.b32.xlu0 %v4425, 28
  %v5928 = vpop.permute.xlu0 %5927
  %5929 = vrot.lane.b32.xlu0 %v4428, 28
  %v5930 = vpop.permute.xlu0 %5929
  %5931 = vrot.lane.b32.xlu0 %v4430, 28
  %v5932 = vpop.permute.xlu0 %5931
  %5933 = vrot.lane.b32.xlu0 %v4433, 28
  %v5934 = vpop.permute.xlu0 %5933
  %5935 = vrot.lane.b32.xlu0 %v4435, 28
  %v5936 = vpop.permute.xlu0 %5935
  %5937 = vrot.lane.b32.xlu0 %v4438, 28
  %v5938 = vpop.permute.xlu0 %5937
  %5939 = vrot.lane.b32.xlu0 %v4440, 28
  %v5940 = vpop.permute.xlu0 %5939
  %5941 = vrot.lane.b32.xlu0 %v4689, 28
  %v5942 = vpop.permute.xlu0 %5941
  %5943 = vrot.lane.b32.xlu0 %v4691, 28
  %v5944 = vpop.permute.xlu0 %5943
  %5945 = vrot.lane.b32.xlu0 %v4715, 28
  %v5946 = vpop.permute.xlu0 %5945
  %5947 = vrot.lane.b32.xlu0 %v4717, 28
  %v5948 = vpop.permute.xlu0 %5947
  %5949 = vrot.lane.b32.xlu0 %v4453, 28
  %v5950 = vpop.permute.xlu0 %5949
  %5951 = vrot.lane.b32.xlu0 %v4455, 28
  %v5952 = vpop.permute.xlu0 %5951
  %5953 = vrot.lane.b32.xlu0 %v4458, 28
  %v5954 = vpop.permute.xlu0 %5953
  %5955 = vrot.lane.b32.xlu0 %v4460, 28
  %v5956 = vpop.permute.xlu0 %5955
  %5957 = vrot.lane.b32.xlu0 %v4463, 28
  %v5958 = vpop.permute.xlu0 %5957
  %5959 = vrot.lane.b32.xlu0 %v4465, 28
  %v5960 = vpop.permute.xlu0 %5959
  %5961 = vrot.lane.b32.xlu0 %v4468, 28
  %v5962 = vpop.permute.xlu0 %5961
  %5963 = vrot.lane.b32.xlu0 %v4470, 28
  %v5964 = vpop.permute.xlu0 %5963
  %5965 = vrot.lane.b32.xlu0 %v4473, 28
  %v5966 = vpop.permute.xlu0 %5965
  %5967 = vrot.lane.b32.xlu0 %v4475, 28
  %v5968 = vpop.permute.xlu0 %5967
  %5969 = vrot.lane.b32.xlu0 %v4478, 28
  %v5970 = vpop.permute.xlu0 %5969
  %5971 = vrot.lane.b32.xlu0 %v4480, 28
  %v5972 = vpop.permute.xlu0 %5971
  %5973 = vrot.lane.b32.xlu0 %v4483, 28
  %v5974 = vpop.permute.xlu0 %5973
  %5975 = vrot.lane.b32.xlu0 %v4485, 28
  %v5976 = vpop.permute.xlu0 %5975
  %5977 = vrot.lane.b32.xlu0 %v4488, 28
  %v5978 = vpop.permute.xlu0 %5977
  %5979 = vrot.lane.b32.xlu0 %v4490, 28
  %v5980 = vpop.permute.xlu0 %5979
  %5981 = vrot.lane.b32.xlu0 %v4493, 28
  %v5982 = vpop.permute.xlu0 %5981
  %5983 = vrot.lane.b32.xlu0 %v4495, 28
  %v5984 = vpop.permute.xlu0 %5983
  %5985 = vrot.lane.b32.xlu0 %v4498, 28
  %v5986 = vpop.permute.xlu0 %5985
  %5987 = vrot.lane.b32.xlu0 %v4500, 28
  %v5988 = vpop.permute.xlu0 %5987
  %5989 = vrot.lane.b32.xlu0 %v4503, 28
  %v5990 = vpop.permute.xlu0 %5989
  %5991 = vrot.lane.b32.xlu0 %v4505, 28
  %v5992 = vpop.permute.xlu0 %5991
  %5993 = vrot.lane.b32.xlu0 %v4508, 28
  %v5994 = vpop.permute.xlu0 %5993
  %5995 = vrot.lane.b32.xlu0 %v4510, 28
  %v5996 = vpop.permute.xlu0 %5995
  %5997 = vrot.lane.b32.xlu0 %v4513, 28
  %v5998 = vpop.permute.xlu0 %5997
  %5999 = vrot.lane.b32.xlu0 %v4515, 28
  %v6000 = vpop.permute.xlu0 %5999
  %6001 = vrot.lane.b32.xlu0 %v4518, 28
  %v6002 = vpop.permute.xlu0 %6001
  %6003 = vrot.lane.b32.xlu0 %v4520, 28
  %v6004 = vpop.permute.xlu0 %6003
  %6005 = vrot.lane.b32.xlu0 %v4694, 28
  %v6006 = vpop.permute.xlu0 %6005
  %6007 = vrot.lane.b32.xlu0 %v4696, 28
  %v6008 = vpop.permute.xlu0 %6007
  %6009 = vrot.lane.b32.xlu0 %v4720, 28
  %v6010 = vpop.permute.xlu0 %6009
  %6011 = vrot.lane.b32.xlu0 %v4722, 28
  %v6012 = vpop.permute.xlu0 %6011
  %6077 = vrot.lane.b32.xlu0 %v4533, 32
  %v6078 = vpop.permute.xlu0 %6077
  %6079 = vrot.lane.b32.xlu0 %v4535, 32
  %v6080 = vpop.permute.xlu0 %6079
  %6081 = vrot.lane.b32.xlu0 %v4538, 32
  %v6082 = vpop.permute.xlu0 %6081
  %6083 = vrot.lane.b32.xlu0 %v4540, 32
  %v6084 = vpop.permute.xlu0 %6083
  %6085 = vrot.lane.b32.xlu0 %v4543, 32
  %v6086 = vpop.permute.xlu0 %6085
  %6087 = vrot.lane.b32.xlu0 %v4545, 32
  %v6088 = vpop.permute.xlu0 %6087
  %6089 = vrot.lane.b32.xlu0 %v4548, 32
  %v6090 = vpop.permute.xlu0 %6089
  %6091 = vrot.lane.b32.xlu0 %v4550, 32
  %v6092 = vpop.permute.xlu0 %6091
  %6093 = vrot.lane.b32.xlu0 %v4553, 32
  %v6094 = vpop.permute.xlu0 %6093
  %6095 = vrot.lane.b32.xlu0 %v4555, 32
  %v6096 = vpop.permute.xlu0 %6095
  %6097 = vrot.lane.b32.xlu0 %v4558, 32
  %v6098 = vpop.permute.xlu0 %6097
  %6099 = vrot.lane.b32.xlu0 %v4560, 32
  %v6100 = vpop.permute.xlu0 %6099
  %6101 = vrot.lane.b32.xlu0 %v4563, 32
  %v6102 = vpop.permute.xlu0 %6101
  %6103 = vrot.lane.b32.xlu0 %v4565, 32
  %v6104 = vpop.permute.xlu0 %6103
  %6105 = vrot.lane.b32.xlu0 %v4568, 32
  %v6106 = vpop.permute.xlu0 %6105
  %6107 = vrot.lane.b32.xlu0 %v4570, 32
  %v6108 = vpop.permute.xlu0 %6107
  %6109 = vrot.lane.b32.xlu0 %v4573, 32
  %v6110 = vpop.permute.xlu0 %6109
  %6111 = vrot.lane.b32.xlu0 %v4575, 32
  %v6112 = vpop.permute.xlu0 %6111
  %6113 = vrot.lane.b32.xlu0 %v4578, 32
  %v6114 = vpop.permute.xlu0 %6113
  %6115 = vrot.lane.b32.xlu0 %v4580, 32
  %v6116 = vpop.permute.xlu0 %6115
  %6117 = vrot.lane.b32.xlu0 %v4583, 32
  %v6118 = vpop.permute.xlu0 %6117
  %6119 = vrot.lane.b32.xlu0 %v4585, 32
  %v6120 = vpop.permute.xlu0 %6119
  %6121 = vrot.lane.b32.xlu0 %v4588, 32
  %v6122 = vpop.permute.xlu0 %6121
  %6123 = vrot.lane.b32.xlu0 %v4590, 32
  %v6124 = vpop.permute.xlu0 %6123
  %6125 = vrot.lane.b32.xlu0 %v4593, 32
  %v6126 = vpop.permute.xlu0 %6125
  %6127 = vrot.lane.b32.xlu0 %v4595, 32
  %v6128 = vpop.permute.xlu0 %6127
  %6129 = vrot.lane.b32.xlu0 %v4598, 32
  %v6130 = vpop.permute.xlu0 %6129
  %6131 = vrot.lane.b32.xlu0 %v4600, 32
  %v6132 = vpop.permute.xlu0 %6131
  %6133 = vrot.lane.b32.xlu0 %v4699, 32
  %v6134 = vpop.permute.xlu0 %6133
  %6135 = vrot.lane.b32.xlu0 %v4701, 32
  %v6136 = vpop.permute.xlu0 %6135
  %6137 = vrot.lane.b32.xlu0 %v4725, 32
  %v6138 = vpop.permute.xlu0 %6137
  %6139 = vrot.lane.b32.xlu0 %v4727, 32
  %v6140 = vpop.permute.xlu0 %6139
  %6141 = vrot.lane.b32.xlu0 %v4613, 32
  %v6142 = vpop.permute.xlu0 %6141
  %6143 = vrot.lane.b32.xlu0 %v4615, 32
  %v6144 = vpop.permute.xlu0 %6143
  %6145 = vrot.lane.b32.xlu0 %v4618, 32
  %v6146 = vpop.permute.xlu0 %6145
  %6147 = vrot.lane.b32.xlu0 %v4620, 32
  %v6148 = vpop.permute.xlu0 %6147
  %6149 = vrot.lane.b32.xlu0 %v4623, 32
  %v6150 = vpop.permute.xlu0 %6149
  %6151 = vrot.lane.b32.xlu0 %v4625, 32
  %v6152 = vpop.permute.xlu0 %6151
  %6153 = vrot.lane.b32.xlu0 %v4628, 32
  %v6154 = vpop.permute.xlu0 %6153
  %6155 = vrot.lane.b32.xlu0 %v4630, 32
  %v6156 = vpop.permute.xlu0 %6155
  %6157 = vrot.lane.b32.xlu0 %v4633, 32
  %v6158 = vpop.permute.xlu0 %6157
  %6159 = vrot.lane.b32.xlu0 %v4635, 32
  %v6160 = vpop.permute.xlu0 %6159
  %6161 = vrot.lane.b32.xlu0 %v4638, 32
  %v6162 = vpop.permute.xlu0 %6161
  %6163 = vrot.lane.b32.xlu0 %v4640, 32
  %v6164 = vpop.permute.xlu0 %6163
  %6165 = vrot.lane.b32.xlu0 %v4643, 32
  %v6166 = vpop.permute.xlu0 %6165
  %6167 = vrot.lane.b32.xlu0 %v4645, 32
  %v6168 = vpop.permute.xlu0 %6167
  %6169 = vrot.lane.b32.xlu0 %v4648, 32
  %v6170 = vpop.permute.xlu0 %6169
  %6171 = vrot.lane.b32.xlu0 %v4650, 32
  %v6172 = vpop.permute.xlu0 %6171
  %6173 = vrot.lane.b32.xlu0 %v4653, 32
  %v6174 = vpop.permute.xlu0 %6173
  %6175 = vrot.lane.b32.xlu0 %v4655, 32
  %v6176 = vpop.permute.xlu0 %6175
  %6177 = vrot.lane.b32.xlu0 %v4658, 32
  %v6178 = vpop.permute.xlu0 %6177
  %6179 = vrot.lane.b32.xlu0 %v4660, 32
  %v6180 = vpop.permute.xlu0 %6179
  %6181 = vrot.lane.b32.xlu0 %v4663, 32
  %v6182 = vpop.permute.xlu0 %6181
  %6183 = vrot.lane.b32.xlu0 %v4665, 32
  %v6184 = vpop.permute.xlu0 %6183
  %6185 = vrot.lane.b32.xlu0 %v4668, 32
  %v6186 = vpop.permute.xlu0 %6185
  %6187 = vrot.lane.b32.xlu0 %v4670, 32
  %v6188 = vpop.permute.xlu0 %6187
  %6189 = vrot.lane.b32.xlu0 %v4673, 32
  %v6190 = vpop.permute.xlu0 %6189
  %6191 = vrot.lane.b32.xlu0 %v4675, 32
  %v6192 = vpop.permute.xlu0 %6191
  %6193 = vrot.lane.b32.xlu0 %v4678, 32
  %v6194 = vpop.permute.xlu0 %6193
  %6195 = vrot.lane.b32.xlu0 %v4680, 32
  %v6196 = vpop.permute.xlu0 %6195
  %6197 = vrot.lane.b32.xlu0 %v4704, 32
  %v6198 = vpop.permute.xlu0 %6197
  %6199 = vrot.lane.b32.xlu0 %v4706, 32
  %v6200 = vpop.permute.xlu0 %6199
  %6201 = vrot.lane.b32.xlu0 %v4730, 32
  %v6202 = vpop.permute.xlu0 %6201
  %6203 = vrot.lane.b32.xlu0 %v4732, 32
  %v6204 = vpop.permute.xlu0 %6203
  %v6269 = vsel %vm26, %v4157, %v4734
  %v6270 = vsel %vm26, %v4158, %v4736
  %v6271 = vsel %vm26, %v4160, %v4738
  %v6272 = vsel %vm26, %v4161, %v4740
  %v6273 = vsel %vm26, %v4163, %v4742
  %v6274 = vsel %vm26, %v4164, %v4744
  %v6275 = vsel %vm26, %v4166, %v4746
  %v6276 = vsel %vm26, %v4167, %v4748
  %v6277 = vsel %vm26, %v4169, %v4750
  %v6278 = vsel %vm26, %v4170, %v4752
  %v6279 = vsel %vm26, %v4172, %v4754
  %v6280 = vsel %vm26, %v4173, %v4756
  %v6281 = vsel %vm26, %v4175, %v4758
  %v6282 = vsel %vm26, %v4176, %v4760
  %v6283 = vsel %vm26, %v4178, %v4762
  %v6284 = vsel %vm26, %v4179, %v4764
  %v6285 = vsel %vm26, %v4181, %v4766
  %v6286 = vsel %vm26, %v4182, %v4768
  %v6287 = vsel %vm26, %v4184, %v4770
  %v6288 = vsel %vm26, %v4185, %v4772
  %v6289 = vsel %vm26, %v4187, %v4774
  %v6290 = vsel %vm26, %v4188, %v4776
  %v6291 = vsel %vm26, %v4190, %v4778
  %v6292 = vsel %vm26, %v4191, %v4780
  %v6293 = vsel %vm26, %v4193, %v4782
  %v6294 = vsel %vm26, %v4194, %v4784
  %v6295 = vsel %vm26, %v4196, %v4786
  %v6296 = vsel %vm26, %v4197, %v4788
  %v6297 = vsel %vm26, %v4199, %v4790
  %v6298 = vsel %vm26, %v4200, %v4792
  %v6299 = vsel %vm26, %v4202, %v4794
  %v6300 = vsel %vm26, %v4203, %v4796
  %v6301 = vsel %vm26, %v4211, %v4798
  %v6302 = vsel %vm26, %v4212, %v4800
  %v6303 = vsel %vm26, %v4214, %v4802
  %v6304 = vsel %vm26, %v4215, %v4804
  %v6305 = vsel %vm26, %v4217, %v4806
  %v6306 = vsel %vm26, %v4218, %v4808
  %v6307 = vsel %vm26, %v4220, %v4810
  %v6308 = vsel %vm26, %v4221, %v4812
  %v6309 = vsel %vm26, %v4223, %v4814
  %v6310 = vsel %vm26, %v4224, %v4816
  %v6311 = vsel %vm26, %v4226, %v4818
  %v6312 = vsel %vm26, %v4227, %v4820
  %v6313 = vsel %vm26, %v4229, %v4822
  %v6314 = vsel %vm26, %v4230, %v4824
  %v6315 = vsel %vm26, %v4232, %v4826
  %v6316 = vsel %vm26, %v4233, %v4828
  %v6317 = vsel %vm26, %v4235, %v4830
  %v6318 = vsel %vm26, %v4236, %v4832
  %v6319 = vsel %vm26, %v4238, %v4834
  %v6320 = vsel %vm26, %v4239, %v4836
  %v6321 = vsel %vm26, %v4241, %v4838
  %v6322 = vsel %vm26, %v4242, %v4840
  %v6323 = vsel %vm26, %v4244, %v4842
  %v6324 = vsel %vm26, %v4245, %v4844
  %v6325 = vsel %vm26, %v4247, %v4846
  %v6326 = vsel %vm26, %v4248, %v4848
  %v6327 = vsel %vm26, %v4250, %v4850
  %v6328 = vsel %vm26, %v4251, %v4852
  %v6329 = vsel %vm26, %v4253, %v4854
  %v6330 = vsel %vm26, %v4254, %v4856
  %v6331 = vsel %vm26, %v4256, %v4858
  %v6332 = vsel %vm26, %v4257, %v4860
  %v6333 = vsel %vm2443, %v6269, %v4926
  %v6334 = vsel %vm2443, %v6270, %v4928
  %v6335 = vsel %vm2443, %v6271, %v4930
  %v6336 = vsel %vm2443, %v6272, %v4932
  %v6337 = vsel %vm2443, %v6273, %v4934
  %v6338 = vsel %vm2443, %v6274, %v4936
  %v6339 = vsel %vm2443, %v6275, %v4938
  %v6340 = vsel %vm2443, %v6276, %v4940
  %v6341 = vsel %vm2443, %v6277, %v4942
  %v6342 = vsel %vm2443, %v6278, %v4944
  %v6343 = vsel %vm2443, %v6279, %v4946
  %v6344 = vsel %vm2443, %v6280, %v4948
  %v6345 = vsel %vm2443, %v6281, %v4950
  %v6346 = vsel %vm2443, %v6282, %v4952
  %v6347 = vsel %vm2443, %v6283, %v4954
  %v6348 = vsel %vm2443, %v6284, %v4956
  %v6349 = vsel %vm2443, %v6285, %v4958
  %v6350 = vsel %vm2443, %v6286, %v4960
  %v6351 = vsel %vm2443, %v6287, %v4962
  %v6352 = vsel %vm2443, %v6288, %v4964
  %v6353 = vsel %vm2443, %v6289, %v4966
  %v6354 = vsel %vm2443, %v6290, %v4968
  %v6355 = vsel %vm2443, %v6291, %v4970
  %v6356 = vsel %vm2443, %v6292, %v4972
  %v6357 = vsel %vm2443, %v6293, %v4974
  %v6358 = vsel %vm2443, %v6294, %v4976
  %v6359 = vsel %vm2443, %v6295, %v4978
  %v6360 = vsel %vm2443, %v6296, %v4980
  %v6361 = vsel %vm2443, %v6297, %v4982
  %v6362 = vsel %vm2443, %v6298, %v4984
  %v6363 = vsel %vm2443, %v6299, %v4986
  %v6364 = vsel %vm2443, %v6300, %v4988
  %v6365 = vsel %vm2443, %v6301, %v4990
  %v6366 = vsel %vm2443, %v6302, %v4992
  %v6367 = vsel %vm2443, %v6303, %v4994
  %v6368 = vsel %vm2443, %v6304, %v4996
  %v6369 = vsel %vm2443, %v6305, %v4998
  %v6370 = vsel %vm2443, %v6306, %v5000
  %v6371 = vsel %vm2443, %v6307, %v5002
  %v6372 = vsel %vm2443, %v6308, %v5004
  %v6373 = vsel %vm2443, %v6309, %v5006
  %v6374 = vsel %vm2443, %v6310, %v5008
  %v6375 = vsel %vm2443, %v6311, %v5010
  %v6376 = vsel %vm2443, %v6312, %v5012
  %v6377 = vsel %vm2443, %v6313, %v5014
  %v6378 = vsel %vm2443, %v6314, %v5016
  %v6379 = vsel %vm2443, %v6315, %v5018
  %v6380 = vsel %vm2443, %v6316, %v5020
  %v6381 = vsel %vm2443, %v6317, %v5022
  %v6382 = vsel %vm2443, %v6318, %v5024
  %v6383 = vsel %vm2443, %v6319, %v5026
  %v6384 = vsel %vm2443, %v6320, %v5028
  %v6385 = vsel %vm2443, %v6321, %v5030
  %v6386 = vsel %vm2443, %v6322, %v5032
  %v6387 = vsel %vm2443, %v6323, %v5034
  %v6388 = vsel %vm2443, %v6324, %v5036
  %v6389 = vsel %vm2443, %v6325, %v5038
  %v6390 = vsel %vm2443, %v6326, %v5040
  %v6391 = vsel %vm2443, %v6327, %v5042
  %v6392 = vsel %vm2443, %v6328, %v5044
  %v6393 = vsel %vm2443, %v6329, %v5046
  %v6394 = vsel %vm2443, %v6330, %v5048
  %v6395 = vsel %vm2443, %v6331, %v5050
  %v6396 = vsel %vm2443, %v6332, %v5052
  %v6397 = vsel %vm2508, %v6333, %v5118
  %v6398 = vsel %vm2508, %v6334, %v5120
  %v6399 = vsel %vm2508, %v6335, %v5122
  %v6400 = vsel %vm2508, %v6336, %v5124
  %v6401 = vsel %vm2508, %v6337, %v5126
  %v6402 = vsel %vm2508, %v6338, %v5128
  %v6403 = vsel %vm2508, %v6339, %v5130
  %v6404 = vsel %vm2508, %v6340, %v5132
  %v6405 = vsel %vm2508, %v6341, %v5134
  %v6406 = vsel %vm2508, %v6342, %v5136
  %v6407 = vsel %vm2508, %v6343, %v5138
  %v6408 = vsel %vm2508, %v6344, %v5140
  %v6409 = vsel %vm2508, %v6345, %v5142
  %v6410 = vsel %vm2508, %v6346, %v5144
  %v6411 = vsel %vm2508, %v6347, %v5146
  %v6412 = vsel %vm2508, %v6348, %v5148
  %v6413 = vsel %vm2508, %v6349, %v5150
  %v6414 = vsel %vm2508, %v6350, %v5152
  %v6415 = vsel %vm2508, %v6351, %v5154
  %v6416 = vsel %vm2508, %v6352, %v5156
  %v6417 = vsel %vm2508, %v6353, %v5158
  %v6418 = vsel %vm2508, %v6354, %v5160
  %v6419 = vsel %vm2508, %v6355, %v5162
  %v6420 = vsel %vm2508, %v6356, %v5164
  %v6421 = vsel %vm2508, %v6357, %v5166
  %v6422 = vsel %vm2508, %v6358, %v5168
  %v6423 = vsel %vm2508, %v6359, %v5170
  %v6424 = vsel %vm2508, %v6360, %v5172
  %v6425 = vsel %vm2508, %v6361, %v5174
  %v6426 = vsel %vm2508, %v6362, %v5176
  %v6427 = vsel %vm2508, %v6363, %v5178
  %v6428 = vsel %vm2508, %v6364, %v5180
  %v6429 = vsel %vm2508, %v6365, %v5182
  %v6430 = vsel %vm2508, %v6366, %v5184
  %v6431 = vsel %vm2508, %v6367, %v5186
  %v6432 = vsel %vm2508, %v6368, %v5188
  %v6433 = vsel %vm2508, %v6369, %v5190
  %v6434 = vsel %vm2508, %v6370, %v5192
  %v6435 = vsel %vm2508, %v6371, %v5194
  %v6436 = vsel %vm2508, %v6372, %v5196
  %v6437 = vsel %vm2508, %v6373, %v5198
  %v6438 = vsel %vm2508, %v6374, %v5200
  %v6439 = vsel %vm2508, %v6375, %v5202
  %v6440 = vsel %vm2508, %v6376, %v5204
  %v6441 = vsel %vm2508, %v6377, %v5206
  %v6442 = vsel %vm2508, %v6378, %v5208
  %v6443 = vsel %vm2508, %v6379, %v5210
  %v6444 = vsel %vm2508, %v6380, %v5212
  %v6445 = vsel %vm2508, %v6381, %v5214
  %v6446 = vsel %vm2508, %v6382, %v5216
  %v6447 = vsel %vm2508, %v6383, %v5218
  %v6448 = vsel %vm2508, %v6384, %v5220
  %v6449 = vsel %vm2508, %v6385, %v5222
  %v6450 = vsel %vm2508, %v6386, %v5224
  %v6451 = vsel %vm2508, %v6387, %v5226
  %v6452 = vsel %vm2508, %v6388, %v5228
  %v6453 = vsel %vm2508, %v6389, %v5230
  %v6454 = vsel %vm2508, %v6390, %v5232
  %v6455 = vsel %vm2508, %v6391, %v5234
  %v6456 = vsel %vm2508, %v6392, %v5236
  %v6457 = vsel %vm2508, %v6393, %v5238
  %v6458 = vsel %vm2508, %v6394, %v5240
  %v6459 = vsel %vm2508, %v6395, %v5242
  %v6460 = vsel %vm2508, %v6396, %v5244
  %v6461 = vsel %vm2573, %v6397, %v5310
  %v6462 = vsel %vm2573, %v6398, %v5312
  %v6463 = vsel %vm2573, %v6399, %v5314
  %v6464 = vsel %vm2573, %v6400, %v5316
  %v6465 = vsel %vm2573, %v6401, %v5318
  %v6466 = vsel %vm2573, %v6402, %v5320
  %v6467 = vsel %vm2573, %v6403, %v5322
  %v6468 = vsel %vm2573, %v6404, %v5324
  %v6469 = vsel %vm2573, %v6405, %v5326
  %v6470 = vsel %vm2573, %v6406, %v5328
  %v6471 = vsel %vm2573, %v6407, %v5330
  %v6472 = vsel %vm2573, %v6408, %v5332
  %v6473 = vsel %vm2573, %v6409, %v5334
  %v6474 = vsel %vm2573, %v6410, %v5336
  %v6475 = vsel %vm2573, %v6411, %v5338
  %v6476 = vsel %vm2573, %v6412, %v5340
  %v6477 = vsel %vm2573, %v6413, %v5342
  %v6478 = vsel %vm2573, %v6414, %v5344
  %v6479 = vsel %vm2573, %v6415, %v5346
  %v6480 = vsel %vm2573, %v6416, %v5348
  %v6481 = vsel %vm2573, %v6417, %v5350
  %v6482 = vsel %vm2573, %v6418, %v5352
  %v6483 = vsel %vm2573, %v6419, %v5354
  %v6484 = vsel %vm2573, %v6420, %v5356
  %v6485 = vsel %vm2573, %v6421, %v5358
  %v6486 = vsel %vm2573, %v6422, %v5360
  %v6487 = vsel %vm2573, %v6423, %v5362
  %v6488 = vsel %vm2573, %v6424, %v5364
  %v6489 = vsel %vm2573, %v6425, %v5366
  %v6490 = vsel %vm2573, %v6426, %v5368
  %v6491 = vsel %vm2573, %v6427, %v5370
  %v6492 = vsel %vm2573, %v6428, %v5372
  %v6493 = vsel %vm2573, %v6429, %v5374
  %v6494 = vsel %vm2573, %v6430, %v5376
  %v6495 = vsel %vm2573, %v6431, %v5378
  %v6496 = vsel %vm2573, %v6432, %v5380
  %v6497 = vsel %vm2573, %v6433, %v5382
  %v6498 = vsel %vm2573, %v6434, %v5384
  %v6499 = vsel %vm2573, %v6435, %v5386
  %v6500 = vsel %vm2573, %v6436, %v5388
  %v6501 = vsel %vm2573, %v6437, %v5390
  %v6502 = vsel %vm2573, %v6438, %v5392
  %v6503 = vsel %vm2573, %v6439, %v5394
  %v6504 = vsel %vm2573, %v6440, %v5396
  %v6505 = vsel %vm2573, %v6441, %v5398
  %v6506 = vsel %vm2573, %v6442, %v5400
  %v6507 = vsel %vm2573, %v6443, %v5402
  %v6508 = vsel %vm2573, %v6444, %v5404
  %v6509 = vsel %vm2573, %v6445, %v5406
  %v6510 = vsel %vm2573, %v6446, %v5408
  %v6511 = vsel %vm2573, %v6447, %v5410
  %v6512 = vsel %vm2573, %v6448, %v5412
  %v6513 = vsel %vm2573, %v6449, %v5414
  %v6514 = vsel %vm2573, %v6450, %v5416
  %v6515 = vsel %vm2573, %v6451, %v5418
  %v6516 = vsel %vm2573, %v6452, %v5420
  %v6517 = vsel %vm2573, %v6453, %v5422
  %v6518 = vsel %vm2573, %v6454, %v5424
  %v6519 = vsel %vm2573, %v6455, %v5426
  %v6520 = vsel %vm2573, %v6456, %v5428
  %v6521 = vsel %vm2573, %v6457, %v5430
  %v6522 = vsel %vm2573, %v6458, %v5432
  %v6523 = vsel %vm2573, %v6459, %v5434
  %v6524 = vsel %vm2573, %v6460, %v5436
  %v6525 = vsel %vm2638, %v6461, %v5502
  %v6526 = vsel %vm2638, %v6462, %v5504
  %v6527 = vsel %vm2638, %v6463, %v5506
  %v6528 = vsel %vm2638, %v6464, %v5508
  %v6529 = vsel %vm2638, %v6465, %v5510
  %v6530 = vsel %vm2638, %v6466, %v5512
  %v6531 = vsel %vm2638, %v6467, %v5514
  %v6532 = vsel %vm2638, %v6468, %v5516
  %v6533 = vsel %vm2638, %v6469, %v5518
  %v6534 = vsel %vm2638, %v6470, %v5520
  %v6535 = vsel %vm2638, %v6471, %v5522
  %v6536 = vsel %vm2638, %v6472, %v5524
  %v6537 = vsel %vm2638, %v6473, %v5526
  %v6538 = vsel %vm2638, %v6474, %v5528
  %v6539 = vsel %vm2638, %v6475, %v5530
  %v6540 = vsel %vm2638, %v6476, %v5532
  %v6541 = vsel %vm2638, %v6477, %v5534
  %v6542 = vsel %vm2638, %v6478, %v5536
  %v6543 = vsel %vm2638, %v6479, %v5538
  %v6544 = vsel %vm2638, %v6480, %v5540
  %v6545 = vsel %vm2638, %v6481, %v5542
  %v6546 = vsel %vm2638, %v6482, %v5544
  %v6547 = vsel %vm2638, %v6483, %v5546
  %v6548 = vsel %vm2638, %v6484, %v5548
  %v6549 = vsel %vm2638, %v6485, %v5550
  %v6550 = vsel %vm2638, %v6486, %v5552
  %v6551 = vsel %vm2638, %v6487, %v5554
  %v6552 = vsel %vm2638, %v6488, %v5556
  %v6553 = vsel %vm2638, %v6489, %v5558
  %v6554 = vsel %vm2638, %v6490, %v5560
  %v6555 = vsel %vm2638, %v6491, %v5562
  %v6556 = vsel %vm2638, %v6492, %v5564
  %v6557 = vsel %vm2638, %v6493, %v5566
  %v6558 = vsel %vm2638, %v6494, %v5568
  %v6559 = vsel %vm2638, %v6495, %v5570
  %v6560 = vsel %vm2638, %v6496, %v5572
  %v6561 = vsel %vm2638, %v6497, %v5574
  %v6562 = vsel %vm2638, %v6498, %v5576
  %v6563 = vsel %vm2638, %v6499, %v5578
  %v6564 = vsel %vm2638, %v6500, %v5580
  %v6565 = vsel %vm2638, %v6501, %v5582
  %v6566 = vsel %vm2638, %v6502, %v5584
  %v6567 = vsel %vm2638, %v6503, %v5586
  %v6568 = vsel %vm2638, %v6504, %v5588
  %v6569 = vsel %vm2638, %v6505, %v5590
  %v6570 = vsel %vm2638, %v6506, %v5592
  %v6571 = vsel %vm2638, %v6507, %v5594
  %v6572 = vsel %vm2638, %v6508, %v5596
  %v6573 = vsel %vm2638, %v6509, %v5598
  %v6574 = vsel %vm2638, %v6510, %v5600
  %v6575 = vsel %vm2638, %v6511, %v5602
  %v6576 = vsel %vm2638, %v6512, %v5604
  %v6577 = vsel %vm2638, %v6513, %v5606
  %v6578 = vsel %vm2638, %v6514, %v5608
  %v6579 = vsel %vm2638, %v6515, %v5610
  %v6580 = vsel %vm2638, %v6516, %v5612
  %v6581 = vsel %vm2638, %v6517, %v5614
  %v6582 = vsel %vm2638, %v6518, %v5616
  %v6583 = vsel %vm2638, %v6519, %v5618
  %v6584 = vsel %vm2638, %v6520, %v5620
  %v6585 = vsel %vm2638, %v6521, %v5622
  %v6586 = vsel %vm2638, %v6522, %v5624
  %v6587 = vsel %vm2638, %v6523, %v5626
  %v6588 = vsel %vm2638, %v6524, %v5628
  %v6589 = vsel %vm2703, %v6525, %v5694
  %v6590 = vsel %vm2703, %v6526, %v5696
  %v6591 = vsel %vm2703, %v6527, %v5698
  %v6592 = vsel %vm2703, %v6528, %v5700
  %v6593 = vsel %vm2703, %v6529, %v5702
  %v6594 = vsel %vm2703, %v6530, %v5704
  %v6595 = vsel %vm2703, %v6531, %v5706
  %v6596 = vsel %vm2703, %v6532, %v5708
  %v6597 = vsel %vm2703, %v6533, %v5710
  %v6598 = vsel %vm2703, %v6534, %v5712
  %v6599 = vsel %vm2703, %v6535, %v5714
  %v6600 = vsel %vm2703, %v6536, %v5716
  %v6601 = vsel %vm2703, %v6537, %v5718
  %v6602 = vsel %vm2703, %v6538, %v5720
  %v6603 = vsel %vm2703, %v6539, %v5722
  %v6604 = vsel %vm2703, %v6540, %v5724
  %v6605 = vsel %vm2703, %v6541, %v5726
  %v6606 = vsel %vm2703, %v6542, %v5728
  %v6607 = vsel %vm2703, %v6543, %v5730
  %v6608 = vsel %vm2703, %v6544, %v5732
  %v6609 = vsel %vm2703, %v6545, %v5734
  %v6610 = vsel %vm2703, %v6546, %v5736
  %v6611 = vsel %vm2703, %v6547, %v5738
  %v6612 = vsel %vm2703, %v6548, %v5740
  %v6613 = vsel %vm2703, %v6549, %v5742
  %v6614 = vsel %vm2703, %v6550, %v5744
  %v6615 = vsel %vm2703, %v6551, %v5746
  %v6616 = vsel %vm2703, %v6552, %v5748
  %v6617 = vsel %vm2703, %v6553, %v5750
  %v6618 = vsel %vm2703, %v6554, %v5752
  %v6619 = vsel %vm2703, %v6555, %v5754
  %v6620 = vsel %vm2703, %v6556, %v5756
  %v6621 = vsel %vm2703, %v6557, %v5758
  %v6622 = vsel %vm2703, %v6558, %v5760
  %v6623 = vsel %vm2703, %v6559, %v5762
  %v6624 = vsel %vm2703, %v6560, %v5764
  %v6625 = vsel %vm2703, %v6561, %v5766
  %v6626 = vsel %vm2703, %v6562, %v5768
  %v6627 = vsel %vm2703, %v6563, %v5770
  %v6628 = vsel %vm2703, %v6564, %v5772
  %v6629 = vsel %vm2703, %v6565, %v5774
  %v6630 = vsel %vm2703, %v6566, %v5776
  %v6631 = vsel %vm2703, %v6567, %v5778
  %v6632 = vsel %vm2703, %v6568, %v5780
  %v6633 = vsel %vm2703, %v6569, %v5782
  %v6634 = vsel %vm2703, %v6570, %v5784
  %v6635 = vsel %vm2703, %v6571, %v5786
  %v6636 = vsel %vm2703, %v6572, %v5788
  %v6637 = vsel %vm2703, %v6573, %v5790
  %v6638 = vsel %vm2703, %v6574, %v5792
  %v6639 = vsel %vm2703, %v6575, %v5794
  %v6640 = vsel %vm2703, %v6576, %v5796
  %v6641 = vsel %vm2703, %v6577, %v5798
  %v6642 = vsel %vm2703, %v6578, %v5800
  %v6643 = vsel %vm2703, %v6579, %v5802
  %v6644 = vsel %vm2703, %v6580, %v5804
  %v6645 = vsel %vm2703, %v6581, %v5806
  %v6646 = vsel %vm2703, %v6582, %v5808
  %v6647 = vsel %vm2703, %v6583, %v5810
  %v6648 = vsel %vm2703, %v6584, %v5812
  %v6649 = vsel %vm2703, %v6585, %v5814
  %v6650 = vsel %vm2703, %v6586, %v5816
  %v6651 = vsel %vm2703, %v6587, %v5818
  %v6652 = vsel %vm2703, %v6588, %v5820
  %v6653 = vsel %vm2768, %v6589, %v5886
  %v6654 = vsel %vm2768, %v6590, %v5888
  %v6655 = vsel %vm2768, %v6591, %v5890
  %v6656 = vsel %vm2768, %v6592, %v5892
  %v6657 = vsel %vm2768, %v6593, %v5894
  %v6658 = vsel %vm2768, %v6594, %v5896
  %v6659 = vsel %vm2768, %v6595, %v5898
  %v6660 = vsel %vm2768, %v6596, %v5900
  %v6661 = vsel %vm2768, %v6597, %v5902
  %v6662 = vsel %vm2768, %v6598, %v5904
  %v6663 = vsel %vm2768, %v6599, %v5906
  %v6664 = vsel %vm2768, %v6600, %v5908
  %v6665 = vsel %vm2768, %v6601, %v5910
  %v6666 = vsel %vm2768, %v6602, %v5912
  %v6667 = vsel %vm2768, %v6603, %v5914
  %v6668 = vsel %vm2768, %v6604, %v5916
  %v6669 = vsel %vm2768, %v6605, %v5918
  %v6670 = vsel %vm2768, %v6606, %v5920
  %v6671 = vsel %vm2768, %v6607, %v5922
  %v6672 = vsel %vm2768, %v6608, %v5924
  %v6673 = vsel %vm2768, %v6609, %v5926
  %v6674 = vsel %vm2768, %v6610, %v5928
  %v6675 = vsel %vm2768, %v6611, %v5930
  %v6676 = vsel %vm2768, %v6612, %v5932
  %v6677 = vsel %vm2768, %v6613, %v5934
  %v6678 = vsel %vm2768, %v6614, %v5936
  %v6679 = vsel %vm2768, %v6615, %v5938
  %v6680 = vsel %vm2768, %v6616, %v5940
  %v6681 = vsel %vm2768, %v6617, %v5942
  %v6682 = vsel %vm2768, %v6618, %v5944
  %v6683 = vsel %vm2768, %v6619, %v5946
  %v6684 = vsel %vm2768, %v6620, %v5948
  %v6685 = vsel %vm2768, %v6621, %v5950
  %v6686 = vsel %vm2768, %v6622, %v5952
  %v6687 = vsel %vm2768, %v6623, %v5954
  %v6688 = vsel %vm2768, %v6624, %v5956
  %v6689 = vsel %vm2768, %v6625, %v5958
  %v6690 = vsel %vm2768, %v6626, %v5960
  %v6691 = vsel %vm2768, %v6627, %v5962
  %v6692 = vsel %vm2768, %v6628, %v5964
  %v6693 = vsel %vm2768, %v6629, %v5966
  %v6694 = vsel %vm2768, %v6630, %v5968
  %v6695 = vsel %vm2768, %v6631, %v5970
  %v6696 = vsel %vm2768, %v6632, %v5972
  %v6697 = vsel %vm2768, %v6633, %v5974
  %v6698 = vsel %vm2768, %v6634, %v5976
  %v6699 = vsel %vm2768, %v6635, %v5978
  %v6700 = vsel %vm2768, %v6636, %v5980
  %v6701 = vsel %vm2768, %v6637, %v5982
  %v6702 = vsel %vm2768, %v6638, %v5984
  %v6703 = vsel %vm2768, %v6639, %v5986
  %v6704 = vsel %vm2768, %v6640, %v5988
  %v6705 = vsel %vm2768, %v6641, %v5990
  %v6706 = vsel %vm2768, %v6642, %v5992
  %v6707 = vsel %vm2768, %v6643, %v5994
  %v6708 = vsel %vm2768, %v6644, %v5996
  %v6709 = vsel %vm2768, %v6645, %v5998
  %v6710 = vsel %vm2768, %v6646, %v6000
  %v6711 = vsel %vm2768, %v6647, %v6002
  %v6712 = vsel %vm2768, %v6648, %v6004
  %v6713 = vsel %vm2768, %v6649, %v6006
  %v6714 = vsel %vm2768, %v6650, %v6008
  %v6715 = vsel %vm2768, %v6651, %v6010
  %v6716 = vsel %vm2768, %v6652, %v6012
  %v6717 = vsel %vm2833, %v6653, %v6078
  %v6718 = vsel %vm2833, %v6654, %v6080
  %v6719 = vsel %vm2833, %v6655, %v6082
  %v6720 = vsel %vm2833, %v6656, %v6084
  %v6721 = vsel %vm2833, %v6657, %v6086
  %v6722 = vsel %vm2833, %v6658, %v6088
  %v6723 = vsel %vm2833, %v6659, %v6090
  %v6724 = vsel %vm2833, %v6660, %v6092
  %v6725 = vsel %vm2833, %v6661, %v6094
  %v6726 = vsel %vm2833, %v6662, %v6096
  %v6727 = vsel %vm2833, %v6663, %v6098
  %v6728 = vsel %vm2833, %v6664, %v6100
  %v6729 = vsel %vm2833, %v6665, %v6102
  %v6730 = vsel %vm2833, %v6666, %v6104
  %v6731 = vsel %vm2833, %v6667, %v6106
  %v6732 = vsel %vm2833, %v6668, %v6108
  %v6733 = vsel %vm2833, %v6669, %v6110
  %v6734 = vsel %vm2833, %v6670, %v6112
  %v6735 = vsel %vm2833, %v6671, %v6114
  %v6736 = vsel %vm2833, %v6672, %v6116
  %v6737 = vsel %vm2833, %v6673, %v6118
  %v6738 = vsel %vm2833, %v6674, %v6120
  %v6739 = vsel %vm2833, %v6675, %v6122
  %v6740 = vsel %vm2833, %v6676, %v6124
  %v6741 = vsel %vm2833, %v6677, %v6126
  %v6742 = vsel %vm2833, %v6678, %v6128
  %v6743 = vsel %vm2833, %v6679, %v6130
  %v6744 = vsel %vm2833, %v6680, %v6132
  %v6745 = vsel %vm2833, %v6681, %v6134
  %v6746 = vsel %vm2833, %v6682, %v6136
  %v6747 = vsel %vm2833, %v6683, %v6138
  %v6748 = vsel %vm2833, %v6684, %v6140
  %v6749 = vsel %vm2833, %v6685, %v6142
  %v6750 = vsel %vm2833, %v6686, %v6144
  %v6751 = vsel %vm2833, %v6687, %v6146
  %v6752 = vsel %vm2833, %v6688, %v6148
  %v6753 = vsel %vm2833, %v6689, %v6150
  %v6754 = vsel %vm2833, %v6690, %v6152
  %v6755 = vsel %vm2833, %v6691, %v6154
  %v6756 = vsel %vm2833, %v6692, %v6156
  %v6757 = vsel %vm2833, %v6693, %v6158
  %v6758 = vsel %vm2833, %v6694, %v6160
  %v6759 = vsel %vm2833, %v6695, %v6162
  %v6760 = vsel %vm2833, %v6696, %v6164
  %v6761 = vsel %vm2833, %v6697, %v6166
  %v6762 = vsel %vm2833, %v6698, %v6168
  %v6763 = vsel %vm2833, %v6699, %v6170
  %v6764 = vsel %vm2833, %v6700, %v6172
  %v6765 = vsel %vm2833, %v6701, %v6174
  %v6766 = vsel %vm2833, %v6702, %v6176
  %v6767 = vsel %vm2833, %v6703, %v6178
  %v6768 = vsel %vm2833, %v6704, %v6180
  %v6769 = vsel %vm2833, %v6705, %v6182
  %v6770 = vsel %vm2833, %v6706, %v6184
  %v6771 = vsel %vm2833, %v6707, %v6186
  %v6772 = vsel %vm2833, %v6708, %v6188
  %v6773 = vsel %vm2833, %v6709, %v6190
  %v6774 = vsel %vm2833, %v6710, %v6192
  %v6775 = vsel %vm2833, %v6711, %v6194
  %v6776 = vsel %vm2833, %v6712, %v6196
  %v6777 = vsel %vm2833, %v6713, %v6198
  %v6778 = vsel %vm2833, %v6714, %v6200
  %v6779 = vsel %vm2833, %v6715, %v6202
  %v6780 = vsel %vm2833, %v6716, %v6204
  %v6781 = vld [vmem:[%s2] sm:$0xff]
  %v6782 = vld [vmem:[%s2 + $0x8] sm:$0xff]
  %v6783 = vld [vmem:[%s2 + $0x10] sm:$0xff]
  %v6784 = vld [vmem:[%s2 + $0x18] sm:$0xff]
  %v6785 = vld [vmem:[%s2 + $0x20] sm:$0xf]
  %v6787 = vsel %vm2903, %v6717, 0
  %v6790 = vsel %vm2903, %v6718, 0
  %v6793 = vsel %vm2903, %v6719, 0
  %v6796 = vsel %vm2903, %v6720, 0
  %v6799 = vsel %vm2903, %v6721, 0
  %v6802 = vsel %vm2903, %v6722, 0
  %v6805 = vsel %vm2903, %v6723, 0
  %v6808 = vsel %vm2903, %v6724, 0
  %v6811 = vsel %vm2903, %v6725, 0
  %v6814 = vsel %vm2903, %v6726, 0
  %v6817 = vsel %vm2903, %v6727, 0
  %v6820 = vsel %vm2903, %v6728, 0
  %v6823 = vsel %vm2903, %v6729, 0
  %v6826 = vsel %vm2903, %v6730, 0
  %v6829 = vsel %vm2903, %v6731, 0
  %v6832 = vsel %vm2903, %v6732, 0
  %v6835 = vsel %vm2903, %v6733, 0
  %v6838 = vsel %vm2903, %v6734, 0
  %v6841 = vsel %vm2903, %v6735, 0
  %v6844 = vsel %vm2903, %v6736, 0
  %v6847 = vsel %vm2903, %v6737, 0
  %v6850 = vsel %vm2903, %v6738, 0
  %v6853 = vsel %vm2903, %v6739, 0
  %v6856 = vsel %vm2903, %v6740, 0
  %v6859 = vsel %vm2903, %v6741, 0
  %v6862 = vsel %vm2903, %v6742, 0
  %v6865 = vsel %vm2903, %v6743, 0
  %v6868 = vsel %vm2903, %v6744, 0
  %v6871 = vsel %vm2903, %v6745, 0
  %v6874 = vsel %vm2903, %v6746, 0
  %v6877 = vsel %vm2903, %v6747, 0
  %v6880 = vsel %vm2903, %v6748, 0
  %v6883 = vsel %vm2903, %v6749, 0
  %v6886 = vsel %vm2903, %v6750, 0
  %v6889 = vsel %vm2903, %v6751, 0
  %v6892 = vsel %vm2903, %v6752, 0
  %v6895 = vsel %vm2903, %v6753, 0
  %v6898 = vsel %vm2903, %v6754, 0
  %v6901 = vsel %vm2903, %v6755, 0
  %v6904 = vsel %vm2903, %v6756, 0
  %v6907 = vsel %vm2903, %v6757, 0
  %v6910 = vsel %vm2903, %v6758, 0
  %v6913 = vsel %vm2903, %v6759, 0
  %v6916 = vsel %vm2903, %v6760, 0
  %v6919 = vsel %vm2903, %v6761, 0
  %v6922 = vsel %vm2903, %v6762, 0
  %v6925 = vsel %vm2903, %v6763, 0
  %v6928 = vsel %vm2903, %v6764, 0
  %v6931 = vsel %vm2903, %v6765, 0
  %v6934 = vsel %vm2903, %v6766, 0
  %v6937 = vsel %vm2903, %v6767, 0
  %v6940 = vsel %vm2903, %v6768, 0
  %v6943 = vsel %vm2903, %v6769, 0
  %v6946 = vsel %vm2903, %v6770, 0
  %v6949 = vsel %vm2903, %v6771, 0
  %v6952 = vsel %vm2903, %v6772, 0
  %v6955 = vsel %vm2903, %v6773, 0
  %v6958 = vsel %vm2903, %v6774, 0
  %v6961 = vsel %vm2903, %v6775, 0
  %v6964 = vsel %vm2903, %v6776, 0
  %v6967 = vsel %vm2903, %v6777, 0
  %v6970 = vsel %vm2903, %v6778, 0
  %v6973 = vsel %vm2903, %v6779, 0
  %v6976 = vsel %vm2903, %v6780, 0
  %v6979 = vsel %vm3096, %v6785, 0
  %6981 = vmatprep.subr.mxu0 0.0
  %6982 = vmatpush1.msra.mxu0 %v6781
  %6983 = vmatprep.subr.mxu0 0.0
  %6984 = vmatpush1.msra.mxu0 %v6782
  %6985 = vmatprep.subr.mxu0 0.0
  %6986 = vmatpush1.msra.mxu0 %v6783
  %6987 = vmatprep.subr.mxu0 0.0
  %6988 = vmatpush1.msra.mxu0 %v6784
  %6989 = vmatprep.subr.mxu0 0.0
  %6990 = vmatpush1.msra.mxu0 %v6979
  %6991 = vmatprep.subr.mxu0 0.0
  %6992 = vmatpush1.msra.mxu0 0.0
  %6993 = vmatprep.subr.mxu0 0.0
  %6994 = vmatpush1.msra.mxu0 0.0
  %6995 = vmatprep.subr.mxu0 0.0
  %6996 = vmatpush1.msra.mxu0 0.0
  %6997 = vmatprep.subr.mxu0 0.0
  %6998 = vmatpush1.msra.mxu0 0.0
  %6999 = vmatprep.subr.mxu0 0.0
  %7000 = vmatpush1.msra.mxu0 0.0
  %7001 = vmatprep.subr.mxu0 0.0
  %7002 = vmatpush1.msra.mxu0 0.0
  %7003 = vmatprep.subr.mxu0 0.0
  %7004 = vmatpush1.msra.mxu0 0.0
  %7005 = vmatprep.subr.mxu0 0.0
  %7006 = vmatpush1.msra.mxu0 0.0
  %7007 = vmatprep.subr.mxu0 0.0
  %7008 = vmatpush1.msra.mxu0 0.0
  %7009 = vmatprep.subr.mxu0 0.0
  %7010 = vmatpush1.msra.mxu0 0.0
  %7011 = vmatprep.subr.mxu0 0.0
  %7012 = vmatpush1.msra.mxu0 0.0
  %7013 = vmatprep.subr.mxu0 0.0
  %7014 = vmatpush1.msra.mxu0 0.0
  %7015 = vmatprep.subr.mxu0 0.0
  %7016 = vmatpush1.msra.mxu0 0.0
  %7017 = vmatprep.subr.mxu0 0.0
  %7018 = vmatpush1.msra.mxu0 0.0
  %7019 = vmatprep.subr.mxu0 0.0
  %7020 = vmatpush1.msra.mxu0 0.0
  %7021 = vmatprep.subr.mxu0 0.0
  %7022 = vmatpush1.msra.mxu0 0.0
  %7023 = vmatprep.subr.mxu0 0.0
  %7024 = vmatpush1.msra.mxu0 0.0
  %7025 = vmatprep.subr.mxu0 0.0
  %7026 = vmatpush1.msra.mxu0 0.0
  %7027 = vmatprep.subr.mxu0 0.0
  %7028 = vmatpush1.msra.mxu0 0.0
  %7029 = vmatprep.subr.mxu0 0.0
  %7030 = vmatpush1.msra.mxu0 0.0
  %7031 = vmatprep.subr.mxu0 0.0
  %7032 = vmatpush1.msra.mxu0 0.0
  %7033 = vmatprep.subr.mxu0 0.0
  %7034 = vmatpush1.msra.mxu0 0.0
  %7035 = vmatprep.subr.mxu0 0.0
  %7036 = vmatpush1.msra.mxu0 0.0
  %7037 = vmatprep.subr.mxu0 0.0
  %7038 = vmatpush1.msra.mxu0 0.0
  %7039 = vmatprep.subr.mxu0 0.0
  %7040 = vmatpush1.msra.mxu0 0.0
  %7041 = vmatprep.subr.mxu0 0.0
  %7042 = vmatpush1.msra.mxu0 0.0
  %7043 = vmatprep.subr.mxu0 0.0
  %7044 = vmatpush1.msra.mxu0 0.0
  %7045 = vmatprep.mubr.f32.mxu0 0.0
  %7046 = vmatmul.mubr.f32.gmra.mrb[0].mxu0 %v6787
  %v7047 = vpop.f32.mrb[0].mxu0
  %v7048 = vadd.f32 0.0, %v7047
  %v7049 = vpop.f32.mrb[0].mxu0
  %7050 = vmatprep.mubr.f32.mxu0 0.0
  %7051 = vmatmul.mubr.f32.gmra.mrb[0].mxu0 %v6790
  %v7052 = vpop.f32.mrb[0].mxu0
  %v7053 = vadd.f32 0.0, %v7052
  %v7054 = vpop.f32.mrb[0].mxu0
  %7055 = vmatprep.mubr.f32.mxu0 0.0
  %7056 = vmatmul.mubr.f32.gmra.mrb[0].mxu0 %v6793
  %v7057 = vpop.f32.mrb[0].mxu0
  %v7058 = vadd.f32 0.0, %v7057
  %v7059 = vpop.f32.mrb[0].mxu0
  %7060 = vmatprep.mubr.f32.mxu0 0.0
  %7061 = vmatmul.mubr.f32.gmra.mrb[0].mxu0 %v6796
  %v7062 = vpop.f32.mrb[0].mxu0
  %v7063 = vadd.f32 0.0, %v7062
  %v7064 = vpop.f32.mrb[0].mxu0
  %7065 = vmatprep.mubr.f32.mxu0 0.0
  %7066 = vmatmul.mubr.f32.gmra.mrb[0].mxu0 %v6799
  %v7067 = vpop.f32.mrb[0].mxu0
  %v7068 = vadd.f32 0.0, %v7067
  %v7069 = vpop.f32.mrb[0].mxu0
  %7070 = vmatprep.mubr.f32.mxu0 0.0
  %7071 = vmatmul.mubr.f32.gmra.mrb[0].mxu0 %v6802
  %v7072 = vpop.f32.mrb[0].mxu0
  %v7073 = vadd.f32 0.0, %v7072
  %v7074 = vpop.f32.mrb[0].mxu0
  %7075 = vmatprep.mubr.f32.mxu0 0.0
  %7076 = vmatmul.mubr.f32.gmra.mrb[0].mxu0 %v6805
  %v7077 = vpop.f32.mrb[0].mxu0
  %v7078 = vadd.f32 0.0, %v7077
  %v7079 = vpop.f32.mrb[0].mxu0
  %7080 = vmatprep.mubr.f32.mxu0 0.0
  %7081 = vmatmul.mubr.f32.gmra.mrb[0].mxu0 %v6808
  %v7082 = vpop.f32.mrb[0].mxu0
  %v7083 = vadd.f32 0.0, %v7082
  %v7084 = vpop.f32.mrb[0].mxu0
  %7085 = vmatprep.mubr.f32.mxu0 0.0
  %7086 = vmatmul.mubr.f32.gmra.mrb[0].mxu0 %v6811
  %v7087 = vpop.f32.mrb[0].mxu0
  %v7088 = vadd.f32 0.0, %v7087
  %v7089 = vpop.f32.mrb[0].mxu0
  %7090 = vmatprep.mubr.f32.mxu0 0.0
  %7091 = vmatmul.mubr.f32.gmra.mrb[0].mxu0 %v6814
  %v7092 = vpop.f32.mrb[0].mxu0
  %v7093 = vadd.f32 0.0, %v7092
  %v7094 = vpop.f32.mrb[0].mxu0
  %7095 = vmatprep.mubr.f32.mxu0 0.0
  %7096 = vmatmul.mubr.f32.gmra.mrb[0].mxu0 %v6817
  %v7097 = vpop.f32.mrb[0].mxu0
  %v7098 = vadd.f32 0.0, %v7097
  %v7099 = vpop.f32.mrb[0].mxu0
  %7100 = vmatprep.mubr.f32.mxu0 0.0
  %7101 = vmatmul.mubr.f32.gmra.mrb[0].mxu0 %v6820
  %v7102 = vpop.f32.mrb[0].mxu0
  %v7103 = vadd.f32 0.0, %v7102
  %v7104 = vpop.f32.mrb[0].mxu0
  %7105 = vmatprep.mubr.f32.mxu0 0.0
  %7106 = vmatmul.mubr.f32.gmra.mrb[0].mxu0 %v6823
  %v7107 = vpop.f32.mrb[0].mxu0
  %v7108 = vadd.f32 0.0, %v7107
  %v7109 = vpop.f32.mrb[0].mxu0
  %7110 = vmatprep.mubr.f32.mxu0 0.0
  %7111 = vmatmul.mubr.f32.gmra.mrb[0].mxu0 %v6826
  %v7112 = vpop.f32.mrb[0].mxu0
  %v7113 = vadd.f32 0.0, %v7112
  %v7114 = vpop.f32.mrb[0].mxu0
  %7115 = vmatprep.mubr.f32.mxu0 0.0
  %7116 = vmatmul.mubr.f32.gmra.mrb[0].mxu0 %v6829
  %v7117 = vpop.f32.mrb[0].mxu0
  %v7118 = vadd.f32 0.0, %v7117
  %v7119 = vpop.f32.mrb[0].mxu0
  %7120 = vmatprep.mubr.f32.mxu0 0.0
  %7121 = vmatmul.mubr.f32.gmra.mrb[0].mxu0 %v6832
  %v7122 = vpop.f32.mrb[0].mxu0
  %v7123 = vadd.f32 0.0, %v7122
  %v7124 = vpop.f32.mrb[0].mxu0
  %7125 = vmatprep.mubr.f32.mxu0 0.0
  %7126 = vmatmul.mubr.f32.gmra.mrb[0].mxu0 %v6835
  %v7127 = vpop.f32.mrb[0].mxu0
  %v7128 = vadd.f32 0.0, %v7127
  %v7129 = vpop.f32.mrb[0].mxu0
  %7130 = vmatprep.mubr.f32.mxu0 0.0
  %7131 = vmatmul.mubr.f32.gmra.mrb[0].mxu0 %v6838
  %v7132 = vpop.f32.mrb[0].mxu0
  %v7133 = vadd.f32 0.0, %v7132
  %v7134 = vpop.f32.mrb[0].mxu0
  %7135 = vmatprep.mubr.f32.mxu0 0.0
  %7136 = vmatmul.mubr.f32.gmra.mrb[0].mxu0 %v6841
  %v7137 = vpop.f32.mrb[0].mxu0
  %v7138 = vadd.f32 0.0, %v7137
  %v7139 = vpop.f32.mrb[0].mxu0
  %7140 = vmatprep.mubr.f32.mxu0 0.0
  %7141 = vmatmul.mubr.f32.gmra.mrb[0].mxu0 %v6844
  %v7142 = vpop.f32.mrb[0].mxu0
  %v7143 = vadd.f32 0.0, %v7142
  %v7144 = vpop.f32.mrb[0].mxu0
  %7145 = vmatprep.mubr.f32.mxu0 0.0
  %7146 = vmatmul.mubr.f32.gmra.mrb[0].mxu0 %v6847
  %v7147 = vpop.f32.mrb[0].mxu0
  %v7148 = vadd.f32 0.0, %v7147
  %v7149 = vpop.f32.mrb[0].mxu0
  %7150 = vmatprep.mubr.f32.mxu0 0.0
  %7151 = vmatmul.mubr.f32.gmra.mrb[0].mxu0 %v6850
  %v7152 = vpop.f32.mrb[0].mxu0
  %v7153 = vadd.f32 0.0, %v7152
  %v7154 = vpop.f32.mrb[0].mxu0
  %7155 = vmatprep.mubr.f32.mxu0 0.0
  %7156 = vmatmul.mubr.f32.gmra.mrb[0].mxu0 %v6853
  %v7157 = vpop.f32.mrb[0].mxu0
  %v7158 = vadd.f32 0.0, %v7157
  %v7159 = vpop.f32.mrb[0].mxu0
  %7160 = vmatprep.mubr.f32.mxu0 0.0
  %7161 = vmatmul.mubr.f32.gmra.mrb[0].mxu0 %v6856
  %v7162 = vpop.f32.mrb[0].mxu0
  %v7163 = vadd.f32 0.0, %v7162
  %v7164 = vpop.f32.mrb[0].mxu0
  %7165 = vmatprep.mubr.f32.mxu0 0.0
  %7166 = vmatmul.mubr.f32.gmra.mrb[0].mxu0 %v6859
  %v7167 = vpop.f32.mrb[0].mxu0
  %v7168 = vadd.f32 0.0, %v7167
  %v7169 = vpop.f32.mrb[0].mxu0
  %7170 = vmatprep.mubr.f32.mxu0 0.0
  %7171 = vmatmul.mubr.f32.gmra.mrb[0].mxu0 %v6862
  %v7172 = vpop.f32.mrb[0].mxu0
  %v7173 = vadd.f32 0.0, %v7172
  %v7174 = vpop.f32.mrb[0].mxu0
  %7175 = vmatprep.mubr.f32.mxu0 0.0
  %7176 = vmatmul.mubr.f32.gmra.mrb[0].mxu0 %v6865
  %v7177 = vpop.f32.mrb[0].mxu0
  %v7178 = vadd.f32 0.0, %v7177
  %v7179 = vpop.f32.mrb[0].mxu0
  %7180 = vmatprep.mubr.f32.mxu0 0.0
  %7181 = vmatmul.mubr.f32.gmra.mrb[0].mxu0 %v6868
  %v7182 = vpop.f32.mrb[0].mxu0
  %v7183 = vadd.f32 0.0, %v7182
  %v7184 = vpop.f32.mrb[0].mxu0
  %7185 = vmatprep.mubr.f32.mxu0 0.0
  %7186 = vmatmul.mubr.f32.gmra.mrb[0].mxu0 %v6871
  %v7187 = vpop.f32.mrb[0].mxu0
  %v7188 = vadd.f32 0.0, %v7187
  %v7189 = vpop.f32.mrb[0].mxu0
  %7190 = vmatprep.mubr.f32.mxu0 0.0
  %7191 = vmatmul.mubr.f32.gmra.mrb[0].mxu0 %v6874
  %v7192 = vpop.f32.mrb[0].mxu0
  %v7193 = vadd.f32 0.0, %v7192
  %v7194 = vpop.f32.mrb[0].mxu0
  %7195 = vmatprep.mubr.f32.mxu0 0.0
  %7196 = vmatmul.mubr.f32.gmra.mrb[0].mxu0 %v6877
  %v7197 = vpop.f32.mrb[0].mxu0
  %v7198 = vadd.f32 0.0, %v7197
  %v7199 = vpop.f32.mrb[0].mxu0
  %7200 = vmatprep.mubr.f32.mxu0 0.0
  %7201 = vmatmul.mubr.f32.gmra.mrb[0].mxu0 %v6880
  %v7202 = vpop.f32.mrb[0].mxu0
  %v7203 = vadd.f32 0.0, %v7202
  %v7204 = vpop.f32.mrb[0].mxu0
  %7205 = vmatprep.mubr.f32.mxu0 0.0
  %7206 = vmatmul.mubr.f32.gmra.mrb[0].mxu0 %v6883
  %v7207 = vpop.f32.mrb[0].mxu0
  %v7208 = vadd.f32 0.0, %v7207
  %v7209 = vpop.f32.mrb[0].mxu0
  %7210 = vmatprep.mubr.f32.mxu0 0.0
  %7211 = vmatmul.mubr.f32.gmra.mrb[0].mxu0 %v6886
  %v7212 = vpop.f32.mrb[0].mxu0
  %v7213 = vadd.f32 0.0, %v7212
  %v7214 = vpop.f32.mrb[0].mxu0
  %7215 = vmatprep.mubr.f32.mxu0 0.0
  %7216 = vmatmul.mubr.f32.gmra.mrb[0].mxu0 %v6889
  %v7217 = vpop.f32.mrb[0].mxu0
  %v7218 = vadd.f32 0.0, %v7217
  %v7219 = vpop.f32.mrb[0].mxu0
  %7220 = vmatprep.mubr.f32.mxu0 0.0
  %7221 = vmatmul.mubr.f32.gmra.mrb[0].mxu0 %v6892
  %v7222 = vpop.f32.mrb[0].mxu0
  %v7223 = vadd.f32 0.0, %v7222
  %v7224 = vpop.f32.mrb[0].mxu0
  %7225 = vmatprep.mubr.f32.mxu0 0.0
  %7226 = vmatmul.mubr.f32.gmra.mrb[0].mxu0 %v6895
  %v7227 = vpop.f32.mrb[0].mxu0
  %v7228 = vadd.f32 0.0, %v7227
  %v7229 = vpop.f32.mrb[0].mxu0
  %7230 = vmatprep.mubr.f32.mxu0 0.0
  %7231 = vmatmul.mubr.f32.gmra.mrb[0].mxu0 %v6898
  %v7232 = vpop.f32.mrb[0].mxu0
  %v7233 = vadd.f32 0.0, %v7232
  %v7234 = vpop.f32.mrb[0].mxu0
  %7235 = vmatprep.mubr.f32.mxu0 0.0
  %7236 = vmatmul.mubr.f32.gmra.mrb[0].mxu0 %v6901
  %v7237 = vpop.f32.mrb[0].mxu0
  %v7238 = vadd.f32 0.0, %v7237
  %v7239 = vpop.f32.mrb[0].mxu0
  %7240 = vmatprep.mubr.f32.mxu0 0.0
  %7241 = vmatmul.mubr.f32.gmra.mrb[0].mxu0 %v6904
  %v7242 = vpop.f32.mrb[0].mxu0
  %v7243 = vadd.f32 0.0, %v7242
  %v7244 = vpop.f32.mrb[0].mxu0
  %7245 = vmatprep.mubr.f32.mxu0 0.0
  %7246 = vmatmul.mubr.f32.gmra.mrb[0].mxu0 %v6907
  %v7247 = vpop.f32.mrb[0].mxu0
  %v7248 = vadd.f32 0.0, %v7247
  %v7249 = vpop.f32.mrb[0].mxu0
  %7250 = vmatprep.mubr.f32.mxu0 0.0
  %7251 = vmatmul.mubr.f32.gmra.mrb[0].mxu0 %v6910
  %v7252 = vpop.f32.mrb[0].mxu0
  %v7253 = vadd.f32 0.0, %v7252
  %v7254 = vpop.f32.mrb[0].mxu0
  %7255 = vmatprep.mubr.f32.mxu0 0.0
  %7256 = vmatmul.mubr.f32.gmra.mrb[0].mxu0 %v6913
  %v7257 = vpop.f32.mrb[0].mxu0
  %v7258 = vadd.f32 0.0, %v7257
  %v7259 = vpop.f32.mrb[0].mxu0
  %7260 = vmatprep.mubr.f32.mxu0 0.0
  %7261 = vmatmul.mubr.f32.gmra.mrb[0].mxu0 %v6916
  %v7262 = vpop.f32.mrb[0].mxu0
  %v7263 = vadd.f32 0.0, %v7262
  %v7264 = vpop.f32.mrb[0].mxu0
  %7265 = vmatprep.mubr.f32.mxu0 0.0
  %7266 = vmatmul.mubr.f32.gmra.mrb[0].mxu0 %v6919
  %v7267 = vpop.f32.mrb[0].mxu0
  %v7268 = vadd.f32 0.0, %v7267
  %v7269 = vpop.f32.mrb[0].mxu0
  %7270 = vmatprep.mubr.f32.mxu0 0.0
  %7271 = vmatmul.mubr.f32.gmra.mrb[0].mxu0 %v6922
  %v7272 = vpop.f32.mrb[0].mxu0
  %v7273 = vadd.f32 0.0, %v7272
  %v7274 = vpop.f32.mrb[0].mxu0
  %7275 = vmatprep.mubr.f32.mxu0 0.0
  %7276 = vmatmul.mubr.f32.gmra.mrb[0].mxu0 %v6925
  %v7277 = vpop.f32.mrb[0].mxu0
  %v7278 = vadd.f32 0.0, %v7277
  %v7279 = vpop.f32.mrb[0].mxu0
  %7280 = vmatprep.mubr.f32.mxu0 0.0
  %7281 = vmatmul.mubr.f32.gmra.mrb[0].mxu0 %v6928
  %v7282 = vpop.f32.mrb[0].mxu0
  %v7283 = vadd.f32 0.0, %v7282
  %v7284 = vpop.f32.mrb[0].mxu0
  %7285 = vmatprep.mubr.f32.mxu0 0.0
  %7286 = vmatmul.mubr.f32.gmra.mrb[0].mxu0 %v6931
  %v7287 = vpop.f32.mrb[0].mxu0
  %v7288 = vadd.f32 0.0, %v7287
  %v7289 = vpop.f32.mrb[0].mxu0
  %7290 = vmatprep.mubr.f32.mxu0 0.0
  %7291 = vmatmul.mubr.f32.gmra.mrb[0].mxu0 %v6934
  %v7292 = vpop.f32.mrb[0].mxu0
  %v7293 = vadd.f32 0.0, %v7292
  %v7294 = vpop.f32.mrb[0].mxu0
  %7295 = vmatprep.mubr.f32.mxu0 0.0
  %7296 = vmatmul.mubr.f32.gmra.mrb[0].mxu0 %v6937
  %v7297 = vpop.f32.mrb[0].mxu0
  %v7298 = vadd.f32 0.0, %v7297
  %v7299 = vpop.f32.mrb[0].mxu0
  %7300 = vmatprep.mubr.f32.mxu0 0.0
  %7301 = vmatmul.mubr.f32.gmra.mrb[0].mxu0 %v6940
  %v7302 = vpop.f32.mrb[0].mxu0
  %v7303 = vadd.f32 0.0, %v7302
  %v7304 = vpop.f32.mrb[0].mxu0
  %7305 = vmatprep.mubr.f32.mxu0 0.0
  %7306 = vmatmul.mubr.f32.gmra.mrb[0].mxu0 %v6943
  %v7307 = vpop.f32.mrb[0].mxu0
  %v7308 = vadd.f32 0.0, %v7307
  %v7309 = vpop.f32.mrb[0].mxu0
  %7310 = vmatprep.mubr.f32.mxu0 0.0
  %7311 = vmatmul.mubr.f32.gmra.mrb[0].mxu0 %v6946
  %v7312 = vpop.f32.mrb[0].mxu0
  %v7313 = vadd.f32 0.0, %v7312
  %v7314 = vpop.f32.mrb[0].mxu0
  %7315 = vmatprep.mubr.f32.mxu0 0.0
  %7316 = vmatmul.mubr.f32.gmra.mrb[0].mxu0 %v6949
  %v7317 = vpop.f32.mrb[0].mxu0
  %v7318 = vadd.f32 0.0, %v7317
  %v7319 = vpop.f32.mrb[0].mxu0
  %7320 = vmatprep.mubr.f32.mxu0 0.0
  %7321 = vmatmul.mubr.f32.gmra.mrb[0].mxu0 %v6952
  %v7322 = vpop.f32.mrb[0].mxu0
  %v7323 = vadd.f32 0.0, %v7322
  %v7324 = vpop.f32.mrb[0].mxu0
  %7325 = vmatprep.mubr.f32.mxu0 0.0
  %7326 = vmatmul.mubr.f32.gmra.mrb[0].mxu0 %v6955
  %v7327 = vpop.f32.mrb[0].mxu0
  %v7328 = vadd.f32 0.0, %v7327
  %v7329 = vpop.f32.mrb[0].mxu0
  %7330 = vmatprep.mubr.f32.mxu0 0.0
  %7331 = vmatmul.mubr.f32.gmra.mrb[0].mxu0 %v6958
  %v7332 = vpop.f32.mrb[0].mxu0
  %v7333 = vadd.f32 0.0, %v7332
  %v7334 = vpop.f32.mrb[0].mxu0
  %7335 = vmatprep.mubr.f32.mxu0 0.0
  %7336 = vmatmul.mubr.f32.gmra.mrb[0].mxu0 %v6961
  %v7337 = vpop.f32.mrb[0].mxu0
  %v7338 = vadd.f32 0.0, %v7337
  %v7339 = vpop.f32.mrb[0].mxu0
  %7340 = vmatprep.mubr.f32.mxu0 0.0
  %7341 = vmatmul.mubr.f32.gmra.mrb[0].mxu0 %v6964
  %v7342 = vpop.f32.mrb[0].mxu0
  %v7343 = vadd.f32 0.0, %v7342
  %v7344 = vpop.f32.mrb[0].mxu0
  %7345 = vmatprep.mubr.f32.mxu0 0.0
  %7346 = vmatmul.mubr.f32.gmra.mrb[0].mxu0 %v6967
  %v7347 = vpop.f32.mrb[0].mxu0
  %v7348 = vadd.f32 0.0, %v7347
  %v7349 = vpop.f32.mrb[0].mxu0
  %7350 = vmatprep.mubr.f32.mxu0 0.0
  %7351 = vmatmul.mubr.f32.gmra.mrb[0].mxu0 %v6970
  %v7352 = vpop.f32.mrb[0].mxu0
  %v7353 = vadd.f32 0.0, %v7352
  %v7354 = vpop.f32.mrb[0].mxu0
  %7355 = vmatprep.mubr.f32.mxu0 0.0
  %7356 = vmatmul.mubr.f32.gmra.mrb[0].mxu0 %v6973
  %v7357 = vpop.f32.mrb[0].mxu0
  %v7358 = vadd.f32 0.0, %v7357
  %v7359 = vpop.f32.mrb[0].mxu0
  %7360 = vmatprep.mubr.f32.mxu0 0.0
  %7361 = vmatmul.mubr.f32.gmra.mrb[0].mxu0 %v6976
  %v7362 = vpop.f32.mrb[0].mxu0
  %v7363 = vadd.f32 0.0, %v7362
  %v7364 = vpop.f32.mrb[0].mxu0
  %7365 = vdwg.mxu0
  %v7366 = vld [vmem:[%s5] sm:$0x1]
  %v7367 = vld [vmem:[%s6] sm:$0x1]
  %v7368 = vsel %vm26, %v7048, 0.0
  %v7369 = vsel %vm26, %v7053, 0.0
  %v7370 = vadd.f32 %v7368, %v7369
  %v7371 = vsel %vm26, %v7058, 0.0
  %v7372 = vadd.f32 %v7370, %v7371
  %v7373 = vsel %vm26, %v7063, 0.0
  %v7374 = vadd.f32 %v7372, %v7373
  %v7375 = vsel %vm26, %v7068, 0.0
  %v7376 = vadd.f32 %v7374, %v7375
  %v7377 = vsel %vm26, %v7073, 0.0
  %v7378 = vadd.f32 %v7376, %v7377
  %v7379 = vsel %vm26, %v7078, 0.0
  %v7380 = vadd.f32 %v7378, %v7379
  %v7381 = vsel %vm26, %v7083, 0.0
  %v7382 = vadd.f32 %v7380, %v7381
  %v7383 = vsel %vm26, %v7088, 0.0
  %v7384 = vadd.f32 %v7382, %v7383
  %v7385 = vsel %vm26, %v7093, 0.0
  %v7386 = vadd.f32 %v7384, %v7385
  %v7387 = vsel %vm26, %v7098, 0.0
  %v7388 = vadd.f32 %v7386, %v7387
  %v7389 = vsel %vm26, %v7103, 0.0
  %v7390 = vadd.f32 %v7388, %v7389
  %v7391 = vsel %vm26, %v7108, 0.0
  %v7392 = vadd.f32 %v7390, %v7391
  %v7393 = vsel %vm26, %v7113, 0.0
  %v7394 = vadd.f32 %v7392, %v7393
  %v7395 = vsel %vm26, %v7118, 0.0
  %v7396 = vadd.f32 %v7394, %v7395
  %v7397 = vsel %vm26, %v7123, 0.0
  %v7398 = vadd.f32 %v7396, %v7397
  %v7399 = vsel %vm26, %v7128, 0.0
  %v7400 = vadd.f32 %v7398, %v7399
  %v7401 = vsel %vm26, %v7133, 0.0
  %v7402 = vadd.f32 %v7400, %v7401
  %v7403 = vsel %vm26, %v7138, 0.0
  %v7404 = vadd.f32 %v7402, %v7403
  %v7405 = vsel %vm26, %v7143, 0.0
  %v7406 = vadd.f32 %v7404, %v7405
  %v7407 = vsel %vm26, %v7148, 0.0
  %v7408 = vadd.f32 %v7406, %v7407
  %v7409 = vsel %vm26, %v7153, 0.0
  %v7410 = vadd.f32 %v7408, %v7409
  %v7411 = vsel %vm26, %v7158, 0.0
  %v7412 = vadd.f32 %v7410, %v7411
  %v7413 = vsel %vm26, %v7163, 0.0
  %v7414 = vadd.f32 %v7412, %v7413
  %v7415 = vsel %vm26, %v7168, 0.0
  %v7416 = vadd.f32 %v7414, %v7415
  %v7417 = vsel %vm26, %v7173, 0.0
  %v7418 = vadd.f32 %v7416, %v7417
  %v7419 = vsel %vm26, %v7178, 0.0
  %v7420 = vadd.f32 %v7418, %v7419
  %v7421 = vsel %vm26, %v7183, 0.0
  %v7422 = vadd.f32 %v7420, %v7421
  %v7423 = vsel %vm26, %v7188, 0.0
  %v7424 = vadd.f32 %v7422, %v7423
  %v7425 = vsel %vm26, %v7193, 0.0
  %v7426 = vadd.f32 %v7424, %v7425
  %v7427 = vsel %vm26, %v7198, 0.0
  %v7428 = vadd.f32 %v7426, %v7427
  %v7429 = vsel %vm26, %v7203, 0.0
  %v7430 = vadd.f32 %v7428, %v7429
  %v7431 = vsel %vm26, %v7208, 0.0
  %v7432 = vadd.f32 %v7430, %v7431
  %v7433 = vsel %vm26, %v7213, 0.0
  %v7434 = vadd.f32 %v7432, %v7433
  %v7435 = vsel %vm26, %v7218, 0.0
  %v7436 = vadd.f32 %v7434, %v7435
  %v7437 = vsel %vm26, %v7223, 0.0
  %v7438 = vadd.f32 %v7436, %v7437
  %v7439 = vsel %vm26, %v7228, 0.0
  %v7440 = vadd.f32 %v7438, %v7439
  %v7441 = vsel %vm26, %v7233, 0.0
  %v7442 = vadd.f32 %v7440, %v7441
  %v7443 = vsel %vm26, %v7238, 0.0
  %v7444 = vadd.f32 %v7442, %v7443
  %v7445 = vsel %vm26, %v7243, 0.0
  %v7446 = vadd.f32 %v7444, %v7445
  %v7447 = vsel %vm26, %v7248, 0.0
  %v7448 = vadd.f32 %v7446, %v7447
  %v7449 = vsel %vm26, %v7253, 0.0
  %v7450 = vadd.f32 %v7448, %v7449
  %v7451 = vsel %vm26, %v7258, 0.0
  %v7452 = vadd.f32 %v7450, %v7451
  %v7453 = vsel %vm26, %v7263, 0.0
  %v7454 = vadd.f32 %v7452, %v7453
  %v7455 = vsel %vm26, %v7268, 0.0
  %v7456 = vadd.f32 %v7454, %v7455
  %v7457 = vsel %vm26, %v7273, 0.0
  %v7458 = vadd.f32 %v7456, %v7457
  %v7459 = vsel %vm26, %v7278, 0.0
  %v7460 = vadd.f32 %v7458, %v7459
  %v7461 = vsel %vm26, %v7283, 0.0
  %v7462 = vadd.f32 %v7460, %v7461
  %v7463 = vsel %vm26, %v7288, 0.0
  %v7464 = vadd.f32 %v7462, %v7463
  %v7465 = vsel %vm26, %v7293, 0.0
  %v7466 = vadd.f32 %v7464, %v7465
  %v7467 = vsel %vm26, %v7298, 0.0
  %v7468 = vadd.f32 %v7466, %v7467
  %v7469 = vsel %vm26, %v7303, 0.0
  %v7470 = vadd.f32 %v7468, %v7469
  %v7471 = vsel %vm26, %v7308, 0.0
  %v7472 = vadd.f32 %v7470, %v7471
  %v7473 = vsel %vm26, %v7313, 0.0
  %v7474 = vadd.f32 %v7472, %v7473
  %v7475 = vsel %vm26, %v7318, 0.0
  %v7476 = vadd.f32 %v7474, %v7475
  %v7477 = vsel %vm26, %v7323, 0.0
  %v7478 = vadd.f32 %v7476, %v7477
  %v7479 = vsel %vm26, %v7328, 0.0
  %v7480 = vadd.f32 %v7478, %v7479
  %v7481 = vsel %vm26, %v7333, 0.0
  %v7482 = vadd.f32 %v7480, %v7481
  %v7483 = vsel %vm26, %v7338, 0.0
  %v7484 = vadd.f32 %v7482, %v7483
  %v7485 = vsel %vm26, %v7343, 0.0
  %v7486 = vadd.f32 %v7484, %v7485
  %v7487 = vsel %vm26, %v7348, 0.0
  %v7488 = vadd.f32 %v7486, %v7487
  %v7489 = vsel %vm26, %v7353, 0.0
  %v7490 = vadd.f32 %v7488, %v7489
  %v7491 = vsel %vm26, %v7358, 0.0
  %v7492 = vadd.f32 %v7490, %v7491
  %v7493 = vsel %vm26, %v7363, 0.0
  %v7494 = vadd.f32 %v7492, %v7493
  %v7495 = vrot.slane %v7494, 4
  %v7496 = vadd.f32 %v7494, %v7495
  %v7497 = vrot.slane %v7496, 2
  %v7498 = vadd.f32 %v7496, %v7497
  %v7499 = vrot.slane %v7498, 1
  %v7500 = vadd.f32 %v7498, %v7499
  %v7501 = vmul.f32 %v7500, %v3620
  %v7502 = vsub.f32 %v7048, %v7501
  %v7503 = vsub.f32 %v7053, %v7501
  %v7504 = vsub.f32 %v7058, %v7501
  %v7505 = vsub.f32 %v7063, %v7501
  %v7506 = vsub.f32 %v7068, %v7501
  %v7507 = vsub.f32 %v7073, %v7501
  %v7508 = vsub.f32 %v7078, %v7501
  %v7509 = vsub.f32 %v7083, %v7501
  %v7510 = vsub.f32 %v7088, %v7501
  %v7511 = vsub.f32 %v7093, %v7501
  %v7512 = vsub.f32 %v7098, %v7501
  %v7513 = vsub.f32 %v7103, %v7501
  %v7514 = vsub.f32 %v7108, %v7501
  %v7515 = vsub.f32 %v7113, %v7501
  %v7516 = vsub.f32 %v7118, %v7501
  %v7517 = vsub.f32 %v7123, %v7501
  %v7518 = vsub.f32 %v7128, %v7501
  %v7519 = vsub.f32 %v7133, %v7501
  %v7520 = vsub.f32 %v7138, %v7501
  %v7521 = vsub.f32 %v7143, %v7501
  %v7522 = vsub.f32 %v7148, %v7501
  %v7523 = vsub.f32 %v7153, %v7501
  %v7524 = vsub.f32 %v7158, %v7501
  %v7525 = vsub.f32 %v7163, %v7501
  %v7526 = vsub.f32 %v7168, %v7501
  %v7527 = vsub.f32 %v7173, %v7501
  %v7528 = vsub.f32 %v7178, %v7501
  %v7529 = vsub.f32 %v7183, %v7501
  %v7530 = vsub.f32 %v7188, %v7501
  %v7531 = vsub.f32 %v7193, %v7501
  %v7532 = vsub.f32 %v7198, %v7501
  %v7533 = vsub.f32 %v7203, %v7501
  %v7534 = vsub.f32 %v7208, %v7501
  %v7535 = vsub.f32 %v7213, %v7501
  %v7536 = vsub.f32 %v7218, %v7501
  %v7537 = vsub.f32 %v7223, %v7501
  %v7538 = vsub.f32 %v7228, %v7501
  %v7539 = vsub.f32 %v7233, %v7501
  %v7540 = vsub.f32 %v7238, %v7501
  %v7541 = vsub.f32 %v7243, %v7501
  %v7542 = vsub.f32 %v7248, %v7501
  %v7543 = vsub.f32 %v7253, %v7501
  %v7544 = vsub.f32 %v7258, %v7501
  %v7545 = vsub.f32 %v7263, %v7501
  %v7546 = vsub.f32 %v7268, %v7501
  %v7547 = vsub.f32 %v7273, %v7501
  %v7548 = vsub.f32 %v7278, %v7501
  %v7549 = vsub.f32 %v7283, %v7501
  %v7550 = vsub.f32 %v7288, %v7501
  %v7551 = vsub.f32 %v7293, %v7501
  %v7552 = vsub.f32 %v7298, %v7501
  %v7553 = vsub.f32 %v7303, %v7501
  %v7554 = vsub.f32 %v7308, %v7501
  %v7555 = vsub.f32 %v7313, %v7501
  %v7556 = vsub.f32 %v7318, %v7501
  %v7557 = vsub.f32 %v7323, %v7501
  %v7558 = vsub.f32 %v7328, %v7501
  %v7559 = vsub.f32 %v7333, %v7501
  %v7560 = vsub.f32 %v7338, %v7501
  %v7561 = vsub.f32 %v7343, %v7501
  %v7562 = vsub.f32 %v7348, %v7501
  %v7563 = vsub.f32 %v7353, %v7501
  %v7564 = vsub.f32 %v7358, %v7501
  %v7565 = vsub.f32 %v7363, %v7501
  %v7566 = vmul.f32 %v7502, %v7502
  %v7567 = vmul.f32 %v7503, %v7503
  %v7568 = vmul.f32 %v7504, %v7504
  %v7569 = vmul.f32 %v7505, %v7505
  %v7570 = vmul.f32 %v7506, %v7506
  %v7571 = vmul.f32 %v7507, %v7507
  %v7572 = vmul.f32 %v7508, %v7508
  %v7573 = vmul.f32 %v7509, %v7509
  %v7574 = vmul.f32 %v7510, %v7510
  %v7575 = vmul.f32 %v7511, %v7511
  %v7576 = vmul.f32 %v7512, %v7512
  %v7577 = vmul.f32 %v7513, %v7513
  %v7578 = vmul.f32 %v7514, %v7514
  %v7579 = vmul.f32 %v7515, %v7515
  %v7580 = vmul.f32 %v7516, %v7516
  %v7581 = vmul.f32 %v7517, %v7517
  %v7582 = vmul.f32 %v7518, %v7518
  %v7583 = vmul.f32 %v7519, %v7519
  %v7584 = vmul.f32 %v7520, %v7520
  %v7585 = vmul.f32 %v7521, %v7521
  %v7586 = vmul.f32 %v7522, %v7522
  %v7587 = vmul.f32 %v7523, %v7523
  %v7588 = vmul.f32 %v7524, %v7524
  %v7589 = vmul.f32 %v7525, %v7525
  %v7590 = vmul.f32 %v7526, %v7526
  %v7591 = vmul.f32 %v7527, %v7527
  %v7592 = vmul.f32 %v7528, %v7528
  %v7593 = vmul.f32 %v7529, %v7529
  %v7594 = vmul.f32 %v7530, %v7530
  %v7595 = vmul.f32 %v7531, %v7531
  %v7596 = vmul.f32 %v7532, %v7532
  %v7597 = vmul.f32 %v7533, %v7533
  %v7598 = vmul.f32 %v7534, %v7534
  %v7599 = vmul.f32 %v7535, %v7535
  %v7600 = vmul.f32 %v7536, %v7536
  %v7601 = vmul.f32 %v7537, %v7537
  %v7602 = vmul.f32 %v7538, %v7538
  %v7603 = vmul.f32 %v7539, %v7539
  %v7604 = vmul.f32 %v7540, %v7540
  %v7605 = vmul.f32 %v7541, %v7541
  %v7606 = vmul.f32 %v7542, %v7542
  %v7607 = vmul.f32 %v7543, %v7543
  %v7608 = vmul.f32 %v7544, %v7544
  %v7609 = vmul.f32 %v7545, %v7545
  %v7610 = vmul.f32 %v7546, %v7546
  %v7611 = vmul.f32 %v7547, %v7547
  %v7612 = vmul.f32 %v7548, %v7548
  %v7613 = vmul.f32 %v7549, %v7549
  %v7614 = vmul.f32 %v7550, %v7550
  %v7615 = vmul.f32 %v7551, %v7551
  %v7616 = vmul.f32 %v7552, %v7552
  %v7617 = vmul.f32 %v7553, %v7553
  %v7618 = vmul.f32 %v7554, %v7554
  %v7619 = vmul.f32 %v7555, %v7555
  %v7620 = vmul.f32 %v7556, %v7556
  %v7621 = vmul.f32 %v7557, %v7557
  %v7622 = vmul.f32 %v7558, %v7558
  %v7623 = vmul.f32 %v7559, %v7559
  %v7624 = vmul.f32 %v7560, %v7560
  %v7625 = vmul.f32 %v7561, %v7561
  %v7626 = vmul.f32 %v7562, %v7562
  %v7627 = vmul.f32 %v7563, %v7563
  %v7628 = vmul.f32 %v7564, %v7564
  %v7629 = vmul.f32 %v7565, %v7565
  %v7630 = vsel %vm26, %v7566, 0.0
  %v7631 = vsel %vm26, %v7567, 0.0
  %v7632 = vadd.f32 %v7630, %v7631
  %v7633 = vsel %vm26, %v7568, 0.0
  %v7634 = vadd.f32 %v7632, %v7633
  %v7635 = vsel %vm26, %v7569, 0.0
  %v7636 = vadd.f32 %v7634, %v7635
  %v7637 = vsel %vm26, %v7570, 0.0
  %v7638 = vadd.f32 %v7636, %v7637
  %v7639 = vsel %vm26, %v7571, 0.0
  %v7640 = vadd.f32 %v7638, %v7639
  %v7641 = vsel %vm26, %v7572, 0.0
  %v7642 = vadd.f32 %v7640, %v7641
  %v7643 = vsel %vm26, %v7573, 0.0
  %v7644 = vadd.f32 %v7642, %v7643
  %v7645 = vsel %vm26, %v7574, 0.0
  %v7646 = vadd.f32 %v7644, %v7645
  %v7647 = vsel %vm26, %v7575, 0.0
  %v7648 = vadd.f32 %v7646, %v7647
  %v7649 = vsel %vm26, %v7576, 0.0
  %v7650 = vadd.f32 %v7648, %v7649
  %v7651 = vsel %vm26, %v7577, 0.0
  %v7652 = vadd.f32 %v7650, %v7651
  %v7653 = vsel %vm26, %v7578, 0.0
  %v7654 = vadd.f32 %v7652, %v7653
  %v7655 = vsel %vm26, %v7579, 0.0
  %v7656 = vadd.f32 %v7654, %v7655
  %v7657 = vsel %vm26, %v7580, 0.0
  %v7658 = vadd.f32 %v7656, %v7657
  %v7659 = vsel %vm26, %v7581, 0.0
  %v7660 = vadd.f32 %v7658, %v7659
  %v7661 = vsel %vm26, %v7582, 0.0
  %v7662 = vadd.f32 %v7660, %v7661
  %v7663 = vsel %vm26, %v7583, 0.0
  %v7664 = vadd.f32 %v7662, %v7663
  %v7665 = vsel %vm26, %v7584, 0.0
  %v7666 = vadd.f32 %v7664, %v7665
  %v7667 = vsel %vm26, %v7585, 0.0
  %v7668 = vadd.f32 %v7666, %v7667
  %v7669 = vsel %vm26, %v7586, 0.0
  %v7670 = vadd.f32 %v7668, %v7669
  %v7671 = vsel %vm26, %v7587, 0.0
  %v7672 = vadd.f32 %v7670, %v7671
  %v7673 = vsel %vm26, %v7588, 0.0
  %v7674 = vadd.f32 %v7672, %v7673
  %v7675 = vsel %vm26, %v7589, 0.0
  %v7676 = vadd.f32 %v7674, %v7675
  %v7677 = vsel %vm26, %v7590, 0.0
  %v7678 = vadd.f32 %v7676, %v7677
  %v7679 = vsel %vm26, %v7591, 0.0
  %v7680 = vadd.f32 %v7678, %v7679
  %v7681 = vsel %vm26, %v7592, 0.0
  %v7682 = vadd.f32 %v7680, %v7681
  %v7683 = vsel %vm26, %v7593, 0.0
  %v7684 = vadd.f32 %v7682, %v7683
  %v7685 = vsel %vm26, %v7594, 0.0
  %v7686 = vadd.f32 %v7684, %v7685
  %v7687 = vsel %vm26, %v7595, 0.0
  %v7688 = vadd.f32 %v7686, %v7687
  %v7689 = vsel %vm26, %v7596, 0.0
  %v7690 = vadd.f32 %v7688, %v7689
  %v7691 = vsel %vm26, %v7597, 0.0
  %v7692 = vadd.f32 %v7690, %v7691
  %v7693 = vsel %vm26, %v7598, 0.0
  %v7694 = vadd.f32 %v7692, %v7693
  %v7695 = vsel %vm26, %v7599, 0.0
  %v7696 = vadd.f32 %v7694, %v7695
  %v7697 = vsel %vm26, %v7600, 0.0
  %v7698 = vadd.f32 %v7696, %v7697
  %v7699 = vsel %vm26, %v7601, 0.0
  %v7700 = vadd.f32 %v7698, %v7699
  %v7701 = vsel %vm26, %v7602, 0.0
  %v7702 = vadd.f32 %v7700, %v7701
  %v7703 = vsel %vm26, %v7603, 0.0
  %v7704 = vadd.f32 %v7702, %v7703
  %v7705 = vsel %vm26, %v7604, 0.0
  %v7706 = vadd.f32 %v7704, %v7705
  %v7707 = vsel %vm26, %v7605, 0.0
  %v7708 = vadd.f32 %v7706, %v7707
  %v7709 = vsel %vm26, %v7606, 0.0
  %v7710 = vadd.f32 %v7708, %v7709
  %v7711 = vsel %vm26, %v7607, 0.0
  %v7712 = vadd.f32 %v7710, %v7711
  %v7713 = vsel %vm26, %v7608, 0.0
  %v7714 = vadd.f32 %v7712, %v7713
  %v7715 = vsel %vm26, %v7609, 0.0
  %v7716 = vadd.f32 %v7714, %v7715
  %v7717 = vsel %vm26, %v7610, 0.0
  %v7718 = vadd.f32 %v7716, %v7717
  %v7719 = vsel %vm26, %v7611, 0.0
  %v7720 = vadd.f32 %v7718, %v7719
  %v7721 = vsel %vm26, %v7612, 0.0
  %v7722 = vadd.f32 %v7720, %v7721
  %v7723 = vsel %vm26, %v7613, 0.0
  %v7724 = vadd.f32 %v7722, %v7723
  %v7725 = vsel %vm26, %v7614, 0.0
  %v7726 = vadd.f32 %v7724, %v7725
  %v7727 = vsel %vm26, %v7615, 0.0
  %v7728 = vadd.f32 %v7726, %v7727
  %v7729 = vsel %vm26, %v7616, 0.0
  %v7730 = vadd.f32 %v7728, %v7729
  %v7731 = vsel %vm26, %v7617, 0.0
  %v7732 = vadd.f32 %v7730, %v7731
  %v7733 = vsel %vm26, %v7618, 0.0
  %v7734 = vadd.f32 %v7732, %v7733
  %v7735 = vsel %vm26, %v7619, 0.0
  %v7736 = vadd.f32 %v7734, %v7735
  %v7737 = vsel %vm26, %v7620, 0.0
  %v7738 = vadd.f32 %v7736, %v7737
  %v7739 = vsel %vm26, %v7621, 0.0
  %v7740 = vadd.f32 %v7738, %v7739
  %v7741 = vsel %vm26, %v7622, 0.0
  %v7742 = vadd.f32 %v7740, %v7741
  %v7743 = vsel %vm26, %v7623, 0.0
  %v7744 = vadd.f32 %v7742, %v7743
  %v7745 = vsel %vm26, %v7624, 0.0
  %v7746 = vadd.f32 %v7744, %v7745
  %v7747 = vsel %vm26, %v7625, 0.0
  %v7748 = vadd.f32 %v7746, %v7747
  %v7749 = vsel %vm26, %v7626, 0.0
  %v7750 = vadd.f32 %v7748, %v7749
  %v7751 = vsel %vm26, %v7627, 0.0
  %v7752 = vadd.f32 %v7750, %v7751
  %v7753 = vsel %vm26, %v7628, 0.0
  %v7754 = vadd.f32 %v7752, %v7753
  %v7755 = vsel %vm26, %v7629, 0.0
  %v7756 = vadd.f32 %v7754, %v7755
  %v7757 = vrot.slane %v7756, 4
  %v7758 = vadd.f32 %v7756, %v7757
  %v7759 = vrot.slane %v7758, 2
  %v7760 = vadd.f32 %v7758, %v7759
  %v7761 = vrot.slane %v7760, 1
  %v7762 = vadd.f32 %v7760, %v7761
  %v7763 = vmul.f32 %v7762, %v3620
  %v7764 = vadd.f32 %v7763, 1e-05
  %v7765 = vrsqrt.pop %v7764
  %v7766 = vmul.f32 %v7366, %v7765
  %v7767 = vmul.f32 %v7501, %v7766
  %v7768 = vsub.f32 %v7367, %v7767
  %v7770 = vlaneseq
  %v7771 = vshrl.u32 %v7770, 7
  %v7772 = vsub.s32 0, %v7771
  %v7773 = vrot.slane %v7766, %v7772
  %v7775 = vmul.f32 %v7048, %v7773
  %v7776 = vmul.f32 %v7053, %v7773
  %v7777 = vmul.f32 %v7058, %v7773
  %v7778 = vmul.f32 %v7063, %v7773
  %v7779 = vmul.f32 %v7068, %v7773
  %v7780 = vmul.f32 %v7073, %v7773
  %v7781 = vmul.f32 %v7078, %v7773
  %v7782 = vmul.f32 %v7083, %v7773
  %v7783 = vmul.f32 %v7088, %v7773
  %v7784 = vmul.f32 %v7093, %v7773
  %v7785 = vmul.f32 %v7098, %v7773
  %v7786 = vmul.f32 %v7103, %v7773
  %v7787 = vmul.f32 %v7108, %v7773
  %v7788 = vmul.f32 %v7113, %v7773
  %v7789 = vmul.f32 %v7118, %v7773
  %v7790 = vmul.f32 %v7123, %v7773
  %v7791 = vmul.f32 %v7128, %v7773
  %v7792 = vmul.f32 %v7133, %v7773
  %v7793 = vmul.f32 %v7138, %v7773
  %v7794 = vmul.f32 %v7143, %v7773
  %v7795 = vmul.f32 %v7148, %v7773
  %v7796 = vmul.f32 %v7153, %v7773
  %v7797 = vmul.f32 %v7158, %v7773
  %v7798 = vmul.f32 %v7163, %v7773
  %v7799 = vmul.f32 %v7168, %v7773
  %v7800 = vmul.f32 %v7173, %v7773
  %v7801 = vmul.f32 %v7178, %v7773
  %v7802 = vmul.f32 %v7183, %v7773
  %v7803 = vmul.f32 %v7188, %v7773
  %v7804 = vmul.f32 %v7193, %v7773
  %v7805 = vmul.f32 %v7198, %v7773
  %v7806 = vmul.f32 %v7203, %v7773
  %v7807 = vmul.f32 %v7208, %v7773
  %v7808 = vmul.f32 %v7213, %v7773
  %v7809 = vmul.f32 %v7218, %v7773
  %v7810 = vmul.f32 %v7223, %v7773
  %v7811 = vmul.f32 %v7228, %v7773
  %v7812 = vmul.f32 %v7233, %v7773
  %v7813 = vmul.f32 %v7238, %v7773
  %v7814 = vmul.f32 %v7243, %v7773
  %v7815 = vmul.f32 %v7248, %v7773
  %v7816 = vmul.f32 %v7253, %v7773
  %v7817 = vmul.f32 %v7258, %v7773
  %v7818 = vmul.f32 %v7263, %v7773
  %v7819 = vmul.f32 %v7268, %v7773
  %v7820 = vmul.f32 %v7273, %v7773
  %v7821 = vmul.f32 %v7278, %v7773
  %v7822 = vmul.f32 %v7283, %v7773
  %v7823 = vmul.f32 %v7288, %v7773
  %v7824 = vmul.f32 %v7293, %v7773
  %v7825 = vmul.f32 %v7298, %v7773
  %v7826 = vmul.f32 %v7303, %v7773
  %v7827 = vmul.f32 %v7308, %v7773
  %v7828 = vmul.f32 %v7313, %v7773
  %v7829 = vmul.f32 %v7318, %v7773
  %v7830 = vmul.f32 %v7323, %v7773
  %v7831 = vmul.f32 %v7328, %v7773
  %v7832 = vmul.f32 %v7333, %v7773
  %v7833 = vmul.f32 %v7338, %v7773
  %v7834 = vmul.f32 %v7343, %v7773
  %v7835 = vmul.f32 %v7348, %v7773
  %v7836 = vmul.f32 %v7353, %v7773
  %v7837 = vmul.f32 %v7358, %v7773
  %v7838 = vmul.f32 %v7363, %v7773
  %v7840 = vlaneseq
  %v7841 = vshrl.u32 %v7840, 7
  %v7842 = vsub.s32 0, %v7841
  %v7843 = vrot.slane %v7768, %v7842
  %v7845 = vadd.f32 %v7775, %v7843
  %v7846 = vadd.f32 %v7776, %v7843
  %v7847 = vadd.f32 %v7777, %v7843
  %v7848 = vadd.f32 %v7778, %v7843
  %v7849 = vadd.f32 %v7779, %v7843
  %v7850 = vadd.f32 %v7780, %v7843
  %v7851 = vadd.f32 %v7781, %v7843
  %v7852 = vadd.f32 %v7782, %v7843
  %v7853 = vadd.f32 %v7783, %v7843
  %v7854 = vadd.f32 %v7784, %v7843
  %v7855 = vadd.f32 %v7785, %v7843
  %v7856 = vadd.f32 %v7786, %v7843
  %v7857 = vadd.f32 %v7787, %v7843
  %v7858 = vadd.f32 %v7788, %v7843
  %v7859 = vadd.f32 %v7789, %v7843
  %v7860 = vadd.f32 %v7790, %v7843
  %v7861 = vadd.f32 %v7791, %v7843
  %v7862 = vadd.f32 %v7792, %v7843
  %v7863 = vadd.f32 %v7793, %v7843
  %v7864 = vadd.f32 %v7794, %v7843
  %v7865 = vadd.f32 %v7795, %v7843
  %v7866 = vadd.f32 %v7796, %v7843
  %v7867 = vadd.f32 %v7797, %v7843
  %v7868 = vadd.f32 %v7798, %v7843
  %v7869 = vadd.f32 %v7799, %v7843
  %v7870 = vadd.f32 %v7800, %v7843
  %v7871 = vadd.f32 %v7801, %v7843
  %v7872 = vadd.f32 %v7802, %v7843
  %v7873 = vadd.f32 %v7803, %v7843
  %v7874 = vadd.f32 %v7804, %v7843
  %v7875 = vadd.f32 %v7805, %v7843
  %v7876 = vadd.f32 %v7806, %v7843
  %v7877 = vadd.f32 %v7807, %v7843
  %v7878 = vadd.f32 %v7808, %v7843
  %v7879 = vadd.f32 %v7809, %v7843
  %v7880 = vadd.f32 %v7810, %v7843
  %v7881 = vadd.f32 %v7811, %v7843
  %v7882 = vadd.f32 %v7812, %v7843
  %v7883 = vadd.f32 %v7813, %v7843
  %v7884 = vadd.f32 %v7814, %v7843
  %v7885 = vadd.f32 %v7815, %v7843
  %v7886 = vadd.f32 %v7816, %v7843
  %v7887 = vadd.f32 %v7817, %v7843
  %v7888 = vadd.f32 %v7818, %v7843
  %v7889 = vadd.f32 %v7819, %v7843
  %v7890 = vadd.f32 %v7820, %v7843
  %v7891 = vadd.f32 %v7821, %v7843
  %v7892 = vadd.f32 %v7822, %v7843
  %v7893 = vadd.f32 %v7823, %v7843
  %v7894 = vadd.f32 %v7824, %v7843
  %v7895 = vadd.f32 %v7825, %v7843
  %v7896 = vadd.f32 %v7826, %v7843
  %v7897 = vadd.f32 %v7827, %v7843
  %v7898 = vadd.f32 %v7828, %v7843
  %v7899 = vadd.f32 %v7829, %v7843
  %v7900 = vadd.f32 %v7830, %v7843
  %v7901 = vadd.f32 %v7831, %v7843
  %v7902 = vadd.f32 %v7832, %v7843
  %v7903 = vadd.f32 %v7833, %v7843
  %v7904 = vadd.f32 %v7834, %v7843
  %v7905 = vadd.f32 %v7835, %v7843
  %v7906 = vadd.f32 %v7836, %v7843
  %v7907 = vadd.f32 %v7837, %v7843
  %v7908 = vadd.f32 %v7838, %v7843
  %v7909 = vld [vmem:[%s0] sm:$0xff]
  %v7910 = vld [vmem:[%s0 + $0x8] sm:$0xff]
  %v7911 = vld [vmem:[%s0 + $0x10] sm:$0xff]
  %v7912 = vld [vmem:[%s0 + $0x18] sm:$0xff]
  %v7913 = vld [vmem:[%s0 + $0x20] sm:$0xff]
  %v7914 = vld [vmem:[%s0 + $0x28] sm:$0xff]
  %v7915 = vld [vmem:[%s0 + $0x30] sm:$0xff]
  %v7916 = vld [vmem:[%s0 + $0x38] sm:$0xff]
  %v7917 = vld [vmem:[%s0 + $0x40] sm:$0xff]
  %v7918 = vld [vmem:[%s0 + $0x48] sm:$0xff]
  %v7919 = vld [vmem:[%s0 + $0x50] sm:$0xff]
  %v7920 = vld [vmem:[%s0 + $0x58] sm:$0xff]
  %v7921 = vld [vmem:[%s0 + $0x60] sm:$0xff]
  %v7922 = vld [vmem:[%s0 + $0x68] sm:$0xff]
  %v7923 = vld [vmem:[%s0 + $0x70] sm:$0xff]
  %v7924 = vld [vmem:[%s0 + $0x78] sm:$0xff]
  %v7925 = vld [vmem:[%s0 + $0x80] sm:$0xff]
  %v7926 = vld [vmem:[%s0 + $0x88] sm:$0xff]
  %v7927 = vld [vmem:[%s0 + $0x90] sm:$0xff]
  %v7928 = vld [vmem:[%s0 + $0x98] sm:$0xff]
  %v7929 = vld [vmem:[%s0 + $0xa0] sm:$0xff]
  %v7930 = vld [vmem:[%s0 + $0xa8] sm:$0xff]
  %v7931 = vld [vmem:[%s0 + $0xb0] sm:$0xff]
  %v7932 = vld [vmem:[%s0 + $0xb8] sm:$0xff]
  %v7933 = vld [vmem:[%s0 + $0xc0] sm:$0xff]
  %v7934 = vld [vmem:[%s0 + $0xc8] sm:$0xff]
  %v7935 = vld [vmem:[%s0 + $0xd0] sm:$0xff]
  %v7936 = vld [vmem:[%s0 + $0xd8] sm:$0xff]
  %v7937 = vld [vmem:[%s0 + $0xe0] sm:$0xff]
  %v7938 = vld [vmem:[%s0 + $0xe8] sm:$0xff]
  %v7939 = vld [vmem:[%s0 + $0xf0] sm:$0xff]
  %v7940 = vld [vmem:[%s0 + $0xf8] sm:$0xff]
  %v7941 = vld [vmem:[%s0 + $0x100] sm:$0xff]
  %v7942 = vld [vmem:[%s0 + $0x108] sm:$0xff]
  %v7943 = vld [vmem:[%s0 + $0x110] sm:$0xff]
  %v7944 = vld [vmem:[%s0 + $0x118] sm:$0xff]
  %v7945 = vld [vmem:[%s0 + $0x120] sm:$0xff]
  %v7946 = vld [vmem:[%s0 + $0x128] sm:$0xff]
  %v7947 = vld [vmem:[%s0 + $0x130] sm:$0xff]
  %v7948 = vld [vmem:[%s0 + $0x138] sm:$0xff]
  %v7949 = vld [vmem:[%s0 + $0x140] sm:$0xff]
  %v7950 = vld [vmem:[%s0 + $0x148] sm:$0xff]
  %v7951 = vld [vmem:[%s0 + $0x150] sm:$0xff]
  %v7952 = vld [vmem:[%s0 + $0x158] sm:$0xff]
  %v7953 = vld [vmem:[%s0 + $0x160] sm:$0xff]
  %v7954 = vld [vmem:[%s0 + $0x168] sm:$0xff]
  %v7955 = vld [vmem:[%s0 + $0x170] sm:$0xff]
  %v7956 = vld [vmem:[%s0 + $0x178] sm:$0xff]
  %v7957 = vld [vmem:[%s0 + $0x180] sm:$0xff]
  %v7958 = vld [vmem:[%s0 + $0x188] sm:$0xff]
  %v7959 = vld [vmem:[%s0 + $0x190] sm:$0xff]
  %v7960 = vld [vmem:[%s0 + $0x198] sm:$0xff]
  %v7961 = vld [vmem:[%s0 + $0x1a0] sm:$0xff]
  %v7962 = vld [vmem:[%s0 + $0x1a8] sm:$0xff]
  %v7963 = vld [vmem:[%s0 + $0x1b0] sm:$0xff]
  %v7964 = vld [vmem:[%s0 + $0x1b8] sm:$0xff]
  %v7965 = vld [vmem:[%s0 + $0x1c0] sm:$0xff]
  %v7966 = vld [vmem:[%s0 + $0x1c8] sm:$0xff]
  %v7967 = vld [vmem:[%s0 + $0x1d0] sm:$0xff]
  %v7968 = vld [vmem:[%s0 + $0x1d8] sm:$0xff]
  %v7969 = vld [vmem:[%s0 + $0x1e0] sm:$0xff]
  %v7970 = vld [vmem:[%s0 + $0x1e8] sm:$0xff]
  %v7971 = vld [vmem:[%s0 + $0x1f0] sm:$0xff]
  %v7972 = vld [vmem:[%s0 + $0x1f8] sm:$0xff]
  %v7973 = vadd.f32 %v7845, %v7909
  %v7974 = vadd.f32 %v7846, %v7910
  %v7975 = vadd.f32 %v7847, %v7911
  %v7976 = vadd.f32 %v7848, %v7912
  %v7977 = vadd.f32 %v7849, %v7913
  %v7978 = vadd.f32 %v7850, %v7914
  %v7979 = vadd.f32 %v7851, %v7915
  %v7980 = vadd.f32 %v7852, %v7916
  %v7981 = vadd.f32 %v7853, %v7917
  %v7982 = vadd.f32 %v7854, %v7918
  %v7983 = vadd.f32 %v7855, %v7919
  %v7984 = vadd.f32 %v7856, %v7920
  %v7985 = vadd.f32 %v7857, %v7921
  %v7986 = vadd.f32 %v7858, %v7922
  %v7987 = vadd.f32 %v7859, %v7923
  %v7988 = vadd.f32 %v7860, %v7924
  %v7989 = vadd.f32 %v7861, %v7925
  %v7990 = vadd.f32 %v7862, %v7926
  %v7991 = vadd.f32 %v7863, %v7927
  %v7992 = vadd.f32 %v7864, %v7928
  %v7993 = vadd.f32 %v7865, %v7929
  %v7994 = vadd.f32 %v7866, %v7930
  %v7995 = vadd.f32 %v7867, %v7931
  %v7996 = vadd.f32 %v7868, %v7932
  %v7997 = vadd.f32 %v7869, %v7933
  %v7998 = vadd.f32 %v7870, %v7934
  %v7999 = vadd.f32 %v7871, %v7935
  %v8000 = vadd.f32 %v7872, %v7936
  %v8001 = vadd.f32 %v7873, %v7937
  %v8002 = vadd.f32 %v7874, %v7938
  %v8003 = vadd.f32 %v7875, %v7939
  %v8004 = vadd.f32 %v7876, %v7940
  %v8005 = vadd.f32 %v7877, %v7941
  %v8006 = vadd.f32 %v7878, %v7942
  %v8007 = vadd.f32 %v7879, %v7943
  %v8008 = vadd.f32 %v7880, %v7944
  %v8009 = vadd.f32 %v7881, %v7945
  %v8010 = vadd.f32 %v7882, %v7946
  %v8011 = vadd.f32 %v7883, %v7947
  %v8012 = vadd.f32 %v7884, %v7948
  %v8013 = vadd.f32 %v7885, %v7949
  %v8014 = vadd.f32 %v7886, %v7950
  %v8015 = vadd.f32 %v7887, %v7951
  %v8016 = vadd.f32 %v7888, %v7952
  %v8017 = vadd.f32 %v7889, %v7953
  %v8018 = vadd.f32 %v7890, %v7954
  %v8019 = vadd.f32 %v7891, %v7955
  %v8020 = vadd.f32 %v7892, %v7956
  %v8021 = vadd.f32 %v7893, %v7957
  %v8022 = vadd.f32 %v7894, %v7958
  %v8023 = vadd.f32 %v7895, %v7959
  %v8024 = vadd.f32 %v7896, %v7960
  %v8025 = vadd.f32 %v7897, %v7961
  %v8026 = vadd.f32 %v7898, %v7962
  %v8027 = vadd.f32 %v7899, %v7963
  %v8028 = vadd.f32 %v7900, %v7964
  %v8029 = vadd.f32 %v7901, %v7965
  %v8030 = vadd.f32 %v7902, %v7966
  %v8031 = vadd.f32 %v7903, %v7967
  %v8032 = vadd.f32 %v7904, %v7968
  %v8033 = vadd.f32 %v7905, %v7969
  %v8034 = vadd.f32 %v7906, %v7970
  %v8035 = vadd.f32 %v7907, %v7971
  %v8036 = vadd.f32 %v7908, %v7972
  %v8037 = vmax.f32 %v7973, 0.0
  %v8038 = vmax.f32 %v7974, 0.0
  %v8039 = vmax.f32 %v7975, 0.0
  %v8040 = vmax.f32 %v7976, 0.0
  %v8041 = vmax.f32 %v7977, 0.0
  %v8042 = vmax.f32 %v7978, 0.0
  %v8043 = vmax.f32 %v7979, 0.0
  %v8044 = vmax.f32 %v7980, 0.0
  %v8045 = vmax.f32 %v7981, 0.0
  %v8046 = vmax.f32 %v7982, 0.0
  %v8047 = vmax.f32 %v7983, 0.0
  %v8048 = vmax.f32 %v7984, 0.0
  %v8049 = vmax.f32 %v7985, 0.0
  %v8050 = vmax.f32 %v7986, 0.0
  %v8051 = vmax.f32 %v7987, 0.0
  %v8052 = vmax.f32 %v7988, 0.0
  %v8053 = vmax.f32 %v7989, 0.0
  %v8054 = vmax.f32 %v7990, 0.0
  %v8055 = vmax.f32 %v7991, 0.0
  %v8056 = vmax.f32 %v7992, 0.0
  %v8057 = vmax.f32 %v7993, 0.0
  %v8058 = vmax.f32 %v7994, 0.0
  %v8059 = vmax.f32 %v7995, 0.0
  %v8060 = vmax.f32 %v7996, 0.0
  %v8061 = vmax.f32 %v7997, 0.0
  %v8062 = vmax.f32 %v7998, 0.0
  %v8063 = vmax.f32 %v7999, 0.0
  %v8064 = vmax.f32 %v8000, 0.0
  %v8065 = vmax.f32 %v8001, 0.0
  %v8066 = vmax.f32 %v8002, 0.0
  %v8067 = vmax.f32 %v8003, 0.0
  %v8068 = vmax.f32 %v8004, 0.0
  %v8069 = vmax.f32 %v8005, 0.0
  %v8070 = vmax.f32 %v8006, 0.0
  %v8071 = vmax.f32 %v8007, 0.0
  %v8072 = vmax.f32 %v8008, 0.0
  %v8073 = vmax.f32 %v8009, 0.0
  %v8074 = vmax.f32 %v8010, 0.0
  %v8075 = vmax.f32 %v8011, 0.0
  %v8076 = vmax.f32 %v8012, 0.0
  %v8077 = vmax.f32 %v8013, 0.0
  %v8078 = vmax.f32 %v8014, 0.0
  %v8079 = vmax.f32 %v8015, 0.0
  %v8080 = vmax.f32 %v8016, 0.0
  %v8081 = vmax.f32 %v8017, 0.0
  %v8082 = vmax.f32 %v8018, 0.0
  %v8083 = vmax.f32 %v8019, 0.0
  %v8084 = vmax.f32 %v8020, 0.0
  %v8085 = vmax.f32 %v8021, 0.0
  %v8086 = vmax.f32 %v8022, 0.0
  %v8087 = vmax.f32 %v8023, 0.0
  %v8088 = vmax.f32 %v8024, 0.0
  %v8089 = vmax.f32 %v8025, 0.0
  %v8090 = vmax.f32 %v8026, 0.0
  %v8091 = vmax.f32 %v8027, 0.0
  %v8092 = vmax.f32 %v8028, 0.0
  %v8093 = vmax.f32 %v8029, 0.0
  %v8094 = vmax.f32 %v8030, 0.0
  %v8095 = vmax.f32 %v8031, 0.0
  %v8096 = vmax.f32 %v8032, 0.0
  %v8097 = vmax.f32 %v8033, 0.0
  %v8098 = vmax.f32 %v8034, 0.0
  %v8099 = vmax.f32 %v8035, 0.0
  %v8100 = vmax.f32 %v8036, 0.0
  %8101 = vst.msk [vmem:[%s7] sm:$0xff] %vm26, %v8037
  %8102 = vst.msk [vmem:[%s7 + $0x8] sm:$0xff] %vm26, %v8038
  %8103 = vst.msk [vmem:[%s7 + $0x10] sm:$0xff] %vm26, %v8039
  %8104 = vst.msk [vmem:[%s7 + $0x18] sm:$0xff] %vm26, %v8040
  %8105 = vst.msk [vmem:[%s7 + $0x20] sm:$0xff] %vm26, %v8041
  %8106 = vst.msk [vmem:[%s7 + $0x28] sm:$0xff] %vm26, %v8042
  %8107 = vst.msk [vmem:[%s7 + $0x30] sm:$0xff] %vm26, %v8043
  %8108 = vst.msk [vmem:[%s7 + $0x38] sm:$0xff] %vm26, %v8044
  %8109 = vst.msk [vmem:[%s7 + $0x40] sm:$0xff] %vm26, %v8045
  %8110 = vst.msk [vmem:[%s7 + $0x48] sm:$0xff] %vm26, %v8046
  %8111 = vst.msk [vmem:[%s7 + $0x50] sm:$0xff] %vm26, %v8047
  %8112 = vst.msk [vmem:[%s7 + $0x58] sm:$0xff] %vm26, %v8048
  %8113 = vst.msk [vmem:[%s7 + $0x60] sm:$0xff] %vm26, %v8049
  %8114 = vst.msk [vmem:[%s7 + $0x68] sm:$0xff] %vm26, %v8050
  %8115 = vst.msk [vmem:[%s7 + $0x70] sm:$0xff] %vm26, %v8051
  %8116 = vst.msk [vmem:[%s7 + $0x78] sm:$0xff] %vm26, %v8052
  %8117 = vst.msk [vmem:[%s7 + $0x80] sm:$0xff] %vm26, %v8053
  %8118 = vst.msk [vmem:[%s7 + $0x88] sm:$0xff] %vm26, %v8054
  %8119 = vst.msk [vmem:[%s7 + $0x90] sm:$0xff] %vm26, %v8055
  %8120 = vst.msk [vmem:[%s7 + $0x98] sm:$0xff] %vm26, %v8056
  %8121 = vst.msk [vmem:[%s7 + $0xa0] sm:$0xff] %vm26, %v8057
  %8122 = vst.msk [vmem:[%s7 + $0xa8] sm:$0xff] %vm26, %v8058
  %8123 = vst.msk [vmem:[%s7 + $0xb0] sm:$0xff] %vm26, %v8059
  %8124 = vst.msk [vmem:[%s7 + $0xb8] sm:$0xff] %vm26, %v8060
  %8125 = vst.msk [vmem:[%s7 + $0xc0] sm:$0xff] %vm26, %v8061
  %8126 = vst.msk [vmem:[%s7 + $0xc8] sm:$0xff] %vm26, %v8062
  %8127 = vst.msk [vmem:[%s7 + $0xd0] sm:$0xff] %vm26, %v8063
  %8128 = vst.msk [vmem:[%s7 + $0xd8] sm:$0xff] %vm26, %v8064
  %8129 = vst.msk [vmem:[%s7 + $0xe0] sm:$0xff] %vm26, %v8065
  %8130 = vst.msk [vmem:[%s7 + $0xe8] sm:$0xff] %vm26, %v8066
  %8131 = vst.msk [vmem:[%s7 + $0xf0] sm:$0xff] %vm26, %v8067
  %8132 = vst.msk [vmem:[%s7 + $0xf8] sm:$0xff] %vm26, %v8068
  %8133 = vst.msk [vmem:[%s7 + $0x100] sm:$0xff] %vm26, %v8069
  %8134 = vst.msk [vmem:[%s7 + $0x108] sm:$0xff] %vm26, %v8070
  %8135 = vst.msk [vmem:[%s7 + $0x110] sm:$0xff] %vm26, %v8071
  %8136 = vst.msk [vmem:[%s7 + $0x118] sm:$0xff] %vm26, %v8072
  %8137 = vst.msk [vmem:[%s7 + $0x120] sm:$0xff] %vm26, %v8073
  %8138 = vst.msk [vmem:[%s7 + $0x128] sm:$0xff] %vm26, %v8074
  %8139 = vst.msk [vmem:[%s7 + $0x130] sm:$0xff] %vm26, %v8075
  %8140 = vst.msk [vmem:[%s7 + $0x138] sm:$0xff] %vm26, %v8076
  %8141 = vst.msk [vmem:[%s7 + $0x140] sm:$0xff] %vm26, %v8077
  %8142 = vst.msk [vmem:[%s7 + $0x148] sm:$0xff] %vm26, %v8078
  %8143 = vst.msk [vmem:[%s7 + $0x150] sm:$0xff] %vm26, %v8079
  %8144 = vst.msk [vmem:[%s7 + $0x158] sm:$0xff] %vm26, %v8080
  %8145 = vst.msk [vmem:[%s7 + $0x160] sm:$0xff] %vm26, %v8081
  %8146 = vst.msk [vmem:[%s7 + $0x168] sm:$0xff] %vm26, %v8082
  %8147 = vst.msk [vmem:[%s7 + $0x170] sm:$0xff] %vm26, %v8083
  %8148 = vst.msk [vmem:[%s7 + $0x178] sm:$0xff] %vm26, %v8084
  %8149 = vst.msk [vmem:[%s7 + $0x180] sm:$0xff] %vm26, %v8085
  %8150 = vst.msk [vmem:[%s7 + $0x188] sm:$0xff] %vm26, %v8086
  %8151 = vst.msk [vmem:[%s7 + $0x190] sm:$0xff] %vm26, %v8087
  %8152 = vst.msk [vmem:[%s7 + $0x198] sm:$0xff] %vm26, %v8088
  %8153 = vst.msk [vmem:[%s7 + $0x1a0] sm:$0xff] %vm26, %v8089
  %8154 = vst.msk [vmem:[%s7 + $0x1a8] sm:$0xff] %vm26, %v8090
  %8155 = vst.msk [vmem:[%s7 + $0x1b0] sm:$0xff] %vm26, %v8091
  %8156 = vst.msk [vmem:[%s7 + $0x1b8] sm:$0xff] %vm26, %v8092
  %8157 = vst.msk [vmem:[%s7 + $0x1c0] sm:$0xff] %vm26, %v8093
  %8158 = vst.msk [vmem:[%s7 + $0x1c8] sm:$0xff] %vm26, %v8094
  %8159 = vst.msk [vmem:[%s7 + $0x1d0] sm:$0xff] %vm26, %v8095
  %8160 = vst.msk [vmem:[%s7 + $0x1d8] sm:$0xff] %vm26, %v8096
  %8161 = vst.msk [vmem:[%s7 + $0x1e0] sm:$0xff] %vm26, %v8097
  %8162 = vst.msk [vmem:[%s7 + $0x1e8] sm:$0xff] %vm26, %v8098
  %8163 = vst.msk [vmem:[%s7 + $0x1f0] sm:$0xff] %vm26, %v8099
  %8164 = vst.msk [vmem:[%s7 + $0x1f8] sm:$0xff] %vm26, %v8100
  // Predicated region
  $region30: #{resblock_pallas.1} parent=0 // pred_check
    _
  $region31: #{resblock_pallas.1} parent=0 // pred_check_branch
    %8166 = sbr.rel (0) target = $region33
  $region32: #{resblock_pallas.1} parent=0 // pred_region
    _
  $region33: #{resblock_pallas.1} parent=0 // pred_fallthru
    _
  // Predicated region
  $region34: #{resblock_pallas.1} parent=0 // pred_check
    _
  $region35: #{resblock_pallas.1} parent=0 // pred_check_branch
    %8168 = sbr.rel (0) target = $region37
  $region36: #{resblock_pallas.1} parent=0 // pred_region
    _
  $region37: #{resblock_pallas.1} parent=0 // pred_fallthru
    _

</llo_original>
